<compile_context>
chip_gen: v7x
topology: tpu7x:2x2x1
jax: 0.10.0
libtpu: 0.0.40
codegen_flags: <defaults>
</compile_context>

<pallas_src>
import functools

import jax
import jax.numpy as jnp
from jax.experimental import pallas as pl
from jax.experimental.pallas import tpu as pltpu


def _fused_kernel(src_ref, ref_ref, wc_ref, bc_ref, ws_ref, bs_ref,
                  wd_ref, bd_ref, out_ref, *, H, W, TH):
    """One grid step = one batch element x one TH-row output strip."""
    C = wc_ref.shape[1]
    s = pl.program_id(1)
    # Start row of this strip in the 2-pixel zero-padded input coordinates.
    row0 = pl.multiple_of(s * TH, TH)

    # (TH+4, W+4, 3) input strips: 2-pixel halo (already zero padded) so we can
    # compute `combined` on a 1-pixel halo of the output strip.
    src = src_ref[0, pl.ds(row0, TH + 4), :, :]
    ref = ref_ref[0, pl.ds(row0, TH + 4), :, :]

    He, We = TH + 2, W + 2  # extended strip = output strip + 1-px `combined` halo

    def im2col(x):
        # 9 shifted (He, We, 3) windows concatenated on channels -> (He*We, 27)
        cols = []
        for ky in range(3):
            for kx in range(3):
                cols.append(x[ky:ky + He, kx:kx + We, :])
        return jnp.concatenate(cols, axis=-1).reshape(He * We, 27)

    src_patch = im2col(src)
    ref_patch = im2col(ref)

    # content = relu(conv(src, Wc) + bc); style = relu(conv(ref, Ws) + bs)
    content = jnp.maximum(
        jnp.dot(src_patch, wc_ref[...], preferred_element_type=jnp.float32)
        + bc_ref[...], 0.0)
    style = jnp.maximum(
        jnp.dot(ref_patch, ws_ref[...], preferred_element_type=jnp.float32)
        + bs_ref[...], 0.0)
    combined = (content + style).reshape(He, We, C)

    # The decoder zero-pads `combined`; zero out halo positions that fall
    # outside the image so the fused conv matches that behaviour.
    ii = jax.lax.broadcasted_iota(jnp.int32, (He, We, 1), 0)
    jj = jax.lax.broadcasted_iota(jnp.int32, (He, We, 1), 1)
    img_row = row0 + ii - 1
    img_col = jj - 1
    valid = (img_row >= 0) & (img_row < H) & (img_col >= 0) & (img_col < W)
    combined = jnp.where(valid, combined, 0.0)

    # Decoder 3x3 conv, Cout zero-padded to 8 lanes.
    acc = jnp.zeros((TH * W, 8), jnp.float32)
    for ky in range(3):
        for kx in range(3):
            patch = combined[ky:ky + TH, kx:kx + W, :].reshape(TH * W, C)
            acc = acc + jnp.dot(patch, wd_ref[ky, kx],
                                preferred_element_type=jnp.float32)

    y = (acc + bd_ref[...]).T            # (8, TH*W) — natively tiled transpose
    out_ref[...] = jnp.tanh(y[0:3, :]).reshape(1, 3, TH * W)


@functools.partial(jax.jit, static_argnames=("strip_rows",))
def transfer_generator_forward(source_img, reference_img, params, strip_rows=8):
    """source_img / reference_img: NCHW float32, like the PyTorch module."""
    src = jnp.transpose(source_img, (0, 2, 3, 1))      # NCHW -> NHWC
    ref = jnp.transpose(reference_img, (0, 2, 3, 1))
    N, H, W, _ = src.shape
    C = params["wc"].shape[-1]

    # Pick a row-strip size TH that divides H; fall back to a single strip if
    # the lane-dense output blocking constraint (TH*W % 128 == 0) would break.
    TH = min(strip_rows, H)
    if H % TH != 0 or ((TH * W) % 128 != 0 and H // TH > 1):
        TH = H
    S = H // TH

    # Zero-pad the (tiny, 3-channel) inputs by 2 so every strip has its halo.
    src_pad = jnp.pad(src, ((0, 0), (2, 2), (2, 2), (0, 0)))
    ref_pad = jnp.pad(ref, ((0, 0), (2, 2), (2, 2), (0, 0)))

    # Encoder weights in im2col form (27, C); decoder Cout padded 3 -> 8.
    wc27 = params["wc"].reshape(27, C)
    ws27 = params["ws"].reshape(27, C)
    wd8 = jnp.pad(params["wd"], ((0, 0), (0, 0), (0, 0), (0, 5)))
    bd8 = jnp.pad(params["bd"], ((0, 0), (0, 5)))

    kernel = functools.partial(_fused_kernel, H=H, W=W, TH=TH)

    out = pl.pallas_call(
        kernel,
        out_shape=jax.ShapeDtypeStruct((N, 3, H * W), jnp.float32),
        grid=(N, S),
        in_specs=[
            pl.BlockSpec((1, H + 4, W + 4, 3), lambda b, s: (b, 0, 0, 0)),
            pl.BlockSpec((1, H + 4, W + 4, 3), lambda b, s: (b, 0, 0, 0)),
            pl.BlockSpec((27, C), lambda b, s: (0, 0)),
            pl.BlockSpec((1, C), lambda b, s: (0, 0)),
            pl.BlockSpec((27, C), lambda b, s: (0, 0)),
            pl.BlockSpec((1, C), lambda b, s: (0, 0)),
            pl.BlockSpec((3, 3, C, 8), lambda b, s: (0, 0, 0, 0)),
            pl.BlockSpec((1, 8), lambda b, s: (0, 0)),
        ],
        out_specs=pl.BlockSpec((1, 3, TH * W), lambda b, s: (b, 0, s)),
        compiler_params=pltpu.CompilerParams(
            dimension_semantics=("parallel", "parallel"),
            vmem_limit_bytes=32 * 1024 * 1024),
    )(src_pad, ref_pad, wc27, params["bc"], ws27, params["bs"], wd8, bd8)

    # Kernel already emitted channel-major data: this reshape is free.
    return out.reshape(N, 3, H, W)


# ---------------- reference (pure JAX) for a correctness check ----------------
def _conv_ref(x_nhwc, w_hwio, b):
    y = jax.lax.conv_general_dilated(
        x_nhwc, w_hwio, window_strides=(1, 1), padding="SAME",
        dimension_numbers=("NHWC", "HWIO", "NHWC"))
    return y + b.reshape(1, 1, 1, -1)


def reference_forward(source_img, reference_img, params):
    src = jnp.transpose(source_img, (0, 2, 3, 1))
    ref = jnp.transpose(reference_img, (0, 2, 3, 1))
    content = jax.nn.relu(_conv_ref(src, params["wc"], params["bc"][0]))
    style = jax.nn.relu(_conv_ref(ref, params["ws"], params["bs"][0]))
    out = jnp.tanh(_conv_ref(content + style, params["wd"], params["bd"][0]))
    return jnp.transpose(out, (0, 3, 1, 2))


def init_params(key, channels):
    ks = jax.random.split(key, 6)

    def uni(k, shape, fan_in):
        bound = 1.0 / jnp.sqrt(fan_in)
        return jax.random.uniform(k, shape, jnp.float32, -bound, bound)

    return {
        # content encoder: Conv2d(3, C, 3)
        "wc": uni(ks[0], (3, 3, 3, channels), 3 * 9),
        "bc": uni(ks[1], (1, channels), 3 * 9),
        # style encoder: Conv2d(3, C, 3)
        "ws": uni(ks[2], (3, 3, 3, channels), 3 * 9),
        "bs": uni(ks[3], (1, channels), 3 * 9),
        # decoder: Conv2d(C, 3, 3)
        "wd": uni(ks[4], (3, 3, channels, 3), channels * 9),
        "bd": uni(ks[5], (1, 3), channels * 9),
    }


if __name__ == "__main__":
    N, H, W = 2, 16, 16
    channels = 32  # small stand-in for style_channels=content_channels=256

    key = jax.random.PRNGKey(0)
    k_src, k_ref, k_par = jax.random.split(key, 3)
    source_img = jax.random.normal(k_src, (N, 3, H, W), jnp.float32)      # NCHW
    reference_img = jax.random.normal(k_ref, (N, 3, H, W), jnp.float32)   # NCHW
    params = init_params(k_par, channels)

    out = transfer_generator_forward(source_img, reference_img, params,
                                     strip_rows=8)
    out = jax.block_until_ready(out)
    assert out.shape == (N, 3, H, W)

    ref_out = jax.block_until_ready(
        reference_forward(source_img, reference_img, params))
    assert jnp.allclose(out, ref_out, atol=1e-3, rtol=1e-3), "mismatch vs reference"

    print("KERNEL_OK")
</pallas_src>

<mosaic_0001>
module attributes {stable_mosaic.version = 11 : i64} {
  func.func @_fused_kernel(%arg0: i32, %arg1: i32, %arg2: memref<1x20x20x3xf32, #tpu.memory_space<vmem>>, %arg3: memref<1x20x20x3xf32, #tpu.memory_space<vmem>>, %arg4: memref<27x32xf32, #tpu.memory_space<vmem>>, %arg5: memref<1x32xf32, #tpu.memory_space<vmem>>, %arg6: memref<27x32xf32, #tpu.memory_space<vmem>>, %arg7: memref<1x32xf32, #tpu.memory_space<vmem>>, %arg8: memref<3x3x32x8xf32, #tpu.memory_space<vmem>>, %arg9: memref<1x8xf32, #tpu.memory_space<vmem>>, %arg10: memref<1x3x128xf32, #tpu.memory_space<vmem>>) attributes {dimension_semantics = [#tpu.dimension_semantics<parallel>, #tpu.dimension_semantics<parallel>], iteration_bounds = array<i64: 2, 2>, scalar_prefetch = 0 : i64, scratch_operands = 0 : i64, tpu.core_type = #tpu.core_type<tc>, window_params = [{transform_indices = @transform_0, window_bounds = array<i64: 1, 20, 20, 3>}, {transform_indices = @transform_1, window_bounds = array<i64: 1, 20, 20, 3>}, {pipeline_mode = #tpu.pipeline_mode<synchronous>, transform_indices = @transform_2, window_bounds = array<i64: 27, 32>}, {pipeline_mode = #tpu.pipeline_mode<synchronous>, transform_indices = @transform_3, window_bounds = array<i64: 1, 32>}, {pipeline_mode = #tpu.pipeline_mode<synchronous>, transform_indices = @transform_4, window_bounds = array<i64: 27, 32>}, {pipeline_mode = #tpu.pipeline_mode<synchronous>, transform_indices = @transform_5, window_bounds = array<i64: 1, 32>}, {pipeline_mode = #tpu.pipeline_mode<synchronous>, transform_indices = @transform_6, window_bounds = array<i64: 3, 3, 32, 8>}, {pipeline_mode = #tpu.pipeline_mode<synchronous>, transform_indices = @transform_7, window_bounds = array<i64: 1, 8>}, {transform_indices = @transform_8, window_bounds = array<i64: 1, 3, 128>}]} {
    %c8_i32 = arith.constant 8 : i32
    %0 = arith.muli %arg1, %c8_i32 : i32
    %1 = tpu.assume_multiple %0, 8 : i32
    %c0 = arith.constant 0 : index
    %2 = arith.index_cast %1 : i32 to index
    %c0_0 = arith.constant 0 : index
    %c0_1 = arith.constant 0 : index
    %3 = vector.load %arg2[%c0, %2, %c0_0, %c0_1] : memref<1x20x20x3xf32, #tpu.memory_space<vmem>>, vector<1x12x20x3xf32>
    %4 = vector.shape_cast %3 : vector<1x12x20x3xf32> to vector<12x20x3xf32>
    %c0_2 = arith.constant 0 : index
    %5 = arith.index_cast %1 : i32 to index
    %c0_3 = arith.constant 0 : index
    %c0_4 = arith.constant 0 : index
    %6 = vector.load %arg3[%c0_2, %5, %c0_3, %c0_4] : memref<1x20x20x3xf32, #tpu.memory_space<vmem>>, vector<1x12x20x3xf32>
    %7 = vector.shape_cast %6 : vector<1x12x20x3xf32> to vector<12x20x3xf32>
    %8 = vector.extract_strided_slice %4 {offsets = [0, 0, 0], sizes = [10, 18, 3], strides = [1, 1, 1]} : vector<12x20x3xf32> to vector<10x18x3xf32>
    %9 = vector.extract_strided_slice %4 {offsets = [0, 1, 0], sizes = [10, 18, 3], strides = [1, 1, 1]} : vector<12x20x3xf32> to vector<10x18x3xf32>
    %10 = vector.extract_strided_slice %4 {offsets = [0, 2, 0], sizes = [10, 18, 3], strides = [1, 1, 1]} : vector<12x20x3xf32> to vector<10x18x3xf32>
    %11 = vector.extract_strided_slice %4 {offsets = [1, 0, 0], sizes = [10, 18, 3], strides = [1, 1, 1]} : vector<12x20x3xf32> to vector<10x18x3xf32>
    %12 = vector.extract_strided_slice %4 {offsets = [1, 1, 0], sizes = [10, 18, 3], strides = [1, 1, 1]} : vector<12x20x3xf32> to vector<10x18x3xf32>
    %13 = vector.extract_strided_slice %4 {offsets = [1, 2, 0], sizes = [10, 18, 3], strides = [1, 1, 1]} : vector<12x20x3xf32> to vector<10x18x3xf32>
    %14 = vector.extract_strided_slice %4 {offsets = [2, 0, 0], sizes = [10, 18, 3], strides = [1, 1, 1]} : vector<12x20x3xf32> to vector<10x18x3xf32>
    %15 = vector.extract_strided_slice %4 {offsets = [2, 1, 0], sizes = [10, 18, 3], strides = [1, 1, 1]} : vector<12x20x3xf32> to vector<10x18x3xf32>
    %16 = vector.extract_strided_slice %4 {offsets = [2, 2, 0], sizes = [10, 18, 3], strides = [1, 1, 1]} : vector<12x20x3xf32> to vector<10x18x3xf32>
    %17 = tpu.concatenate %8, %9, %10, %11, %12, %13, %14, %15, %16 in 2 : vector<10x18x3xf32>, vector<10x18x3xf32>, vector<10x18x3xf32>, vector<10x18x3xf32>, vector<10x18x3xf32>, vector<10x18x3xf32>, vector<10x18x3xf32>, vector<10x18x3xf32>, vector<10x18x3xf32> -> vector<10x18x27xf32>
    %18 = vector.shape_cast %17 : vector<10x18x27xf32> to vector<180x27xf32>
    %19 = vector.extract_strided_slice %7 {offsets = [0, 0, 0], sizes = [10, 18, 3], strides = [1, 1, 1]} : vector<12x20x3xf32> to vector<10x18x3xf32>
    %20 = vector.extract_strided_slice %7 {offsets = [0, 1, 0], sizes = [10, 18, 3], strides = [1, 1, 1]} : vector<12x20x3xf32> to vector<10x18x3xf32>
    %21 = vector.extract_strided_slice %7 {offsets = [0, 2, 0], sizes = [10, 18, 3], strides = [1, 1, 1]} : vector<12x20x3xf32> to vector<10x18x3xf32>
    %22 = vector.extract_strided_slice %7 {offsets = [1, 0, 0], sizes = [10, 18, 3], strides = [1, 1, 1]} : vector<12x20x3xf32> to vector<10x18x3xf32>
    %23 = vector.extract_strided_slice %7 {offsets = [1, 1, 0], sizes = [10, 18, 3], strides = [1, 1, 1]} : vector<12x20x3xf32> to vector<10x18x3xf32>
    %24 = vector.extract_strided_slice %7 {offsets = [1, 2, 0], sizes = [10, 18, 3], strides = [1, 1, 1]} : vector<12x20x3xf32> to vector<10x18x3xf32>
    %25 = vector.extract_strided_slice %7 {offsets = [2, 0, 0], sizes = [10, 18, 3], strides = [1, 1, 1]} : vector<12x20x3xf32> to vector<10x18x3xf32>
    %26 = vector.extract_strided_slice %7 {offsets = [2, 1, 0], sizes = [10, 18, 3], strides = [1, 1, 1]} : vector<12x20x3xf32> to vector<10x18x3xf32>
    %27 = vector.extract_strided_slice %7 {offsets = [2, 2, 0], sizes = [10, 18, 3], strides = [1, 1, 1]} : vector<12x20x3xf32> to vector<10x18x3xf32>
    %28 = tpu.concatenate %19, %20, %21, %22, %23, %24, %25, %26, %27 in 2 : vector<10x18x3xf32>, vector<10x18x3xf32>, vector<10x18x3xf32>, vector<10x18x3xf32>, vector<10x18x3xf32>, vector<10x18x3xf32>, vector<10x18x3xf32>, vector<10x18x3xf32>, vector<10x18x3xf32> -> vector<10x18x27xf32>
    %29 = vector.shape_cast %28 : vector<10x18x27xf32> to vector<180x27xf32>
    %c0_5 = arith.constant 0 : index
    %c0_6 = arith.constant 0 : index
    %30 = vector.load %arg4[%c0_5, %c0_6] : memref<27x32xf32, #tpu.memory_space<vmem>>, vector<27x32xf32>
    %cst = arith.constant dense<0.000000e+00> : vector<180x32xf32>
    %31 = tpu.matmul %18, %30, %cst {dimension_numbers = #tpu.dot_dimension_numbers<[1], [0], [0], [1], [0, 0, 1, 1], [], []>} : vector<180x27xf32>, vector<27x32xf32>, vector<180x32xf32> -> vector<180x32xf32>
    %c0_7 = arith.constant 0 : index
    %c0_8 = arith.constant 0 : index
    %32 = vector.load %arg5[%c0_7, %c0_8] : memref<1x32xf32, #tpu.memory_space<vmem>>, vector<1x32xf32>
    %33 = vector.broadcast %32 : vector<1x32xf32> to vector<180x32xf32>
    %34 = arith.addf %31, %33 : vector<180x32xf32>
    %cst_9 = arith.constant 0.000000e+00 : f32
    %35 = vector.broadcast %cst_9 : f32 to vector<180x32xf32>
    %36 = arith.maximumf %34, %35 : vector<180x32xf32>
    %c0_10 = arith.constant 0 : index
    %c0_11 = arith.constant 0 : index
    %37 = vector.load %arg6[%c0_10, %c0_11] : memref<27x32xf32, #tpu.memory_space<vmem>>, vector<27x32xf32>
    %cst_12 = arith.constant dense<0.000000e+00> : vector<180x32xf32>
    %38 = tpu.matmul %29, %37, %cst_12 {dimension_numbers = #tpu.dot_dimension_numbers<[1], [0], [0], [1], [0, 0, 1, 1], [], []>} : vector<180x27xf32>, vector<27x32xf32>, vector<180x32xf32> -> vector<180x32xf32>
    %c0_13 = arith.constant 0 : index
    %c0_14 = arith.constant 0 : index
    %39 = vector.load %arg7[%c0_13, %c0_14] : memref<1x32xf32, #tpu.memory_space<vmem>>, vector<1x32xf32>
    %40 = vector.broadcast %39 : vector<1x32xf32> to vector<180x32xf32>
    %41 = arith.addf %38, %40 : vector<180x32xf32>
    %cst_15 = arith.constant 0.000000e+00 : f32
    %42 = vector.broadcast %cst_15 : f32 to vector<180x32xf32>
    %43 = arith.maximumf %41, %42 : vector<180x32xf32>
    %44 = arith.addf %36, %43 : vector<180x32xf32>
    %45 = vector.shape_cast %44 : vector<180x32xf32> to vector<10x18x32xf32>
    %46 = tpu.iota {dimensions = array<i32: 0>} : vector<10x18x1xi32>
    %47 = tpu.iota {dimensions = array<i32: 1>} : vector<10x18x1xi32>
    %48 = vector.broadcast %1 : i32 to vector<10x18x1xi32>
    %49 = arith.addi %48, %46 : vector<10x18x1xi32>
    %c1_i32 = arith.constant 1 : i32
    %50 = vector.broadcast %c1_i32 : i32 to vector<10x18x1xi32>
    %51 = arith.subi %49, %50 : vector<10x18x1xi32>
    %c1_i32_16 = arith.constant 1 : i32
    %52 = vector.broadcast %c1_i32_16 : i32 to vector<10x18x1xi32>
    %53 = arith.subi %47, %52 : vector<10x18x1xi32>
    %c0_i32 = arith.constant 0 : i32
    %54 = vector.broadcast %c0_i32 : i32 to vector<10x18x1xi32>
    %55 = arith.cmpi sge, %51, %54 : vector<10x18x1xi32>
    %c16_i32 = arith.constant 16 : i32
    %56 = vector.broadcast %c16_i32 : i32 to vector<10x18x1xi32>
    %57 = arith.cmpi slt, %51, %56 : vector<10x18x1xi32>
    %58 = arith.andi %55, %57 : vector<10x18x1xi1>
    %c0_i32_17 = arith.constant 0 : i32
    %59 = vector.broadcast %c0_i32_17 : i32 to vector<10x18x1xi32>
    %60 = arith.cmpi sge, %53, %59 : vector<10x18x1xi32>
    %61 = arith.andi %58, %60 : vector<10x18x1xi1>
    %c16_i32_18 = arith.constant 16 : i32
    %62 = vector.broadcast %c16_i32_18 : i32 to vector<10x18x1xi32>
    %63 = arith.cmpi slt, %53, %62 : vector<10x18x1xi32>
    %64 = arith.andi %61, %63 : vector<10x18x1xi1>
    %cst_19 = arith.constant 0.000000e+00 : f32
    %65 = vector.shape_cast %64 : vector<10x18x1xi1> to vector<10x18x1xi1>
    %66 = vector.broadcast %65 : vector<10x18x1xi1> to vector<10x18x32xi1>
    %67 = vector.broadcast %cst_19 : f32 to vector<10x18x32xf32>
    %68 = arith.select %66, %45, %67 : vector<10x18x32xi1>, vector<10x18x32xf32>
    %cst_20 = arith.constant 0.000000e+00 : f32
    %69 = vector.broadcast %cst_20 : f32 to vector<128x8xf32>
    %70 = vector.extract_strided_slice %68 {offsets = [0, 0, 0], sizes = [8, 16, 32], strides = [1, 1, 1]} : vector<10x18x32xf32> to vector<8x16x32xf32>
    %71 = vector.shape_cast %70 : vector<8x16x32xf32> to vector<128x32xf32>
    %c0_21 = arith.constant 0 : index
    %c0_22 = arith.constant 0 : index
    %c0_23 = arith.constant 0 : index
    %c0_24 = arith.constant 0 : index
    %72 = vector.load %arg8[%c0_21, %c0_22, %c0_23, %c0_24] : memref<3x3x32x8xf32, #tpu.memory_space<vmem>>, vector<1x1x32x8xf32>
    %73 = vector.shape_cast %72 : vector<1x1x32x8xf32> to vector<32x8xf32>
    %cst_25 = arith.constant dense<0.000000e+00> : vector<128x8xf32>
    %74 = tpu.matmul %71, %73, %cst_25 {dimension_numbers = #tpu.dot_dimension_numbers<[1], [0], [0], [1], [0, 0, 1, 1], [], []>} : vector<128x32xf32>, vector<32x8xf32>, vector<128x8xf32> -> vector<128x8xf32>
    %75 = arith.addf %69, %74 : vector<128x8xf32>
    %76 = vector.extract_strided_slice %68 {offsets = [0, 1, 0], sizes = [8, 16, 32], strides = [1, 1, 1]} : vector<10x18x32xf32> to vector<8x16x32xf32>
    %77 = vector.shape_cast %76 : vector<8x16x32xf32> to vector<128x32xf32>
    %c0_26 = arith.constant 0 : index
    %c1 = arith.constant 1 : index
    %c0_27 = arith.constant 0 : index
    %c0_28 = arith.constant 0 : index
    %78 = vector.load %arg8[%c0_26, %c1, %c0_27, %c0_28] : memref<3x3x32x8xf32, #tpu.memory_space<vmem>>, vector<1x1x32x8xf32>
    %79 = vector.shape_cast %78 : vector<1x1x32x8xf32> to vector<32x8xf32>
    %cst_29 = arith.constant dense<0.000000e+00> : vector<128x8xf32>
    %80 = tpu.matmul %77, %79, %cst_29 {dimension_numbers = #tpu.dot_dimension_numbers<[1], [0], [0], [1], [0, 0, 1, 1], [], []>} : vector<128x32xf32>, vector<32x8xf32>, vector<128x8xf32> -> vector<128x8xf32>
    %81 = arith.addf %75, %80 : vector<128x8xf32>
    %82 = vector.extract_strided_slice %68 {offsets = [0, 2, 0], sizes = [8, 16, 32], strides = [1, 1, 1]} : vector<10x18x32xf32> to vector<8x16x32xf32>
    %83 = vector.shape_cast %82 : vector<8x16x32xf32> to vector<128x32xf32>
    %c0_30 = arith.constant 0 : index
    %c2 = arith.constant 2 : index
    %c0_31 = arith.constant 0 : index
    %c0_32 = arith.constant 0 : index
    %84 = vector.load %arg8[%c0_30, %c2, %c0_31, %c0_32] : memref<3x3x32x8xf32, #tpu.memory_space<vmem>>, vector<1x1x32x8xf32>
    %85 = vector.shape_cast %84 : vector<1x1x32x8xf32> to vector<32x8xf32>
    %cst_33 = arith.constant dense<0.000000e+00> : vector<128x8xf32>
    %86 = tpu.matmul %83, %85, %cst_33 {dimension_numbers = #tpu.dot_dimension_numbers<[1], [0], [0], [1], [0, 0, 1, 1], [], []>} : vector<128x32xf32>, vector<32x8xf32>, vector<128x8xf32> -> vector<128x8xf32>
    %87 = arith.addf %81, %86 : vector<128x8xf32>
    %88 = vector.extract_strided_slice %68 {offsets = [1, 0, 0], sizes = [8, 16, 32], strides = [1, 1, 1]} : vector<10x18x32xf32> to vector<8x16x32xf32>
    %89 = vector.shape_cast %88 : vector<8x16x32xf32> to vector<128x32xf32>
    %c1_34 = arith.constant 1 : index
    %c0_35 = arith.constant 0 : index
    %c0_36 = arith.constant 0 : index
    %c0_37 = arith.constant 0 : index
    %90 = vector.load %arg8[%c1_34, %c0_35, %c0_36, %c0_37] : memref<3x3x32x8xf32, #tpu.memory_space<vmem>>, vector<1x1x32x8xf32>
    %91 = vector.shape_cast %90 : vector<1x1x32x8xf32> to vector<32x8xf32>
    %cst_38 = arith.constant dense<0.000000e+00> : vector<128x8xf32>
    %92 = tpu.matmul %89, %91, %cst_38 {dimension_numbers = #tpu.dot_dimension_numbers<[1], [0], [0], [1], [0, 0, 1, 1], [], []>} : vector<128x32xf32>, vector<32x8xf32>, vector<128x8xf32> -> vector<128x8xf32>
    %93 = arith.addf %87, %92 : vector<128x8xf32>
    %94 = vector.extract_strided_slice %68 {offsets = [1, 1, 0], sizes = [8, 16, 32], strides = [1, 1, 1]} : vector<10x18x32xf32> to vector<8x16x32xf32>
    %95 = vector.shape_cast %94 : vector<8x16x32xf32> to vector<128x32xf32>
    %c1_39 = arith.constant 1 : index
    %c1_40 = arith.constant 1 : index
    %c0_41 = arith.constant 0 : index
    %c0_42 = arith.constant 0 : index
    %96 = vector.load %arg8[%c1_39, %c1_40, %c0_41, %c0_42] : memref<3x3x32x8xf32, #tpu.memory_space<vmem>>, vector<1x1x32x8xf32>
    %97 = vector.shape_cast %96 : vector<1x1x32x8xf32> to vector<32x8xf32>
    %cst_43 = arith.constant dense<0.000000e+00> : vector<128x8xf32>
    %98 = tpu.matmul %95, %97, %cst_43 {dimension_numbers = #tpu.dot_dimension_numbers<[1], [0], [0], [1], [0, 0, 1, 1], [], []>} : vector<128x32xf32>, vector<32x8xf32>, vector<128x8xf32> -> vector<128x8xf32>
    %99 = arith.addf %93, %98 : vector<128x8xf32>
    %100 = vector.extract_strided_slice %68 {offsets = [1, 2, 0], sizes = [8, 16, 32], strides = [1, 1, 1]} : vector<10x18x32xf32> to vector<8x16x32xf32>
    %101 = vector.shape_cast %100 : vector<8x16x32xf32> to vector<128x32xf32>
    %c1_44 = arith.constant 1 : index
    %c2_45 = arith.constant 2 : index
    %c0_46 = arith.constant 0 : index
    %c0_47 = arith.constant 0 : index
    %102 = vector.load %arg8[%c1_44, %c2_45, %c0_46, %c0_47] : memref<3x3x32x8xf32, #tpu.memory_space<vmem>>, vector<1x1x32x8xf32>
    %103 = vector.shape_cast %102 : vector<1x1x32x8xf32> to vector<32x8xf32>
    %cst_48 = arith.constant dense<0.000000e+00> : vector<128x8xf32>
    %104 = tpu.matmul %101, %103, %cst_48 {dimension_numbers = #tpu.dot_dimension_numbers<[1], [0], [0], [1], [0, 0, 1, 1], [], []>} : vector<128x32xf32>, vector<32x8xf32>, vector<128x8xf32> -> vector<128x8xf32>
    %105 = arith.addf %99, %104 : vector<128x8xf32>
    %106 = vector.extract_strided_slice %68 {offsets = [2, 0, 0], sizes = [8, 16, 32], strides = [1, 1, 1]} : vector<10x18x32xf32> to vector<8x16x32xf32>
    %107 = vector.shape_cast %106 : vector<8x16x32xf32> to vector<128x32xf32>
    %c2_49 = arith.constant 2 : index
    %c0_50 = arith.constant 0 : index
    %c0_51 = arith.constant 0 : index
    %c0_52 = arith.constant 0 : index
    %108 = vector.load %arg8[%c2_49, %c0_50, %c0_51, %c0_52] : memref<3x3x32x8xf32, #tpu.memory_space<vmem>>, vector<1x1x32x8xf32>
    %109 = vector.shape_cast %108 : vector<1x1x32x8xf32> to vector<32x8xf32>
    %cst_53 = arith.constant dense<0.000000e+00> : vector<128x8xf32>
    %110 = tpu.matmul %107, %109, %cst_53 {dimension_numbers = #tpu.dot_dimension_numbers<[1], [0], [0], [1], [0, 0, 1, 1], [], []>} : vector<128x32xf32>, vector<32x8xf32>, vector<128x8xf32> -> vector<128x8xf32>
    %111 = arith.addf %105, %110 : vector<128x8xf32>
    %112 = vector.extract_strided_slice %68 {offsets = [2, 1, 0], sizes = [8, 16, 32], strides = [1, 1, 1]} : vector<10x18x32xf32> to vector<8x16x32xf32>
    %113 = vector.shape_cast %112 : vector<8x16x32xf32> to vector<128x32xf32>
    %c2_54 = arith.constant 2 : index
    %c1_55 = arith.constant 1 : index
    %c0_56 = arith.constant 0 : index
    %c0_57 = arith.constant 0 : index
    %114 = vector.load %arg8[%c2_54, %c1_55, %c0_56, %c0_57] : memref<3x3x32x8xf32, #tpu.memory_space<vmem>>, vector<1x1x32x8xf32>
    %115 = vector.shape_cast %114 : vector<1x1x32x8xf32> to vector<32x8xf32>
    %cst_58 = arith.constant dense<0.000000e+00> : vector<128x8xf32>
    %116 = tpu.matmul %113, %115, %cst_58 {dimension_numbers = #tpu.dot_dimension_numbers<[1], [0], [0], [1], [0, 0, 1, 1], [], []>} : vector<128x32xf32>, vector<32x8xf32>, vector<128x8xf32> -> vector<128x8xf32>
    %117 = arith.addf %111, %116 : vector<128x8xf32>
    %118 = vector.extract_strided_slice %68 {offsets = [2, 2, 0], sizes = [8, 16, 32], strides = [1, 1, 1]} : vector<10x18x32xf32> to vector<8x16x32xf32>
    %119 = vector.shape_cast %118 : vector<8x16x32xf32> to vector<128x32xf32>
    %c2_59 = arith.constant 2 : index
    %c2_60 = arith.constant 2 : index
    %c0_61 = arith.constant 0 : index
    %c0_62 = arith.constant 0 : index
    %120 = vector.load %arg8[%c2_59, %c2_60, %c0_61, %c0_62] : memref<3x3x32x8xf32, #tpu.memory_space<vmem>>, vector<1x1x32x8xf32>
    %121 = vector.shape_cast %120 : vector<1x1x32x8xf32> to vector<32x8xf32>
    %cst_63 = arith.constant dense<0.000000e+00> : vector<128x8xf32>
    %122 = tpu.matmul %119, %121, %cst_63 {dimension_numbers = #tpu.dot_dimension_numbers<[1], [0], [0], [1], [0, 0, 1, 1], [], []>} : vector<128x32xf32>, vector<32x8xf32>, vector<128x8xf32> -> vector<128x8xf32>
    %123 = arith.addf %117, %122 : vector<128x8xf32>
    %c0_64 = arith.constant 0 : index
    %c0_65 = arith.constant 0 : index
    %124 = vector.load %arg9[%c0_64, %c0_65] : memref<1x8xf32, #tpu.memory_space<vmem>>, vector<1x8xf32>
    %125 = vector.broadcast %124 : vector<1x8xf32> to vector<128x8xf32>
    %126 = arith.addf %123, %125 : vector<128x8xf32>
    %127 = tpu.transpose %126, [1, 0] : vector<128x8xf32> -> vector<8x128xf32>
    %128 = vector.extract_strided_slice %127 {offsets = [0, 0], sizes = [3, 128], strides = [1, 1]} : vector<8x128xf32> to vector<3x128xf32>
    %129 = math.tanh %128 : vector<3x128xf32>
    %130 = vector.shape_cast %129 : vector<3x128xf32> to vector<1x3x128xf32>
    %c0_66 = arith.constant 0 : index
    %c0_67 = arith.constant 0 : index
    %c0_68 = arith.constant 0 : index
    %131 = vector.load %arg10[%c0_66, %c0_67, %c0_68] : memref<1x3x128xf32, #tpu.memory_space<vmem>>, vector<1x3x128xf32>
    tpu.vector_store %arg10[%c0_66, %c0_67, %c0_68], %130 {strides = array<i32>} : memref<1x3x128xf32, #tpu.memory_space<vmem>>, vector<1x3x128xf32>,
    return
  }
  func.func @transform_0(%arg0: i32, %arg1: i32) -> (i32, i32, i32, i32) {
    %c0_i32 = arith.constant 0 : i32
    %c0_i32_0 = arith.constant 0 : i32
    %c0_i32_1 = arith.constant 0 : i32
    %c0_i32_2 = arith.constant 0 : i32
    return %arg0, %c0_i32, %c0_i32_0, %c0_i32_1 : i32, i32, i32, i32
  }
  func.func @transform_1(%arg0: i32, %arg1: i32) -> (i32, i32, i32, i32) {
    %c0_i32 = arith.constant 0 : i32
    %c0_i32_0 = arith.constant 0 : i32
    %c0_i32_1 = arith.constant 0 : i32
    %c0_i32_2 = arith.constant 0 : i32
    return %arg0, %c0_i32, %c0_i32_0, %c0_i32_1 : i32, i32, i32, i32
  }
  func.func @transform_2(%arg0: i32, %arg1: i32) -> (i32, i32) {
    %c0_i32 = arith.constant 0 : i32
    %c0_i32_0 = arith.constant 0 : i32
    %c0_i32_1 = arith.constant 0 : i32
    return %c0_i32, %c0_i32_0 : i32, i32
  }
  func.func @transform_3(%arg0: i32, %arg1: i32) -> (i32, i32) {
    %c0_i32 = arith.constant 0 : i32
    %c0_i32_0 = arith.constant 0 : i32
    %c0_i32_1 = arith.constant 0 : i32
    return %c0_i32, %c0_i32_0 : i32, i32
  }
  func.func @transform_4(%arg0: i32, %arg1: i32) -> (i32, i32) {
    %c0_i32 = arith.constant 0 : i32
    %c0_i32_0 = arith.constant 0 : i32
    %c0_i32_1 = arith.constant 0 : i32
    return %c0_i32, %c0_i32_0 : i32, i32
  }
  func.func @transform_5(%arg0: i32, %arg1: i32) -> (i32, i32) {
    %c0_i32 = arith.constant 0 : i32
    %c0_i32_0 = arith.constant 0 : i32
    %c0_i32_1 = arith.constant 0 : i32
    return %c0_i32, %c0_i32_0 : i32, i32
  }
  func.func @transform_6(%arg0: i32, %arg1: i32) -> (i32, i32, i32, i32) {
    %c0_i32 = arith.constant 0 : i32
    %c0_i32_0 = arith.constant 0 : i32
    %c0_i32_1 = arith.constant 0 : i32
    %c0_i32_2 = arith.constant 0 : i32
    %c0_i32_3 = arith.constant 0 : i32
    return %c0_i32, %c0_i32_0, %c0_i32_1, %c0_i32_2 : i32, i32, i32, i32
  }
  func.func @transform_7(%arg0: i32, %arg1: i32) -> (i32, i32) {
    %c0_i32 = arith.constant 0 : i32
    %c0_i32_0 = arith.constant 0 : i32
    %c0_i32_1 = arith.constant 0 : i32
    return %c0_i32, %c0_i32_0 : i32, i32
  }
  func.func @transform_8(%arg0: i32, %arg1: i32) -> (i32, i32, i32) {
    %c0_i32 = arith.constant 0 : i32
    %c0_i32_0 = arith.constant 0 : i32
    return %arg0, %c0_i32, %arg1 : i32, i32, i32
  }
}

</mosaic_0001>

<llo_original>
// kernel: transfer_generator_forward.1
$region0: #{transfer_generator_forward.1}
  #allocation0 [shape = 'u32[]', space=smem, size = 0x4, offset = 0x4, fixed_abs, tag = 'smem constant byte address 0x4 - core index']
  #allocation1 [shape = 'u32[144,128]{1,0:T(1,128)}', space=vmem, size = 0x12000, scoped, tag = 'internal scratch']
  %s0 = inlined_call_operand.vmem [shape: f32[2,20,20,3], index: 0, kind: input, shape index: {}]
  %s1 = inlined_call_operand.vmem [shape: f32[2,20,20,3], index: 1, kind: input, shape index: {}]
  %s2 = inlined_call_operand.vmem [shape: f32[27,32], index: 2, kind: input, shape index: {}]
  %s3 = inlined_call_operand.vmem [shape: f32[1,32], index: 3, kind: input, shape index: {}]
  %s4 = inlined_call_operand.vmem [shape: f32[27,32], index: 4, kind: input, shape index: {}]
  %s5 = inlined_call_operand.vmem [shape: f32[1,32], index: 5, kind: input, shape index: {}]
  %s6 = inlined_call_operand.vmem [shape: f32[3,3,32,8], index: 6, kind: input, shape index: {}]
  %s7 = inlined_call_operand.vmem [shape: f32[1,8], index: 7, kind: input, shape index: {}]
  %s8 = inlined_call_operand.vmem [shape: f32[2,3,256], index: 8, kind: output, shape index: {}]
  %s9 = sld [smem:[#allocation0]]
  $region65: #{transfer_generator_forward.1} parent=0
    _
  %s11 = ssub.s32 1, %s9
  %s12 = scalar_select 0, %s11, %s9
  loop: start=0, step=1, limit=6
  $region2: #{transfer_generator_forward.1} parent=0 // loop_pre_header
    _
  $region3: #{transfer_generator_forward.1} parent=0 // loop_header
    %s14 = sphi 0, %s18
    %p15 = scmp.ge.s32.totalorder %s14, 6
    %s21 = sphi 0, %s33
    %s22 = sphi 0, %s29
    %s23 = sphi 0, %s21
    %s24 = sphi 0, %s22
    %s25 = sphi 0, %s23
    %s26 = sphi 0, %s24
    %s36 = sphi 0, %s38
    %s39 = sphi 0, %s36
    %s40 = sphi 0, %s39
    %s56 = sphi 0, %s40
    %s62 = sphi 0, %s64
    %s65 = sphi 0, %s62
    %s66 = sphi 0, %s65
    %s82 = sphi 0, %s66
    %s86 = sphi 0, %s86
    %s88 = sphi 0, %s86
    %s89 = sphi 0, %s88
    %s103 = sphi 0, %s89
    %s107 = sphi 0, %s107
    %s109 = sphi 0, %s107
    %s110 = sphi 0, %s109
    %s124 = sphi 0, %s110
    %s128 = sphi 0, %s128
    %s130 = sphi 0, %s128
    %s131 = sphi 0, %s130
    %s145 = sphi 0, %s131
    %s149 = sphi 0, %s149
    %s151 = sphi 0, %s149
    %s152 = sphi 0, %s151
    %s166 = sphi 0, %s152
    %s170 = sphi 0, %s170
    %s172 = sphi 0, %s170
    %s173 = sphi 0, %s172
    %s187 = sphi 0, %s173
    %s191 = sphi 0, %s191
    %s193 = sphi 0, %s191
    %s194 = sphi 0, %s193
    %s208 = sphi 0, %s194
    %s216 = sphi 0, %s218
    %s219 = sphi 0, %s216
    %s220 = sphi 0, %s219
    %s236 = sphi 0, %s220
  $region4: #{transfer_generator_forward.1} parent=0 // loop_header_branch
    %17 = sbr.rel (%p15) target = $region8
  $region5: #{transfer_generator_forward.1} parent=0 // loop_body
    %s19 = ssub.s32 %s14, 1
    %s20 = ssub.s32 %s14, 2
    %s27 = sadd.s32 1, %s22
    %p28 = scmp.ge.s32.totalorder %s27, 2
    %s29 = scalar_select %p28, 0, %s27
    %s30 = sadd.s32 1, %s21
    %s31 = scalar_select %p28, %s30, %s21
    %p32 = scmp.ge.s32.totalorder %s31, 2
    %s33 = scalar_select %p32, 0, %s31
    %s34 = ssub.s32 %s21, %s33
    %p35 = scmp.eq.s32.totalorder %s34, 0
    %s37 = sadd.s32 %s36, 1
    %s38 = scalar_select %p35, %s36, %s37
    %p41 = pneg %p35
    %p42 = scmp.eq.s32.totalorder %s14, 3
    %p43 = por %p41, %p42
    %p44 = scmp.ne.s32.totalorder %s36, %s39
    %p45 = scmp.eq.s32.totalorder %s14, 0
    %p46 = por %p44, %p45
    %p47 = scmp.ne.s32.totalorder %s36, %s39
    %p48 = scmp.eq.s32.totalorder %s19, 3
    %p49 = por %p47, %p48
    %p50 = scmp.ne.s32.totalorder %s39, %s40
    %p51 = scmp.eq.s32.totalorder %s19, 0
    %p52 = por %p50, %p51
    %p53 = scmp.ne.s32.totalorder %s39, %s40
    %p54 = scmp.eq.s32.totalorder %s20, 3
    %p55 = por %p53, %p54
    %p57 = scmp.ne.s32.totalorder %s40, %s56
    %p58 = scmp.eq.s32.totalorder %s20, 0
    %p59 = por %p57, %p58
    %s60 = ssub.s32 %s21, %s33
    %p61 = scmp.eq.s32.totalorder %s60, 0
    %s63 = sadd.s32 %s62, 1
    %s64 = scalar_select %p61, %s62, %s63
    %p67 = pneg %p61
    %p68 = scmp.eq.s32.totalorder %s14, 3
    %p69 = por %p67, %p68
    %p70 = scmp.ne.s32.totalorder %s62, %s65
    %p71 = scmp.eq.s32.totalorder %s14, 0
    %p72 = por %p70, %p71
    %p73 = scmp.ne.s32.totalorder %s62, %s65
    %p74 = scmp.eq.s32.totalorder %s19, 3
    %p75 = por %p73, %p74
    %p76 = scmp.ne.s32.totalorder %s65, %s66
    %p77 = scmp.eq.s32.totalorder %s19, 0
    %p78 = por %p76, %p77
    %p79 = scmp.ne.s32.totalorder %s65, %s66
    %p80 = scmp.eq.s32.totalorder %s20, 3
    %p81 = por %p79, %p80
    %p83 = scmp.ne.s32.totalorder %s66, %s82
    %p84 = scmp.eq.s32.totalorder %s20, 0
    %p85 = por %p83, %p84
    %s87 = sadd.s32 %s86, 1
    %p90 = scmp.eq.s32.totalorder %s14, 3
    %p91 = scmp.ne.s32.totalorder %s86, %s88
    %p92 = scmp.eq.s32.totalorder %s14, 0
    %p93 = por %p91, %p92
    %p94 = scmp.ne.s32.totalorder %s86, %s88
    %p95 = scmp.eq.s32.totalorder %s19, 3
    %p96 = por %p94, %p95
    %p97 = scmp.ne.s32.totalorder %s88, %s89
    %p98 = scmp.eq.s32.totalorder %s19, 0
    %p99 = por %p97, %p98
    %p100 = scmp.ne.s32.totalorder %s88, %s89
    %p101 = scmp.eq.s32.totalorder %s20, 3
    %p102 = por %p100, %p101
    %p104 = scmp.ne.s32.totalorder %s89, %s103
    %p105 = scmp.eq.s32.totalorder %s20, 0
    %p106 = por %p104, %p105
    %s108 = sadd.s32 %s107, 1
    %p111 = scmp.eq.s32.totalorder %s14, 3
    %p112 = scmp.ne.s32.totalorder %s107, %s109
    %p113 = scmp.eq.s32.totalorder %s14, 0
    %p114 = por %p112, %p113
    %p115 = scmp.ne.s32.totalorder %s107, %s109
    %p116 = scmp.eq.s32.totalorder %s19, 3
    %p117 = por %p115, %p116
    %p118 = scmp.ne.s32.totalorder %s109, %s110
    %p119 = scmp.eq.s32.totalorder %s19, 0
    %p120 = por %p118, %p119
    %p121 = scmp.ne.s32.totalorder %s109, %s110
    %p122 = scmp.eq.s32.totalorder %s20, 3
    %p123 = por %p121, %p122
    %p125 = scmp.ne.s32.totalorder %s110, %s124
    %p126 = scmp.eq.s32.totalorder %s20, 0
    %p127 = por %p125, %p126
    %s129 = sadd.s32 %s128, 1
    %p132 = scmp.eq.s32.totalorder %s14, 3
    %p133 = scmp.ne.s32.totalorder %s128, %s130
    %p134 = scmp.eq.s32.totalorder %s14, 0
    %p135 = por %p133, %p134
    %p136 = scmp.ne.s32.totalorder %s128, %s130
    %p137 = scmp.eq.s32.totalorder %s19, 3
    %p138 = por %p136, %p137
    %p139 = scmp.ne.s32.totalorder %s130, %s131
    %p140 = scmp.eq.s32.totalorder %s19, 0
    %p141 = por %p139, %p140
    %p142 = scmp.ne.s32.totalorder %s130, %s131
    %p143 = scmp.eq.s32.totalorder %s20, 3
    %p144 = por %p142, %p143
    %p146 = scmp.ne.s32.totalorder %s131, %s145
    %p147 = scmp.eq.s32.totalorder %s20, 0
    %p148 = por %p146, %p147
    %s150 = sadd.s32 %s149, 1
    %p153 = scmp.eq.s32.totalorder %s14, 3
    %p154 = scmp.ne.s32.totalorder %s149, %s151
    %p155 = scmp.eq.s32.totalorder %s14, 0
    %p156 = por %p154, %p155
    %p157 = scmp.ne.s32.totalorder %s149, %s151
    %p158 = scmp.eq.s32.totalorder %s19, 3
    %p159 = por %p157, %p158
    %p160 = scmp.ne.s32.totalorder %s151, %s152
    %p161 = scmp.eq.s32.totalorder %s19, 0
    %p162 = por %p160, %p161
    %p163 = scmp.ne.s32.totalorder %s151, %s152
    %p164 = scmp.eq.s32.totalorder %s20, 3
    %p165 = por %p163, %p164
    %p167 = scmp.ne.s32.totalorder %s152, %s166
    %p168 = scmp.eq.s32.totalorder %s20, 0
    %p169 = por %p167, %p168
    %s171 = sadd.s32 %s170, 1
    %p174 = scmp.eq.s32.totalorder %s14, 3
    %p175 = scmp.ne.s32.totalorder %s170, %s172
    %p176 = scmp.eq.s32.totalorder %s14, 0
    %p177 = por %p175, %p176
    %p178 = scmp.ne.s32.totalorder %s170, %s172
    %p179 = scmp.eq.s32.totalorder %s19, 3
    %p180 = por %p178, %p179
    %p181 = scmp.ne.s32.totalorder %s172, %s173
    %p182 = scmp.eq.s32.totalorder %s19, 0
    %p183 = por %p181, %p182
    %p184 = scmp.ne.s32.totalorder %s172, %s173
    %p185 = scmp.eq.s32.totalorder %s20, 3
    %p186 = por %p184, %p185
    %p188 = scmp.ne.s32.totalorder %s173, %s187
    %p189 = scmp.eq.s32.totalorder %s20, 0
    %p190 = por %p188, %p189
    %s192 = sadd.s32 %s191, 1
    %p195 = scmp.eq.s32.totalorder %s14, 3
    %p196 = scmp.ne.s32.totalorder %s191, %s193
    %p197 = scmp.eq.s32.totalorder %s14, 0
    %p198 = por %p196, %p197
    %p199 = scmp.ne.s32.totalorder %s191, %s193
    %p200 = scmp.eq.s32.totalorder %s19, 3
    %p201 = por %p199, %p200
    %p202 = scmp.ne.s32.totalorder %s193, %s194
    %p203 = scmp.eq.s32.totalorder %s19, 0
    %p204 = por %p202, %p203
    %p205 = scmp.ne.s32.totalorder %s193, %s194
    %p206 = scmp.eq.s32.totalorder %s20, 3
    %p207 = por %p205, %p206
    %p209 = scmp.ne.s32.totalorder %s194, %s208
    %p210 = scmp.eq.s32.totalorder %s20, 0
    %p211 = por %p209, %p210
    %s212 = ssub.s32 %s21, %s33
    %s213 = ssub.s32 %s22, %s29
    %s214 = sor.u32 %s212, %s213
    %p215 = scmp.eq.s32.totalorder %s214, 0
    %s217 = sadd.s32 %s216, 1
    %s218 = scalar_select %p215, %s216, %s217
    %p221 = pneg %p215
    %p222 = scmp.eq.s32.totalorder %s14, 3
    %p223 = por %p221, %p222
    %p224 = scmp.ne.s32.totalorder %s216, %s219
    %p225 = scmp.eq.s32.totalorder %s14, 0
    %p226 = por %p224, %p225
    %p227 = scmp.ne.s32.totalorder %s216, %s219
    %p228 = scmp.eq.s32.totalorder %s19, 3
    %p229 = por %p227, %p228
    %p230 = scmp.ne.s32.totalorder %s219, %s220
    %p231 = scmp.eq.s32.totalorder %s19, 0
    %p232 = por %p230, %p231
    %p233 = scmp.ne.s32.totalorder %s219, %s220
    %p234 = scmp.eq.s32.totalorder %s20, 3
    %p235 = por %p233, %p234
    %p237 = scmp.ne.s32.totalorder %s220, %s236
    %p238 = scmp.eq.s32.totalorder %s20, 0
    %p239 = por %p237, %p238
    %p240 = scmp.le.s32.totalorder 1, %s14
    %p241 = scmp.lt.s32.totalorder %s14, 5
    %p242 = pnand %p240, %p241
    %p243 = pneg %p242
    // Predicated region
    $region9: #{transfer_generator_forward.1} parent=5 // pred_check
      _
    $region10: #{transfer_generator_forward.1} parent=5 // pred_check_branch
      %245 = sbr.rel (%p242) target = $region12
    $region11: #{transfer_generator_forward.1} parent=5 // pred_region
      %s246 = ssub.s32 %s14, 1
      // Predicated region
      $region13: #{transfer_generator_forward.1} parent=11 // pred_check
        %p247 = pneg %p99
      $region14: #{transfer_generator_forward.1} parent=11 // pred_check_branch
        %249 = sbr.rel (%p247) target = $region16
      $region15: #{transfer_generator_forward.1} parent=11 // pred_region
        _
      $region16: #{transfer_generator_forward.1} parent=11 // pred_fallthru
        _
      // Predicated region
      $region17: #{transfer_generator_forward.1} parent=11 // pred_check
        %p250 = pneg %p120
      $region18: #{transfer_generator_forward.1} parent=11 // pred_check_branch
        %252 = sbr.rel (%p250) target = $region20
      $region19: #{transfer_generator_forward.1} parent=11 // pred_region
        _
      $region20: #{transfer_generator_forward.1} parent=11 // pred_fallthru
        _
      // Predicated region
      $region21: #{transfer_generator_forward.1} parent=11 // pred_check
        %p253 = pneg %p141
      $region22: #{transfer_generator_forward.1} parent=11 // pred_check_branch
        %255 = sbr.rel (%p253) target = $region24
      $region23: #{transfer_generator_forward.1} parent=11 // pred_region
        _
      $region24: #{transfer_generator_forward.1} parent=11 // pred_fallthru
        _
      // Predicated region
      $region25: #{transfer_generator_forward.1} parent=11 // pred_check
        %p256 = pneg %p162
      $region26: #{transfer_generator_forward.1} parent=11 // pred_check_branch
        %258 = sbr.rel (%p256) target = $region28
      $region27: #{transfer_generator_forward.1} parent=11 // pred_region
        _
      $region28: #{transfer_generator_forward.1} parent=11 // pred_fallthru
        _
      // Predicated region
      $region29: #{transfer_generator_forward.1} parent=11 // pred_check
        %p259 = pneg %p183
      $region30: #{transfer_generator_forward.1} parent=11 // pred_check_branch
        %261 = sbr.rel (%p259) target = $region32
      $region31: #{transfer_generator_forward.1} parent=11 // pred_region
        _
      $region32: #{transfer_generator_forward.1} parent=11 // pred_fallthru
        _
      // Predicated region
      $region33: #{transfer_generator_forward.1} parent=11 // pred_check
        %p262 = pneg %p204
      $region34: #{transfer_generator_forward.1} parent=11 // pred_check_branch
        %264 = sbr.rel (%p262) target = $region36
      $region35: #{transfer_generator_forward.1} parent=11 // pred_region
        _
      $region36: #{transfer_generator_forward.1} parent=11 // pred_fallthru
        _
    $region12: #{transfer_generator_forward.1} parent=5 // pred_fallthru
      _
    %p265 = scmp.lt.s32.totalorder %s14, 4
    // Predicated region
    $region37: #{transfer_generator_forward.1} parent=5 // pred_check
      %p266 = pneg %p265
    $region38: #{transfer_generator_forward.1} parent=5 // pred_check_branch
      %268 = sbr.rel (%p266) target = $region40
    $region39: #{transfer_generator_forward.1} parent=5 // pred_region
      // Predicated region
      $region41: #{transfer_generator_forward.1} parent=39 // pred_check
        %p269 = pneg %p46
      $region42: #{transfer_generator_forward.1} parent=39 // pred_check_branch
        %271 = sbr.rel (%p269) target = $region44
      $region43: #{transfer_generator_forward.1} parent=39 // pred_region
        %p272 = scmp.lt.s32.totalorder %s21, 1
        %s273 = scalar_select %p272, %s21, 1
        %s274 = smul.addr %s273, 60
        %s275 = smul.addr %s274, 8
        %s276 = scalar_lea.vmem %s0, %s275
      $region44: #{transfer_generator_forward.1} parent=39 // pred_fallthru
        _
      // Predicated region
      $region45: #{transfer_generator_forward.1} parent=39 // pred_check
        %p277 = pneg %p72
      $region46: #{transfer_generator_forward.1} parent=39 // pred_check_branch
        %279 = sbr.rel (%p277) target = $region48
      $region47: #{transfer_generator_forward.1} parent=39 // pred_region
        %p280 = scmp.lt.s32.totalorder %s21, 1
        %s281 = scalar_select %p280, %s21, 1
        %s282 = smul.addr %s281, 60
        %s283 = smul.addr %s282, 8
        %s284 = scalar_lea.vmem %s1, %s283
      $region48: #{transfer_generator_forward.1} parent=39 // pred_fallthru
        _
    $region40: #{transfer_generator_forward.1} parent=5 // pred_fallthru
      _
    %p285 = scmp.le.s32.totalorder 1, %s14
    %p286 = scmp.lt.s32.totalorder %s14, 5
    %p287 = pnand %p285, %p286
    %p288 = pneg %p287
    // Predicated region
    $region49: #{transfer_generator_forward.1} parent=5 // pred_check
      _
    $region50: #{transfer_generator_forward.1} parent=5 // pred_check_branch
      %290 = sbr.rel (%p287) target = $region52
    $region51: #{transfer_generator_forward.1} parent=5 // pred_region
      %s291 = ssub.s32 %s14, 1
      %p292 = scmp.lt.s32.totalorder %s23, 1
      %s293 = scalar_select %p292, %s23, 1
      %s294 = smul.addr %s293, 60
      %s295 = smul.addr %s294, 8
      %s296 = scalar_lea.vmem %s0, %s295
      %p297 = pneg %p52
      %p298 = pneg %p49
      %p299 = scmp.lt.s32.totalorder %s23, 1
      %s300 = scalar_select %p299, %s23, 1
      %s301 = smul.addr %s300, 60
      %s302 = smul.addr %s301, 8
      %s303 = scalar_lea.vmem %s1, %s302
      %p304 = pneg %p78
      %p305 = pneg %p75
      %p306 = pneg %p99
      %p307 = pneg %p96
      %p308 = pneg %p120
      %p309 = pneg %p117
      %p310 = pneg %p141
      %p311 = pneg %p138
      %p312 = pneg %p162
      %p313 = pneg %p159
      %p314 = pneg %p183
      %p315 = pneg %p180
      %p316 = pneg %p204
      %p317 = pneg %p201
      %p318 = pneg %p232
      %p319 = pneg %p229
      %p320 = scmp.lt.s32.totalorder %s23, 1
      %s321 = scalar_select %p320, %s23, 1
      %p322 = scmp.lt.s32.totalorder %s24, 1
      %s323 = scalar_select %p322, %s24, 1
      %s324 = smul.addr %s321, 2
      %s325 = sadd.s32 %s323, %s324
      %s326 = smul.addr %s325, 4
      %s327 = scalar_lea.vmem %s8, %s326
      %p328 = scmp.lt.s32.totalorder %s23, 1
      %s329 = scalar_select %p328, %s23, 1
      %s330 = smul.addr %s329, 60
      %s331 = smul.addr %s330, 8
      %s332 = scalar_lea.vmem %s0, %s331
      %p333 = scmp.lt.s32.totalorder %s23, 1
      %s334 = scalar_select %p333, %s23, 1
      %s335 = smul.addr %s334, 60
      %s336 = smul.addr %s335, 8
      %s337 = scalar_lea.vmem %s1, %s336
      %p338 = scmp.lt.s32.totalorder %s23, 1
      %s339 = scalar_select %p338, %s23, 1
      %p340 = scmp.lt.s32.totalorder %s24, 1
      %s341 = scalar_select %p340, %s24, 1
      %s342 = smul.addr %s339, 2
      %s343 = sadd.s32 %s341, %s342
      %s344 = smul.addr %s343, 4
      %s345 = scalar_lea.vmem %s8, %s344
      %s346 = smul.u32 %s24, 8
      %s347 = smul.u32 %s346, 24
      %s348 = scalar_lea.vmem %s332, %s347
      %v349 = vld [vmem:[%s348] sm:$0xff]
      %v350 = vld [vmem:[%s348 + $0x8] sm:$0xff]
      %v351 = vld [vmem:[%s348 + $0x10] sm:$0xf]
      %v352 = vld [vmem:[%s348 + $0x18] sm:$0xff]
      %v353 = vld [vmem:[%s348 + $0x20] sm:$0xff]
      %v354 = vld [vmem:[%s348 + $0x28] sm:$0xf]
      %v355 = vld [vmem:[%s348 + $0x30] sm:$0xff]
      %v356 = vld [vmem:[%s348 + $0x38] sm:$0xff]
      %v357 = vld [vmem:[%s348 + $0x40] sm:$0xf]
      %v358 = vld [vmem:[%s348 + $0x48] sm:$0xff]
      %v359 = vld [vmem:[%s348 + $0x50] sm:$0xff]
      %v360 = vld [vmem:[%s348 + $0x58] sm:$0xf]
      %v361 = vld [vmem:[%s348 + $0x60] sm:$0xff]
      %v362 = vld [vmem:[%s348 + $0x68] sm:$0xff]
      %v363 = vld [vmem:[%s348 + $0x70] sm:$0xf]
      %v364 = vld [vmem:[%s348 + $0x78] sm:$0xff]
      %v365 = vld [vmem:[%s348 + $0x80] sm:$0xff]
      %v366 = vld [vmem:[%s348 + $0x88] sm:$0xf]
      %v367 = vld [vmem:[%s348 + $0x90] sm:$0xff]
      %v368 = vld [vmem:[%s348 + $0x98] sm:$0xff]
      %v369 = vld [vmem:[%s348 + $0xa0] sm:$0xf]
      %v370 = vld [vmem:[%s348 + $0xa8] sm:$0xff]
      %v371 = vld [vmem:[%s348 + $0xb0] sm:$0xff]
      %v372 = vld [vmem:[%s348 + $0xb8] sm:$0xf]
      %v373 = vld [vmem:[%s348 + $0xc0] sm:$0xff]
      %v374 = vld [vmem:[%s348 + $0xc8] sm:$0xff]
      %v375 = vld [vmem:[%s348 + $0xd0] sm:$0xf]
      %v376 = vld [vmem:[%s348 + $0xd8] sm:$0xff]
      %v377 = vld [vmem:[%s348 + $0xe0] sm:$0xff]
      %v378 = vld [vmem:[%s348 + $0xe8] sm:$0xf]
      %v379 = vld [vmem:[%s348 + $0xf0] sm:$0xff]
      %v380 = vld [vmem:[%s348 + $0xf8] sm:$0xff]
      %v381 = vld [vmem:[%s348 + $0x100] sm:$0xf]
      %v382 = vld [vmem:[%s348 + $0x108] sm:$0xff]
      %v383 = vld [vmem:[%s348 + $0x110] sm:$0xff]
      %v384 = vld [vmem:[%s348 + $0x118] sm:$0xf]
      %s385 = scalar_lea.vmem %s337, %s347
      %v386 = vld [vmem:[%s385] sm:$0xff]
      %v387 = vld [vmem:[%s385 + $0x8] sm:$0xff]
      %v388 = vld [vmem:[%s385 + $0x10] sm:$0xf]
      %v389 = vld [vmem:[%s385 + $0x18] sm:$0xff]
      %v390 = vld [vmem:[%s385 + $0x20] sm:$0xff]
      %v391 = vld [vmem:[%s385 + $0x28] sm:$0xf]
      %v392 = vld [vmem:[%s385 + $0x30] sm:$0xff]
      %v393 = vld [vmem:[%s385 + $0x38] sm:$0xff]
      %v394 = vld [vmem:[%s385 + $0x40] sm:$0xf]
      %v395 = vld [vmem:[%s385 + $0x48] sm:$0xff]
      %v396 = vld [vmem:[%s385 + $0x50] sm:$0xff]
      %v397 = vld [vmem:[%s385 + $0x58] sm:$0xf]
      %v398 = vld [vmem:[%s385 + $0x60] sm:$0xff]
      %v399 = vld [vmem:[%s385 + $0x68] sm:$0xff]
      %v400 = vld [vmem:[%s385 + $0x70] sm:$0xf]
      %v401 = vld [vmem:[%s385 + $0x78] sm:$0xff]
      %v402 = vld [vmem:[%s385 + $0x80] sm:$0xff]
      %v403 = vld [vmem:[%s385 + $0x88] sm:$0xf]
      %v404 = vld [vmem:[%s385 + $0x90] sm:$0xff]
      %v405 = vld [vmem:[%s385 + $0x98] sm:$0xff]
      %v406 = vld [vmem:[%s385 + $0xa0] sm:$0xf]
      %v407 = vld [vmem:[%s385 + $0xa8] sm:$0xff]
      %v408 = vld [vmem:[%s385 + $0xb0] sm:$0xff]
      %v409 = vld [vmem:[%s385 + $0xb8] sm:$0xf]
      %v410 = vld [vmem:[%s385 + $0xc0] sm:$0xff]
      %v411 = vld [vmem:[%s385 + $0xc8] sm:$0xff]
      %v412 = vld [vmem:[%s385 + $0xd0] sm:$0xf]
      %v413 = vld [vmem:[%s385 + $0xd8] sm:$0xff]
      %v414 = vld [vmem:[%s385 + $0xe0] sm:$0xff]
      %v415 = vld [vmem:[%s385 + $0xe8] sm:$0xf]
      %v416 = vld [vmem:[%s385 + $0xf0] sm:$0xff]
      %v417 = vld [vmem:[%s385 + $0xf8] sm:$0xff]
      %v418 = vld [vmem:[%s385 + $0x100] sm:$0xf]
      %v419 = vld [vmem:[%s385 + $0x108] sm:$0xff]
      %v420 = vld [vmem:[%s385 + $0x110] sm:$0xff]
      %v421 = vld [vmem:[%s385 + $0x118] sm:$0xf]
      %vm452 = vcmask 1046528
      %v453 = vrot.slane %v349, 1
      %v454 = vrot.slane %v350, 1
      %v455 = vsel %vm452, %v453, %v454
      %v456 = vrot.slane %v351, 1
      %v457 = vsel %vm452, %v454, %v456
      %v458 = vrot.slane %v352, 1
      %v459 = vrot.slane %v353, 1
      %v460 = vsel %vm452, %v458, %v459
      %v461 = vrot.slane %v354, 1
      %v462 = vsel %vm452, %v459, %v461
      %v463 = vrot.slane %v355, 1
      %v464 = vrot.slane %v356, 1
      %v465 = vsel %vm452, %v463, %v464
      %v466 = vrot.slane %v357, 1
      %v467 = vsel %vm452, %v464, %v466
      %v468 = vrot.slane %v358, 1
      %v469 = vrot.slane %v359, 1
      %v470 = vsel %vm452, %v468, %v469
      %v471 = vrot.slane %v360, 1
      %v472 = vsel %vm452, %v469, %v471
      %v473 = vrot.slane %v361, 1
      %v474 = vrot.slane %v362, 1
      %v475 = vsel %vm452, %v473, %v474
      %v476 = vrot.slane %v363, 1
      %v477 = vsel %vm452, %v474, %v476
      %v478 = vrot.slane %v364, 1
      %v479 = vrot.slane %v365, 1
      %v480 = vsel %vm452, %v478, %v479
      %v481 = vrot.slane %v366, 1
      %v482 = vsel %vm452, %v479, %v481
      %v483 = vrot.slane %v367, 1
      %v484 = vrot.slane %v368, 1
      %v485 = vsel %vm452, %v483, %v484
      %v486 = vrot.slane %v369, 1
      %v487 = vsel %vm452, %v484, %v486
      %v488 = vrot.slane %v370, 1
      %v489 = vrot.slane %v371, 1
      %v490 = vsel %vm452, %v488, %v489
      %v491 = vrot.slane %v372, 1
      %v492 = vsel %vm452, %v489, %v491
      %v493 = vrot.slane %v373, 1
      %v494 = vrot.slane %v374, 1
      %v495 = vsel %vm452, %v493, %v494
      %v496 = vrot.slane %v375, 1
      %v497 = vsel %vm452, %v494, %v496
      %v498 = vrot.slane %v376, 1
      %v499 = vrot.slane %v377, 1
      %v500 = vsel %vm452, %v498, %v499
      %v501 = vrot.slane %v378, 1
      %v502 = vsel %vm452, %v499, %v501
      %503 = vrot.lane.b32.xlu0 %v455, 3
      %v504 = vpop.permute.xlu0 %503
      %505 = vrot.lane.b32.xlu0 %v457, 3
      %v506 = vpop.permute.xlu0 %505
      %507 = vrot.lane.b32.xlu0 %v456, 3
      %v508 = vpop.permute.xlu0 %507
      %509 = vrot.lane.b32.xlu0 %v460, 3
      %v510 = vpop.permute.xlu0 %509
      %511 = vrot.lane.b32.xlu0 %v462, 3
      %v512 = vpop.permute.xlu0 %511
      %513 = vrot.lane.b32.xlu0 %v461, 3
      %v514 = vpop.permute.xlu0 %513
      %515 = vrot.lane.b32.xlu0 %v465, 3
      %v516 = vpop.permute.xlu0 %515
      %517 = vrot.lane.b32.xlu0 %v467, 3
      %v518 = vpop.permute.xlu0 %517
      %519 = vrot.lane.b32.xlu0 %v466, 3
      %v520 = vpop.permute.xlu0 %519
      %521 = vrot.lane.b32.xlu0 %v470, 3
      %v522 = vpop.permute.xlu0 %521
      %523 = vrot.lane.b32.xlu0 %v472, 3
      %v524 = vpop.permute.xlu0 %523
      %525 = vrot.lane.b32.xlu0 %v471, 3
      %v526 = vpop.permute.xlu0 %525
      %527 = vrot.lane.b32.xlu0 %v475, 3
      %v528 = vpop.permute.xlu0 %527
      %529 = vrot.lane.b32.xlu0 %v477, 3
      %v530 = vpop.permute.xlu0 %529
      %531 = vrot.lane.b32.xlu0 %v476, 3
      %v532 = vpop.permute.xlu0 %531
      %533 = vrot.lane.b32.xlu0 %v480, 3
      %v534 = vpop.permute.xlu0 %533
      %535 = vrot.lane.b32.xlu0 %v482, 3
      %v536 = vpop.permute.xlu0 %535
      %537 = vrot.lane.b32.xlu0 %v481, 3
      %v538 = vpop.permute.xlu0 %537
      %539 = vrot.lane.b32.xlu0 %v485, 3
      %v540 = vpop.permute.xlu0 %539
      %541 = vrot.lane.b32.xlu0 %v487, 3
      %v542 = vpop.permute.xlu0 %541
      %543 = vrot.lane.b32.xlu0 %v486, 3
      %v544 = vpop.permute.xlu0 %543
      %545 = vrot.lane.b32.xlu0 %v490, 3
      %v546 = vpop.permute.xlu0 %545
      %547 = vrot.lane.b32.xlu0 %v492, 3
      %v548 = vpop.permute.xlu0 %547
      %549 = vrot.lane.b32.xlu0 %v491, 3
      %v550 = vpop.permute.xlu0 %549
      %551 = vrot.lane.b32.xlu0 %v495, 3
      %v552 = vpop.permute.xlu0 %551
      %553 = vrot.lane.b32.xlu0 %v497, 3
      %v554 = vpop.permute.xlu0 %553
      %555 = vrot.lane.b32.xlu0 %v496, 3
      %v556 = vpop.permute.xlu0 %555
      %557 = vrot.lane.b32.xlu0 %v500, 3
      %v558 = vpop.permute.xlu0 %557
      %559 = vrot.lane.b32.xlu0 %v502, 3
      %v560 = vpop.permute.xlu0 %559
      %561 = vrot.lane.b32.xlu0 %v501, 3
      %v562 = vpop.permute.xlu0 %561
      %vm593 = vcmask 1045504
      %v594 = vrot.slane %v349, 2
      %v595 = vrot.slane %v350, 2
      %v596 = vsel %vm593, %v594, %v595
      %v597 = vrot.slane %v351, 2
      %v598 = vsel %vm593, %v595, %v597
      %v599 = vrot.slane %v352, 2
      %v600 = vrot.slane %v353, 2
      %v601 = vsel %vm593, %v599, %v600
      %v602 = vrot.slane %v354, 2
      %v603 = vsel %vm593, %v600, %v602
      %v604 = vrot.slane %v355, 2
      %v605 = vrot.slane %v356, 2
      %v606 = vsel %vm593, %v604, %v605
      %v607 = vrot.slane %v357, 2
      %v608 = vsel %vm593, %v605, %v607
      %v609 = vrot.slane %v358, 2
      %v610 = vrot.slane %v359, 2
      %v611 = vsel %vm593, %v609, %v610
      %v612 = vrot.slane %v360, 2
      %v613 = vsel %vm593, %v610, %v612
      %v614 = vrot.slane %v361, 2
      %v615 = vrot.slane %v362, 2
      %v616 = vsel %vm593, %v614, %v615
      %v617 = vrot.slane %v363, 2
      %v618 = vsel %vm593, %v615, %v617
      %v619 = vrot.slane %v364, 2
      %v620 = vrot.slane %v365, 2
      %v621 = vsel %vm593, %v619, %v620
      %v622 = vrot.slane %v366, 2
      %v623 = vsel %vm593, %v620, %v622
      %v624 = vrot.slane %v367, 2
      %v625 = vrot.slane %v368, 2
      %v626 = vsel %vm593, %v624, %v625
      %v627 = vrot.slane %v369, 2
      %v628 = vsel %vm593, %v625, %v627
      %v629 = vrot.slane %v370, 2
      %v630 = vrot.slane %v371, 2
      %v631 = vsel %vm593, %v629, %v630
      %v632 = vrot.slane %v372, 2
      %v633 = vsel %vm593, %v630, %v632
      %v634 = vrot.slane %v373, 2
      %v635 = vrot.slane %v374, 2
      %v636 = vsel %vm593, %v634, %v635
      %v637 = vrot.slane %v375, 2
      %v638 = vsel %vm593, %v635, %v637
      %v639 = vrot.slane %v376, 2
      %v640 = vrot.slane %v377, 2
      %v641 = vsel %vm593, %v639, %v640
      %v642 = vrot.slane %v378, 2
      %v643 = vsel %vm593, %v640, %v642
      %644 = vrot.lane.b32.xlu0 %v596, 6
      %v645 = vpop.permute.xlu0 %644
      %646 = vrot.lane.b32.xlu0 %v598, 6
      %v647 = vpop.permute.xlu0 %646
      %648 = vrot.lane.b32.xlu0 %v597, 6
      %v649 = vpop.permute.xlu0 %648
      %650 = vrot.lane.b32.xlu0 %v601, 6
      %v651 = vpop.permute.xlu0 %650
      %652 = vrot.lane.b32.xlu0 %v603, 6
      %v653 = vpop.permute.xlu0 %652
      %654 = vrot.lane.b32.xlu0 %v602, 6
      %v655 = vpop.permute.xlu0 %654
      %656 = vrot.lane.b32.xlu0 %v606, 6
      %v657 = vpop.permute.xlu0 %656
      %658 = vrot.lane.b32.xlu0 %v608, 6
      %v659 = vpop.permute.xlu0 %658
      %660 = vrot.lane.b32.xlu0 %v607, 6
      %v661 = vpop.permute.xlu0 %660
      %662 = vrot.lane.b32.xlu0 %v611, 6
      %v663 = vpop.permute.xlu0 %662
      %664 = vrot.lane.b32.xlu0 %v613, 6
      %v665 = vpop.permute.xlu0 %664
      %666 = vrot.lane.b32.xlu0 %v612, 6
      %v667 = vpop.permute.xlu0 %666
      %668 = vrot.lane.b32.xlu0 %v616, 6
      %v669 = vpop.permute.xlu0 %668
      %670 = vrot.lane.b32.xlu0 %v618, 6
      %v671 = vpop.permute.xlu0 %670
      %672 = vrot.lane.b32.xlu0 %v617, 6
      %v673 = vpop.permute.xlu0 %672
      %674 = vrot.lane.b32.xlu0 %v621, 6
      %v675 = vpop.permute.xlu0 %674
      %676 = vrot.lane.b32.xlu0 %v623, 6
      %v677 = vpop.permute.xlu0 %676
      %678 = vrot.lane.b32.xlu0 %v622, 6
      %v679 = vpop.permute.xlu0 %678
      %680 = vrot.lane.b32.xlu0 %v626, 6
      %v681 = vpop.permute.xlu0 %680
      %682 = vrot.lane.b32.xlu0 %v628, 6
      %v683 = vpop.permute.xlu0 %682
      %684 = vrot.lane.b32.xlu0 %v627, 6
      %v685 = vpop.permute.xlu0 %684
      %686 = vrot.lane.b32.xlu0 %v631, 6
      %v687 = vpop.permute.xlu0 %686
      %688 = vrot.lane.b32.xlu0 %v633, 6
      %v689 = vpop.permute.xlu0 %688
      %690 = vrot.lane.b32.xlu0 %v632, 6
      %v691 = vpop.permute.xlu0 %690
      %692 = vrot.lane.b32.xlu0 %v636, 6
      %v693 = vpop.permute.xlu0 %692
      %694 = vrot.lane.b32.xlu0 %v638, 6
      %v695 = vpop.permute.xlu0 %694
      %696 = vrot.lane.b32.xlu0 %v637, 6
      %v697 = vpop.permute.xlu0 %696
      %698 = vrot.lane.b32.xlu0 %v641, 6
      %v699 = vpop.permute.xlu0 %698
      %700 = vrot.lane.b32.xlu0 %v643, 6
      %v701 = vpop.permute.xlu0 %700
      %702 = vrot.lane.b32.xlu0 %v642, 6
      %v703 = vpop.permute.xlu0 %702
      %737 = vrot.lane.b32.xlu0 %v352, 9
      %v738 = vpop.permute.xlu0 %737
      %739 = vrot.lane.b32.xlu0 %v353, 9
      %v740 = vpop.permute.xlu0 %739
      %741 = vrot.lane.b32.xlu0 %v354, 9
      %v742 = vpop.permute.xlu0 %741
      %743 = vrot.lane.b32.xlu0 %v355, 9
      %v744 = vpop.permute.xlu0 %743
      %745 = vrot.lane.b32.xlu0 %v356, 9
      %v746 = vpop.permute.xlu0 %745
      %747 = vrot.lane.b32.xlu0 %v357, 9
      %v748 = vpop.permute.xlu0 %747
      %749 = vrot.lane.b32.xlu0 %v358, 9
      %v750 = vpop.permute.xlu0 %749
      %751 = vrot.lane.b32.xlu0 %v359, 9
      %v752 = vpop.permute.xlu0 %751
      %753 = vrot.lane.b32.xlu0 %v360, 9
      %v754 = vpop.permute.xlu0 %753
      %755 = vrot.lane.b32.xlu0 %v361, 9
      %v756 = vpop.permute.xlu0 %755
      %757 = vrot.lane.b32.xlu0 %v362, 9
      %v758 = vpop.permute.xlu0 %757
      %759 = vrot.lane.b32.xlu0 %v363, 9
      %v760 = vpop.permute.xlu0 %759
      %761 = vrot.lane.b32.xlu0 %v364, 9
      %v762 = vpop.permute.xlu0 %761
      %763 = vrot.lane.b32.xlu0 %v365, 9
      %v764 = vpop.permute.xlu0 %763
      %765 = vrot.lane.b32.xlu0 %v366, 9
      %v766 = vpop.permute.xlu0 %765
      %767 = vrot.lane.b32.xlu0 %v367, 9
      %v768 = vpop.permute.xlu0 %767
      %769 = vrot.lane.b32.xlu0 %v368, 9
      %v770 = vpop.permute.xlu0 %769
      %771 = vrot.lane.b32.xlu0 %v369, 9
      %v772 = vpop.permute.xlu0 %771
      %773 = vrot.lane.b32.xlu0 %v370, 9
      %v774 = vpop.permute.xlu0 %773
      %775 = vrot.lane.b32.xlu0 %v371, 9
      %v776 = vpop.permute.xlu0 %775
      %777 = vrot.lane.b32.xlu0 %v372, 9
      %v778 = vpop.permute.xlu0 %777
      %779 = vrot.lane.b32.xlu0 %v373, 9
      %v780 = vpop.permute.xlu0 %779
      %781 = vrot.lane.b32.xlu0 %v374, 9
      %v782 = vpop.permute.xlu0 %781
      %783 = vrot.lane.b32.xlu0 %v375, 9
      %v784 = vpop.permute.xlu0 %783
      %785 = vrot.lane.b32.xlu0 %v376, 9
      %v786 = vpop.permute.xlu0 %785
      %787 = vrot.lane.b32.xlu0 %v377, 9
      %v788 = vpop.permute.xlu0 %787
      %789 = vrot.lane.b32.xlu0 %v378, 9
      %v790 = vpop.permute.xlu0 %789
      %791 = vrot.lane.b32.xlu0 %v379, 9
      %v792 = vpop.permute.xlu0 %791
      %793 = vrot.lane.b32.xlu0 %v380, 9
      %v794 = vpop.permute.xlu0 %793
      %795 = vrot.lane.b32.xlu0 %v381, 9
      %v796 = vpop.permute.xlu0 %795
      %v827 = vrot.slane %v379, 1
      %v828 = vrot.slane %v380, 1
      %v829 = vsel %vm452, %v827, %v828
      %v830 = vrot.slane %v381, 1
      %v831 = vsel %vm452, %v828, %v830
      %832 = vrot.lane.b32.xlu0 %v460, 12
      %v833 = vpop.permute.xlu0 %832
      %834 = vrot.lane.b32.xlu0 %v462, 12
      %v835 = vpop.permute.xlu0 %834
      %836 = vrot.lane.b32.xlu0 %v461, 12
      %v837 = vpop.permute.xlu0 %836
      %838 = vrot.lane.b32.xlu0 %v465, 12
      %v839 = vpop.permute.xlu0 %838
      %840 = vrot.lane.b32.xlu0 %v467, 12
      %v841 = vpop.permute.xlu0 %840
      %842 = vrot.lane.b32.xlu0 %v466, 12
      %v843 = vpop.permute.xlu0 %842
      %844 = vrot.lane.b32.xlu0 %v470, 12
      %v845 = vpop.permute.xlu0 %844
      %846 = vrot.lane.b32.xlu0 %v472, 12
      %v847 = vpop.permute.xlu0 %846
      %848 = vrot.lane.b32.xlu0 %v471, 12
      %v849 = vpop.permute.xlu0 %848
      %850 = vrot.lane.b32.xlu0 %v475, 12
      %v851 = vpop.permute.xlu0 %850
      %852 = vrot.lane.b32.xlu0 %v477, 12
      %v853 = vpop.permute.xlu0 %852
      %854 = vrot.lane.b32.xlu0 %v476, 12
      %v855 = vpop.permute.xlu0 %854
      %856 = vrot.lane.b32.xlu0 %v480, 12
      %v857 = vpop.permute.xlu0 %856
      %858 = vrot.lane.b32.xlu0 %v482, 12
      %v859 = vpop.permute.xlu0 %858
      %860 = vrot.lane.b32.xlu0 %v481, 12
      %v861 = vpop.permute.xlu0 %860
      %862 = vrot.lane.b32.xlu0 %v485, 12
      %v863 = vpop.permute.xlu0 %862
      %864 = vrot.lane.b32.xlu0 %v487, 12
      %v865 = vpop.permute.xlu0 %864
      %866 = vrot.lane.b32.xlu0 %v486, 12
      %v867 = vpop.permute.xlu0 %866
      %868 = vrot.lane.b32.xlu0 %v490, 12
      %v869 = vpop.permute.xlu0 %868
      %870 = vrot.lane.b32.xlu0 %v492, 12
      %v871 = vpop.permute.xlu0 %870
      %872 = vrot.lane.b32.xlu0 %v491, 12
      %v873 = vpop.permute.xlu0 %872
      %874 = vrot.lane.b32.xlu0 %v495, 12
      %v875 = vpop.permute.xlu0 %874
      %876 = vrot.lane.b32.xlu0 %v497, 12
      %v877 = vpop.permute.xlu0 %876
      %878 = vrot.lane.b32.xlu0 %v496, 12
      %v879 = vpop.permute.xlu0 %878
      %880 = vrot.lane.b32.xlu0 %v500, 12
      %v881 = vpop.permute.xlu0 %880
      %882 = vrot.lane.b32.xlu0 %v502, 12
      %v883 = vpop.permute.xlu0 %882
      %884 = vrot.lane.b32.xlu0 %v501, 12
      %v885 = vpop.permute.xlu0 %884
      %886 = vrot.lane.b32.xlu0 %v829, 12
      %v887 = vpop.permute.xlu0 %886
      %888 = vrot.lane.b32.xlu0 %v831, 12
      %v889 = vpop.permute.xlu0 %888
      %890 = vrot.lane.b32.xlu0 %v830, 12
      %v891 = vpop.permute.xlu0 %890
      %v922 = vrot.slane %v379, 2
      %v923 = vrot.slane %v380, 2
      %v924 = vsel %vm593, %v922, %v923
      %v925 = vrot.slane %v381, 2
      %v926 = vsel %vm593, %v923, %v925
      %927 = vrot.lane.b32.xlu0 %v601, 15
      %v928 = vpop.permute.xlu0 %927
      %929 = vrot.lane.b32.xlu0 %v603, 15
      %v930 = vpop.permute.xlu0 %929
      %931 = vrot.lane.b32.xlu0 %v602, 15
      %v932 = vpop.permute.xlu0 %931
      %933 = vrot.lane.b32.xlu0 %v606, 15
      %v934 = vpop.permute.xlu0 %933
      %935 = vrot.lane.b32.xlu0 %v608, 15
      %v936 = vpop.permute.xlu0 %935
      %937 = vrot.lane.b32.xlu0 %v607, 15
      %v938 = vpop.permute.xlu0 %937
      %939 = vrot.lane.b32.xlu0 %v611, 15
      %v940 = vpop.permute.xlu0 %939
      %941 = vrot.lane.b32.xlu0 %v613, 15
      %v942 = vpop.permute.xlu0 %941
      %943 = vrot.lane.b32.xlu0 %v612, 15
      %v944 = vpop.permute.xlu0 %943
      %945 = vrot.lane.b32.xlu0 %v616, 15
      %v946 = vpop.permute.xlu0 %945
      %947 = vrot.lane.b32.xlu0 %v618, 15
      %v948 = vpop.permute.xlu0 %947
      %949 = vrot.lane.b32.xlu0 %v617, 15
      %v950 = vpop.permute.xlu0 %949
      %951 = vrot.lane.b32.xlu0 %v621, 15
      %v952 = vpop.permute.xlu0 %951
      %953 = vrot.lane.b32.xlu0 %v623, 15
      %v954 = vpop.permute.xlu0 %953
      %955 = vrot.lane.b32.xlu0 %v622, 15
      %v956 = vpop.permute.xlu0 %955
      %957 = vrot.lane.b32.xlu0 %v626, 15
      %v958 = vpop.permute.xlu0 %957
      %959 = vrot.lane.b32.xlu0 %v628, 15
      %v960 = vpop.permute.xlu0 %959
      %961 = vrot.lane.b32.xlu0 %v627, 15
      %v962 = vpop.permute.xlu0 %961
      %963 = vrot.lane.b32.xlu0 %v631, 15
      %v964 = vpop.permute.xlu0 %963
      %965 = vrot.lane.b32.xlu0 %v633, 15
      %v966 = vpop.permute.xlu0 %965
      %967 = vrot.lane.b32.xlu0 %v632, 15
      %v968 = vpop.permute.xlu0 %967
      %969 = vrot.lane.b32.xlu0 %v636, 15
      %v970 = vpop.permute.xlu0 %969
      %971 = vrot.lane.b32.xlu0 %v638, 15
      %v972 = vpop.permute.xlu0 %971
      %973 = vrot.lane.b32.xlu0 %v637, 15
      %v974 = vpop.permute.xlu0 %973
      %975 = vrot.lane.b32.xlu0 %v641, 15
      %v976 = vpop.permute.xlu0 %975
      %977 = vrot.lane.b32.xlu0 %v643, 15
      %v978 = vpop.permute.xlu0 %977
      %979 = vrot.lane.b32.xlu0 %v642, 15
      %v980 = vpop.permute.xlu0 %979
      %981 = vrot.lane.b32.xlu0 %v924, 15
      %v982 = vpop.permute.xlu0 %981
      %983 = vrot.lane.b32.xlu0 %v926, 15
      %v984 = vpop.permute.xlu0 %983
      %985 = vrot.lane.b32.xlu0 %v925, 15
      %v986 = vpop.permute.xlu0 %985
      %1020 = vrot.lane.b32.xlu0 %v355, 18
      %v1021 = vpop.permute.xlu0 %1020
      %1022 = vrot.lane.b32.xlu0 %v356, 18
      %v1023 = vpop.permute.xlu0 %1022
      %1024 = vrot.lane.b32.xlu0 %v357, 18
      %v1025 = vpop.permute.xlu0 %1024
      %1026 = vrot.lane.b32.xlu0 %v358, 18
      %v1027 = vpop.permute.xlu0 %1026
      %1028 = vrot.lane.b32.xlu0 %v359, 18
      %v1029 = vpop.permute.xlu0 %1028
      %1030 = vrot.lane.b32.xlu0 %v360, 18
      %v1031 = vpop.permute.xlu0 %1030
      %1032 = vrot.lane.b32.xlu0 %v361, 18
      %v1033 = vpop.permute.xlu0 %1032
      %1034 = vrot.lane.b32.xlu0 %v362, 18
      %v1035 = vpop.permute.xlu0 %1034
      %1036 = vrot.lane.b32.xlu0 %v363, 18
      %v1037 = vpop.permute.xlu0 %1036
      %1038 = vrot.lane.b32.xlu0 %v364, 18
      %v1039 = vpop.permute.xlu0 %1038
      %1040 = vrot.lane.b32.xlu0 %v365, 18
      %v1041 = vpop.permute.xlu0 %1040
      %1042 = vrot.lane.b32.xlu0 %v366, 18
      %v1043 = vpop.permute.xlu0 %1042
      %1044 = vrot.lane.b32.xlu0 %v367, 18
      %v1045 = vpop.permute.xlu0 %1044
      %1046 = vrot.lane.b32.xlu0 %v368, 18
      %v1047 = vpop.permute.xlu0 %1046
      %1048 = vrot.lane.b32.xlu0 %v369, 18
      %v1049 = vpop.permute.xlu0 %1048
      %1050 = vrot.lane.b32.xlu0 %v370, 18
      %v1051 = vpop.permute.xlu0 %1050
      %1052 = vrot.lane.b32.xlu0 %v371, 18
      %v1053 = vpop.permute.xlu0 %1052
      %1054 = vrot.lane.b32.xlu0 %v372, 18
      %v1055 = vpop.permute.xlu0 %1054
      %1056 = vrot.lane.b32.xlu0 %v373, 18
      %v1057 = vpop.permute.xlu0 %1056
      %1058 = vrot.lane.b32.xlu0 %v374, 18
      %v1059 = vpop.permute.xlu0 %1058
      %1060 = vrot.lane.b32.xlu0 %v375, 18
      %v1061 = vpop.permute.xlu0 %1060
      %1062 = vrot.lane.b32.xlu0 %v376, 18
      %v1063 = vpop.permute.xlu0 %1062
      %1064 = vrot.lane.b32.xlu0 %v377, 18
      %v1065 = vpop.permute.xlu0 %1064
      %1066 = vrot.lane.b32.xlu0 %v378, 18
      %v1067 = vpop.permute.xlu0 %1066
      %1068 = vrot.lane.b32.xlu0 %v379, 18
      %v1069 = vpop.permute.xlu0 %1068
      %1070 = vrot.lane.b32.xlu0 %v380, 18
      %v1071 = vpop.permute.xlu0 %1070
      %1072 = vrot.lane.b32.xlu0 %v381, 18
      %v1073 = vpop.permute.xlu0 %1072
      %1074 = vrot.lane.b32.xlu0 %v382, 18
      %v1075 = vpop.permute.xlu0 %1074
      %1076 = vrot.lane.b32.xlu0 %v383, 18
      %v1077 = vpop.permute.xlu0 %1076
      %1078 = vrot.lane.b32.xlu0 %v384, 18
      %v1079 = vpop.permute.xlu0 %1078
      %v1110 = vrot.slane %v382, 1
      %v1111 = vrot.slane %v383, 1
      %v1112 = vsel %vm452, %v1110, %v1111
      %v1113 = vrot.slane %v384, 1
      %v1114 = vsel %vm452, %v1111, %v1113
      %1115 = vrot.lane.b32.xlu0 %v465, 21
      %v1116 = vpop.permute.xlu0 %1115
      %1117 = vrot.lane.b32.xlu0 %v467, 21
      %v1118 = vpop.permute.xlu0 %1117
      %1119 = vrot.lane.b32.xlu0 %v466, 21
      %v1120 = vpop.permute.xlu0 %1119
      %1121 = vrot.lane.b32.xlu0 %v470, 21
      %v1122 = vpop.permute.xlu0 %1121
      %1123 = vrot.lane.b32.xlu0 %v472, 21
      %v1124 = vpop.permute.xlu0 %1123
      %1125 = vrot.lane.b32.xlu0 %v471, 21
      %v1126 = vpop.permute.xlu0 %1125
      %1127 = vrot.lane.b32.xlu0 %v475, 21
      %v1128 = vpop.permute.xlu0 %1127
      %1129 = vrot.lane.b32.xlu0 %v477, 21
      %v1130 = vpop.permute.xlu0 %1129
      %1131 = vrot.lane.b32.xlu0 %v476, 21
      %v1132 = vpop.permute.xlu0 %1131
      %1133 = vrot.lane.b32.xlu0 %v480, 21
      %v1134 = vpop.permute.xlu0 %1133
      %1135 = vrot.lane.b32.xlu0 %v482, 21
      %v1136 = vpop.permute.xlu0 %1135
      %1137 = vrot.lane.b32.xlu0 %v481, 21
      %v1138 = vpop.permute.xlu0 %1137
      %1139 = vrot.lane.b32.xlu0 %v485, 21
      %v1140 = vpop.permute.xlu0 %1139
      %1141 = vrot.lane.b32.xlu0 %v487, 21
      %v1142 = vpop.permute.xlu0 %1141
      %1143 = vrot.lane.b32.xlu0 %v486, 21
      %v1144 = vpop.permute.xlu0 %1143
      %1145 = vrot.lane.b32.xlu0 %v490, 21
      %v1146 = vpop.permute.xlu0 %1145
      %1147 = vrot.lane.b32.xlu0 %v492, 21
      %v1148 = vpop.permute.xlu0 %1147
      %1149 = vrot.lane.b32.xlu0 %v491, 21
      %v1150 = vpop.permute.xlu0 %1149
      %1151 = vrot.lane.b32.xlu0 %v495, 21
      %v1152 = vpop.permute.xlu0 %1151
      %1153 = vrot.lane.b32.xlu0 %v497, 21
      %v1154 = vpop.permute.xlu0 %1153
      %1155 = vrot.lane.b32.xlu0 %v496, 21
      %v1156 = vpop.permute.xlu0 %1155
      %1157 = vrot.lane.b32.xlu0 %v500, 21
      %v1158 = vpop.permute.xlu0 %1157
      %1159 = vrot.lane.b32.xlu0 %v502, 21
      %v1160 = vpop.permute.xlu0 %1159
      %1161 = vrot.lane.b32.xlu0 %v501, 21
      %v1162 = vpop.permute.xlu0 %1161
      %1163 = vrot.lane.b32.xlu0 %v829, 21
      %v1164 = vpop.permute.xlu0 %1163
      %1165 = vrot.lane.b32.xlu0 %v831, 21
      %v1166 = vpop.permute.xlu0 %1165
      %1167 = vrot.lane.b32.xlu0 %v830, 21
      %v1168 = vpop.permute.xlu0 %1167
      %1169 = vrot.lane.b32.xlu0 %v1112, 21
      %v1170 = vpop.permute.xlu0 %1169
      %1171 = vrot.lane.b32.xlu0 %v1114, 21
      %v1172 = vpop.permute.xlu0 %1171
      %1173 = vrot.lane.b32.xlu0 %v1113, 21
      %v1174 = vpop.permute.xlu0 %1173
      %v1205 = vrot.slane %v382, 2
      %v1206 = vrot.slane %v383, 2
      %v1207 = vsel %vm593, %v1205, %v1206
      %v1208 = vrot.slane %v384, 2
      %v1209 = vsel %vm593, %v1206, %v1208
      %1210 = vrot.lane.b32.xlu0 %v606, 24
      %v1211 = vpop.permute.xlu0 %1210
      %1212 = vrot.lane.b32.xlu0 %v608, 24
      %v1213 = vpop.permute.xlu0 %1212
      %1214 = vrot.lane.b32.xlu0 %v607, 24
      %v1215 = vpop.permute.xlu0 %1214
      %1216 = vrot.lane.b32.xlu0 %v611, 24
      %v1217 = vpop.permute.xlu0 %1216
      %1218 = vrot.lane.b32.xlu0 %v613, 24
      %v1219 = vpop.permute.xlu0 %1218
      %1220 = vrot.lane.b32.xlu0 %v612, 24
      %v1221 = vpop.permute.xlu0 %1220
      %1222 = vrot.lane.b32.xlu0 %v616, 24
      %v1223 = vpop.permute.xlu0 %1222
      %1224 = vrot.lane.b32.xlu0 %v618, 24
      %v1225 = vpop.permute.xlu0 %1224
      %1226 = vrot.lane.b32.xlu0 %v617, 24
      %v1227 = vpop.permute.xlu0 %1226
      %1228 = vrot.lane.b32.xlu0 %v621, 24
      %v1229 = vpop.permute.xlu0 %1228
      %1230 = vrot.lane.b32.xlu0 %v623, 24
      %v1231 = vpop.permute.xlu0 %1230
      %1232 = vrot.lane.b32.xlu0 %v622, 24
      %v1233 = vpop.permute.xlu0 %1232
      %1234 = vrot.lane.b32.xlu0 %v626, 24
      %v1235 = vpop.permute.xlu0 %1234
      %1236 = vrot.lane.b32.xlu0 %v628, 24
      %v1237 = vpop.permute.xlu0 %1236
      %1238 = vrot.lane.b32.xlu0 %v627, 24
      %v1239 = vpop.permute.xlu0 %1238
      %1240 = vrot.lane.b32.xlu0 %v631, 24
      %v1241 = vpop.permute.xlu0 %1240
      %1242 = vrot.lane.b32.xlu0 %v633, 24
      %v1243 = vpop.permute.xlu0 %1242
      %1244 = vrot.lane.b32.xlu0 %v632, 24
      %v1245 = vpop.permute.xlu0 %1244
      %1246 = vrot.lane.b32.xlu0 %v636, 24
      %v1247 = vpop.permute.xlu0 %1246
      %1248 = vrot.lane.b32.xlu0 %v638, 24
      %v1249 = vpop.permute.xlu0 %1248
      %1250 = vrot.lane.b32.xlu0 %v637, 24
      %v1251 = vpop.permute.xlu0 %1250
      %1252 = vrot.lane.b32.xlu0 %v641, 24
      %v1253 = vpop.permute.xlu0 %1252
      %1254 = vrot.lane.b32.xlu0 %v643, 24
      %v1255 = vpop.permute.xlu0 %1254
      %1256 = vrot.lane.b32.xlu0 %v642, 24
      %v1257 = vpop.permute.xlu0 %1256
      %1258 = vrot.lane.b32.xlu0 %v924, 24
      %v1259 = vpop.permute.xlu0 %1258
      %1260 = vrot.lane.b32.xlu0 %v926, 24
      %v1261 = vpop.permute.xlu0 %1260
      %1262 = vrot.lane.b32.xlu0 %v925, 24
      %v1263 = vpop.permute.xlu0 %1262
      %1264 = vrot.lane.b32.xlu0 %v1207, 24
      %v1265 = vpop.permute.xlu0 %1264
      %1266 = vrot.lane.b32.xlu0 %v1209, 24
      %v1267 = vpop.permute.xlu0 %1266
      %1268 = vrot.lane.b32.xlu0 %v1208, 24
      %v1269 = vpop.permute.xlu0 %1268
      %vm1300 = vcmask 23552
      %v1301 = vsel %vm1300, %v349, %v504
      %v1302 = vsel %vm1300, %v350, %v506
      %v1303 = vsel %vm1300, %v351, %v508
      %v1304 = vsel %vm1300, %v352, %v510
      %v1305 = vsel %vm1300, %v353, %v512
      %v1306 = vsel %vm1300, %v354, %v514
      %v1307 = vsel %vm1300, %v355, %v516
      %v1308 = vsel %vm1300, %v356, %v518
      %v1309 = vsel %vm1300, %v357, %v520
      %v1310 = vsel %vm1300, %v358, %v522
      %v1311 = vsel %vm1300, %v359, %v524
      %v1312 = vsel %vm1300, %v360, %v526
      %v1313 = vsel %vm1300, %v361, %v528
      %v1314 = vsel %vm1300, %v362, %v530
      %v1315 = vsel %vm1300, %v363, %v532
      %v1316 = vsel %vm1300, %v364, %v534
      %v1317 = vsel %vm1300, %v365, %v536
      %v1318 = vsel %vm1300, %v366, %v538
      %v1319 = vsel %vm1300, %v367, %v540
      %v1320 = vsel %vm1300, %v368, %v542
      %v1321 = vsel %vm1300, %v369, %v544
      %v1322 = vsel %vm1300, %v370, %v546
      %v1323 = vsel %vm1300, %v371, %v548
      %v1324 = vsel %vm1300, %v372, %v550
      %v1325 = vsel %vm1300, %v373, %v552
      %v1326 = vsel %vm1300, %v374, %v554
      %v1327 = vsel %vm1300, %v375, %v556
      %v1328 = vsel %vm1300, %v376, %v558
      %v1329 = vsel %vm1300, %v377, %v560
      %v1330 = vsel %vm1300, %v378, %v562
      %vm1331 = vcmask 48128
      %v1332 = vsel %vm1331, %v1301, %v645
      %v1333 = vsel %vm1331, %v1302, %v647
      %v1334 = vsel %vm1331, %v1303, %v649
      %v1335 = vsel %vm1331, %v1304, %v651
      %v1336 = vsel %vm1331, %v1305, %v653
      %v1337 = vsel %vm1331, %v1306, %v655
      %v1338 = vsel %vm1331, %v1307, %v657
      %v1339 = vsel %vm1331, %v1308, %v659
      %v1340 = vsel %vm1331, %v1309, %v661
      %v1341 = vsel %vm1331, %v1310, %v663
      %v1342 = vsel %vm1331, %v1311, %v665
      %v1343 = vsel %vm1331, %v1312, %v667
      %v1344 = vsel %vm1331, %v1313, %v669
      %v1345 = vsel %vm1331, %v1314, %v671
      %v1346 = vsel %vm1331, %v1315, %v673
      %v1347 = vsel %vm1331, %v1316, %v675
      %v1348 = vsel %vm1331, %v1317, %v677
      %v1349 = vsel %vm1331, %v1318, %v679
      %v1350 = vsel %vm1331, %v1319, %v681
      %v1351 = vsel %vm1331, %v1320, %v683
      %v1352 = vsel %vm1331, %v1321, %v685
      %v1353 = vsel %vm1331, %v1322, %v687
      %v1354 = vsel %vm1331, %v1323, %v689
      %v1355 = vsel %vm1331, %v1324, %v691
      %v1356 = vsel %vm1331, %v1325, %v693
      %v1357 = vsel %vm1331, %v1326, %v695
      %v1358 = vsel %vm1331, %v1327, %v697
      %v1359 = vsel %vm1331, %v1328, %v699
      %v1360 = vsel %vm1331, %v1329, %v701
      %v1361 = vsel %vm1331, %v1330, %v703
      %vm1362 = vcmask 72704
      %v1363 = vsel %vm1362, %v1332, %v738
      %v1364 = vsel %vm1362, %v1333, %v740
      %v1365 = vsel %vm1362, %v1334, %v742
      %v1366 = vsel %vm1362, %v1335, %v744
      %v1367 = vsel %vm1362, %v1336, %v746
      %v1368 = vsel %vm1362, %v1337, %v748
      %v1369 = vsel %vm1362, %v1338, %v750
      %v1370 = vsel %vm1362, %v1339, %v752
      %v1371 = vsel %vm1362, %v1340, %v754
      %v1372 = vsel %vm1362, %v1341, %v756
      %v1373 = vsel %vm1362, %v1342, %v758
      %v1374 = vsel %vm1362, %v1343, %v760
      %v1375 = vsel %vm1362, %v1344, %v762
      %v1376 = vsel %vm1362, %v1345, %v764
      %v1377 = vsel %vm1362, %v1346, %v766
      %v1378 = vsel %vm1362, %v1347, %v768
      %v1379 = vsel %vm1362, %v1348, %v770
      %v1380 = vsel %vm1362, %v1349, %v772
      %v1381 = vsel %vm1362, %v1350, %v774
      %v1382 = vsel %vm1362, %v1351, %v776
      %v1383 = vsel %vm1362, %v1352, %v778
      %v1384 = vsel %vm1362, %v1353, %v780
      %v1385 = vsel %vm1362, %v1354, %v782
      %v1386 = vsel %vm1362, %v1355, %v784
      %v1387 = vsel %vm1362, %v1356, %v786
      %v1388 = vsel %vm1362, %v1357, %v788
      %v1389 = vsel %vm1362, %v1358, %v790
      %v1390 = vsel %vm1362, %v1359, %v792
      %v1391 = vsel %vm1362, %v1360, %v794
      %v1392 = vsel %vm1362, %v1361, %v796
      %vm1393 = vcmask 97280
      %v1394 = vsel %vm1393, %v1363, %v833
      %v1395 = vsel %vm1393, %v1364, %v835
      %v1396 = vsel %vm1393, %v1365, %v837
      %v1397 = vsel %vm1393, %v1366, %v839
      %v1398 = vsel %vm1393, %v1367, %v841
      %v1399 = vsel %vm1393, %v1368, %v843
      %v1400 = vsel %vm1393, %v1369, %v845
      %v1401 = vsel %vm1393, %v1370, %v847
      %v1402 = vsel %vm1393, %v1371, %v849
      %v1403 = vsel %vm1393, %v1372, %v851
      %v1404 = vsel %vm1393, %v1373, %v853
      %v1405 = vsel %vm1393, %v1374, %v855
      %v1406 = vsel %vm1393, %v1375, %v857
      %v1407 = vsel %vm1393, %v1376, %v859
      %v1408 = vsel %vm1393, %v1377, %v861
      %v1409 = vsel %vm1393, %v1378, %v863
      %v1410 = vsel %vm1393, %v1379, %v865
      %v1411 = vsel %vm1393, %v1380, %v867
      %v1412 = vsel %vm1393, %v1381, %v869
      %v1413 = vsel %vm1393, %v1382, %v871
      %v1414 = vsel %vm1393, %v1383, %v873
      %v1415 = vsel %vm1393, %v1384, %v875
      %v1416 = vsel %vm1393, %v1385, %v877
      %v1417 = vsel %vm1393, %v1386, %v879
      %v1418 = vsel %vm1393, %v1387, %v881
      %v1419 = vsel %vm1393, %v1388, %v883
      %v1420 = vsel %vm1393, %v1389, %v885
      %v1421 = vsel %vm1393, %v1390, %v887
      %v1422 = vsel %vm1393, %v1391, %v889
      %v1423 = vsel %vm1393, %v1392, %v891
      %vm1424 = vcmask 121856
      %v1425 = vsel %vm1424, %v1394, %v928
      %v1426 = vsel %vm1424, %v1395, %v930
      %v1427 = vsel %vm1424, %v1396, %v932
      %v1428 = vsel %vm1424, %v1397, %v934
      %v1429 = vsel %vm1424, %v1398, %v936
      %v1430 = vsel %vm1424, %v1399, %v938
      %v1431 = vsel %vm1424, %v1400, %v940
      %v1432 = vsel %vm1424, %v1401, %v942
      %v1433 = vsel %vm1424, %v1402, %v944
      %v1434 = vsel %vm1424, %v1403, %v946
      %v1435 = vsel %vm1424, %v1404, %v948
      %v1436 = vsel %vm1424, %v1405, %v950
      %v1437 = vsel %vm1424, %v1406, %v952
      %v1438 = vsel %vm1424, %v1407, %v954
      %v1439 = vsel %vm1424, %v1408, %v956
      %v1440 = vsel %vm1424, %v1409, %v958
      %v1441 = vsel %vm1424, %v1410, %v960
      %v1442 = vsel %vm1424, %v1411, %v962
      %v1443 = vsel %vm1424, %v1412, %v964
      %v1444 = vsel %vm1424, %v1413, %v966
      %v1445 = vsel %vm1424, %v1414, %v968
      %v1446 = vsel %vm1424, %v1415, %v970
      %v1447 = vsel %vm1424, %v1416, %v972
      %v1448 = vsel %vm1424, %v1417, %v974
      %v1449 = vsel %vm1424, %v1418, %v976
      %v1450 = vsel %vm1424, %v1419, %v978
      %v1451 = vsel %vm1424, %v1420, %v980
      %v1452 = vsel %vm1424, %v1421, %v982
      %v1453 = vsel %vm1424, %v1422, %v984
      %v1454 = vsel %vm1424, %v1423, %v986
      %vm1455 = vcmask 146432
      %v1456 = vsel %vm1455, %v1425, %v1021
      %v1457 = vsel %vm1455, %v1426, %v1023
      %v1458 = vsel %vm1455, %v1427, %v1025
      %v1459 = vsel %vm1455, %v1428, %v1027
      %v1460 = vsel %vm1455, %v1429, %v1029
      %v1461 = vsel %vm1455, %v1430, %v1031
      %v1462 = vsel %vm1455, %v1431, %v1033
      %v1463 = vsel %vm1455, %v1432, %v1035
      %v1464 = vsel %vm1455, %v1433, %v1037
      %v1465 = vsel %vm1455, %v1434, %v1039
      %v1466 = vsel %vm1455, %v1435, %v1041
      %v1467 = vsel %vm1455, %v1436, %v1043
      %v1468 = vsel %vm1455, %v1437, %v1045
      %v1469 = vsel %vm1455, %v1438, %v1047
      %v1470 = vsel %vm1455, %v1439, %v1049
      %v1471 = vsel %vm1455, %v1440, %v1051
      %v1472 = vsel %vm1455, %v1441, %v1053
      %v1473 = vsel %vm1455, %v1442, %v1055
      %v1474 = vsel %vm1455, %v1443, %v1057
      %v1475 = vsel %vm1455, %v1444, %v1059
      %v1476 = vsel %vm1455, %v1445, %v1061
      %v1477 = vsel %vm1455, %v1446, %v1063
      %v1478 = vsel %vm1455, %v1447, %v1065
      %v1479 = vsel %vm1455, %v1448, %v1067
      %v1480 = vsel %vm1455, %v1449, %v1069
      %v1481 = vsel %vm1455, %v1450, %v1071
      %v1482 = vsel %vm1455, %v1451, %v1073
      %v1483 = vsel %vm1455, %v1452, %v1075
      %v1484 = vsel %vm1455, %v1453, %v1077
      %v1485 = vsel %vm1455, %v1454, %v1079
      %vm1486 = vcmask 171008
      %v1487 = vsel %vm1486, %v1456, %v1116
      %v1488 = vsel %vm1486, %v1457, %v1118
      %v1489 = vsel %vm1486, %v1458, %v1120
      %v1490 = vsel %vm1486, %v1459, %v1122
      %v1491 = vsel %vm1486, %v1460, %v1124
      %v1492 = vsel %vm1486, %v1461, %v1126
      %v1493 = vsel %vm1486, %v1462, %v1128
      %v1494 = vsel %vm1486, %v1463, %v1130
      %v1495 = vsel %vm1486, %v1464, %v1132
      %v1496 = vsel %vm1486, %v1465, %v1134
      %v1497 = vsel %vm1486, %v1466, %v1136
      %v1498 = vsel %vm1486, %v1467, %v1138
      %v1499 = vsel %vm1486, %v1468, %v1140
      %v1500 = vsel %vm1486, %v1469, %v1142
      %v1501 = vsel %vm1486, %v1470, %v1144
      %v1502 = vsel %vm1486, %v1471, %v1146
      %v1503 = vsel %vm1486, %v1472, %v1148
      %v1504 = vsel %vm1486, %v1473, %v1150
      %v1505 = vsel %vm1486, %v1474, %v1152
      %v1506 = vsel %vm1486, %v1475, %v1154
      %v1507 = vsel %vm1486, %v1476, %v1156
      %v1508 = vsel %vm1486, %v1477, %v1158
      %v1509 = vsel %vm1486, %v1478, %v1160
      %v1510 = vsel %vm1486, %v1479, %v1162
      %v1511 = vsel %vm1486, %v1480, %v1164
      %v1512 = vsel %vm1486, %v1481, %v1166
      %v1513 = vsel %vm1486, %v1482, %v1168
      %v1514 = vsel %vm1486, %v1483, %v1170
      %v1515 = vsel %vm1486, %v1484, %v1172
      %v1516 = vsel %vm1486, %v1485, %v1174
      %vm1517 = vcmask 195584
      %v1518 = vsel %vm1517, %v1487, %v1211
      %v1519 = vsel %vm1517, %v1488, %v1213
      %v1520 = vsel %vm1517, %v1489, %v1215
      %v1521 = vsel %vm1517, %v1490, %v1217
      %v1522 = vsel %vm1517, %v1491, %v1219
      %v1523 = vsel %vm1517, %v1492, %v1221
      %v1524 = vsel %vm1517, %v1493, %v1223
      %v1525 = vsel %vm1517, %v1494, %v1225
      %v1526 = vsel %vm1517, %v1495, %v1227
      %v1527 = vsel %vm1517, %v1496, %v1229
      %v1528 = vsel %vm1517, %v1497, %v1231
      %v1529 = vsel %vm1517, %v1498, %v1233
      %v1530 = vsel %vm1517, %v1499, %v1235
      %v1531 = vsel %vm1517, %v1500, %v1237
      %v1532 = vsel %vm1517, %v1501, %v1239
      %v1533 = vsel %vm1517, %v1502, %v1241
      %v1534 = vsel %vm1517, %v1503, %v1243
      %v1535 = vsel %vm1517, %v1504, %v1245
      %v1536 = vsel %vm1517, %v1505, %v1247
      %v1537 = vsel %vm1517, %v1506, %v1249
      %v1538 = vsel %vm1517, %v1507, %v1251
      %v1539 = vsel %vm1517, %v1508, %v1253
      %v1540 = vsel %vm1517, %v1509, %v1255
      %v1541 = vsel %vm1517, %v1510, %v1257
      %v1542 = vsel %vm1517, %v1511, %v1259
      %v1543 = vsel %vm1517, %v1512, %v1261
      %v1544 = vsel %vm1517, %v1513, %v1263
      %v1545 = vsel %vm1517, %v1514, %v1265
      %v1546 = vsel %vm1517, %v1515, %v1267
      %v1547 = vsel %vm1517, %v1516, %v1269
      %v1578 = vcombine.high %v1518, %v1518
      %v1580 = vunpack.c.l.s4 1983009808
      %v1581 = vunpack.c.0.s8 %v1580
      %v1582 = vlaneseq
      %v1583 = vshrl.u32 %v1582, 7
      %v1584 = vsub.s32 %v1581, %v1583
      %v1585 = vrot.slane %v1518, %v1584
      %v1587 = vunpack.c.l.s4 1983009808
      %v1588 = vunpack.c.0.s8 %v1587
      %v1589 = vlaneseq
      %v1590 = vshrl.u32 %v1589, 7
      %v1591 = vsub.s32 %v1588, %v1590
      %v1592 = vrot.slane %v1578, %v1591
      %v1593 = vcombine.high %v1585, %v1585
      %v1594 = vcombine.high %v1592, %v1592
      %v1595 = vcombine.high %v1519, %v1519
      %v1597 = vunpack.c.l.s4 1983009808
      %v1598 = vunpack.c.0.s8 %v1597
      %v1599 = vlaneseq
      %v1600 = vshrl.u32 %v1599, 7
      %v1601 = vsub.s32 %v1598, %v1600
      %v1602 = vrot.slane %v1519, %v1601
      %v1604 = vunpack.c.l.s4 1983009808
      %v1605 = vunpack.c.0.s8 %v1604
      %v1606 = vlaneseq
      %v1607 = vshrl.u32 %v1606, 7
      %v1608 = vsub.s32 %v1605, %v1607
      %v1609 = vrot.slane %v1595, %v1608
      %v1610 = vcombine.high %v1602, %v1602
      %v1611 = vcombine.high %v1609, %v1609
      %v1613 = vunpack.c.l.s4 1983009808
      %v1614 = vunpack.c.0.s8 %v1613
      %v1615 = vlaneseq
      %v1616 = vshrl.u32 %v1615, 7
      %v1617 = vsub.s32 %v1614, %v1616
      %v1618 = vrot.slane %v1520, %v1617
      %v1619 = vcombine.high %v1521, %v1521
      %v1621 = vunpack.c.l.s4 1983009808
      %v1622 = vunpack.c.0.s8 %v1621
      %v1623 = vlaneseq
      %v1624 = vshrl.u32 %v1623, 7
      %v1625 = vsub.s32 %v1622, %v1624
      %v1626 = vrot.slane %v1521, %v1625
      %v1628 = vunpack.c.l.s4 1983009808
      %v1629 = vunpack.c.0.s8 %v1628
      %v1630 = vlaneseq
      %v1631 = vshrl.u32 %v1630, 7
      %v1632 = vsub.s32 %v1629, %v1631
      %v1633 = vrot.slane %v1619, %v1632
      %v1634 = vcombine.high %v1626, %v1626
      %v1635 = vcombine.high %v1633, %v1633
      %v1636 = vcombine.high %v1522, %v1522
      %v1638 = vunpack.c.l.s4 1983009808
      %v1639 = vunpack.c.0.s8 %v1638
      %v1640 = vlaneseq
      %v1641 = vshrl.u32 %v1640, 7
      %v1642 = vsub.s32 %v1639, %v1641
      %v1643 = vrot.slane %v1522, %v1642
      %v1645 = vunpack.c.l.s4 1983009808
      %v1646 = vunpack.c.0.s8 %v1645
      %v1647 = vlaneseq
      %v1648 = vshrl.u32 %v1647, 7
      %v1649 = vsub.s32 %v1646, %v1648
      %v1650 = vrot.slane %v1636, %v1649
      %v1651 = vcombine.high %v1643, %v1643
      %v1652 = vcombine.high %v1650, %v1650
      %v1654 = vunpack.c.l.s4 1983009808
      %v1655 = vunpack.c.0.s8 %v1654
      %v1656 = vlaneseq
      %v1657 = vshrl.u32 %v1656, 7
      %v1658 = vsub.s32 %v1655, %v1657
      %v1659 = vrot.slane %v1523, %v1658
      %v1660 = vcombine.high %v1524, %v1524
      %v1662 = vunpack.c.l.s4 1983009808
      %v1663 = vunpack.c.0.s8 %v1662
      %v1664 = vlaneseq
      %v1665 = vshrl.u32 %v1664, 7
      %v1666 = vsub.s32 %v1663, %v1665
      %v1667 = vrot.slane %v1524, %v1666
      %v1669 = vunpack.c.l.s4 1983009808
      %v1670 = vunpack.c.0.s8 %v1669
      %v1671 = vlaneseq
      %v1672 = vshrl.u32 %v1671, 7
      %v1673 = vsub.s32 %v1670, %v1672
      %v1674 = vrot.slane %v1660, %v1673
      %v1675 = vcombine.high %v1667, %v1667
      %v1676 = vcombine.high %v1674, %v1674
      %v1677 = vcombine.high %v1525, %v1525
      %v1679 = vunpack.c.l.s4 1983009808
      %v1680 = vunpack.c.0.s8 %v1679
      %v1681 = vlaneseq
      %v1682 = vshrl.u32 %v1681, 7
      %v1683 = vsub.s32 %v1680, %v1682
      %v1684 = vrot.slane %v1525, %v1683
      %v1686 = vunpack.c.l.s4 1983009808
      %v1687 = vunpack.c.0.s8 %v1686
      %v1688 = vlaneseq
      %v1689 = vshrl.u32 %v1688, 7
      %v1690 = vsub.s32 %v1687, %v1689
      %v1691 = vrot.slane %v1677, %v1690
      %v1692 = vcombine.high %v1684, %v1684
      %v1693 = vcombine.high %v1691, %v1691
      %v1695 = vunpack.c.l.s4 1983009808
      %v1696 = vunpack.c.0.s8 %v1695
      %v1697 = vlaneseq
      %v1698 = vshrl.u32 %v1697, 7
      %v1699 = vsub.s32 %v1696, %v1698
      %v1700 = vrot.slane %v1526, %v1699
      %v1701 = vcombine.high %v1527, %v1527
      %v1703 = vunpack.c.l.s4 1983009808
      %v1704 = vunpack.c.0.s8 %v1703
      %v1705 = vlaneseq
      %v1706 = vshrl.u32 %v1705, 7
      %v1707 = vsub.s32 %v1704, %v1706
      %v1708 = vrot.slane %v1527, %v1707
      %v1710 = vunpack.c.l.s4 1983009808
      %v1711 = vunpack.c.0.s8 %v1710
      %v1712 = vlaneseq
      %v1713 = vshrl.u32 %v1712, 7
      %v1714 = vsub.s32 %v1711, %v1713
      %v1715 = vrot.slane %v1701, %v1714
      %v1716 = vcombine.high %v1708, %v1708
      %v1717 = vcombine.high %v1715, %v1715
      %v1718 = vcombine.high %v1528, %v1528
      %v1720 = vunpack.c.l.s4 1983009808
      %v1721 = vunpack.c.0.s8 %v1720
      %v1722 = vlaneseq
      %v1723 = vshrl.u32 %v1722, 7
      %v1724 = vsub.s32 %v1721, %v1723
      %v1725 = vrot.slane %v1528, %v1724
      %v1727 = vunpack.c.l.s4 1983009808
      %v1728 = vunpack.c.0.s8 %v1727
      %v1729 = vlaneseq
      %v1730 = vshrl.u32 %v1729, 7
      %v1731 = vsub.s32 %v1728, %v1730
      %v1732 = vrot.slane %v1718, %v1731
      %v1733 = vcombine.high %v1725, %v1725
      %v1734 = vcombine.high %v1732, %v1732
      %v1736 = vunpack.c.l.s4 1983009808
      %v1737 = vunpack.c.0.s8 %v1736
      %v1738 = vlaneseq
      %v1739 = vshrl.u32 %v1738, 7
      %v1740 = vsub.s32 %v1737, %v1739
      %v1741 = vrot.slane %v1529, %v1740
      %v1742 = vcombine.high %v1530, %v1530
      %v1744 = vunpack.c.l.s4 1983009808
      %v1745 = vunpack.c.0.s8 %v1744
      %v1746 = vlaneseq
      %v1747 = vshrl.u32 %v1746, 7
      %v1748 = vsub.s32 %v1745, %v1747
      %v1749 = vrot.slane %v1530, %v1748
      %v1751 = vunpack.c.l.s4 1983009808
      %v1752 = vunpack.c.0.s8 %v1751
      %v1753 = vlaneseq
      %v1754 = vshrl.u32 %v1753, 7
      %v1755 = vsub.s32 %v1752, %v1754
      %v1756 = vrot.slane %v1742, %v1755
      %v1757 = vcombine.high %v1749, %v1749
      %v1758 = vcombine.high %v1756, %v1756
      %v1759 = vcombine.high %v1531, %v1531
      %v1761 = vunpack.c.l.s4 1983009808
      %v1762 = vunpack.c.0.s8 %v1761
      %v1763 = vlaneseq
      %v1764 = vshrl.u32 %v1763, 7
      %v1765 = vsub.s32 %v1762, %v1764
      %v1766 = vrot.slane %v1531, %v1765
      %v1768 = vunpack.c.l.s4 1983009808
      %v1769 = vunpack.c.0.s8 %v1768
      %v1770 = vlaneseq
      %v1771 = vshrl.u32 %v1770, 7
      %v1772 = vsub.s32 %v1769, %v1771
      %v1773 = vrot.slane %v1759, %v1772
      %v1774 = vcombine.high %v1766, %v1766
      %v1775 = vcombine.high %v1773, %v1773
      %v1777 = vunpack.c.l.s4 1983009808
      %v1778 = vunpack.c.0.s8 %v1777
      %v1779 = vlaneseq
      %v1780 = vshrl.u32 %v1779, 7
      %v1781 = vsub.s32 %v1778, %v1780
      %v1782 = vrot.slane %v1532, %v1781
      %v1783 = vcombine.high %v1533, %v1533
      %v1785 = vunpack.c.l.s4 1983009808
      %v1786 = vunpack.c.0.s8 %v1785
      %v1787 = vlaneseq
      %v1788 = vshrl.u32 %v1787, 7
      %v1789 = vsub.s32 %v1786, %v1788
      %v1790 = vrot.slane %v1533, %v1789
      %v1792 = vunpack.c.l.s4 1983009808
      %v1793 = vunpack.c.0.s8 %v1792
      %v1794 = vlaneseq
      %v1795 = vshrl.u32 %v1794, 7
      %v1796 = vsub.s32 %v1793, %v1795
      %v1797 = vrot.slane %v1783, %v1796
      %v1798 = vcombine.high %v1790, %v1790
      %v1799 = vcombine.high %v1797, %v1797
      %v1800 = vcombine.high %v1534, %v1534
      %v1802 = vunpack.c.l.s4 1983009808
      %v1803 = vunpack.c.0.s8 %v1802
      %v1804 = vlaneseq
      %v1805 = vshrl.u32 %v1804, 7
      %v1806 = vsub.s32 %v1803, %v1805
      %v1807 = vrot.slane %v1534, %v1806
      %v1809 = vunpack.c.l.s4 1983009808
      %v1810 = vunpack.c.0.s8 %v1809
      %v1811 = vlaneseq
      %v1812 = vshrl.u32 %v1811, 7
      %v1813 = vsub.s32 %v1810, %v1812
      %v1814 = vrot.slane %v1800, %v1813
      %v1815 = vcombine.high %v1807, %v1807
      %v1816 = vcombine.high %v1814, %v1814
      %v1818 = vunpack.c.l.s4 1983009808
      %v1819 = vunpack.c.0.s8 %v1818
      %v1820 = vlaneseq
      %v1821 = vshrl.u32 %v1820, 7
      %v1822 = vsub.s32 %v1819, %v1821
      %v1823 = vrot.slane %v1535, %v1822
      %v1824 = vcombine.high %v1536, %v1536
      %v1826 = vunpack.c.l.s4 1983009808
      %v1827 = vunpack.c.0.s8 %v1826
      %v1828 = vlaneseq
      %v1829 = vshrl.u32 %v1828, 7
      %v1830 = vsub.s32 %v1827, %v1829
      %v1831 = vrot.slane %v1536, %v1830
      %v1833 = vunpack.c.l.s4 1983009808
      %v1834 = vunpack.c.0.s8 %v1833
      %v1835 = vlaneseq
      %v1836 = vshrl.u32 %v1835, 7
      %v1837 = vsub.s32 %v1834, %v1836
      %v1838 = vrot.slane %v1824, %v1837
      %v1839 = vcombine.high %v1831, %v1831
      %v1840 = vcombine.high %v1838, %v1838
      %v1841 = vcombine.high %v1537, %v1537
      %v1843 = vunpack.c.l.s4 1983009808
      %v1844 = vunpack.c.0.s8 %v1843
      %v1845 = vlaneseq
      %v1846 = vshrl.u32 %v1845, 7
      %v1847 = vsub.s32 %v1844, %v1846
      %v1848 = vrot.slane %v1537, %v1847
      %v1850 = vunpack.c.l.s4 1983009808
      %v1851 = vunpack.c.0.s8 %v1850
      %v1852 = vlaneseq
      %v1853 = vshrl.u32 %v1852, 7
      %v1854 = vsub.s32 %v1851, %v1853
      %v1855 = vrot.slane %v1841, %v1854
      %v1856 = vcombine.high %v1848, %v1848
      %v1857 = vcombine.high %v1855, %v1855
      %v1859 = vunpack.c.l.s4 1983009808
      %v1860 = vunpack.c.0.s8 %v1859
      %v1861 = vlaneseq
      %v1862 = vshrl.u32 %v1861, 7
      %v1863 = vsub.s32 %v1860, %v1862
      %v1864 = vrot.slane %v1538, %v1863
      %v1865 = vcombine.high %v1539, %v1539
      %v1867 = vunpack.c.l.s4 1983009808
      %v1868 = vunpack.c.0.s8 %v1867
      %v1869 = vlaneseq
      %v1870 = vshrl.u32 %v1869, 7
      %v1871 = vsub.s32 %v1868, %v1870
      %v1872 = vrot.slane %v1539, %v1871
      %v1874 = vunpack.c.l.s4 1983009808
      %v1875 = vunpack.c.0.s8 %v1874
      %v1876 = vlaneseq
      %v1877 = vshrl.u32 %v1876, 7
      %v1878 = vsub.s32 %v1875, %v1877
      %v1879 = vrot.slane %v1865, %v1878
      %v1880 = vcombine.high %v1872, %v1872
      %v1881 = vcombine.high %v1879, %v1879
      %v1882 = vcombine.high %v1540, %v1540
      %v1884 = vunpack.c.l.s4 1983009808
      %v1885 = vunpack.c.0.s8 %v1884
      %v1886 = vlaneseq
      %v1887 = vshrl.u32 %v1886, 7
      %v1888 = vsub.s32 %v1885, %v1887
      %v1889 = vrot.slane %v1540, %v1888
      %v1891 = vunpack.c.l.s4 1983009808
      %v1892 = vunpack.c.0.s8 %v1891
      %v1893 = vlaneseq
      %v1894 = vshrl.u32 %v1893, 7
      %v1895 = vsub.s32 %v1892, %v1894
      %v1896 = vrot.slane %v1882, %v1895
      %v1897 = vcombine.high %v1889, %v1889
      %v1898 = vcombine.high %v1896, %v1896
      %v1900 = vunpack.c.l.s4 1983009808
      %v1901 = vunpack.c.0.s8 %v1900
      %v1902 = vlaneseq
      %v1903 = vshrl.u32 %v1902, 7
      %v1904 = vsub.s32 %v1901, %v1903
      %v1905 = vrot.slane %v1541, %v1904
      %v1906 = vcombine.high %v1542, %v1542
      %v1908 = vunpack.c.l.s4 1983009808
      %v1909 = vunpack.c.0.s8 %v1908
      %v1910 = vlaneseq
      %v1911 = vshrl.u32 %v1910, 7
      %v1912 = vsub.s32 %v1909, %v1911
      %v1913 = vrot.slane %v1542, %v1912
      %v1915 = vunpack.c.l.s4 1983009808
      %v1916 = vunpack.c.0.s8 %v1915
      %v1917 = vlaneseq
      %v1918 = vshrl.u32 %v1917, 7
      %v1919 = vsub.s32 %v1916, %v1918
      %v1920 = vrot.slane %v1906, %v1919
      %v1921 = vcombine.high %v1913, %v1913
      %v1922 = vcombine.high %v1920, %v1920
      %v1923 = vcombine.high %v1543, %v1543
      %v1925 = vunpack.c.l.s4 1983009808
      %v1926 = vunpack.c.0.s8 %v1925
      %v1927 = vlaneseq
      %v1928 = vshrl.u32 %v1927, 7
      %v1929 = vsub.s32 %v1926, %v1928
      %v1930 = vrot.slane %v1543, %v1929
      %v1932 = vunpack.c.l.s4 1983009808
      %v1933 = vunpack.c.0.s8 %v1932
      %v1934 = vlaneseq
      %v1935 = vshrl.u32 %v1934, 7
      %v1936 = vsub.s32 %v1933, %v1935
      %v1937 = vrot.slane %v1923, %v1936
      %v1938 = vcombine.high %v1930, %v1930
      %v1939 = vcombine.high %v1937, %v1937
      %v1941 = vunpack.c.l.s4 1983009808
      %v1942 = vunpack.c.0.s8 %v1941
      %v1943 = vlaneseq
      %v1944 = vshrl.u32 %v1943, 7
      %v1945 = vsub.s32 %v1942, %v1944
      %v1946 = vrot.slane %v1544, %v1945
      %v1947 = vcombine.high %v1545, %v1545
      %v1949 = vunpack.c.l.s4 1983009808
      %v1950 = vunpack.c.0.s8 %v1949
      %v1951 = vlaneseq
      %v1952 = vshrl.u32 %v1951, 7
      %v1953 = vsub.s32 %v1950, %v1952
      %v1954 = vrot.slane %v1545, %v1953
      %v1956 = vunpack.c.l.s4 1983009808
      %v1957 = vunpack.c.0.s8 %v1956
      %v1958 = vlaneseq
      %v1959 = vshrl.u32 %v1958, 7
      %v1960 = vsub.s32 %v1957, %v1959
      %v1961 = vrot.slane %v1947, %v1960
      %v1962 = vcombine.high %v1954, %v1954
      %v1963 = vcombine.high %v1961, %v1961
      %v1964 = vcombine.high %v1546, %v1546
      %v1966 = vunpack.c.l.s4 1983009808
      %v1967 = vunpack.c.0.s8 %v1966
      %v1968 = vlaneseq
      %v1969 = vshrl.u32 %v1968, 7
      %v1970 = vsub.s32 %v1967, %v1969
      %v1971 = vrot.slane %v1546, %v1970
      %v1973 = vunpack.c.l.s4 1983009808
      %v1974 = vunpack.c.0.s8 %v1973
      %v1975 = vlaneseq
      %v1976 = vshrl.u32 %v1975, 7
      %v1977 = vsub.s32 %v1974, %v1976
      %v1978 = vrot.slane %v1964, %v1977
      %v1979 = vcombine.high %v1971, %v1971
      %v1980 = vcombine.high %v1978, %v1978
      %v1982 = vunpack.c.l.s4 1983009808
      %v1983 = vunpack.c.0.s8 %v1982
      %v1984 = vlaneseq
      %v1985 = vshrl.u32 %v1984, 7
      %v1986 = vsub.s32 %v1983, %v1985
      %v1987 = vrot.slane %v1547, %v1986
      %v2018 = vrot.slane %v386, 1
      %v2019 = vrot.slane %v387, 1
      %v2020 = vsel %vm452, %v2018, %v2019
      %v2021 = vrot.slane %v388, 1
      %v2022 = vsel %vm452, %v2019, %v2021
      %v2023 = vrot.slane %v389, 1
      %v2024 = vrot.slane %v390, 1
      %v2025 = vsel %vm452, %v2023, %v2024
      %v2026 = vrot.slane %v391, 1
      %v2027 = vsel %vm452, %v2024, %v2026
      %v2028 = vrot.slane %v392, 1
      %v2029 = vrot.slane %v393, 1
      %v2030 = vsel %vm452, %v2028, %v2029
      %v2031 = vrot.slane %v394, 1
      %v2032 = vsel %vm452, %v2029, %v2031
      %v2033 = vrot.slane %v395, 1
      %v2034 = vrot.slane %v396, 1
      %v2035 = vsel %vm452, %v2033, %v2034
      %v2036 = vrot.slane %v397, 1
      %v2037 = vsel %vm452, %v2034, %v2036
      %v2038 = vrot.slane %v398, 1
      %v2039 = vrot.slane %v399, 1
      %v2040 = vsel %vm452, %v2038, %v2039
      %v2041 = vrot.slane %v400, 1
      %v2042 = vsel %vm452, %v2039, %v2041
      %v2043 = vrot.slane %v401, 1
      %v2044 = vrot.slane %v402, 1
      %v2045 = vsel %vm452, %v2043, %v2044
      %v2046 = vrot.slane %v403, 1
      %v2047 = vsel %vm452, %v2044, %v2046
      %v2048 = vrot.slane %v404, 1
      %v2049 = vrot.slane %v405, 1
      %v2050 = vsel %vm452, %v2048, %v2049
      %v2051 = vrot.slane %v406, 1
      %v2052 = vsel %vm452, %v2049, %v2051
      %v2053 = vrot.slane %v407, 1
      %v2054 = vrot.slane %v408, 1
      %v2055 = vsel %vm452, %v2053, %v2054
      %v2056 = vrot.slane %v409, 1
      %v2057 = vsel %vm452, %v2054, %v2056
      %v2058 = vrot.slane %v410, 1
      %v2059 = vrot.slane %v411, 1
      %v2060 = vsel %vm452, %v2058, %v2059
      %v2061 = vrot.slane %v412, 1
      %v2062 = vsel %vm452, %v2059, %v2061
      %v2063 = vrot.slane %v413, 1
      %v2064 = vrot.slane %v414, 1
      %v2065 = vsel %vm452, %v2063, %v2064
      %v2066 = vrot.slane %v415, 1
      %v2067 = vsel %vm452, %v2064, %v2066
      %2068 = vrot.lane.b32.xlu0 %v2020, 3
      %v2069 = vpop.permute.xlu0 %2068
      %2070 = vrot.lane.b32.xlu0 %v2022, 3
      %v2071 = vpop.permute.xlu0 %2070
      %2072 = vrot.lane.b32.xlu0 %v2021, 3
      %v2073 = vpop.permute.xlu0 %2072
      %2074 = vrot.lane.b32.xlu0 %v2025, 3
      %v2075 = vpop.permute.xlu0 %2074
      %2076 = vrot.lane.b32.xlu0 %v2027, 3
      %v2077 = vpop.permute.xlu0 %2076
      %2078 = vrot.lane.b32.xlu0 %v2026, 3
      %v2079 = vpop.permute.xlu0 %2078
      %2080 = vrot.lane.b32.xlu0 %v2030, 3
      %v2081 = vpop.permute.xlu0 %2080
      %2082 = vrot.lane.b32.xlu0 %v2032, 3
      %v2083 = vpop.permute.xlu0 %2082
      %2084 = vrot.lane.b32.xlu0 %v2031, 3
      %v2085 = vpop.permute.xlu0 %2084
      %2086 = vrot.lane.b32.xlu0 %v2035, 3
      %v2087 = vpop.permute.xlu0 %2086
      %2088 = vrot.lane.b32.xlu0 %v2037, 3
      %v2089 = vpop.permute.xlu0 %2088
      %2090 = vrot.lane.b32.xlu0 %v2036, 3
      %v2091 = vpop.permute.xlu0 %2090
      %2092 = vrot.lane.b32.xlu0 %v2040, 3
      %v2093 = vpop.permute.xlu0 %2092
      %2094 = vrot.lane.b32.xlu0 %v2042, 3
      %v2095 = vpop.permute.xlu0 %2094
      %2096 = vrot.lane.b32.xlu0 %v2041, 3
      %v2097 = vpop.permute.xlu0 %2096
      %2098 = vrot.lane.b32.xlu0 %v2045, 3
      %v2099 = vpop.permute.xlu0 %2098
      %2100 = vrot.lane.b32.xlu0 %v2047, 3
      %v2101 = vpop.permute.xlu0 %2100
      %2102 = vrot.lane.b32.xlu0 %v2046, 3
      %v2103 = vpop.permute.xlu0 %2102
      %2104 = vrot.lane.b32.xlu0 %v2050, 3
      %v2105 = vpop.permute.xlu0 %2104
      %2106 = vrot.lane.b32.xlu0 %v2052, 3
      %v2107 = vpop.permute.xlu0 %2106
      %2108 = vrot.lane.b32.xlu0 %v2051, 3
      %v2109 = vpop.permute.xlu0 %2108
      %2110 = vrot.lane.b32.xlu0 %v2055, 3
      %v2111 = vpop.permute.xlu0 %2110
      %2112 = vrot.lane.b32.xlu0 %v2057, 3
      %v2113 = vpop.permute.xlu0 %2112
      %2114 = vrot.lane.b32.xlu0 %v2056, 3
      %v2115 = vpop.permute.xlu0 %2114
      %2116 = vrot.lane.b32.xlu0 %v2060, 3
      %v2117 = vpop.permute.xlu0 %2116
      %2118 = vrot.lane.b32.xlu0 %v2062, 3
      %v2119 = vpop.permute.xlu0 %2118
      %2120 = vrot.lane.b32.xlu0 %v2061, 3
      %v2121 = vpop.permute.xlu0 %2120
      %2122 = vrot.lane.b32.xlu0 %v2065, 3
      %v2123 = vpop.permute.xlu0 %2122
      %2124 = vrot.lane.b32.xlu0 %v2067, 3
      %v2125 = vpop.permute.xlu0 %2124
      %2126 = vrot.lane.b32.xlu0 %v2066, 3
      %v2127 = vpop.permute.xlu0 %2126
      %v2158 = vrot.slane %v386, 2
      %v2159 = vrot.slane %v387, 2
      %v2160 = vsel %vm593, %v2158, %v2159
      %v2161 = vrot.slane %v388, 2
      %v2162 = vsel %vm593, %v2159, %v2161
      %v2163 = vrot.slane %v389, 2
      %v2164 = vrot.slane %v390, 2
      %v2165 = vsel %vm593, %v2163, %v2164
      %v2166 = vrot.slane %v391, 2
      %v2167 = vsel %vm593, %v2164, %v2166
      %v2168 = vrot.slane %v392, 2
      %v2169 = vrot.slane %v393, 2
      %v2170 = vsel %vm593, %v2168, %v2169
      %v2171 = vrot.slane %v394, 2
      %v2172 = vsel %vm593, %v2169, %v2171
      %v2173 = vrot.slane %v395, 2
      %v2174 = vrot.slane %v396, 2
      %v2175 = vsel %vm593, %v2173, %v2174
      %v2176 = vrot.slane %v397, 2
      %v2177 = vsel %vm593, %v2174, %v2176
      %v2178 = vrot.slane %v398, 2
      %v2179 = vrot.slane %v399, 2
      %v2180 = vsel %vm593, %v2178, %v2179
      %v2181 = vrot.slane %v400, 2
      %v2182 = vsel %vm593, %v2179, %v2181
      %v2183 = vrot.slane %v401, 2
      %v2184 = vrot.slane %v402, 2
      %v2185 = vsel %vm593, %v2183, %v2184
      %v2186 = vrot.slane %v403, 2
      %v2187 = vsel %vm593, %v2184, %v2186
      %v2188 = vrot.slane %v404, 2
      %v2189 = vrot.slane %v405, 2
      %v2190 = vsel %vm593, %v2188, %v2189
      %v2191 = vrot.slane %v406, 2
      %v2192 = vsel %vm593, %v2189, %v2191
      %v2193 = vrot.slane %v407, 2
      %v2194 = vrot.slane %v408, 2
      %v2195 = vsel %vm593, %v2193, %v2194
      %v2196 = vrot.slane %v409, 2
      %v2197 = vsel %vm593, %v2194, %v2196
      %v2198 = vrot.slane %v410, 2
      %v2199 = vrot.slane %v411, 2
      %v2200 = vsel %vm593, %v2198, %v2199
      %v2201 = vrot.slane %v412, 2
      %v2202 = vsel %vm593, %v2199, %v2201
      %v2203 = vrot.slane %v413, 2
      %v2204 = vrot.slane %v414, 2
      %v2205 = vsel %vm593, %v2203, %v2204
      %v2206 = vrot.slane %v415, 2
      %v2207 = vsel %vm593, %v2204, %v2206
      %2208 = vrot.lane.b32.xlu0 %v2160, 6
      %v2209 = vpop.permute.xlu0 %2208
      %2210 = vrot.lane.b32.xlu0 %v2162, 6
      %v2211 = vpop.permute.xlu0 %2210
      %2212 = vrot.lane.b32.xlu0 %v2161, 6
      %v2213 = vpop.permute.xlu0 %2212
      %2214 = vrot.lane.b32.xlu0 %v2165, 6
      %v2215 = vpop.permute.xlu0 %2214
      %2216 = vrot.lane.b32.xlu0 %v2167, 6
      %v2217 = vpop.permute.xlu0 %2216
      %2218 = vrot.lane.b32.xlu0 %v2166, 6
      %v2219 = vpop.permute.xlu0 %2218
      %2220 = vrot.lane.b32.xlu0 %v2170, 6
      %v2221 = vpop.permute.xlu0 %2220
      %2222 = vrot.lane.b32.xlu0 %v2172, 6
      %v2223 = vpop.permute.xlu0 %2222
      %2224 = vrot.lane.b32.xlu0 %v2171, 6
      %v2225 = vpop.permute.xlu0 %2224
      %2226 = vrot.lane.b32.xlu0 %v2175, 6
      %v2227 = vpop.permute.xlu0 %2226
      %2228 = vrot.lane.b32.xlu0 %v2177, 6
      %v2229 = vpop.permute.xlu0 %2228
      %2230 = vrot.lane.b32.xlu0 %v2176, 6
      %v2231 = vpop.permute.xlu0 %2230
      %2232 = vrot.lane.b32.xlu0 %v2180, 6
      %v2233 = vpop.permute.xlu0 %2232
      %2234 = vrot.lane.b32.xlu0 %v2182, 6
      %v2235 = vpop.permute.xlu0 %2234
      %2236 = vrot.lane.b32.xlu0 %v2181, 6
      %v2237 = vpop.permute.xlu0 %2236
      %2238 = vrot.lane.b32.xlu0 %v2185, 6
      %v2239 = vpop.permute.xlu0 %2238
      %2240 = vrot.lane.b32.xlu0 %v2187, 6
      %v2241 = vpop.permute.xlu0 %2240
      %2242 = vrot.lane.b32.xlu0 %v2186, 6
      %v2243 = vpop.permute.xlu0 %2242
      %2244 = vrot.lane.b32.xlu0 %v2190, 6
      %v2245 = vpop.permute.xlu0 %2244
      %2246 = vrot.lane.b32.xlu0 %v2192, 6
      %v2247 = vpop.permute.xlu0 %2246
      %2248 = vrot.lane.b32.xlu0 %v2191, 6
      %v2249 = vpop.permute.xlu0 %2248
      %2250 = vrot.lane.b32.xlu0 %v2195, 6
      %v2251 = vpop.permute.xlu0 %2250
      %2252 = vrot.lane.b32.xlu0 %v2197, 6
      %v2253 = vpop.permute.xlu0 %2252
      %2254 = vrot.lane.b32.xlu0 %v2196, 6
      %v2255 = vpop.permute.xlu0 %2254
      %2256 = vrot.lane.b32.xlu0 %v2200, 6
      %v2257 = vpop.permute.xlu0 %2256
      %2258 = vrot.lane.b32.xlu0 %v2202, 6
      %v2259 = vpop.permute.xlu0 %2258
      %2260 = vrot.lane.b32.xlu0 %v2201, 6
      %v2261 = vpop.permute.xlu0 %2260
      %2262 = vrot.lane.b32.xlu0 %v2205, 6
      %v2263 = vpop.permute.xlu0 %2262
      %2264 = vrot.lane.b32.xlu0 %v2207, 6
      %v2265 = vpop.permute.xlu0 %2264
      %2266 = vrot.lane.b32.xlu0 %v2206, 6
      %v2267 = vpop.permute.xlu0 %2266
      %2301 = vrot.lane.b32.xlu0 %v389, 9
      %v2302 = vpop.permute.xlu0 %2301
      %2303 = vrot.lane.b32.xlu0 %v390, 9
      %v2304 = vpop.permute.xlu0 %2303
      %2305 = vrot.lane.b32.xlu0 %v391, 9
      %v2306 = vpop.permute.xlu0 %2305
      %2307 = vrot.lane.b32.xlu0 %v392, 9
      %v2308 = vpop.permute.xlu0 %2307
      %2309 = vrot.lane.b32.xlu0 %v393, 9
      %v2310 = vpop.permute.xlu0 %2309
      %2311 = vrot.lane.b32.xlu0 %v394, 9
      %v2312 = vpop.permute.xlu0 %2311
      %2313 = vrot.lane.b32.xlu0 %v395, 9
      %v2314 = vpop.permute.xlu0 %2313
      %2315 = vrot.lane.b32.xlu0 %v396, 9
      %v2316 = vpop.permute.xlu0 %2315
      %2317 = vrot.lane.b32.xlu0 %v397, 9
      %v2318 = vpop.permute.xlu0 %2317
      %2319 = vrot.lane.b32.xlu0 %v398, 9
      %v2320 = vpop.permute.xlu0 %2319
      %2321 = vrot.lane.b32.xlu0 %v399, 9
      %v2322 = vpop.permute.xlu0 %2321
      %2323 = vrot.lane.b32.xlu0 %v400, 9
      %v2324 = vpop.permute.xlu0 %2323
      %2325 = vrot.lane.b32.xlu0 %v401, 9
      %v2326 = vpop.permute.xlu0 %2325
      %2327 = vrot.lane.b32.xlu0 %v402, 9
      %v2328 = vpop.permute.xlu0 %2327
      %2329 = vrot.lane.b32.xlu0 %v403, 9
      %v2330 = vpop.permute.xlu0 %2329
      %2331 = vrot.lane.b32.xlu0 %v404, 9
      %v2332 = vpop.permute.xlu0 %2331
      %2333 = vrot.lane.b32.xlu0 %v405, 9
      %v2334 = vpop.permute.xlu0 %2333
      %2335 = vrot.lane.b32.xlu0 %v406, 9
      %v2336 = vpop.permute.xlu0 %2335
      %2337 = vrot.lane.b32.xlu0 %v407, 9
      %v2338 = vpop.permute.xlu0 %2337
      %2339 = vrot.lane.b32.xlu0 %v408, 9
      %v2340 = vpop.permute.xlu0 %2339
      %2341 = vrot.lane.b32.xlu0 %v409, 9
      %v2342 = vpop.permute.xlu0 %2341
      %2343 = vrot.lane.b32.xlu0 %v410, 9
      %v2344 = vpop.permute.xlu0 %2343
      %2345 = vrot.lane.b32.xlu0 %v411, 9
      %v2346 = vpop.permute.xlu0 %2345
      %2347 = vrot.lane.b32.xlu0 %v412, 9
      %v2348 = vpop.permute.xlu0 %2347
      %2349 = vrot.lane.b32.xlu0 %v413, 9
      %v2350 = vpop.permute.xlu0 %2349
      %2351 = vrot.lane.b32.xlu0 %v414, 9
      %v2352 = vpop.permute.xlu0 %2351
      %2353 = vrot.lane.b32.xlu0 %v415, 9
      %v2354 = vpop.permute.xlu0 %2353
      %2355 = vrot.lane.b32.xlu0 %v416, 9
      %v2356 = vpop.permute.xlu0 %2355
      %2357 = vrot.lane.b32.xlu0 %v417, 9
      %v2358 = vpop.permute.xlu0 %2357
      %2359 = vrot.lane.b32.xlu0 %v418, 9
      %v2360 = vpop.permute.xlu0 %2359
      %v2391 = vrot.slane %v416, 1
      %v2392 = vrot.slane %v417, 1
      %v2393 = vsel %vm452, %v2391, %v2392
      %v2394 = vrot.slane %v418, 1
      %v2395 = vsel %vm452, %v2392, %v2394
      %2396 = vrot.lane.b32.xlu0 %v2025, 12
      %v2397 = vpop.permute.xlu0 %2396
      %2398 = vrot.lane.b32.xlu0 %v2027, 12
      %v2399 = vpop.permute.xlu0 %2398
      %2400 = vrot.lane.b32.xlu0 %v2026, 12
      %v2401 = vpop.permute.xlu0 %2400
      %2402 = vrot.lane.b32.xlu0 %v2030, 12
      %v2403 = vpop.permute.xlu0 %2402
      %2404 = vrot.lane.b32.xlu0 %v2032, 12
      %v2405 = vpop.permute.xlu0 %2404
      %2406 = vrot.lane.b32.xlu0 %v2031, 12
      %v2407 = vpop.permute.xlu0 %2406
      %2408 = vrot.lane.b32.xlu0 %v2035, 12
      %v2409 = vpop.permute.xlu0 %2408
      %2410 = vrot.lane.b32.xlu0 %v2037, 12
      %v2411 = vpop.permute.xlu0 %2410
      %2412 = vrot.lane.b32.xlu0 %v2036, 12
      %v2413 = vpop.permute.xlu0 %2412
      %2414 = vrot.lane.b32.xlu0 %v2040, 12
      %v2415 = vpop.permute.xlu0 %2414
      %2416 = vrot.lane.b32.xlu0 %v2042, 12
      %v2417 = vpop.permute.xlu0 %2416
      %2418 = vrot.lane.b32.xlu0 %v2041, 12
      %v2419 = vpop.permute.xlu0 %2418
      %2420 = vrot.lane.b32.xlu0 %v2045, 12
      %v2421 = vpop.permute.xlu0 %2420
      %2422 = vrot.lane.b32.xlu0 %v2047, 12
      %v2423 = vpop.permute.xlu0 %2422
      %2424 = vrot.lane.b32.xlu0 %v2046, 12
      %v2425 = vpop.permute.xlu0 %2424
      %2426 = vrot.lane.b32.xlu0 %v2050, 12
      %v2427 = vpop.permute.xlu0 %2426
      %2428 = vrot.lane.b32.xlu0 %v2052, 12
      %v2429 = vpop.permute.xlu0 %2428
      %2430 = vrot.lane.b32.xlu0 %v2051, 12
      %v2431 = vpop.permute.xlu0 %2430
      %2432 = vrot.lane.b32.xlu0 %v2055, 12
      %v2433 = vpop.permute.xlu0 %2432
      %2434 = vrot.lane.b32.xlu0 %v2057, 12
      %v2435 = vpop.permute.xlu0 %2434
      %2436 = vrot.lane.b32.xlu0 %v2056, 12
      %v2437 = vpop.permute.xlu0 %2436
      %2438 = vrot.lane.b32.xlu0 %v2060, 12
      %v2439 = vpop.permute.xlu0 %2438
      %2440 = vrot.lane.b32.xlu0 %v2062, 12
      %v2441 = vpop.permute.xlu0 %2440
      %2442 = vrot.lane.b32.xlu0 %v2061, 12
      %v2443 = vpop.permute.xlu0 %2442
      %2444 = vrot.lane.b32.xlu0 %v2065, 12
      %v2445 = vpop.permute.xlu0 %2444
      %2446 = vrot.lane.b32.xlu0 %v2067, 12
      %v2447 = vpop.permute.xlu0 %2446
      %2448 = vrot.lane.b32.xlu0 %v2066, 12
      %v2449 = vpop.permute.xlu0 %2448
      %2450 = vrot.lane.b32.xlu0 %v2393, 12
      %v2451 = vpop.permute.xlu0 %2450
      %2452 = vrot.lane.b32.xlu0 %v2395, 12
      %v2453 = vpop.permute.xlu0 %2452
      %2454 = vrot.lane.b32.xlu0 %v2394, 12
      %v2455 = vpop.permute.xlu0 %2454
      %v2486 = vrot.slane %v416, 2
      %v2487 = vrot.slane %v417, 2
      %v2488 = vsel %vm593, %v2486, %v2487
      %v2489 = vrot.slane %v418, 2
      %v2490 = vsel %vm593, %v2487, %v2489
      %2491 = vrot.lane.b32.xlu0 %v2165, 15
      %v2492 = vpop.permute.xlu0 %2491
      %2493 = vrot.lane.b32.xlu0 %v2167, 15
      %v2494 = vpop.permute.xlu0 %2493
      %2495 = vrot.lane.b32.xlu0 %v2166, 15
      %v2496 = vpop.permute.xlu0 %2495
      %2497 = vrot.lane.b32.xlu0 %v2170, 15
      %v2498 = vpop.permute.xlu0 %2497
      %2499 = vrot.lane.b32.xlu0 %v2172, 15
      %v2500 = vpop.permute.xlu0 %2499
      %2501 = vrot.lane.b32.xlu0 %v2171, 15
      %v2502 = vpop.permute.xlu0 %2501
      %2503 = vrot.lane.b32.xlu0 %v2175, 15
      %v2504 = vpop.permute.xlu0 %2503
      %2505 = vrot.lane.b32.xlu0 %v2177, 15
      %v2506 = vpop.permute.xlu0 %2505
      %2507 = vrot.lane.b32.xlu0 %v2176, 15
      %v2508 = vpop.permute.xlu0 %2507
      %2509 = vrot.lane.b32.xlu0 %v2180, 15
      %v2510 = vpop.permute.xlu0 %2509
      %2511 = vrot.lane.b32.xlu0 %v2182, 15
      %v2512 = vpop.permute.xlu0 %2511
      %2513 = vrot.lane.b32.xlu0 %v2181, 15
      %v2514 = vpop.permute.xlu0 %2513
      %2515 = vrot.lane.b32.xlu0 %v2185, 15
      %v2516 = vpop.permute.xlu0 %2515
      %2517 = vrot.lane.b32.xlu0 %v2187, 15
      %v2518 = vpop.permute.xlu0 %2517
      %2519 = vrot.lane.b32.xlu0 %v2186, 15
      %v2520 = vpop.permute.xlu0 %2519
      %2521 = vrot.lane.b32.xlu0 %v2190, 15
      %v2522 = vpop.permute.xlu0 %2521
      %2523 = vrot.lane.b32.xlu0 %v2192, 15
      %v2524 = vpop.permute.xlu0 %2523
      %2525 = vrot.lane.b32.xlu0 %v2191, 15
      %v2526 = vpop.permute.xlu0 %2525
      %2527 = vrot.lane.b32.xlu0 %v2195, 15
      %v2528 = vpop.permute.xlu0 %2527
      %2529 = vrot.lane.b32.xlu0 %v2197, 15
      %v2530 = vpop.permute.xlu0 %2529
      %2531 = vrot.lane.b32.xlu0 %v2196, 15
      %v2532 = vpop.permute.xlu0 %2531
      %2533 = vrot.lane.b32.xlu0 %v2200, 15
      %v2534 = vpop.permute.xlu0 %2533
      %2535 = vrot.lane.b32.xlu0 %v2202, 15
      %v2536 = vpop.permute.xlu0 %2535
      %2537 = vrot.lane.b32.xlu0 %v2201, 15
      %v2538 = vpop.permute.xlu0 %2537
      %2539 = vrot.lane.b32.xlu0 %v2205, 15
      %v2540 = vpop.permute.xlu0 %2539
      %2541 = vrot.lane.b32.xlu0 %v2207, 15
      %v2542 = vpop.permute.xlu0 %2541
      %2543 = vrot.lane.b32.xlu0 %v2206, 15
      %v2544 = vpop.permute.xlu0 %2543
      %2545 = vrot.lane.b32.xlu0 %v2488, 15
      %v2546 = vpop.permute.xlu0 %2545
      %2547 = vrot.lane.b32.xlu0 %v2490, 15
      %v2548 = vpop.permute.xlu0 %2547
      %2549 = vrot.lane.b32.xlu0 %v2489, 15
      %v2550 = vpop.permute.xlu0 %2549
      %2584 = vrot.lane.b32.xlu0 %v392, 18
      %v2585 = vpop.permute.xlu0 %2584
      %2586 = vrot.lane.b32.xlu0 %v393, 18
      %v2587 = vpop.permute.xlu0 %2586
      %2588 = vrot.lane.b32.xlu0 %v394, 18
      %v2589 = vpop.permute.xlu0 %2588
      %2590 = vrot.lane.b32.xlu0 %v395, 18
      %v2591 = vpop.permute.xlu0 %2590
      %2592 = vrot.lane.b32.xlu0 %v396, 18
      %v2593 = vpop.permute.xlu0 %2592
      %2594 = vrot.lane.b32.xlu0 %v397, 18
      %v2595 = vpop.permute.xlu0 %2594
      %2596 = vrot.lane.b32.xlu0 %v398, 18
      %v2597 = vpop.permute.xlu0 %2596
      %2598 = vrot.lane.b32.xlu0 %v399, 18
      %v2599 = vpop.permute.xlu0 %2598
      %2600 = vrot.lane.b32.xlu0 %v400, 18
      %v2601 = vpop.permute.xlu0 %2600
      %2602 = vrot.lane.b32.xlu0 %v401, 18
      %v2603 = vpop.permute.xlu0 %2602
      %2604 = vrot.lane.b32.xlu0 %v402, 18
      %v2605 = vpop.permute.xlu0 %2604
      %2606 = vrot.lane.b32.xlu0 %v403, 18
      %v2607 = vpop.permute.xlu0 %2606
      %2608 = vrot.lane.b32.xlu0 %v404, 18
      %v2609 = vpop.permute.xlu0 %2608
      %2610 = vrot.lane.b32.xlu0 %v405, 18
      %v2611 = vpop.permute.xlu0 %2610
      %2612 = vrot.lane.b32.xlu0 %v406, 18
      %v2613 = vpop.permute.xlu0 %2612
      %2614 = vrot.lane.b32.xlu0 %v407, 18
      %v2615 = vpop.permute.xlu0 %2614
      %2616 = vrot.lane.b32.xlu0 %v408, 18
      %v2617 = vpop.permute.xlu0 %2616
      %2618 = vrot.lane.b32.xlu0 %v409, 18
      %v2619 = vpop.permute.xlu0 %2618
      %2620 = vrot.lane.b32.xlu0 %v410, 18
      %v2621 = vpop.permute.xlu0 %2620
      %2622 = vrot.lane.b32.xlu0 %v411, 18
      %v2623 = vpop.permute.xlu0 %2622
      %2624 = vrot.lane.b32.xlu0 %v412, 18
      %v2625 = vpop.permute.xlu0 %2624
      %2626 = vrot.lane.b32.xlu0 %v413, 18
      %v2627 = vpop.permute.xlu0 %2626
      %2628 = vrot.lane.b32.xlu0 %v414, 18
      %v2629 = vpop.permute.xlu0 %2628
      %2630 = vrot.lane.b32.xlu0 %v415, 18
      %v2631 = vpop.permute.xlu0 %2630
      %2632 = vrot.lane.b32.xlu0 %v416, 18
      %v2633 = vpop.permute.xlu0 %2632
      %2634 = vrot.lane.b32.xlu0 %v417, 18
      %v2635 = vpop.permute.xlu0 %2634
      %2636 = vrot.lane.b32.xlu0 %v418, 18
      %v2637 = vpop.permute.xlu0 %2636
      %2638 = vrot.lane.b32.xlu0 %v419, 18
      %v2639 = vpop.permute.xlu0 %2638
      %2640 = vrot.lane.b32.xlu0 %v420, 18
      %v2641 = vpop.permute.xlu0 %2640
      %2642 = vrot.lane.b32.xlu0 %v421, 18
      %v2643 = vpop.permute.xlu0 %2642
      %v2674 = vrot.slane %v419, 1
      %v2675 = vrot.slane %v420, 1
      %v2676 = vsel %vm452, %v2674, %v2675
      %v2677 = vrot.slane %v421, 1
      %v2678 = vsel %vm452, %v2675, %v2677
      %2679 = vrot.lane.b32.xlu0 %v2030, 21
      %v2680 = vpop.permute.xlu0 %2679
      %2681 = vrot.lane.b32.xlu0 %v2032, 21
      %v2682 = vpop.permute.xlu0 %2681
      %2683 = vrot.lane.b32.xlu0 %v2031, 21
      %v2684 = vpop.permute.xlu0 %2683
      %2685 = vrot.lane.b32.xlu0 %v2035, 21
      %v2686 = vpop.permute.xlu0 %2685
      %2687 = vrot.lane.b32.xlu0 %v2037, 21
      %v2688 = vpop.permute.xlu0 %2687
      %2689 = vrot.lane.b32.xlu0 %v2036, 21
      %v2690 = vpop.permute.xlu0 %2689
      %2691 = vrot.lane.b32.xlu0 %v2040, 21
      %v2692 = vpop.permute.xlu0 %2691
      %2693 = vrot.lane.b32.xlu0 %v2042, 21
      %v2694 = vpop.permute.xlu0 %2693
      %2695 = vrot.lane.b32.xlu0 %v2041, 21
      %v2696 = vpop.permute.xlu0 %2695
      %2697 = vrot.lane.b32.xlu0 %v2045, 21
      %v2698 = vpop.permute.xlu0 %2697
      %2699 = vrot.lane.b32.xlu0 %v2047, 21
      %v2700 = vpop.permute.xlu0 %2699
      %2701 = vrot.lane.b32.xlu0 %v2046, 21
      %v2702 = vpop.permute.xlu0 %2701
      %2703 = vrot.lane.b32.xlu0 %v2050, 21
      %v2704 = vpop.permute.xlu0 %2703
      %2705 = vrot.lane.b32.xlu0 %v2052, 21
      %v2706 = vpop.permute.xlu0 %2705
      %2707 = vrot.lane.b32.xlu0 %v2051, 21
      %v2708 = vpop.permute.xlu0 %2707
      %2709 = vrot.lane.b32.xlu0 %v2055, 21
      %v2710 = vpop.permute.xlu0 %2709
      %2711 = vrot.lane.b32.xlu0 %v2057, 21
      %v2712 = vpop.permute.xlu0 %2711
      %2713 = vrot.lane.b32.xlu0 %v2056, 21
      %v2714 = vpop.permute.xlu0 %2713
      %2715 = vrot.lane.b32.xlu0 %v2060, 21
      %v2716 = vpop.permute.xlu0 %2715
      %2717 = vrot.lane.b32.xlu0 %v2062, 21
      %v2718 = vpop.permute.xlu0 %2717
      %2719 = vrot.lane.b32.xlu0 %v2061, 21
      %v2720 = vpop.permute.xlu0 %2719
      %2721 = vrot.lane.b32.xlu0 %v2065, 21
      %v2722 = vpop.permute.xlu0 %2721
      %2723 = vrot.lane.b32.xlu0 %v2067, 21
      %v2724 = vpop.permute.xlu0 %2723
      %2725 = vrot.lane.b32.xlu0 %v2066, 21
      %v2726 = vpop.permute.xlu0 %2725
      %2727 = vrot.lane.b32.xlu0 %v2393, 21
      %v2728 = vpop.permute.xlu0 %2727
      %2729 = vrot.lane.b32.xlu0 %v2395, 21
      %v2730 = vpop.permute.xlu0 %2729
      %2731 = vrot.lane.b32.xlu0 %v2394, 21
      %v2732 = vpop.permute.xlu0 %2731
      %2733 = vrot.lane.b32.xlu0 %v2676, 21
      %v2734 = vpop.permute.xlu0 %2733
      %2735 = vrot.lane.b32.xlu0 %v2678, 21
      %v2736 = vpop.permute.xlu0 %2735
      %2737 = vrot.lane.b32.xlu0 %v2677, 21
      %v2738 = vpop.permute.xlu0 %2737
      %v2769 = vrot.slane %v419, 2
      %v2770 = vrot.slane %v420, 2
      %v2771 = vsel %vm593, %v2769, %v2770
      %v2772 = vrot.slane %v421, 2
      %v2773 = vsel %vm593, %v2770, %v2772
      %2774 = vrot.lane.b32.xlu0 %v2170, 24
      %v2775 = vpop.permute.xlu0 %2774
      %2776 = vrot.lane.b32.xlu0 %v2172, 24
      %v2777 = vpop.permute.xlu0 %2776
      %2778 = vrot.lane.b32.xlu0 %v2171, 24
      %v2779 = vpop.permute.xlu0 %2778
      %2780 = vrot.lane.b32.xlu0 %v2175, 24
      %v2781 = vpop.permute.xlu0 %2780
      %2782 = vrot.lane.b32.xlu0 %v2177, 24
      %v2783 = vpop.permute.xlu0 %2782
      %2784 = vrot.lane.b32.xlu0 %v2176, 24
      %v2785 = vpop.permute.xlu0 %2784
      %2786 = vrot.lane.b32.xlu0 %v2180, 24
      %v2787 = vpop.permute.xlu0 %2786
      %2788 = vrot.lane.b32.xlu0 %v2182, 24
      %v2789 = vpop.permute.xlu0 %2788
      %2790 = vrot.lane.b32.xlu0 %v2181, 24
      %v2791 = vpop.permute.xlu0 %2790
      %2792 = vrot.lane.b32.xlu0 %v2185, 24
      %v2793 = vpop.permute.xlu0 %2792
      %2794 = vrot.lane.b32.xlu0 %v2187, 24
      %v2795 = vpop.permute.xlu0 %2794
      %2796 = vrot.lane.b32.xlu0 %v2186, 24
      %v2797 = vpop.permute.xlu0 %2796
      %2798 = vrot.lane.b32.xlu0 %v2190, 24
      %v2799 = vpop.permute.xlu0 %2798
      %2800 = vrot.lane.b32.xlu0 %v2192, 24
      %v2801 = vpop.permute.xlu0 %2800
      %2802 = vrot.lane.b32.xlu0 %v2191, 24
      %v2803 = vpop.permute.xlu0 %2802
      %2804 = vrot.lane.b32.xlu0 %v2195, 24
      %v2805 = vpop.permute.xlu0 %2804
      %2806 = vrot.lane.b32.xlu0 %v2197, 24
      %v2807 = vpop.permute.xlu0 %2806
      %2808 = vrot.lane.b32.xlu0 %v2196, 24
      %v2809 = vpop.permute.xlu0 %2808
      %2810 = vrot.lane.b32.xlu0 %v2200, 24
      %v2811 = vpop.permute.xlu0 %2810
      %2812 = vrot.lane.b32.xlu0 %v2202, 24
      %v2813 = vpop.permute.xlu0 %2812
      %2814 = vrot.lane.b32.xlu0 %v2201, 24
      %v2815 = vpop.permute.xlu0 %2814
      %2816 = vrot.lane.b32.xlu0 %v2205, 24
      %v2817 = vpop.permute.xlu0 %2816
      %2818 = vrot.lane.b32.xlu0 %v2207, 24
      %v2819 = vpop.permute.xlu0 %2818
      %2820 = vrot.lane.b32.xlu0 %v2206, 24
      %v2821 = vpop.permute.xlu0 %2820
      %2822 = vrot.lane.b32.xlu0 %v2488, 24
      %v2823 = vpop.permute.xlu0 %2822
      %2824 = vrot.lane.b32.xlu0 %v2490, 24
      %v2825 = vpop.permute.xlu0 %2824
      %2826 = vrot.lane.b32.xlu0 %v2489, 24
      %v2827 = vpop.permute.xlu0 %2826
      %2828 = vrot.lane.b32.xlu0 %v2771, 24
      %v2829 = vpop.permute.xlu0 %2828
      %2830 = vrot.lane.b32.xlu0 %v2773, 24
      %v2831 = vpop.permute.xlu0 %2830
      %2832 = vrot.lane.b32.xlu0 %v2772, 24
      %v2833 = vpop.permute.xlu0 %2832
      %v2864 = vsel %vm1300, %v386, %v2069
      %v2865 = vsel %vm1300, %v387, %v2071
      %v2866 = vsel %vm1300, %v388, %v2073
      %v2867 = vsel %vm1300, %v389, %v2075
      %v2868 = vsel %vm1300, %v390, %v2077
      %v2869 = vsel %vm1300, %v391, %v2079
      %v2870 = vsel %vm1300, %v392, %v2081
      %v2871 = vsel %vm1300, %v393, %v2083
      %v2872 = vsel %vm1300, %v394, %v2085
      %v2873 = vsel %vm1300, %v395, %v2087
      %v2874 = vsel %vm1300, %v396, %v2089
      %v2875 = vsel %vm1300, %v397, %v2091
      %v2876 = vsel %vm1300, %v398, %v2093
      %v2877 = vsel %vm1300, %v399, %v2095
      %v2878 = vsel %vm1300, %v400, %v2097
      %v2879 = vsel %vm1300, %v401, %v2099
      %v2880 = vsel %vm1300, %v402, %v2101
      %v2881 = vsel %vm1300, %v403, %v2103
      %v2882 = vsel %vm1300, %v404, %v2105
      %v2883 = vsel %vm1300, %v405, %v2107
      %v2884 = vsel %vm1300, %v406, %v2109
      %v2885 = vsel %vm1300, %v407, %v2111
      %v2886 = vsel %vm1300, %v408, %v2113
      %v2887 = vsel %vm1300, %v409, %v2115
      %v2888 = vsel %vm1300, %v410, %v2117
      %v2889 = vsel %vm1300, %v411, %v2119
      %v2890 = vsel %vm1300, %v412, %v2121
      %v2891 = vsel %vm1300, %v413, %v2123
      %v2892 = vsel %vm1300, %v414, %v2125
      %v2893 = vsel %vm1300, %v415, %v2127
      %v2894 = vsel %vm1331, %v2864, %v2209
      %v2895 = vsel %vm1331, %v2865, %v2211
      %v2896 = vsel %vm1331, %v2866, %v2213
      %v2897 = vsel %vm1331, %v2867, %v2215
      %v2898 = vsel %vm1331, %v2868, %v2217
      %v2899 = vsel %vm1331, %v2869, %v2219
      %v2900 = vsel %vm1331, %v2870, %v2221
      %v2901 = vsel %vm1331, %v2871, %v2223
      %v2902 = vsel %vm1331, %v2872, %v2225
      %v2903 = vsel %vm1331, %v2873, %v2227
      %v2904 = vsel %vm1331, %v2874, %v2229
      %v2905 = vsel %vm1331, %v2875, %v2231
      %v2906 = vsel %vm1331, %v2876, %v2233
      %v2907 = vsel %vm1331, %v2877, %v2235
      %v2908 = vsel %vm1331, %v2878, %v2237
      %v2909 = vsel %vm1331, %v2879, %v2239
      %v2910 = vsel %vm1331, %v2880, %v2241
      %v2911 = vsel %vm1331, %v2881, %v2243
      %v2912 = vsel %vm1331, %v2882, %v2245
      %v2913 = vsel %vm1331, %v2883, %v2247
      %v2914 = vsel %vm1331, %v2884, %v2249
      %v2915 = vsel %vm1331, %v2885, %v2251
      %v2916 = vsel %vm1331, %v2886, %v2253
      %v2917 = vsel %vm1331, %v2887, %v2255
      %v2918 = vsel %vm1331, %v2888, %v2257
      %v2919 = vsel %vm1331, %v2889, %v2259
      %v2920 = vsel %vm1331, %v2890, %v2261
      %v2921 = vsel %vm1331, %v2891, %v2263
      %v2922 = vsel %vm1331, %v2892, %v2265
      %v2923 = vsel %vm1331, %v2893, %v2267
      %v2924 = vsel %vm1362, %v2894, %v2302
      %v2925 = vsel %vm1362, %v2895, %v2304
      %v2926 = vsel %vm1362, %v2896, %v2306
      %v2927 = vsel %vm1362, %v2897, %v2308
      %v2928 = vsel %vm1362, %v2898, %v2310
      %v2929 = vsel %vm1362, %v2899, %v2312
      %v2930 = vsel %vm1362, %v2900, %v2314
      %v2931 = vsel %vm1362, %v2901, %v2316
      %v2932 = vsel %vm1362, %v2902, %v2318
      %v2933 = vsel %vm1362, %v2903, %v2320
      %v2934 = vsel %vm1362, %v2904, %v2322
      %v2935 = vsel %vm1362, %v2905, %v2324
      %v2936 = vsel %vm1362, %v2906, %v2326
      %v2937 = vsel %vm1362, %v2907, %v2328
      %v2938 = vsel %vm1362, %v2908, %v2330
      %v2939 = vsel %vm1362, %v2909, %v2332
      %v2940 = vsel %vm1362, %v2910, %v2334
      %v2941 = vsel %vm1362, %v2911, %v2336
      %v2942 = vsel %vm1362, %v2912, %v2338
      %v2943 = vsel %vm1362, %v2913, %v2340
      %v2944 = vsel %vm1362, %v2914, %v2342
      %v2945 = vsel %vm1362, %v2915, %v2344
      %v2946 = vsel %vm1362, %v2916, %v2346
      %v2947 = vsel %vm1362, %v2917, %v2348
      %v2948 = vsel %vm1362, %v2918, %v2350
      %v2949 = vsel %vm1362, %v2919, %v2352
      %v2950 = vsel %vm1362, %v2920, %v2354
      %v2951 = vsel %vm1362, %v2921, %v2356
      %v2952 = vsel %vm1362, %v2922, %v2358
      %v2953 = vsel %vm1362, %v2923, %v2360
      %v2954 = vsel %vm1393, %v2924, %v2397
      %v2955 = vsel %vm1393, %v2925, %v2399
      %v2956 = vsel %vm1393, %v2926, %v2401
      %v2957 = vsel %vm1393, %v2927, %v2403
      %v2958 = vsel %vm1393, %v2928, %v2405
      %v2959 = vsel %vm1393, %v2929, %v2407
      %v2960 = vsel %vm1393, %v2930, %v2409
      %v2961 = vsel %vm1393, %v2931, %v2411
      %v2962 = vsel %vm1393, %v2932, %v2413
      %v2963 = vsel %vm1393, %v2933, %v2415
      %v2964 = vsel %vm1393, %v2934, %v2417
      %v2965 = vsel %vm1393, %v2935, %v2419
      %v2966 = vsel %vm1393, %v2936, %v2421
      %v2967 = vsel %vm1393, %v2937, %v2423
      %v2968 = vsel %vm1393, %v2938, %v2425
      %v2969 = vsel %vm1393, %v2939, %v2427
      %v2970 = vsel %vm1393, %v2940, %v2429
      %v2971 = vsel %vm1393, %v2941, %v2431
      %v2972 = vsel %vm1393, %v2942, %v2433
      %v2973 = vsel %vm1393, %v2943, %v2435
      %v2974 = vsel %vm1393, %v2944, %v2437
      %v2975 = vsel %vm1393, %v2945, %v2439
      %v2976 = vsel %vm1393, %v2946, %v2441
      %v2977 = vsel %vm1393, %v2947, %v2443
      %v2978 = vsel %vm1393, %v2948, %v2445
      %v2979 = vsel %vm1393, %v2949, %v2447
      %v2980 = vsel %vm1393, %v2950, %v2449
      %v2981 = vsel %vm1393, %v2951, %v2451
      %v2982 = vsel %vm1393, %v2952, %v2453
      %v2983 = vsel %vm1393, %v2953, %v2455
      %v2984 = vsel %vm1424, %v2954, %v2492
      %v2985 = vsel %vm1424, %v2955, %v2494
      %v2986 = vsel %vm1424, %v2956, %v2496
      %v2987 = vsel %vm1424, %v2957, %v2498
      %v2988 = vsel %vm1424, %v2958, %v2500
      %v2989 = vsel %vm1424, %v2959, %v2502
      %v2990 = vsel %vm1424, %v2960, %v2504
      %v2991 = vsel %vm1424, %v2961, %v2506
      %v2992 = vsel %vm1424, %v2962, %v2508
      %v2993 = vsel %vm1424, %v2963, %v2510
      %v2994 = vsel %vm1424, %v2964, %v2512
      %v2995 = vsel %vm1424, %v2965, %v2514
      %v2996 = vsel %vm1424, %v2966, %v2516
      %v2997 = vsel %vm1424, %v2967, %v2518
      %v2998 = vsel %vm1424, %v2968, %v2520
      %v2999 = vsel %vm1424, %v2969, %v2522
      %v3000 = vsel %vm1424, %v2970, %v2524
      %v3001 = vsel %vm1424, %v2971, %v2526
      %v3002 = vsel %vm1424, %v2972, %v2528
      %v3003 = vsel %vm1424, %v2973, %v2530
      %v3004 = vsel %vm1424, %v2974, %v2532
      %v3005 = vsel %vm1424, %v2975, %v2534
      %v3006 = vsel %vm1424, %v2976, %v2536
      %v3007 = vsel %vm1424, %v2977, %v2538
      %v3008 = vsel %vm1424, %v2978, %v2540
      %v3009 = vsel %vm1424, %v2979, %v2542
      %v3010 = vsel %vm1424, %v2980, %v2544
      %v3011 = vsel %vm1424, %v2981, %v2546
      %v3012 = vsel %vm1424, %v2982, %v2548
      %v3013 = vsel %vm1424, %v2983, %v2550
      %v3014 = vsel %vm1455, %v2984, %v2585
      %v3015 = vsel %vm1455, %v2985, %v2587
      %v3016 = vsel %vm1455, %v2986, %v2589
      %v3017 = vsel %vm1455, %v2987, %v2591
      %v3018 = vsel %vm1455, %v2988, %v2593
      %v3019 = vsel %vm1455, %v2989, %v2595
      %v3020 = vsel %vm1455, %v2990, %v2597
      %v3021 = vsel %vm1455, %v2991, %v2599
      %v3022 = vsel %vm1455, %v2992, %v2601
      %v3023 = vsel %vm1455, %v2993, %v2603
      %v3024 = vsel %vm1455, %v2994, %v2605
      %v3025 = vsel %vm1455, %v2995, %v2607
      %v3026 = vsel %vm1455, %v2996, %v2609
      %v3027 = vsel %vm1455, %v2997, %v2611
      %v3028 = vsel %vm1455, %v2998, %v2613
      %v3029 = vsel %vm1455, %v2999, %v2615
      %v3030 = vsel %vm1455, %v3000, %v2617
      %v3031 = vsel %vm1455, %v3001, %v2619
      %v3032 = vsel %vm1455, %v3002, %v2621
      %v3033 = vsel %vm1455, %v3003, %v2623
      %v3034 = vsel %vm1455, %v3004, %v2625
      %v3035 = vsel %vm1455, %v3005, %v2627
      %v3036 = vsel %vm1455, %v3006, %v2629
      %v3037 = vsel %vm1455, %v3007, %v2631
      %v3038 = vsel %vm1455, %v3008, %v2633
      %v3039 = vsel %vm1455, %v3009, %v2635
      %v3040 = vsel %vm1455, %v3010, %v2637
      %v3041 = vsel %vm1455, %v3011, %v2639
      %v3042 = vsel %vm1455, %v3012, %v2641
      %v3043 = vsel %vm1455, %v3013, %v2643
      %v3044 = vsel %vm1486, %v3014, %v2680
      %v3045 = vsel %vm1486, %v3015, %v2682
      %v3046 = vsel %vm1486, %v3016, %v2684
      %v3047 = vsel %vm1486, %v3017, %v2686
      %v3048 = vsel %vm1486, %v3018, %v2688
      %v3049 = vsel %vm1486, %v3019, %v2690
      %v3050 = vsel %vm1486, %v3020, %v2692
      %v3051 = vsel %vm1486, %v3021, %v2694
      %v3052 = vsel %vm1486, %v3022, %v2696
      %v3053 = vsel %vm1486, %v3023, %v2698
      %v3054 = vsel %vm1486, %v3024, %v2700
      %v3055 = vsel %vm1486, %v3025, %v2702
      %v3056 = vsel %vm1486, %v3026, %v2704
      %v3057 = vsel %vm1486, %v3027, %v2706
      %v3058 = vsel %vm1486, %v3028, %v2708
      %v3059 = vsel %vm1486, %v3029, %v2710
      %v3060 = vsel %vm1486, %v3030, %v2712
      %v3061 = vsel %vm1486, %v3031, %v2714
      %v3062 = vsel %vm1486, %v3032, %v2716
      %v3063 = vsel %vm1486, %v3033, %v2718
      %v3064 = vsel %vm1486, %v3034, %v2720
      %v3065 = vsel %vm1486, %v3035, %v2722
      %v3066 = vsel %vm1486, %v3036, %v2724
      %v3067 = vsel %vm1486, %v3037, %v2726
      %v3068 = vsel %vm1486, %v3038, %v2728
      %v3069 = vsel %vm1486, %v3039, %v2730
      %v3070 = vsel %vm1486, %v3040, %v2732
      %v3071 = vsel %vm1486, %v3041, %v2734
      %v3072 = vsel %vm1486, %v3042, %v2736
      %v3073 = vsel %vm1486, %v3043, %v2738
      %v3074 = vsel %vm1517, %v3044, %v2775
      %v3075 = vsel %vm1517, %v3045, %v2777
      %v3076 = vsel %vm1517, %v3046, %v2779
      %v3077 = vsel %vm1517, %v3047, %v2781
      %v3078 = vsel %vm1517, %v3048, %v2783
      %v3079 = vsel %vm1517, %v3049, %v2785
      %v3080 = vsel %vm1517, %v3050, %v2787
      %v3081 = vsel %vm1517, %v3051, %v2789
      %v3082 = vsel %vm1517, %v3052, %v2791
      %v3083 = vsel %vm1517, %v3053, %v2793
      %v3084 = vsel %vm1517, %v3054, %v2795
      %v3085 = vsel %vm1517, %v3055, %v2797
      %v3086 = vsel %vm1517, %v3056, %v2799
      %v3087 = vsel %vm1517, %v3057, %v2801
      %v3088 = vsel %vm1517, %v3058, %v2803
      %v3089 = vsel %vm1517, %v3059, %v2805
      %v3090 = vsel %vm1517, %v3060, %v2807
      %v3091 = vsel %vm1517, %v3061, %v2809
      %v3092 = vsel %vm1517, %v3062, %v2811
      %v3093 = vsel %vm1517, %v3063, %v2813
      %v3094 = vsel %vm1517, %v3064, %v2815
      %v3095 = vsel %vm1517, %v3065, %v2817
      %v3096 = vsel %vm1517, %v3066, %v2819
      %v3097 = vsel %vm1517, %v3067, %v2821
      %v3098 = vsel %vm1517, %v3068, %v2823
      %v3099 = vsel %vm1517, %v3069, %v2825
      %v3100 = vsel %vm1517, %v3070, %v2827
      %v3101 = vsel %vm1517, %v3071, %v2829
      %v3102 = vsel %vm1517, %v3072, %v2831
      %v3103 = vsel %vm1517, %v3073, %v2833
      %v3134 = vcombine.high %v3074, %v3074
      %v3136 = vunpack.c.l.s4 1983009808
      %v3137 = vunpack.c.0.s8 %v3136
      %v3138 = vlaneseq
      %v3139 = vshrl.u32 %v3138, 7
      %v3140 = vsub.s32 %v3137, %v3139
      %v3141 = vrot.slane %v3074, %v3140
      %v3143 = vunpack.c.l.s4 1983009808
      %v3144 = vunpack.c.0.s8 %v3143
      %v3145 = vlaneseq
      %v3146 = vshrl.u32 %v3145, 7
      %v3147 = vsub.s32 %v3144, %v3146
      %v3148 = vrot.slane %v3134, %v3147
      %v3149 = vcombine.high %v3141, %v3141
      %v3150 = vcombine.high %v3148, %v3148
      %v3151 = vcombine.high %v3075, %v3075
      %v3153 = vunpack.c.l.s4 1983009808
      %v3154 = vunpack.c.0.s8 %v3153
      %v3155 = vlaneseq
      %v3156 = vshrl.u32 %v3155, 7
      %v3157 = vsub.s32 %v3154, %v3156
      %v3158 = vrot.slane %v3075, %v3157
      %v3160 = vunpack.c.l.s4 1983009808
      %v3161 = vunpack.c.0.s8 %v3160
      %v3162 = vlaneseq
      %v3163 = vshrl.u32 %v3162, 7
      %v3164 = vsub.s32 %v3161, %v3163
      %v3165 = vrot.slane %v3151, %v3164
      %v3166 = vcombine.high %v3158, %v3158
      %v3167 = vcombine.high %v3165, %v3165
      %v3169 = vunpack.c.l.s4 1983009808
      %v3170 = vunpack.c.0.s8 %v3169
      %v3171 = vlaneseq
      %v3172 = vshrl.u32 %v3171, 7
      %v3173 = vsub.s32 %v3170, %v3172
      %v3174 = vrot.slane %v3076, %v3173
      %v3175 = vcombine.high %v3077, %v3077
      %v3177 = vunpack.c.l.s4 1983009808
      %v3178 = vunpack.c.0.s8 %v3177
      %v3179 = vlaneseq
      %v3180 = vshrl.u32 %v3179, 7
      %v3181 = vsub.s32 %v3178, %v3180
      %v3182 = vrot.slane %v3077, %v3181
      %v3184 = vunpack.c.l.s4 1983009808
      %v3185 = vunpack.c.0.s8 %v3184
      %v3186 = vlaneseq
      %v3187 = vshrl.u32 %v3186, 7
      %v3188 = vsub.s32 %v3185, %v3187
      %v3189 = vrot.slane %v3175, %v3188
      %v3190 = vcombine.high %v3182, %v3182
      %v3191 = vcombine.high %v3189, %v3189
      %v3192 = vcombine.high %v3078, %v3078
      %v3194 = vunpack.c.l.s4 1983009808
      %v3195 = vunpack.c.0.s8 %v3194
      %v3196 = vlaneseq
      %v3197 = vshrl.u32 %v3196, 7
      %v3198 = vsub.s32 %v3195, %v3197
      %v3199 = vrot.slane %v3078, %v3198
      %v3201 = vunpack.c.l.s4 1983009808
      %v3202 = vunpack.c.0.s8 %v3201
      %v3203 = vlaneseq
      %v3204 = vshrl.u32 %v3203, 7
      %v3205 = vsub.s32 %v3202, %v3204
      %v3206 = vrot.slane %v3192, %v3205
      %v3207 = vcombine.high %v3199, %v3199
      %v3208 = vcombine.high %v3206, %v3206
      %v3210 = vunpack.c.l.s4 1983009808
      %v3211 = vunpack.c.0.s8 %v3210
      %v3212 = vlaneseq
      %v3213 = vshrl.u32 %v3212, 7
      %v3214 = vsub.s32 %v3211, %v3213
      %v3215 = vrot.slane %v3079, %v3214
      %v3216 = vcombine.high %v3080, %v3080
      %v3218 = vunpack.c.l.s4 1983009808
      %v3219 = vunpack.c.0.s8 %v3218
      %v3220 = vlaneseq
      %v3221 = vshrl.u32 %v3220, 7
      %v3222 = vsub.s32 %v3219, %v3221
      %v3223 = vrot.slane %v3080, %v3222
      %v3225 = vunpack.c.l.s4 1983009808
      %v3226 = vunpack.c.0.s8 %v3225
      %v3227 = vlaneseq
      %v3228 = vshrl.u32 %v3227, 7
      %v3229 = vsub.s32 %v3226, %v3228
      %v3230 = vrot.slane %v3216, %v3229
      %v3231 = vcombine.high %v3223, %v3223
      %v3232 = vcombine.high %v3230, %v3230
      %v3233 = vcombine.high %v3081, %v3081
      %v3235 = vunpack.c.l.s4 1983009808
      %v3236 = vunpack.c.0.s8 %v3235
      %v3237 = vlaneseq
      %v3238 = vshrl.u32 %v3237, 7
      %v3239 = vsub.s32 %v3236, %v3238
      %v3240 = vrot.slane %v3081, %v3239
      %v3242 = vunpack.c.l.s4 1983009808
      %v3243 = vunpack.c.0.s8 %v3242
      %v3244 = vlaneseq
      %v3245 = vshrl.u32 %v3244, 7
      %v3246 = vsub.s32 %v3243, %v3245
      %v3247 = vrot.slane %v3233, %v3246
      %v3248 = vcombine.high %v3240, %v3240
      %v3249 = vcombine.high %v3247, %v3247
      %v3251 = vunpack.c.l.s4 1983009808
      %v3252 = vunpack.c.0.s8 %v3251
      %v3253 = vlaneseq
      %v3254 = vshrl.u32 %v3253, 7
      %v3255 = vsub.s32 %v3252, %v3254
      %v3256 = vrot.slane %v3082, %v3255
      %v3257 = vcombine.high %v3083, %v3083
      %v3259 = vunpack.c.l.s4 1983009808
      %v3260 = vunpack.c.0.s8 %v3259
      %v3261 = vlaneseq
      %v3262 = vshrl.u32 %v3261, 7
      %v3263 = vsub.s32 %v3260, %v3262
      %v3264 = vrot.slane %v3083, %v3263
      %v3266 = vunpack.c.l.s4 1983009808
      %v3267 = vunpack.c.0.s8 %v3266
      %v3268 = vlaneseq
      %v3269 = vshrl.u32 %v3268, 7
      %v3270 = vsub.s32 %v3267, %v3269
      %v3271 = vrot.slane %v3257, %v3270
      %v3272 = vcombine.high %v3264, %v3264
      %v3273 = vcombine.high %v3271, %v3271
      %v3274 = vcombine.high %v3084, %v3084
      %v3276 = vunpack.c.l.s4 1983009808
      %v3277 = vunpack.c.0.s8 %v3276
      %v3278 = vlaneseq
      %v3279 = vshrl.u32 %v3278, 7
      %v3280 = vsub.s32 %v3277, %v3279
      %v3281 = vrot.slane %v3084, %v3280
      %v3283 = vunpack.c.l.s4 1983009808
      %v3284 = vunpack.c.0.s8 %v3283
      %v3285 = vlaneseq
      %v3286 = vshrl.u32 %v3285, 7
      %v3287 = vsub.s32 %v3284, %v3286
      %v3288 = vrot.slane %v3274, %v3287
      %v3289 = vcombine.high %v3281, %v3281
      %v3290 = vcombine.high %v3288, %v3288
      %v3292 = vunpack.c.l.s4 1983009808
      %v3293 = vunpack.c.0.s8 %v3292
      %v3294 = vlaneseq
      %v3295 = vshrl.u32 %v3294, 7
      %v3296 = vsub.s32 %v3293, %v3295
      %v3297 = vrot.slane %v3085, %v3296
      %v3298 = vcombine.high %v3086, %v3086
      %v3300 = vunpack.c.l.s4 1983009808
      %v3301 = vunpack.c.0.s8 %v3300
      %v3302 = vlaneseq
      %v3303 = vshrl.u32 %v3302, 7
      %v3304 = vsub.s32 %v3301, %v3303
      %v3305 = vrot.slane %v3086, %v3304
      %v3307 = vunpack.c.l.s4 1983009808
      %v3308 = vunpack.c.0.s8 %v3307
      %v3309 = vlaneseq
      %v3310 = vshrl.u32 %v3309, 7
      %v3311 = vsub.s32 %v3308, %v3310
      %v3312 = vrot.slane %v3298, %v3311
      %v3313 = vcombine.high %v3305, %v3305
      %v3314 = vcombine.high %v3312, %v3312
      %v3315 = vcombine.high %v3087, %v3087
      %v3317 = vunpack.c.l.s4 1983009808
      %v3318 = vunpack.c.0.s8 %v3317
      %v3319 = vlaneseq
      %v3320 = vshrl.u32 %v3319, 7
      %v3321 = vsub.s32 %v3318, %v3320
      %v3322 = vrot.slane %v3087, %v3321
      %v3324 = vunpack.c.l.s4 1983009808
      %v3325 = vunpack.c.0.s8 %v3324
      %v3326 = vlaneseq
      %v3327 = vshrl.u32 %v3326, 7
      %v3328 = vsub.s32 %v3325, %v3327
      %v3329 = vrot.slane %v3315, %v3328
      %v3330 = vcombine.high %v3322, %v3322
      %v3331 = vcombine.high %v3329, %v3329
      %v3333 = vunpack.c.l.s4 1983009808
      %v3334 = vunpack.c.0.s8 %v3333
      %v3335 = vlaneseq
      %v3336 = vshrl.u32 %v3335, 7
      %v3337 = vsub.s32 %v3334, %v3336
      %v3338 = vrot.slane %v3088, %v3337
      %v3339 = vcombine.high %v3089, %v3089
      %v3341 = vunpack.c.l.s4 1983009808
      %v3342 = vunpack.c.0.s8 %v3341
      %v3343 = vlaneseq
      %v3344 = vshrl.u32 %v3343, 7
      %v3345 = vsub.s32 %v3342, %v3344
      %v3346 = vrot.slane %v3089, %v3345
      %v3348 = vunpack.c.l.s4 1983009808
      %v3349 = vunpack.c.0.s8 %v3348
      %v3350 = vlaneseq
      %v3351 = vshrl.u32 %v3350, 7
      %v3352 = vsub.s32 %v3349, %v3351
      %v3353 = vrot.slane %v3339, %v3352
      %v3354 = vcombine.high %v3346, %v3346
      %v3355 = vcombine.high %v3353, %v3353
      %v3356 = vcombine.high %v3090, %v3090
      %v3358 = vunpack.c.l.s4 1983009808
      %v3359 = vunpack.c.0.s8 %v3358
      %v3360 = vlaneseq
      %v3361 = vshrl.u32 %v3360, 7
      %v3362 = vsub.s32 %v3359, %v3361
      %v3363 = vrot.slane %v3090, %v3362
      %v3365 = vunpack.c.l.s4 1983009808
      %v3366 = vunpack.c.0.s8 %v3365
      %v3367 = vlaneseq
      %v3368 = vshrl.u32 %v3367, 7
      %v3369 = vsub.s32 %v3366, %v3368
      %v3370 = vrot.slane %v3356, %v3369
      %v3371 = vcombine.high %v3363, %v3363
      %v3372 = vcombine.high %v3370, %v3370
      %v3374 = vunpack.c.l.s4 1983009808
      %v3375 = vunpack.c.0.s8 %v3374
      %v3376 = vlaneseq
      %v3377 = vshrl.u32 %v3376, 7
      %v3378 = vsub.s32 %v3375, %v3377
      %v3379 = vrot.slane %v3091, %v3378
      %v3380 = vcombine.high %v3092, %v3092
      %v3382 = vunpack.c.l.s4 1983009808
      %v3383 = vunpack.c.0.s8 %v3382
      %v3384 = vlaneseq
      %v3385 = vshrl.u32 %v3384, 7
      %v3386 = vsub.s32 %v3383, %v3385
      %v3387 = vrot.slane %v3092, %v3386
      %v3389 = vunpack.c.l.s4 1983009808
      %v3390 = vunpack.c.0.s8 %v3389
      %v3391 = vlaneseq
      %v3392 = vshrl.u32 %v3391, 7
      %v3393 = vsub.s32 %v3390, %v3392
      %v3394 = vrot.slane %v3380, %v3393
      %v3395 = vcombine.high %v3387, %v3387
      %v3396 = vcombine.high %v3394, %v3394
      %v3397 = vcombine.high %v3093, %v3093
      %v3399 = vunpack.c.l.s4 1983009808
      %v3400 = vunpack.c.0.s8 %v3399
      %v3401 = vlaneseq
      %v3402 = vshrl.u32 %v3401, 7
      %v3403 = vsub.s32 %v3400, %v3402
      %v3404 = vrot.slane %v3093, %v3403
      %v3406 = vunpack.c.l.s4 1983009808
      %v3407 = vunpack.c.0.s8 %v3406
      %v3408 = vlaneseq
      %v3409 = vshrl.u32 %v3408, 7
      %v3410 = vsub.s32 %v3407, %v3409
      %v3411 = vrot.slane %v3397, %v3410
      %v3412 = vcombine.high %v3404, %v3404
      %v3413 = vcombine.high %v3411, %v3411
      %v3415 = vunpack.c.l.s4 1983009808
      %v3416 = vunpack.c.0.s8 %v3415
      %v3417 = vlaneseq
      %v3418 = vshrl.u32 %v3417, 7
      %v3419 = vsub.s32 %v3416, %v3418
      %v3420 = vrot.slane %v3094, %v3419
      %v3421 = vcombine.high %v3095, %v3095
      %v3423 = vunpack.c.l.s4 1983009808
      %v3424 = vunpack.c.0.s8 %v3423
      %v3425 = vlaneseq
      %v3426 = vshrl.u32 %v3425, 7
      %v3427 = vsub.s32 %v3424, %v3426
      %v3428 = vrot.slane %v3095, %v3427
      %v3430 = vunpack.c.l.s4 1983009808
      %v3431 = vunpack.c.0.s8 %v3430
      %v3432 = vlaneseq
      %v3433 = vshrl.u32 %v3432, 7
      %v3434 = vsub.s32 %v3431, %v3433
      %v3435 = vrot.slane %v3421, %v3434
      %v3436 = vcombine.high %v3428, %v3428
      %v3437 = vcombine.high %v3435, %v3435
      %v3438 = vcombine.high %v3096, %v3096
      %v3440 = vunpack.c.l.s4 1983009808
      %v3441 = vunpack.c.0.s8 %v3440
      %v3442 = vlaneseq
      %v3443 = vshrl.u32 %v3442, 7
      %v3444 = vsub.s32 %v3441, %v3443
      %v3445 = vrot.slane %v3096, %v3444
      %v3447 = vunpack.c.l.s4 1983009808
      %v3448 = vunpack.c.0.s8 %v3447
      %v3449 = vlaneseq
      %v3450 = vshrl.u32 %v3449, 7
      %v3451 = vsub.s32 %v3448, %v3450
      %v3452 = vrot.slane %v3438, %v3451
      %v3453 = vcombine.high %v3445, %v3445
      %v3454 = vcombine.high %v3452, %v3452
      %v3456 = vunpack.c.l.s4 1983009808
      %v3457 = vunpack.c.0.s8 %v3456
      %v3458 = vlaneseq
      %v3459 = vshrl.u32 %v3458, 7
      %v3460 = vsub.s32 %v3457, %v3459
      %v3461 = vrot.slane %v3097, %v3460
      %v3462 = vcombine.high %v3098, %v3098
      %v3464 = vunpack.c.l.s4 1983009808
      %v3465 = vunpack.c.0.s8 %v3464
      %v3466 = vlaneseq
      %v3467 = vshrl.u32 %v3466, 7
      %v3468 = vsub.s32 %v3465, %v3467
      %v3469 = vrot.slane %v3098, %v3468
      %v3471 = vunpack.c.l.s4 1983009808
      %v3472 = vunpack.c.0.s8 %v3471
      %v3473 = vlaneseq
      %v3474 = vshrl.u32 %v3473, 7
      %v3475 = vsub.s32 %v3472, %v3474
      %v3476 = vrot.slane %v3462, %v3475
      %v3477 = vcombine.high %v3469, %v3469
      %v3478 = vcombine.high %v3476, %v3476
      %v3479 = vcombine.high %v3099, %v3099
      %v3481 = vunpack.c.l.s4 1983009808
      %v3482 = vunpack.c.0.s8 %v3481
      %v3483 = vlaneseq
      %v3484 = vshrl.u32 %v3483, 7
      %v3485 = vsub.s32 %v3482, %v3484
      %v3486 = vrot.slane %v3099, %v3485
      %v3488 = vunpack.c.l.s4 1983009808
      %v3489 = vunpack.c.0.s8 %v3488
      %v3490 = vlaneseq
      %v3491 = vshrl.u32 %v3490, 7
      %v3492 = vsub.s32 %v3489, %v3491
      %v3493 = vrot.slane %v3479, %v3492
      %v3494 = vcombine.high %v3486, %v3486
      %v3495 = vcombine.high %v3493, %v3493
      %v3497 = vunpack.c.l.s4 1983009808
      %v3498 = vunpack.c.0.s8 %v3497
      %v3499 = vlaneseq
      %v3500 = vshrl.u32 %v3499, 7
      %v3501 = vsub.s32 %v3498, %v3500
      %v3502 = vrot.slane %v3100, %v3501
      %v3503 = vcombine.high %v3101, %v3101
      %v3505 = vunpack.c.l.s4 1983009808
      %v3506 = vunpack.c.0.s8 %v3505
      %v3507 = vlaneseq
      %v3508 = vshrl.u32 %v3507, 7
      %v3509 = vsub.s32 %v3506, %v3508
      %v3510 = vrot.slane %v3101, %v3509
      %v3512 = vunpack.c.l.s4 1983009808
      %v3513 = vunpack.c.0.s8 %v3512
      %v3514 = vlaneseq
      %v3515 = vshrl.u32 %v3514, 7
      %v3516 = vsub.s32 %v3513, %v3515
      %v3517 = vrot.slane %v3503, %v3516
      %v3518 = vcombine.high %v3510, %v3510
      %v3519 = vcombine.high %v3517, %v3517
      %v3520 = vcombine.high %v3102, %v3102
      %v3522 = vunpack.c.l.s4 1983009808
      %v3523 = vunpack.c.0.s8 %v3522
      %v3524 = vlaneseq
      %v3525 = vshrl.u32 %v3524, 7
      %v3526 = vsub.s32 %v3523, %v3525
      %v3527 = vrot.slane %v3102, %v3526
      %v3529 = vunpack.c.l.s4 1983009808
      %v3530 = vunpack.c.0.s8 %v3529
      %v3531 = vlaneseq
      %v3532 = vshrl.u32 %v3531, 7
      %v3533 = vsub.s32 %v3530, %v3532
      %v3534 = vrot.slane %v3520, %v3533
      %v3535 = vcombine.high %v3527, %v3527
      %v3536 = vcombine.high %v3534, %v3534
      %v3538 = vunpack.c.l.s4 1983009808
      %v3539 = vunpack.c.0.s8 %v3538
      %v3540 = vlaneseq
      %v3541 = vshrl.u32 %v3540, 7
      %v3542 = vsub.s32 %v3539, %v3541
      %v3543 = vrot.slane %v3103, %v3542
      %v3544 = vld [vmem:[%s2] sm:$0xff]
      %v3545 = vld [vmem:[%s2 + $0x8] sm:$0xff]
      %v3546 = vld [vmem:[%s2 + $0x10] sm:$0xff]
      %v3547 = vld [vmem:[%s2 + $0x18] sm:$0x7]
      %v3548 = vld [vmem:[%s3] sm:$0x1]
      %v3550 = vlaneseq
      %v3551 = vshrl.u32 %v3550, 7
      %v3552 = vsub.s32 0, %v3551
      %v3553 = vrot.slane %v3548, %v3552
      %v3555 = vcombine.low %v1585, %v1593
      %v3556 = vcombine.low %v1592, %v1594
      %v3558 = vunpack.c.l.s4 1983009808
      %v3559 = vunpack.c.0.s8 %v3558
      %v3560 = vlaneseq
      %v3561 = vshrl.u32 %v3560, 7
      %v3562 = vsub.s32 %v3559, %v3561
      %v3563 = vrot.slane %v3555, %v3562
      %v3565 = vunpack.c.l.s4 1983009808
      %v3566 = vunpack.c.0.s8 %v3565
      %v3567 = vlaneseq
      %v3568 = vshrl.u32 %v3567, 7
      %v3569 = vsub.s32 %v3566, %v3568
      %v3570 = vrot.slane %v3556, %v3569
      %v3571 = vcombine.low %v3563, %v3570
      %v3572 = vcombine.low %v1602, %v1610
      %v3573 = vcombine.low %v1609, %v1611
      %v3575 = vunpack.c.l.s4 1983009808
      %v3576 = vunpack.c.0.s8 %v3575
      %v3577 = vlaneseq
      %v3578 = vshrl.u32 %v3577, 7
      %v3579 = vsub.s32 %v3576, %v3578
      %v3580 = vrot.slane %v3572, %v3579
      %v3582 = vunpack.c.l.s4 1983009808
      %v3583 = vunpack.c.0.s8 %v3582
      %v3584 = vlaneseq
      %v3585 = vshrl.u32 %v3584, 7
      %v3586 = vsub.s32 %v3583, %v3585
      %v3587 = vrot.slane %v3573, %v3586
      %v3588 = vcombine.low %v3580, %v3587
      %v3589 = vcombine.low %v1618, %v1626
      %v3590 = vcombine.low %v1634, %v1633
      %v3592 = vunpack.c.l.s4 1983009808
      %v3593 = vunpack.c.0.s8 %v3592
      %v3594 = vlaneseq
      %v3595 = vshrl.u32 %v3594, 7
      %v3596 = vsub.s32 %v3593, %v3595
      %v3597 = vrot.slane %v3589, %v3596
      %v3599 = vunpack.c.l.s4 1983009808
      %v3600 = vunpack.c.0.s8 %v3599
      %v3601 = vlaneseq
      %v3602 = vshrl.u32 %v3601, 7
      %v3603 = vsub.s32 %v3600, %v3602
      %v3604 = vrot.slane %v3590, %v3603
      %v3605 = vcombine.low %v3597, %v3604
      %v3606 = vcombine.low %v1635, %v1643
      %v3607 = vcombine.low %v1651, %v1650
      %v3609 = vunpack.c.l.s4 1983009808
      %v3610 = vunpack.c.0.s8 %v3609
      %v3611 = vlaneseq
      %v3612 = vshrl.u32 %v3611, 7
      %v3613 = vsub.s32 %v3610, %v3612
      %v3614 = vrot.slane %v3606, %v3613
      %v3616 = vunpack.c.l.s4 1983009808
      %v3617 = vunpack.c.0.s8 %v3616
      %v3618 = vlaneseq
      %v3619 = vshrl.u32 %v3618, 7
      %v3620 = vsub.s32 %v3617, %v3619
      %v3621 = vrot.slane %v3607, %v3620
      %v3622 = vcombine.low %v3614, %v3621
      %v3623 = vcombine.low %v1652, %v1659
      %v3624 = vcombine.low %v1667, %v1675
      %v3626 = vunpack.c.l.s4 1983009808
      %v3627 = vunpack.c.0.s8 %v3626
      %v3628 = vlaneseq
      %v3629 = vshrl.u32 %v3628, 7
      %v3630 = vsub.s32 %v3627, %v3629
      %v3631 = vrot.slane %v3623, %v3630
      %v3633 = vunpack.c.l.s4 1983009808
      %v3634 = vunpack.c.0.s8 %v3633
      %v3635 = vlaneseq
      %v3636 = vshrl.u32 %v3635, 7
      %v3637 = vsub.s32 %v3634, %v3636
      %v3638 = vrot.slane %v3624, %v3637
      %v3639 = vcombine.low %v3631, %v3638
      %v3640 = vcombine.low %v1674, %v1676
      %v3641 = vcombine.low %v1684, %v1692
      %v3643 = vunpack.c.l.s4 1983009808
      %v3644 = vunpack.c.0.s8 %v3643
      %v3645 = vlaneseq
      %v3646 = vshrl.u32 %v3645, 7
      %v3647 = vsub.s32 %v3644, %v3646
      %v3648 = vrot.slane %v3640, %v3647
      %v3650 = vunpack.c.l.s4 1983009808
      %v3651 = vunpack.c.0.s8 %v3650
      %v3652 = vlaneseq
      %v3653 = vshrl.u32 %v3652, 7
      %v3654 = vsub.s32 %v3651, %v3653
      %v3655 = vrot.slane %v3641, %v3654
      %v3656 = vcombine.low %v3648, %v3655
      %v3657 = vcombine.low %v1691, %v1693
      %v3658 = vcombine.low %v1700, %v1708
      %v3660 = vunpack.c.l.s4 1983009808
      %v3661 = vunpack.c.0.s8 %v3660
      %v3662 = vlaneseq
      %v3663 = vshrl.u32 %v3662, 7
      %v3664 = vsub.s32 %v3661, %v3663
      %v3665 = vrot.slane %v3657, %v3664
      %v3667 = vunpack.c.l.s4 1983009808
      %v3668 = vunpack.c.0.s8 %v3667
      %v3669 = vlaneseq
      %v3670 = vshrl.u32 %v3669, 7
      %v3671 = vsub.s32 %v3668, %v3670
      %v3672 = vrot.slane %v3658, %v3671
      %v3673 = vcombine.low %v3665, %v3672
      %v3674 = vcombine.low %v1716, %v1715
      %v3675 = vcombine.low %v1717, %v1725
      %v3677 = vunpack.c.l.s4 1983009808
      %v3678 = vunpack.c.0.s8 %v3677
      %v3679 = vlaneseq
      %v3680 = vshrl.u32 %v3679, 7
      %v3681 = vsub.s32 %v3678, %v3680
      %v3682 = vrot.slane %v3674, %v3681
      %v3684 = vunpack.c.l.s4 1983009808
      %v3685 = vunpack.c.0.s8 %v3684
      %v3686 = vlaneseq
      %v3687 = vshrl.u32 %v3686, 7
      %v3688 = vsub.s32 %v3685, %v3687
      %v3689 = vrot.slane %v3675, %v3688
      %v3690 = vcombine.low %v3682, %v3689
      %v3691 = vcombine.low %v1733, %v1732
      %v3692 = vcombine.low %v1734, %v1741
      %v3694 = vunpack.c.l.s4 1983009808
      %v3695 = vunpack.c.0.s8 %v3694
      %v3696 = vlaneseq
      %v3697 = vshrl.u32 %v3696, 7
      %v3698 = vsub.s32 %v3695, %v3697
      %v3699 = vrot.slane %v3691, %v3698
      %v3701 = vunpack.c.l.s4 1983009808
      %v3702 = vunpack.c.0.s8 %v3701
      %v3703 = vlaneseq
      %v3704 = vshrl.u32 %v3703, 7
      %v3705 = vsub.s32 %v3702, %v3704
      %v3706 = vrot.slane %v3692, %v3705
      %v3707 = vcombine.low %v3699, %v3706
      %v3708 = vcombine.low %v1749, %v1757
      %v3709 = vcombine.low %v1756, %v1758
      %v3711 = vunpack.c.l.s4 1983009808
      %v3712 = vunpack.c.0.s8 %v3711
      %v3713 = vlaneseq
      %v3714 = vshrl.u32 %v3713, 7
      %v3715 = vsub.s32 %v3712, %v3714
      %v3716 = vrot.slane %v3708, %v3715
      %v3718 = vunpack.c.l.s4 1983009808
      %v3719 = vunpack.c.0.s8 %v3718
      %v3720 = vlaneseq
      %v3721 = vshrl.u32 %v3720, 7
      %v3722 = vsub.s32 %v3719, %v3721
      %v3723 = vrot.slane %v3709, %v3722
      %v3724 = vcombine.low %v3716, %v3723
      %v3725 = vcombine.low %v1766, %v1774
      %v3726 = vcombine.low %v1773, %v1775
      %v3728 = vunpack.c.l.s4 1983009808
      %v3729 = vunpack.c.0.s8 %v3728
      %v3730 = vlaneseq
      %v3731 = vshrl.u32 %v3730, 7
      %v3732 = vsub.s32 %v3729, %v3731
      %v3733 = vrot.slane %v3725, %v3732
      %v3735 = vunpack.c.l.s4 1983009808
      %v3736 = vunpack.c.0.s8 %v3735
      %v3737 = vlaneseq
      %v3738 = vshrl.u32 %v3737, 7
      %v3739 = vsub.s32 %v3736, %v3738
      %v3740 = vrot.slane %v3726, %v3739
      %v3741 = vcombine.low %v3733, %v3740
      %v3742 = vcombine.low %v1782, %v1790
      %v3743 = vcombine.low %v1798, %v1797
      %v3745 = vunpack.c.l.s4 1983009808
      %v3746 = vunpack.c.0.s8 %v3745
      %v3747 = vlaneseq
      %v3748 = vshrl.u32 %v3747, 7
      %v3749 = vsub.s32 %v3746, %v3748
      %v3750 = vrot.slane %v3742, %v3749
      %v3752 = vunpack.c.l.s4 1983009808
      %v3753 = vunpack.c.0.s8 %v3752
      %v3754 = vlaneseq
      %v3755 = vshrl.u32 %v3754, 7
      %v3756 = vsub.s32 %v3753, %v3755
      %v3757 = vrot.slane %v3743, %v3756
      %v3758 = vcombine.low %v3750, %v3757
      %v3759 = vcombine.low %v1799, %v1807
      %v3760 = vcombine.low %v1815, %v1814
      %v3762 = vunpack.c.l.s4 1983009808
      %v3763 = vunpack.c.0.s8 %v3762
      %v3764 = vlaneseq
      %v3765 = vshrl.u32 %v3764, 7
      %v3766 = vsub.s32 %v3763, %v3765
      %v3767 = vrot.slane %v3759, %v3766
      %v3769 = vunpack.c.l.s4 1983009808
      %v3770 = vunpack.c.0.s8 %v3769
      %v3771 = vlaneseq
      %v3772 = vshrl.u32 %v3771, 7
      %v3773 = vsub.s32 %v3770, %v3772
      %v3774 = vrot.slane %v3760, %v3773
      %v3775 = vcombine.low %v3767, %v3774
      %v3776 = vcombine.low %v1816, %v1823
      %v3777 = vcombine.low %v1831, %v1839
      %v3779 = vunpack.c.l.s4 1983009808
      %v3780 = vunpack.c.0.s8 %v3779
      %v3781 = vlaneseq
      %v3782 = vshrl.u32 %v3781, 7
      %v3783 = vsub.s32 %v3780, %v3782
      %v3784 = vrot.slane %v3776, %v3783
      %v3786 = vunpack.c.l.s4 1983009808
      %v3787 = vunpack.c.0.s8 %v3786
      %v3788 = vlaneseq
      %v3789 = vshrl.u32 %v3788, 7
      %v3790 = vsub.s32 %v3787, %v3789
      %v3791 = vrot.slane %v3777, %v3790
      %v3792 = vcombine.low %v3784, %v3791
      %v3793 = vcombine.low %v1838, %v1840
      %v3794 = vcombine.low %v1848, %v1856
      %v3796 = vunpack.c.l.s4 1983009808
      %v3797 = vunpack.c.0.s8 %v3796
      %v3798 = vlaneseq
      %v3799 = vshrl.u32 %v3798, 7
      %v3800 = vsub.s32 %v3797, %v3799
      %v3801 = vrot.slane %v3793, %v3800
      %v3803 = vunpack.c.l.s4 1983009808
      %v3804 = vunpack.c.0.s8 %v3803
      %v3805 = vlaneseq
      %v3806 = vshrl.u32 %v3805, 7
      %v3807 = vsub.s32 %v3804, %v3806
      %v3808 = vrot.slane %v3794, %v3807
      %v3809 = vcombine.low %v3801, %v3808
      %v3810 = vcombine.low %v1855, %v1857
      %v3811 = vcombine.low %v1864, %v1872
      %v3813 = vunpack.c.l.s4 1983009808
      %v3814 = vunpack.c.0.s8 %v3813
      %v3815 = vlaneseq
      %v3816 = vshrl.u32 %v3815, 7
      %v3817 = vsub.s32 %v3814, %v3816
      %v3818 = vrot.slane %v3810, %v3817
      %v3820 = vunpack.c.l.s4 1983009808
      %v3821 = vunpack.c.0.s8 %v3820
      %v3822 = vlaneseq
      %v3823 = vshrl.u32 %v3822, 7
      %v3824 = vsub.s32 %v3821, %v3823
      %v3825 = vrot.slane %v3811, %v3824
      %v3826 = vcombine.low %v3818, %v3825
      %v3827 = vcombine.low %v1880, %v1879
      %v3828 = vcombine.low %v1881, %v1889
      %v3830 = vunpack.c.l.s4 1983009808
      %v3831 = vunpack.c.0.s8 %v3830
      %v3832 = vlaneseq
      %v3833 = vshrl.u32 %v3832, 7
      %v3834 = vsub.s32 %v3831, %v3833
      %v3835 = vrot.slane %v3827, %v3834
      %v3837 = vunpack.c.l.s4 1983009808
      %v3838 = vunpack.c.0.s8 %v3837
      %v3839 = vlaneseq
      %v3840 = vshrl.u32 %v3839, 7
      %v3841 = vsub.s32 %v3838, %v3840
      %v3842 = vrot.slane %v3828, %v3841
      %v3843 = vcombine.low %v3835, %v3842
      %v3844 = vcombine.low %v1897, %v1896
      %v3845 = vcombine.low %v1898, %v1905
      %v3847 = vunpack.c.l.s4 1983009808
      %v3848 = vunpack.c.0.s8 %v3847
      %v3849 = vlaneseq
      %v3850 = vshrl.u32 %v3849, 7
      %v3851 = vsub.s32 %v3848, %v3850
      %v3852 = vrot.slane %v3844, %v3851
      %v3854 = vunpack.c.l.s4 1983009808
      %v3855 = vunpack.c.0.s8 %v3854
      %v3856 = vlaneseq
      %v3857 = vshrl.u32 %v3856, 7
      %v3858 = vsub.s32 %v3855, %v3857
      %v3859 = vrot.slane %v3845, %v3858
      %v3860 = vcombine.low %v3852, %v3859
      %v3861 = vcombine.low %v1913, %v1921
      %v3862 = vcombine.low %v1920, %v1922
      %v3864 = vunpack.c.l.s4 1983009808
      %v3865 = vunpack.c.0.s8 %v3864
      %v3866 = vlaneseq
      %v3867 = vshrl.u32 %v3866, 7
      %v3868 = vsub.s32 %v3865, %v3867
      %v3869 = vrot.slane %v3861, %v3868
      %v3871 = vunpack.c.l.s4 1983009808
      %v3872 = vunpack.c.0.s8 %v3871
      %v3873 = vlaneseq
      %v3874 = vshrl.u32 %v3873, 7
      %v3875 = vsub.s32 %v3872, %v3874
      %v3876 = vrot.slane %v3862, %v3875
      %v3877 = vcombine.low %v3869, %v3876
      %v3878 = vcombine.low %v1930, %v1938
      %v3879 = vcombine.low %v1937, %v1939
      %v3881 = vunpack.c.l.s4 1983009808
      %v3882 = vunpack.c.0.s8 %v3881
      %v3883 = vlaneseq
      %v3884 = vshrl.u32 %v3883, 7
      %v3885 = vsub.s32 %v3882, %v3884
      %v3886 = vrot.slane %v3878, %v3885
      %v3888 = vunpack.c.l.s4 1983009808
      %v3889 = vunpack.c.0.s8 %v3888
      %v3890 = vlaneseq
      %v3891 = vshrl.u32 %v3890, 7
      %v3892 = vsub.s32 %v3889, %v3891
      %v3893 = vrot.slane %v3879, %v3892
      %v3894 = vcombine.low %v3886, %v3893
      %v3895 = vcombine.low %v1946, %v1954
      %v3896 = vcombine.low %v1962, %v1961
      %v3898 = vunpack.c.l.s4 1983009808
      %v3899 = vunpack.c.0.s8 %v3898
      %v3900 = vlaneseq
      %v3901 = vshrl.u32 %v3900, 7
      %v3902 = vsub.s32 %v3899, %v3901
      %v3903 = vrot.slane %v3895, %v3902
      %v3905 = vunpack.c.l.s4 1983009808
      %v3906 = vunpack.c.0.s8 %v3905
      %v3907 = vlaneseq
      %v3908 = vshrl.u32 %v3907, 7
      %v3909 = vsub.s32 %v3906, %v3908
      %v3910 = vrot.slane %v3896, %v3909
      %v3911 = vcombine.low %v3903, %v3910
      %v3912 = vcombine.low %v1963, %v1971
      %v3913 = vcombine.low %v1979, %v1978
      %v3915 = vunpack.c.l.s4 1983009808
      %v3916 = vunpack.c.0.s8 %v3915
      %v3917 = vlaneseq
      %v3918 = vshrl.u32 %v3917, 7
      %v3919 = vsub.s32 %v3916, %v3918
      %v3920 = vrot.slane %v3912, %v3919
      %v3922 = vunpack.c.l.s4 1983009808
      %v3923 = vunpack.c.0.s8 %v3922
      %v3924 = vlaneseq
      %v3925 = vshrl.u32 %v3924, 7
      %v3926 = vsub.s32 %v3923, %v3925
      %v3927 = vrot.slane %v3913, %v3926
      %v3928 = vcombine.low %v3920, %v3927
      %v3929 = vcombine.low %v1980, %v1987
      %v3931 = vunpack.c.l.s4 1983009808
      %v3932 = vunpack.c.0.s8 %v3931
      %v3933 = vlaneseq
      %v3934 = vshrl.u32 %v3933, 7
      %v3935 = vsub.s32 %v3932, %v3934
      %v3936 = vrot.slane %v3929, %v3935
      %vm3937 = vcmask 220160
      %v3938 = vsel %vm3937, %v3571, 0
      %v3940 = vsel %vm3937, %v3588, 0
      %v3942 = vsel %vm3937, %v3605, 0
      %v3944 = vsel %vm3937, %v3622, 0
      %v3946 = vsel %vm3937, %v3639, 0
      %v3948 = vsel %vm3937, %v3656, 0
      %v3950 = vsel %vm3937, %v3673, 0
      %v3952 = vsel %vm3937, %v3690, 0
      %v3954 = vsel %vm3937, %v3707, 0
      %v3956 = vsel %vm3937, %v3724, 0
      %v3958 = vsel %vm3937, %v3741, 0
      %v3960 = vsel %vm3937, %v3758, 0
      %v3962 = vsel %vm3937, %v3775, 0
      %v3964 = vsel %vm3937, %v3792, 0
      %v3966 = vsel %vm3937, %v3809, 0
      %v3968 = vsel %vm3937, %v3826, 0
      %v3970 = vsel %vm3937, %v3843, 0
      %v3972 = vsel %vm3937, %v3860, 0
      %v3974 = vsel %vm3937, %v3877, 0
      %v3976 = vsel %vm3937, %v3894, 0
      %v3978 = vsel %vm3937, %v3911, 0
      %v3980 = vsel %vm3937, %v3928, 0
      %v3982 = vsel %vm3937, %v3936, 0
      %vm3984 = vcmask 1042432
      %v3986 = vsel %vm3984, %v3547, 0
      %3988 = vmatprep.subr.mxu0 0.0
      %3989 = vmatpush1.msra.mxu0 %v3544
      %3990 = vmatprep.subr.mxu0 0.0
      %3991 = vmatpush1.msra.mxu0 %v3545
      %3992 = vmatprep.subr.mxu0 0.0
      %3993 = vmatpush1.msra.mxu0 %v3546
      %3994 = vmatprep.subr.mxu0 0.0
      %3995 = vmatpush1.msra.mxu0 %v3986
      %3996 = vmatprep.subr.mxu0 0.0
      %3997 = vmatpush1.msra.mxu0 0.0
      %3998 = vmatprep.subr.mxu0 0.0
      %3999 = vmatpush1.msra.mxu0 0.0
      %4000 = vmatprep.subr.mxu0 0.0
      %4001 = vmatpush1.msra.mxu0 0.0
      %4002 = vmatprep.subr.mxu0 0.0
      %4003 = vmatpush1.msra.mxu0 0.0
      %4004 = vmatprep.subr.mxu0 0.0
      %4005 = vmatpush1.msra.mxu0 0.0
      %4006 = vmatprep.subr.mxu0 0.0
      %4007 = vmatpush1.msra.mxu0 0.0
      %4008 = vmatprep.subr.mxu0 0.0
      %4009 = vmatpush1.msra.mxu0 0.0
      %4010 = vmatprep.subr.mxu0 0.0
      %4011 = vmatpush1.msra.mxu0 0.0
      %4012 = vmatprep.subr.mxu0 0.0
      %4013 = vmatpush1.msra.mxu0 0.0
      %4014 = vmatprep.subr.mxu0 0.0
      %4015 = vmatpush1.msra.mxu0 0.0
      %4016 = vmatprep.subr.mxu0 0.0
      %4017 = vmatpush1.msra.mxu0 0.0
      %4018 = vmatprep.subr.mxu0 0.0
      %4019 = vmatpush1.msra.mxu0 0.0
      %4020 = vmatprep.subr.mxu0 0.0
      %4021 = vmatpush1.msra.mxu0 0.0
      %4022 = vmatprep.subr.mxu0 0.0
      %4023 = vmatpush1.msra.mxu0 0.0
      %4024 = vmatprep.subr.mxu0 0.0
      %4025 = vmatpush1.msra.mxu0 0.0
      %4026 = vmatprep.subr.mxu0 0.0
      %4027 = vmatpush1.msra.mxu0 0.0
      %4028 = vmatprep.subr.mxu0 0.0
      %4029 = vmatpush1.msra.mxu0 0.0
      %4030 = vmatprep.subr.mxu0 0.0
      %4031 = vmatpush1.msra.mxu0 0.0
      %4032 = vmatprep.subr.mxu0 0.0
      %4033 = vmatpush1.msra.mxu0 0.0
      %4034 = vmatprep.subr.mxu0 0.0
      %4035 = vmatpush1.msra.mxu0 0.0
      %4036 = vmatprep.subr.mxu0 0.0
      %4037 = vmatpush1.msra.mxu0 0.0
      %4038 = vmatprep.subr.mxu0 0.0
      %4039 = vmatpush1.msra.mxu0 0.0
      %4040 = vmatprep.subr.mxu0 0.0
      %4041 = vmatpush1.msra.mxu0 0.0
      %4042 = vmatprep.subr.mxu0 0.0
      %4043 = vmatpush1.msra.mxu0 0.0
      %4044 = vmatprep.subr.mxu0 0.0
      %4045 = vmatpush1.msra.mxu0 0.0
      %4046 = vmatprep.subr.mxu0 0.0
      %4047 = vmatpush1.msra.mxu0 0.0
      %4048 = vmatprep.subr.mxu0 0.0
      %4049 = vmatpush1.msra.mxu0 0.0
      %4050 = vmatprep.subr.mxu0 0.0
      %4051 = vmatpush1.msra.mxu0 0.0
      %4052 = vmatprep.mubr.f32.mxu0 0.0
      %4053 = vmatmul.mubr.f32.gmra.mrb[0].mxu0 %v3938
      %v4054 = vpop.f32.mrb[0].mxu0
      %v4055 = vadd.f32 %v3553, %v4054
      %v4056 = vpop.f32.mrb[0].mxu0
      %4057 = vmatprep.mubr.f32.mxu0 0.0
      %4058 = vmatmul.mubr.f32.gmra.mrb[0].mxu0 %v3940
      %v4059 = vpop.f32.mrb[0].mxu0
      %v4060 = vadd.f32 %v3553, %v4059
      %v4061 = vpop.f32.mrb[0].mxu0
      %4062 = vmatprep.mubr.f32.mxu0 0.0
      %4063 = vmatmul.mubr.f32.gmra.mrb[0].mxu0 %v3942
      %v4064 = vpop.f32.mrb[0].mxu0
      %v4065 = vadd.f32 %v3553, %v4064
      %v4066 = vpop.f32.mrb[0].mxu0
      %4067 = vmatprep.mubr.f32.mxu0 0.0
      %4068 = vmatmul.mubr.f32.gmra.mrb[0].mxu0 %v3944
      %v4069 = vpop.f32.mrb[0].mxu0
      %v4070 = vadd.f32 %v3553, %v4069
      %v4071 = vpop.f32.mrb[0].mxu0
      %4072 = vmatprep.mubr.f32.mxu0 0.0
      %4073 = vmatmul.mubr.f32.gmra.mrb[0].mxu0 %v3946
      %v4074 = vpop.f32.mrb[0].mxu0
      %v4075 = vadd.f32 %v3553, %v4074
      %v4076 = vpop.f32.mrb[0].mxu0
      %4077 = vmatprep.mubr.f32.mxu0 0.0
      %4078 = vmatmul.mubr.f32.gmra.mrb[0].mxu0 %v3948
      %v4079 = vpop.f32.mrb[0].mxu0
      %v4080 = vadd.f32 %v3553, %v4079
      %v4081 = vpop.f32.mrb[0].mxu0
      %4082 = vmatprep.mubr.f32.mxu0 0.0
      %4083 = vmatmul.mubr.f32.gmra.mrb[0].mxu0 %v3950
      %v4084 = vpop.f32.mrb[0].mxu0
      %v4085 = vadd.f32 %v3553, %v4084
      %v4086 = vpop.f32.mrb[0].mxu0
      %4087 = vmatprep.mubr.f32.mxu0 0.0
      %4088 = vmatmul.mubr.f32.gmra.mrb[0].mxu0 %v3952
      %v4089 = vpop.f32.mrb[0].mxu0
      %v4090 = vadd.f32 %v3553, %v4089
      %v4091 = vpop.f32.mrb[0].mxu0
      %4092 = vmatprep.mubr.f32.mxu0 0.0
      %4093 = vmatmul.mubr.f32.gmra.mrb[0].mxu0 %v3954
      %v4094 = vpop.f32.mrb[0].mxu0
      %v4095 = vadd.f32 %v3553, %v4094
      %v4096 = vpop.f32.mrb[0].mxu0
      %4097 = vmatprep.mubr.f32.mxu0 0.0
      %4098 = vmatmul.mubr.f32.gmra.mrb[0].mxu0 %v3956
      %v4099 = vpop.f32.mrb[0].mxu0
      %v4100 = vadd.f32 %v3553, %v4099
      %v4101 = vpop.f32.mrb[0].mxu0
      %4102 = vmatprep.mubr.f32.mxu0 0.0
      %4103 = vmatmul.mubr.f32.gmra.mrb[0].mxu0 %v3958
      %v4104 = vpop.f32.mrb[0].mxu0
      %v4105 = vadd.f32 %v3553, %v4104
      %v4106 = vpop.f32.mrb[0].mxu0
      %4107 = vmatprep.mubr.f32.mxu0 0.0
      %4108 = vmatmul.mubr.f32.gmra.mrb[0].mxu0 %v3960
      %v4109 = vpop.f32.mrb[0].mxu0
      %v4110 = vadd.f32 %v3553, %v4109
      %v4111 = vpop.f32.mrb[0].mxu0
      %4112 = vmatprep.mubr.f32.mxu0 0.0
      %4113 = vmatmul.mubr.f32.gmra.mrb[0].mxu0 %v3962
      %v4114 = vpop.f32.mrb[0].mxu0
      %v4115 = vadd.f32 %v3553, %v4114
      %v4116 = vpop.f32.mrb[0].mxu0
      %4117 = vmatprep.mubr.f32.mxu0 0.0
      %4118 = vmatmul.mubr.f32.gmra.mrb[0].mxu0 %v3964
      %v4119 = vpop.f32.mrb[0].mxu0
      %v4120 = vadd.f32 %v3553, %v4119
      %v4121 = vpop.f32.mrb[0].mxu0
      %4122 = vmatprep.mubr.f32.mxu0 0.0
      %4123 = vmatmul.mubr.f32.gmra.mrb[0].mxu0 %v3966
      %v4124 = vpop.f32.mrb[0].mxu0
      %v4125 = vadd.f32 %v3553, %v4124
      %v4126 = vpop.f32.mrb[0].mxu0
      %4127 = vmatprep.mubr.f32.mxu0 0.0
      %4128 = vmatmul.mubr.f32.gmra.mrb[0].mxu0 %v3968
      %v4129 = vpop.f32.mrb[0].mxu0
      %v4130 = vadd.f32 %v3553, %v4129
      %v4131 = vpop.f32.mrb[0].mxu0
      %4132 = vmatprep.mubr.f32.mxu0 0.0
      %4133 = vmatmul.mubr.f32.gmra.mrb[0].mxu0 %v3970
      %v4134 = vpop.f32.mrb[0].mxu0
      %v4135 = vadd.f32 %v3553, %v4134
      %v4136 = vpop.f32.mrb[0].mxu0
      %4137 = vmatprep.mubr.f32.mxu0 0.0
      %4138 = vmatmul.mubr.f32.gmra.mrb[0].mxu0 %v3972
      %v4139 = vpop.f32.mrb[0].mxu0
      %v4140 = vadd.f32 %v3553, %v4139
      %v4141 = vpop.f32.mrb[0].mxu0
      %4142 = vmatprep.mubr.f32.mxu0 0.0
      %4143 = vmatmul.mubr.f32.gmra.mrb[0].mxu0 %v3974
      %v4144 = vpop.f32.mrb[0].mxu0
      %v4145 = vadd.f32 %v3553, %v4144
      %v4146 = vpop.f32.mrb[0].mxu0
      %4147 = vmatprep.mubr.f32.mxu0 0.0
      %4148 = vmatmul.mubr.f32.gmra.mrb[0].mxu0 %v3976
      %v4149 = vpop.f32.mrb[0].mxu0
      %v4150 = vadd.f32 %v3553, %v4149
      %v4151 = vpop.f32.mrb[0].mxu0
      %4152 = vmatprep.mubr.f32.mxu0 0.0
      %4153 = vmatmul.mubr.f32.gmra.mrb[0].mxu0 %v3978
      %v4154 = vpop.f32.mrb[0].mxu0
      %v4155 = vadd.f32 %v3553, %v4154
      %v4156 = vpop.f32.mrb[0].mxu0
      %4157 = vmatprep.mubr.f32.mxu0 0.0
      %4158 = vmatmul.mubr.f32.gmra.mrb[0].mxu0 %v3980
      %v4159 = vpop.f32.mrb[0].mxu0
      %v4160 = vadd.f32 %v3553, %v4159
      %v4161 = vpop.f32.mrb[0].mxu0
      %4162 = vmatprep.mubr.f32.mxu0 0.0
      %4163 = vmatmul.mubr.f32.gmra.mrb[0].mxu0 %v3982
      %v4164 = vpop.f32.mrb[0].mxu0
      %v4165 = vadd.f32 %v3553, %v4164
      %v4166 = vpop.f32.mrb[0].mxu0
      %4167 = vdwg.mxu0
      %v4168 = vmax.f32 %v4055, 0.0
      %v4169 = vmax.f32 %v4060, 0.0
      %v4170 = vmax.f32 %v4065, 0.0
      %v4171 = vmax.f32 %v4070, 0.0
      %v4172 = vmax.f32 %v4075, 0.0
      %v4173 = vmax.f32 %v4080, 0.0
      %v4174 = vmax.f32 %v4085, 0.0
      %v4175 = vmax.f32 %v4090, 0.0
      %v4176 = vmax.f32 %v4095, 0.0
      %v4177 = vmax.f32 %v4100, 0.0
      %v4178 = vmax.f32 %v4105, 0.0
      %v4179 = vmax.f32 %v4110, 0.0
      %v4180 = vmax.f32 %v4115, 0.0
      %v4181 = vmax.f32 %v4120, 0.0
      %v4182 = vmax.f32 %v4125, 0.0
      %v4183 = vmax.f32 %v4130, 0.0
      %v4184 = vmax.f32 %v4135, 0.0
      %v4185 = vmax.f32 %v4140, 0.0
      %v4186 = vmax.f32 %v4145, 0.0
      %v4187 = vmax.f32 %v4150, 0.0
      %v4188 = vmax.f32 %v4155, 0.0
      %v4189 = vmax.f32 %v4160, 0.0
      %v4190 = vmax.f32 %v4165, 0.0
      %v4191 = vld [vmem:[%s4] sm:$0xff]
      %v4192 = vld [vmem:[%s4 + $0x8] sm:$0xff]
      %v4193 = vld [vmem:[%s4 + $0x10] sm:$0xff]
      %v4194 = vld [vmem:[%s4 + $0x18] sm:$0x7]
      %v4195 = vld [vmem:[%s5] sm:$0x1]
      %v4197 = vlaneseq
      %v4198 = vshrl.u32 %v4197, 7
      %v4199 = vsub.s32 0, %v4198
      %v4200 = vrot.slane %v4195, %v4199
      %v4202 = vcombine.low %v3141, %v3149
      %v4203 = vcombine.low %v3148, %v3150
      %v4205 = vunpack.c.l.s4 1983009808
      %v4206 = vunpack.c.0.s8 %v4205
      %v4207 = vlaneseq
      %v4208 = vshrl.u32 %v4207, 7
      %v4209 = vsub.s32 %v4206, %v4208
      %v4210 = vrot.slane %v4202, %v4209
      %v4212 = vunpack.c.l.s4 1983009808
      %v4213 = vunpack.c.0.s8 %v4212
      %v4214 = vlaneseq
      %v4215 = vshrl.u32 %v4214, 7
      %v4216 = vsub.s32 %v4213, %v4215
      %v4217 = vrot.slane %v4203, %v4216
      %v4218 = vcombine.low %v4210, %v4217
      %v4219 = vcombine.low %v3158, %v3166
      %v4220 = vcombine.low %v3165, %v3167
      %v4222 = vunpack.c.l.s4 1983009808
      %v4223 = vunpack.c.0.s8 %v4222
      %v4224 = vlaneseq
      %v4225 = vshrl.u32 %v4224, 7
      %v4226 = vsub.s32 %v4223, %v4225
      %v4227 = vrot.slane %v4219, %v4226
      %v4229 = vunpack.c.l.s4 1983009808
      %v4230 = vunpack.c.0.s8 %v4229
      %v4231 = vlaneseq
      %v4232 = vshrl.u32 %v4231, 7
      %v4233 = vsub.s32 %v4230, %v4232
      %v4234 = vrot.slane %v4220, %v4233
      %v4235 = vcombine.low %v4227, %v4234
      %v4236 = vcombine.low %v3174, %v3182
      %v4237 = vcombine.low %v3190, %v3189
      %v4239 = vunpack.c.l.s4 1983009808
      %v4240 = vunpack.c.0.s8 %v4239
      %v4241 = vlaneseq
      %v4242 = vshrl.u32 %v4241, 7
      %v4243 = vsub.s32 %v4240, %v4242
      %v4244 = vrot.slane %v4236, %v4243
      %v4246 = vunpack.c.l.s4 1983009808
      %v4247 = vunpack.c.0.s8 %v4246
      %v4248 = vlaneseq
      %v4249 = vshrl.u32 %v4248, 7
      %v4250 = vsub.s32 %v4247, %v4249
      %v4251 = vrot.slane %v4237, %v4250
      %v4252 = vcombine.low %v4244, %v4251
      %v4253 = vcombine.low %v3191, %v3199
      %v4254 = vcombine.low %v3207, %v3206
      %v4256 = vunpack.c.l.s4 1983009808
      %v4257 = vunpack.c.0.s8 %v4256
      %v4258 = vlaneseq
      %v4259 = vshrl.u32 %v4258, 7
      %v4260 = vsub.s32 %v4257, %v4259
      %v4261 = vrot.slane %v4253, %v4260
      %v4263 = vunpack.c.l.s4 1983009808
      %v4264 = vunpack.c.0.s8 %v4263
      %v4265 = vlaneseq
      %v4266 = vshrl.u32 %v4265, 7
      %v4267 = vsub.s32 %v4264, %v4266
      %v4268 = vrot.slane %v4254, %v4267
      %v4269 = vcombine.low %v4261, %v4268
      %v4270 = vcombine.low %v3208, %v3215
      %v4271 = vcombine.low %v3223, %v3231
      %v4273 = vunpack.c.l.s4 1983009808
      %v4274 = vunpack.c.0.s8 %v4273
      %v4275 = vlaneseq
      %v4276 = vshrl.u32 %v4275, 7
      %v4277 = vsub.s32 %v4274, %v4276
      %v4278 = vrot.slane %v4270, %v4277
      %v4280 = vunpack.c.l.s4 1983009808
      %v4281 = vunpack.c.0.s8 %v4280
      %v4282 = vlaneseq
      %v4283 = vshrl.u32 %v4282, 7
      %v4284 = vsub.s32 %v4281, %v4283
      %v4285 = vrot.slane %v4271, %v4284
      %v4286 = vcombine.low %v4278, %v4285
      %v4287 = vcombine.low %v3230, %v3232
      %v4288 = vcombine.low %v3240, %v3248
      %v4290 = vunpack.c.l.s4 1983009808
      %v4291 = vunpack.c.0.s8 %v4290
      %v4292 = vlaneseq
      %v4293 = vshrl.u32 %v4292, 7
      %v4294 = vsub.s32 %v4291, %v4293
      %v4295 = vrot.slane %v4287, %v4294
      %v4297 = vunpack.c.l.s4 1983009808
      %v4298 = vunpack.c.0.s8 %v4297
      %v4299 = vlaneseq
      %v4300 = vshrl.u32 %v4299, 7
      %v4301 = vsub.s32 %v4298, %v4300
      %v4302 = vrot.slane %v4288, %v4301
      %v4303 = vcombine.low %v4295, %v4302
      %v4304 = vcombine.low %v3247, %v3249
      %v4305 = vcombine.low %v3256, %v3264
      %v4307 = vunpack.c.l.s4 1983009808
      %v4308 = vunpack.c.0.s8 %v4307
      %v4309 = vlaneseq
      %v4310 = vshrl.u32 %v4309, 7
      %v4311 = vsub.s32 %v4308, %v4310
      %v4312 = vrot.slane %v4304, %v4311
      %v4314 = vunpack.c.l.s4 1983009808
      %v4315 = vunpack.c.0.s8 %v4314
      %v4316 = vlaneseq
      %v4317 = vshrl.u32 %v4316, 7
      %v4318 = vsub.s32 %v4315, %v4317
      %v4319 = vrot.slane %v4305, %v4318
      %v4320 = vcombine.low %v4312, %v4319
      %v4321 = vcombine.low %v3272, %v3271
      %v4322 = vcombine.low %v3273, %v3281
      %v4324 = vunpack.c.l.s4 1983009808
      %v4325 = vunpack.c.0.s8 %v4324
      %v4326 = vlaneseq
      %v4327 = vshrl.u32 %v4326, 7
      %v4328 = vsub.s32 %v4325, %v4327
      %v4329 = vrot.slane %v4321, %v4328
      %v4331 = vunpack.c.l.s4 1983009808
      %v4332 = vunpack.c.0.s8 %v4331
      %v4333 = vlaneseq
      %v4334 = vshrl.u32 %v4333, 7
      %v4335 = vsub.s32 %v4332, %v4334
      %v4336 = vrot.slane %v4322, %v4335
      %v4337 = vcombine.low %v4329, %v4336
      %v4338 = vcombine.low %v3289, %v3288
      %v4339 = vcombine.low %v3290, %v3297
      %v4341 = vunpack.c.l.s4 1983009808
      %v4342 = vunpack.c.0.s8 %v4341
      %v4343 = vlaneseq
      %v4344 = vshrl.u32 %v4343, 7
      %v4345 = vsub.s32 %v4342, %v4344
      %v4346 = vrot.slane %v4338, %v4345
      %v4348 = vunpack.c.l.s4 1983009808
      %v4349 = vunpack.c.0.s8 %v4348
      %v4350 = vlaneseq
      %v4351 = vshrl.u32 %v4350, 7
      %v4352 = vsub.s32 %v4349, %v4351
      %v4353 = vrot.slane %v4339, %v4352
      %v4354 = vcombine.low %v4346, %v4353
      %v4355 = vcombine.low %v3305, %v3313
      %v4356 = vcombine.low %v3312, %v3314
      %v4358 = vunpack.c.l.s4 1983009808
      %v4359 = vunpack.c.0.s8 %v4358
      %v4360 = vlaneseq
      %v4361 = vshrl.u32 %v4360, 7
      %v4362 = vsub.s32 %v4359, %v4361
      %v4363 = vrot.slane %v4355, %v4362
      %v4365 = vunpack.c.l.s4 1983009808
      %v4366 = vunpack.c.0.s8 %v4365
      %v4367 = vlaneseq
      %v4368 = vshrl.u32 %v4367, 7
      %v4369 = vsub.s32 %v4366, %v4368
      %v4370 = vrot.slane %v4356, %v4369
      %v4371 = vcombine.low %v4363, %v4370
      %v4372 = vcombine.low %v3322, %v3330
      %v4373 = vcombine.low %v3329, %v3331
      %v4375 = vunpack.c.l.s4 1983009808
      %v4376 = vunpack.c.0.s8 %v4375
      %v4377 = vlaneseq
      %v4378 = vshrl.u32 %v4377, 7
      %v4379 = vsub.s32 %v4376, %v4378
      %v4380 = vrot.slane %v4372, %v4379
      %v4382 = vunpack.c.l.s4 1983009808
      %v4383 = vunpack.c.0.s8 %v4382
      %v4384 = vlaneseq
      %v4385 = vshrl.u32 %v4384, 7
      %v4386 = vsub.s32 %v4383, %v4385
      %v4387 = vrot.slane %v4373, %v4386
      %v4388 = vcombine.low %v4380, %v4387
      %v4389 = vcombine.low %v3338, %v3346
      %v4390 = vcombine.low %v3354, %v3353
      %v4392 = vunpack.c.l.s4 1983009808
      %v4393 = vunpack.c.0.s8 %v4392
      %v4394 = vlaneseq
      %v4395 = vshrl.u32 %v4394, 7
      %v4396 = vsub.s32 %v4393, %v4395
      %v4397 = vrot.slane %v4389, %v4396
      %v4399 = vunpack.c.l.s4 1983009808
      %v4400 = vunpack.c.0.s8 %v4399
      %v4401 = vlaneseq
      %v4402 = vshrl.u32 %v4401, 7
      %v4403 = vsub.s32 %v4400, %v4402
      %v4404 = vrot.slane %v4390, %v4403
      %v4405 = vcombine.low %v4397, %v4404
      %v4406 = vcombine.low %v3355, %v3363
      %v4407 = vcombine.low %v3371, %v3370
      %v4409 = vunpack.c.l.s4 1983009808
      %v4410 = vunpack.c.0.s8 %v4409
      %v4411 = vlaneseq
      %v4412 = vshrl.u32 %v4411, 7
      %v4413 = vsub.s32 %v4410, %v4412
      %v4414 = vrot.slane %v4406, %v4413
      %v4416 = vunpack.c.l.s4 1983009808
      %v4417 = vunpack.c.0.s8 %v4416
      %v4418 = vlaneseq
      %v4419 = vshrl.u32 %v4418, 7
      %v4420 = vsub.s32 %v4417, %v4419
      %v4421 = vrot.slane %v4407, %v4420
      %v4422 = vcombine.low %v4414, %v4421
      %v4423 = vcombine.low %v3372, %v3379
      %v4424 = vcombine.low %v3387, %v3395
      %v4426 = vunpack.c.l.s4 1983009808
      %v4427 = vunpack.c.0.s8 %v4426
      %v4428 = vlaneseq
      %v4429 = vshrl.u32 %v4428, 7
      %v4430 = vsub.s32 %v4427, %v4429
      %v4431 = vrot.slane %v4423, %v4430
      %v4433 = vunpack.c.l.s4 1983009808
      %v4434 = vunpack.c.0.s8 %v4433
      %v4435 = vlaneseq
      %v4436 = vshrl.u32 %v4435, 7
      %v4437 = vsub.s32 %v4434, %v4436
      %v4438 = vrot.slane %v4424, %v4437
      %v4439 = vcombine.low %v4431, %v4438
      %v4440 = vcombine.low %v3394, %v3396
      %v4441 = vcombine.low %v3404, %v3412
      %v4443 = vunpack.c.l.s4 1983009808
      %v4444 = vunpack.c.0.s8 %v4443
      %v4445 = vlaneseq
      %v4446 = vshrl.u32 %v4445, 7
      %v4447 = vsub.s32 %v4444, %v4446
      %v4448 = vrot.slane %v4440, %v4447
      %v4450 = vunpack.c.l.s4 1983009808
      %v4451 = vunpack.c.0.s8 %v4450
      %v4452 = vlaneseq
      %v4453 = vshrl.u32 %v4452, 7
      %v4454 = vsub.s32 %v4451, %v4453
      %v4455 = vrot.slane %v4441, %v4454
      %v4456 = vcombine.low %v4448, %v4455
      %v4457 = vcombine.low %v3411, %v3413
      %v4458 = vcombine.low %v3420, %v3428
      %v4460 = vunpack.c.l.s4 1983009808
      %v4461 = vunpack.c.0.s8 %v4460
      %v4462 = vlaneseq
      %v4463 = vshrl.u32 %v4462, 7
      %v4464 = vsub.s32 %v4461, %v4463
      %v4465 = vrot.slane %v4457, %v4464
      %v4467 = vunpack.c.l.s4 1983009808
      %v4468 = vunpack.c.0.s8 %v4467
      %v4469 = vlaneseq
      %v4470 = vshrl.u32 %v4469, 7
      %v4471 = vsub.s32 %v4468, %v4470
      %v4472 = vrot.slane %v4458, %v4471
      %v4473 = vcombine.low %v4465, %v4472
      %v4474 = vcombine.low %v3436, %v3435
      %v4475 = vcombine.low %v3437, %v3445
      %v4477 = vunpack.c.l.s4 1983009808
      %v4478 = vunpack.c.0.s8 %v4477
      %v4479 = vlaneseq
      %v4480 = vshrl.u32 %v4479, 7
      %v4481 = vsub.s32 %v4478, %v4480
      %v4482 = vrot.slane %v4474, %v4481
      %v4484 = vunpack.c.l.s4 1983009808
      %v4485 = vunpack.c.0.s8 %v4484
      %v4486 = vlaneseq
      %v4487 = vshrl.u32 %v4486, 7
      %v4488 = vsub.s32 %v4485, %v4487
      %v4489 = vrot.slane %v4475, %v4488
      %v4490 = vcombine.low %v4482, %v4489
      %v4491 = vcombine.low %v3453, %v3452
      %v4492 = vcombine.low %v3454, %v3461
      %v4494 = vunpack.c.l.s4 1983009808
      %v4495 = vunpack.c.0.s8 %v4494
      %v4496 = vlaneseq
      %v4497 = vshrl.u32 %v4496, 7
      %v4498 = vsub.s32 %v4495, %v4497
      %v4499 = vrot.slane %v4491, %v4498
      %v4501 = vunpack.c.l.s4 1983009808
      %v4502 = vunpack.c.0.s8 %v4501
      %v4503 = vlaneseq
      %v4504 = vshrl.u32 %v4503, 7
      %v4505 = vsub.s32 %v4502, %v4504
      %v4506 = vrot.slane %v4492, %v4505
      %v4507 = vcombine.low %v4499, %v4506
      %v4508 = vcombine.low %v3469, %v3477
      %v4509 = vcombine.low %v3476, %v3478
      %v4511 = vunpack.c.l.s4 1983009808
      %v4512 = vunpack.c.0.s8 %v4511
      %v4513 = vlaneseq
      %v4514 = vshrl.u32 %v4513, 7
      %v4515 = vsub.s32 %v4512, %v4514
      %v4516 = vrot.slane %v4508, %v4515
      %v4518 = vunpack.c.l.s4 1983009808
      %v4519 = vunpack.c.0.s8 %v4518
      %v4520 = vlaneseq
      %v4521 = vshrl.u32 %v4520, 7
      %v4522 = vsub.s32 %v4519, %v4521
      %v4523 = vrot.slane %v4509, %v4522
      %v4524 = vcombine.low %v4516, %v4523
      %v4525 = vcombine.low %v3486, %v3494
      %v4526 = vcombine.low %v3493, %v3495
      %v4528 = vunpack.c.l.s4 1983009808
      %v4529 = vunpack.c.0.s8 %v4528
      %v4530 = vlaneseq
      %v4531 = vshrl.u32 %v4530, 7
      %v4532 = vsub.s32 %v4529, %v4531
      %v4533 = vrot.slane %v4525, %v4532
      %v4535 = vunpack.c.l.s4 1983009808
      %v4536 = vunpack.c.0.s8 %v4535
      %v4537 = vlaneseq
      %v4538 = vshrl.u32 %v4537, 7
      %v4539 = vsub.s32 %v4536, %v4538
      %v4540 = vrot.slane %v4526, %v4539
      %v4541 = vcombine.low %v4533, %v4540
      %v4542 = vcombine.low %v3502, %v3510
      %v4543 = vcombine.low %v3518, %v3517
      %v4545 = vunpack.c.l.s4 1983009808
      %v4546 = vunpack.c.0.s8 %v4545
      %v4547 = vlaneseq
      %v4548 = vshrl.u32 %v4547, 7
      %v4549 = vsub.s32 %v4546, %v4548
      %v4550 = vrot.slane %v4542, %v4549
      %v4552 = vunpack.c.l.s4 1983009808
      %v4553 = vunpack.c.0.s8 %v4552
      %v4554 = vlaneseq
      %v4555 = vshrl.u32 %v4554, 7
      %v4556 = vsub.s32 %v4553, %v4555
      %v4557 = vrot.slane %v4543, %v4556
      %v4558 = vcombine.low %v4550, %v4557
      %v4559 = vcombine.low %v3519, %v3527
      %v4560 = vcombine.low %v3535, %v3534
      %v4562 = vunpack.c.l.s4 1983009808
      %v4563 = vunpack.c.0.s8 %v4562
      %v4564 = vlaneseq
      %v4565 = vshrl.u32 %v4564, 7
      %v4566 = vsub.s32 %v4563, %v4565
      %v4567 = vrot.slane %v4559, %v4566
      %v4569 = vunpack.c.l.s4 1983009808
      %v4570 = vunpack.c.0.s8 %v4569
      %v4571 = vlaneseq
      %v4572 = vshrl.u32 %v4571, 7
      %v4573 = vsub.s32 %v4570, %v4572
      %v4574 = vrot.slane %v4560, %v4573
      %v4575 = vcombine.low %v4567, %v4574
      %v4576 = vcombine.low %v3536, %v3543
      %v4578 = vunpack.c.l.s4 1983009808
      %v4579 = vunpack.c.0.s8 %v4578
      %v4580 = vlaneseq
      %v4581 = vshrl.u32 %v4580, 7
      %v4582 = vsub.s32 %v4579, %v4581
      %v4583 = vrot.slane %v4576, %v4582
      %v4584 = vsel %vm3937, %v4218, 0
      %v4586 = vsel %vm3937, %v4235, 0
      %v4588 = vsel %vm3937, %v4252, 0
      %v4590 = vsel %vm3937, %v4269, 0
      %v4592 = vsel %vm3937, %v4286, 0
      %v4594 = vsel %vm3937, %v4303, 0
      %v4596 = vsel %vm3937, %v4320, 0
      %v4598 = vsel %vm3937, %v4337, 0
      %v4600 = vsel %vm3937, %v4354, 0
      %v4602 = vsel %vm3937, %v4371, 0
      %v4604 = vsel %vm3937, %v4388, 0
      %v4606 = vsel %vm3937, %v4405, 0
      %v4608 = vsel %vm3937, %v4422, 0
      %v4610 = vsel %vm3937, %v4439, 0
      %v4612 = vsel %vm3937, %v4456, 0
      %v4614 = vsel %vm3937, %v4473, 0
      %v4616 = vsel %vm3937, %v4490, 0
      %v4618 = vsel %vm3937, %v4507, 0
      %v4620 = vsel %vm3937, %v4524, 0
      %v4622 = vsel %vm3937, %v4541, 0
      %v4624 = vsel %vm3937, %v4558, 0
      %v4626 = vsel %vm3937, %v4575, 0
      %v4628 = vsel %vm3937, %v4583, 0
      %v4631 = vsel %vm3984, %v4194, 0
      %4633 = vmatprep.subr.mxu0 0.0
      %4634 = vmatpush1.msra.mxu0 %v4191
      %4635 = vmatprep.subr.mxu0 0.0
      %4636 = vmatpush1.msra.mxu0 %v4192
      %4637 = vmatprep.subr.mxu0 0.0
      %4638 = vmatpush1.msra.mxu0 %v4193
      %4639 = vmatprep.subr.mxu0 0.0
      %4640 = vmatpush1.msra.mxu0 %v4631
      %4641 = vmatprep.subr.mxu0 0.0
      %4642 = vmatpush1.msra.mxu0 0.0
      %4643 = vmatprep.subr.mxu0 0.0
      %4644 = vmatpush1.msra.mxu0 0.0
      %4645 = vmatprep.subr.mxu0 0.0
      %4646 = vmatpush1.msra.mxu0 0.0
      %4647 = vmatprep.subr.mxu0 0.0
      %4648 = vmatpush1.msra.mxu0 0.0
      %4649 = vmatprep.subr.mxu0 0.0
      %4650 = vmatpush1.msra.mxu0 0.0
      %4651 = vmatprep.subr.mxu0 0.0
      %4652 = vmatpush1.msra.mxu0 0.0
      %4653 = vmatprep.subr.mxu0 0.0
      %4654 = vmatpush1.msra.mxu0 0.0
      %4655 = vmatprep.subr.mxu0 0.0
      %4656 = vmatpush1.msra.mxu0 0.0
      %4657 = vmatprep.subr.mxu0 0.0
      %4658 = vmatpush1.msra.mxu0 0.0
      %4659 = vmatprep.subr.mxu0 0.0
      %4660 = vmatpush1.msra.mxu0 0.0
      %4661 = vmatprep.subr.mxu0 0.0
      %4662 = vmatpush1.msra.mxu0 0.0
      %4663 = vmatprep.subr.mxu0 0.0
      %4664 = vmatpush1.msra.mxu0 0.0
      %4665 = vmatprep.subr.mxu0 0.0
      %4666 = vmatpush1.msra.mxu0 0.0
      %4667 = vmatprep.subr.mxu0 0.0
      %4668 = vmatpush1.msra.mxu0 0.0
      %4669 = vmatprep.subr.mxu0 0.0
      %4670 = vmatpush1.msra.mxu0 0.0
      %4671 = vmatprep.subr.mxu0 0.0
      %4672 = vmatpush1.msra.mxu0 0.0
      %4673 = vmatprep.subr.mxu0 0.0
      %4674 = vmatpush1.msra.mxu0 0.0
      %4675 = vmatprep.subr.mxu0 0.0
      %4676 = vmatpush1.msra.mxu0 0.0
      %4677 = vmatprep.subr.mxu0 0.0
      %4678 = vmatpush1.msra.mxu0 0.0
      %4679 = vmatprep.subr.mxu0 0.0
      %4680 = vmatpush1.msra.mxu0 0.0
      %4681 = vmatprep.subr.mxu0 0.0
      %4682 = vmatpush1.msra.mxu0 0.0
      %4683 = vmatprep.subr.mxu0 0.0
      %4684 = vmatpush1.msra.mxu0 0.0
      %4685 = vmatprep.subr.mxu0 0.0
      %4686 = vmatpush1.msra.mxu0 0.0
      %4687 = vmatprep.subr.mxu0 0.0
      %4688 = vmatpush1.msra.mxu0 0.0
      %4689 = vmatprep.subr.mxu0 0.0
      %4690 = vmatpush1.msra.mxu0 0.0
      %4691 = vmatprep.subr.mxu0 0.0
      %4692 = vmatpush1.msra.mxu0 0.0
      %4693 = vmatprep.subr.mxu0 0.0
      %4694 = vmatpush1.msra.mxu0 0.0
      %4695 = vmatprep.subr.mxu0 0.0
      %4696 = vmatpush1.msra.mxu0 0.0
      %4697 = vmatprep.mubr.f32.mxu0 0.0
      %4698 = vmatmul.mubr.f32.gmra.mrb[0].mxu0 %v4584
      %v4699 = vpop.f32.mrb[0].mxu0
      %v4700 = vadd.f32 %v4200, %v4699
      %v4701 = vpop.f32.mrb[0].mxu0
      %4702 = vmatprep.mubr.f32.mxu0 0.0
      %4703 = vmatmul.mubr.f32.gmra.mrb[0].mxu0 %v4586
      %v4704 = vpop.f32.mrb[0].mxu0
      %v4705 = vadd.f32 %v4200, %v4704
      %v4706 = vpop.f32.mrb[0].mxu0
      %4707 = vmatprep.mubr.f32.mxu0 0.0
      %4708 = vmatmul.mubr.f32.gmra.mrb[0].mxu0 %v4588
      %v4709 = vpop.f32.mrb[0].mxu0
      %v4710 = vadd.f32 %v4200, %v4709
      %v4711 = vpop.f32.mrb[0].mxu0
      %4712 = vmatprep.mubr.f32.mxu0 0.0
      %4713 = vmatmul.mubr.f32.gmra.mrb[0].mxu0 %v4590
      %v4714 = vpop.f32.mrb[0].mxu0
      %v4715 = vadd.f32 %v4200, %v4714
      %v4716 = vpop.f32.mrb[0].mxu0
      %4717 = vmatprep.mubr.f32.mxu0 0.0
      %4718 = vmatmul.mubr.f32.gmra.mrb[0].mxu0 %v4592
      %v4719 = vpop.f32.mrb[0].mxu0
      %v4720 = vadd.f32 %v4200, %v4719
      %v4721 = vpop.f32.mrb[0].mxu0
      %4722 = vmatprep.mubr.f32.mxu0 0.0
      %4723 = vmatmul.mubr.f32.gmra.mrb[0].mxu0 %v4594
      %v4724 = vpop.f32.mrb[0].mxu0
      %v4725 = vadd.f32 %v4200, %v4724
      %v4726 = vpop.f32.mrb[0].mxu0
      %4727 = vmatprep.mubr.f32.mxu0 0.0
      %4728 = vmatmul.mubr.f32.gmra.mrb[0].mxu0 %v4596
      %v4729 = vpop.f32.mrb[0].mxu0
      %v4730 = vadd.f32 %v4200, %v4729
      %v4731 = vpop.f32.mrb[0].mxu0
      %4732 = vmatprep.mubr.f32.mxu0 0.0
      %4733 = vmatmul.mubr.f32.gmra.mrb[0].mxu0 %v4598
      %v4734 = vpop.f32.mrb[0].mxu0
      %v4735 = vadd.f32 %v4200, %v4734
      %v4736 = vpop.f32.mrb[0].mxu0
      %4737 = vmatprep.mubr.f32.mxu0 0.0
      %4738 = vmatmul.mubr.f32.gmra.mrb[0].mxu0 %v4600
      %v4739 = vpop.f32.mrb[0].mxu0
      %v4740 = vadd.f32 %v4200, %v4739
      %v4741 = vpop.f32.mrb[0].mxu0
      %4742 = vmatprep.mubr.f32.mxu0 0.0
      %4743 = vmatmul.mubr.f32.gmra.mrb[0].mxu0 %v4602
      %v4744 = vpop.f32.mrb[0].mxu0
      %v4745 = vadd.f32 %v4200, %v4744
      %v4746 = vpop.f32.mrb[0].mxu0
      %4747 = vmatprep.mubr.f32.mxu0 0.0
      %4748 = vmatmul.mubr.f32.gmra.mrb[0].mxu0 %v4604
      %v4749 = vpop.f32.mrb[0].mxu0
      %v4750 = vadd.f32 %v4200, %v4749
      %v4751 = vpop.f32.mrb[0].mxu0
      %4752 = vmatprep.mubr.f32.mxu0 0.0
      %4753 = vmatmul.mubr.f32.gmra.mrb[0].mxu0 %v4606
      %v4754 = vpop.f32.mrb[0].mxu0
      %v4755 = vadd.f32 %v4200, %v4754
      %v4756 = vpop.f32.mrb[0].mxu0
      %4757 = vmatprep.mubr.f32.mxu0 0.0
      %4758 = vmatmul.mubr.f32.gmra.mrb[0].mxu0 %v4608
      %v4759 = vpop.f32.mrb[0].mxu0
      %v4760 = vadd.f32 %v4200, %v4759
      %v4761 = vpop.f32.mrb[0].mxu0
      %4762 = vmatprep.mubr.f32.mxu0 0.0
      %4763 = vmatmul.mubr.f32.gmra.mrb[0].mxu0 %v4610
      %v4764 = vpop.f32.mrb[0].mxu0
      %v4765 = vadd.f32 %v4200, %v4764
      %v4766 = vpop.f32.mrb[0].mxu0
      %4767 = vmatprep.mubr.f32.mxu0 0.0
      %4768 = vmatmul.mubr.f32.gmra.mrb[0].mxu0 %v4612
      %v4769 = vpop.f32.mrb[0].mxu0
      %v4770 = vadd.f32 %v4200, %v4769
      %v4771 = vpop.f32.mrb[0].mxu0
      %4772 = vmatprep.mubr.f32.mxu0 0.0
      %4773 = vmatmul.mubr.f32.gmra.mrb[0].mxu0 %v4614
      %v4774 = vpop.f32.mrb[0].mxu0
      %v4775 = vadd.f32 %v4200, %v4774
      %v4776 = vpop.f32.mrb[0].mxu0
      %4777 = vmatprep.mubr.f32.mxu0 0.0
      %4778 = vmatmul.mubr.f32.gmra.mrb[0].mxu0 %v4616
      %v4779 = vpop.f32.mrb[0].mxu0
      %v4780 = vadd.f32 %v4200, %v4779
      %v4781 = vpop.f32.mrb[0].mxu0
      %4782 = vmatprep.mubr.f32.mxu0 0.0
      %4783 = vmatmul.mubr.f32.gmra.mrb[0].mxu0 %v4618
      %v4784 = vpop.f32.mrb[0].mxu0
      %v4785 = vadd.f32 %v4200, %v4784
      %v4786 = vpop.f32.mrb[0].mxu0
      %4787 = vmatprep.mubr.f32.mxu0 0.0
      %4788 = vmatmul.mubr.f32.gmra.mrb[0].mxu0 %v4620
      %v4789 = vpop.f32.mrb[0].mxu0
      %v4790 = vadd.f32 %v4200, %v4789
      %v4791 = vpop.f32.mrb[0].mxu0
      %4792 = vmatprep.mubr.f32.mxu0 0.0
      %4793 = vmatmul.mubr.f32.gmra.mrb[0].mxu0 %v4622
      %v4794 = vpop.f32.mrb[0].mxu0
      %v4795 = vadd.f32 %v4200, %v4794
      %v4796 = vpop.f32.mrb[0].mxu0
      %4797 = vmatprep.mubr.f32.mxu0 0.0
      %4798 = vmatmul.mubr.f32.gmra.mrb[0].mxu0 %v4624
      %v4799 = vpop.f32.mrb[0].mxu0
      %v4800 = vadd.f32 %v4200, %v4799
      %v4801 = vpop.f32.mrb[0].mxu0
      %4802 = vmatprep.mubr.f32.mxu0 0.0
      %4803 = vmatmul.mubr.f32.gmra.mrb[0].mxu0 %v4626
      %v4804 = vpop.f32.mrb[0].mxu0
      %v4805 = vadd.f32 %v4200, %v4804
      %v4806 = vpop.f32.mrb[0].mxu0
      %4807 = vmatprep.mubr.f32.mxu0 0.0
      %4808 = vmatmul.mubr.f32.gmra.mrb[0].mxu0 %v4628
      %v4809 = vpop.f32.mrb[0].mxu0
      %v4810 = vadd.f32 %v4200, %v4809
      %v4811 = vpop.f32.mrb[0].mxu0
      %4812 = vdwg.mxu0
      %v4813 = vmax.f32 %v4700, 0.0
      %v4814 = vmax.f32 %v4705, 0.0
      %v4815 = vmax.f32 %v4710, 0.0
      %v4816 = vmax.f32 %v4715, 0.0
      %v4817 = vmax.f32 %v4720, 0.0
      %v4818 = vmax.f32 %v4725, 0.0
      %v4819 = vmax.f32 %v4730, 0.0
      %v4820 = vmax.f32 %v4735, 0.0
      %v4821 = vmax.f32 %v4740, 0.0
      %v4822 = vmax.f32 %v4745, 0.0
      %v4823 = vmax.f32 %v4750, 0.0
      %v4824 = vmax.f32 %v4755, 0.0
      %v4825 = vmax.f32 %v4760, 0.0
      %v4826 = vmax.f32 %v4765, 0.0
      %v4827 = vmax.f32 %v4770, 0.0
      %v4828 = vmax.f32 %v4775, 0.0
      %v4829 = vmax.f32 %v4780, 0.0
      %v4830 = vmax.f32 %v4785, 0.0
      %v4831 = vmax.f32 %v4790, 0.0
      %v4832 = vmax.f32 %v4795, 0.0
      %v4833 = vmax.f32 %v4800, 0.0
      %v4834 = vmax.f32 %v4805, 0.0
      %v4835 = vmax.f32 %v4810, 0.0
      %v4836 = vadd.f32 %v4168, %v4813
      %v4837 = vadd.f32 %v4169, %v4814
      %v4838 = vadd.f32 %v4170, %v4815
      %v4839 = vadd.f32 %v4171, %v4816
      %v4840 = vadd.f32 %v4172, %v4817
      %v4841 = vadd.f32 %v4173, %v4818
      %v4842 = vadd.f32 %v4174, %v4819
      %v4843 = vadd.f32 %v4175, %v4820
      %v4844 = vadd.f32 %v4176, %v4821
      %v4845 = vadd.f32 %v4177, %v4822
      %v4846 = vadd.f32 %v4178, %v4823
      %v4847 = vadd.f32 %v4179, %v4824
      %v4848 = vadd.f32 %v4180, %v4825
      %v4849 = vadd.f32 %v4181, %v4826
      %v4850 = vadd.f32 %v4182, %v4827
      %v4851 = vadd.f32 %v4183, %v4828
      %v4852 = vadd.f32 %v4184, %v4829
      %v4853 = vadd.f32 %v4185, %v4830
      %v4854 = vadd.f32 %v4186, %v4831
      %v4855 = vadd.f32 %v4187, %v4832
      %v4856 = vadd.f32 %v4188, %v4833
      %v4857 = vadd.f32 %v4189, %v4834
      %v4858 = vadd.f32 %v4190, %v4835
      %v4882 = vcombine.high %v4836, %v4836
      %v4884 = vunpack.c.l.s4 1983009808
      %v4885 = vunpack.c.0.s8 %v4884
      %v4886 = vlaneseq
      %v4887 = vshrl.u32 %v4886, 7
      %v4888 = vsub.s32 %v4885, %v4887
      %v4889 = vrot.slane %v4836, %v4888
      %v4891 = vunpack.c.l.s4 1983009808
      %v4892 = vunpack.c.0.s8 %v4891
      %v4893 = vlaneseq
      %v4894 = vshrl.u32 %v4893, 7
      %v4895 = vsub.s32 %v4892, %v4894
      %v4896 = vrot.slane %v4882, %v4895
      %v4897 = vcombine.high %v4889, %v4889
      %v4898 = vcombine.high %v4896, %v4896
      %v4899 = vcombine.high %v4837, %v4837
      %v4901 = vunpack.c.l.s4 1983009808
      %v4902 = vunpack.c.0.s8 %v4901
      %v4903 = vlaneseq
      %v4904 = vshrl.u32 %v4903, 7
      %v4905 = vsub.s32 %v4902, %v4904
      %v4906 = vrot.slane %v4837, %v4905
      %v4908 = vunpack.c.l.s4 1983009808
      %v4909 = vunpack.c.0.s8 %v4908
      %v4910 = vlaneseq
      %v4911 = vshrl.u32 %v4910, 7
      %v4912 = vsub.s32 %v4909, %v4911
      %v4913 = vrot.slane %v4899, %v4912
      %v4914 = vcombine.high %v4906, %v4906
      %v4915 = vcombine.high %v4913, %v4913
      %v4916 = vcombine.high %v4838, %v4838
      %v4918 = vunpack.c.l.s4 1983009808
      %v4919 = vunpack.c.0.s8 %v4918
      %v4920 = vlaneseq
      %v4921 = vshrl.u32 %v4920, 7
      %v4922 = vsub.s32 %v4919, %v4921
      %v4923 = vrot.slane %v4838, %v4922
      %v4925 = vunpack.c.l.s4 1983009808
      %v4926 = vunpack.c.0.s8 %v4925
      %v4927 = vlaneseq
      %v4928 = vshrl.u32 %v4927, 7
      %v4929 = vsub.s32 %v4926, %v4928
      %v4930 = vrot.slane %v4916, %v4929
      %v4931 = vcombine.high %v4923, %v4923
      %v4932 = vcombine.high %v4930, %v4930
      %v4933 = vcombine.high %v4839, %v4839
      %v4935 = vunpack.c.l.s4 1983009808
      %v4936 = vunpack.c.0.s8 %v4935
      %v4937 = vlaneseq
      %v4938 = vshrl.u32 %v4937, 7
      %v4939 = vsub.s32 %v4936, %v4938
      %v4940 = vrot.slane %v4839, %v4939
      %v4942 = vunpack.c.l.s4 1983009808
      %v4943 = vunpack.c.0.s8 %v4942
      %v4944 = vlaneseq
      %v4945 = vshrl.u32 %v4944, 7
      %v4946 = vsub.s32 %v4943, %v4945
      %v4947 = vrot.slane %v4933, %v4946
      %v4948 = vcombine.high %v4940, %v4940
      %v4949 = vcombine.high %v4947, %v4947
      %v4950 = vcombine.high %v4840, %v4840
      %v4952 = vunpack.c.l.s4 1983009808
      %v4953 = vunpack.c.0.s8 %v4952
      %v4954 = vlaneseq
      %v4955 = vshrl.u32 %v4954, 7
      %v4956 = vsub.s32 %v4953, %v4955
      %v4957 = vrot.slane %v4840, %v4956
      %v4959 = vunpack.c.l.s4 1983009808
      %v4960 = vunpack.c.0.s8 %v4959
      %v4961 = vlaneseq
      %v4962 = vshrl.u32 %v4961, 7
      %v4963 = vsub.s32 %v4960, %v4962
      %v4964 = vrot.slane %v4950, %v4963
      %v4965 = vcombine.high %v4957, %v4957
      %v4966 = vcombine.high %v4964, %v4964
      %v4967 = vcombine.high %v4841, %v4841
      %v4969 = vunpack.c.l.s4 1983009808
      %v4970 = vunpack.c.0.s8 %v4969
      %v4971 = vlaneseq
      %v4972 = vshrl.u32 %v4971, 7
      %v4973 = vsub.s32 %v4970, %v4972
      %v4974 = vrot.slane %v4841, %v4973
      %v4976 = vunpack.c.l.s4 1983009808
      %v4977 = vunpack.c.0.s8 %v4976
      %v4978 = vlaneseq
      %v4979 = vshrl.u32 %v4978, 7
      %v4980 = vsub.s32 %v4977, %v4979
      %v4981 = vrot.slane %v4967, %v4980
      %v4982 = vcombine.high %v4974, %v4974
      %v4983 = vcombine.high %v4981, %v4981
      %v4984 = vcombine.high %v4842, %v4842
      %v4986 = vunpack.c.l.s4 1983009808
      %v4987 = vunpack.c.0.s8 %v4986
      %v4988 = vlaneseq
      %v4989 = vshrl.u32 %v4988, 7
      %v4990 = vsub.s32 %v4987, %v4989
      %v4991 = vrot.slane %v4842, %v4990
      %v4993 = vunpack.c.l.s4 1983009808
      %v4994 = vunpack.c.0.s8 %v4993
      %v4995 = vlaneseq
      %v4996 = vshrl.u32 %v4995, 7
      %v4997 = vsub.s32 %v4994, %v4996
      %v4998 = vrot.slane %v4984, %v4997
      %v4999 = vcombine.high %v4991, %v4991
      %v5000 = vcombine.high %v4998, %v4998
      %v5001 = vcombine.high %v4843, %v4843
      %v5003 = vunpack.c.l.s4 1983009808
      %v5004 = vunpack.c.0.s8 %v5003
      %v5005 = vlaneseq
      %v5006 = vshrl.u32 %v5005, 7
      %v5007 = vsub.s32 %v5004, %v5006
      %v5008 = vrot.slane %v4843, %v5007
      %v5010 = vunpack.c.l.s4 1983009808
      %v5011 = vunpack.c.0.s8 %v5010
      %v5012 = vlaneseq
      %v5013 = vshrl.u32 %v5012, 7
      %v5014 = vsub.s32 %v5011, %v5013
      %v5015 = vrot.slane %v5001, %v5014
      %v5016 = vcombine.high %v5008, %v5008
      %v5017 = vcombine.high %v5015, %v5015
      %v5018 = vcombine.high %v4844, %v4844
      %v5020 = vunpack.c.l.s4 1983009808
      %v5021 = vunpack.c.0.s8 %v5020
      %v5022 = vlaneseq
      %v5023 = vshrl.u32 %v5022, 7
      %v5024 = vsub.s32 %v5021, %v5023
      %v5025 = vrot.slane %v4844, %v5024
      %v5027 = vunpack.c.l.s4 1983009808
      %v5028 = vunpack.c.0.s8 %v5027
      %v5029 = vlaneseq
      %v5030 = vshrl.u32 %v5029, 7
      %v5031 = vsub.s32 %v5028, %v5030
      %v5032 = vrot.slane %v5018, %v5031
      %v5033 = vcombine.high %v5025, %v5025
      %v5034 = vcombine.high %v5032, %v5032
      %v5035 = vcombine.high %v4845, %v4845
      %v5037 = vunpack.c.l.s4 1983009808
      %v5038 = vunpack.c.0.s8 %v5037
      %v5039 = vlaneseq
      %v5040 = vshrl.u32 %v5039, 7
      %v5041 = vsub.s32 %v5038, %v5040
      %v5042 = vrot.slane %v4845, %v5041
      %v5044 = vunpack.c.l.s4 1983009808
      %v5045 = vunpack.c.0.s8 %v5044
      %v5046 = vlaneseq
      %v5047 = vshrl.u32 %v5046, 7
      %v5048 = vsub.s32 %v5045, %v5047
      %v5049 = vrot.slane %v5035, %v5048
      %v5050 = vcombine.high %v5042, %v5042
      %v5051 = vcombine.high %v5049, %v5049
      %v5052 = vcombine.high %v4846, %v4846
      %v5054 = vunpack.c.l.s4 1983009808
      %v5055 = vunpack.c.0.s8 %v5054
      %v5056 = vlaneseq
      %v5057 = vshrl.u32 %v5056, 7
      %v5058 = vsub.s32 %v5055, %v5057
      %v5059 = vrot.slane %v4846, %v5058
      %v5061 = vunpack.c.l.s4 1983009808
      %v5062 = vunpack.c.0.s8 %v5061
      %v5063 = vlaneseq
      %v5064 = vshrl.u32 %v5063, 7
      %v5065 = vsub.s32 %v5062, %v5064
      %v5066 = vrot.slane %v5052, %v5065
      %v5067 = vcombine.high %v5059, %v5059
      %v5068 = vcombine.high %v5066, %v5066
      %v5069 = vcombine.high %v4847, %v4847
      %v5071 = vunpack.c.l.s4 1983009808
      %v5072 = vunpack.c.0.s8 %v5071
      %v5073 = vlaneseq
      %v5074 = vshrl.u32 %v5073, 7
      %v5075 = vsub.s32 %v5072, %v5074
      %v5076 = vrot.slane %v4847, %v5075
      %v5078 = vunpack.c.l.s4 1983009808
      %v5079 = vunpack.c.0.s8 %v5078
      %v5080 = vlaneseq
      %v5081 = vshrl.u32 %v5080, 7
      %v5082 = vsub.s32 %v5079, %v5081
      %v5083 = vrot.slane %v5069, %v5082
      %v5084 = vcombine.high %v5076, %v5076
      %v5085 = vcombine.high %v5083, %v5083
      %v5086 = vcombine.high %v4848, %v4848
      %v5088 = vunpack.c.l.s4 1983009808
      %v5089 = vunpack.c.0.s8 %v5088
      %v5090 = vlaneseq
      %v5091 = vshrl.u32 %v5090, 7
      %v5092 = vsub.s32 %v5089, %v5091
      %v5093 = vrot.slane %v4848, %v5092
      %v5095 = vunpack.c.l.s4 1983009808
      %v5096 = vunpack.c.0.s8 %v5095
      %v5097 = vlaneseq
      %v5098 = vshrl.u32 %v5097, 7
      %v5099 = vsub.s32 %v5096, %v5098
      %v5100 = vrot.slane %v5086, %v5099
      %v5101 = vcombine.high %v5093, %v5093
      %v5102 = vcombine.high %v5100, %v5100
      %v5103 = vcombine.high %v4849, %v4849
      %v5105 = vunpack.c.l.s4 1983009808
      %v5106 = vunpack.c.0.s8 %v5105
      %v5107 = vlaneseq
      %v5108 = vshrl.u32 %v5107, 7
      %v5109 = vsub.s32 %v5106, %v5108
      %v5110 = vrot.slane %v4849, %v5109
      %v5112 = vunpack.c.l.s4 1983009808
      %v5113 = vunpack.c.0.s8 %v5112
      %v5114 = vlaneseq
      %v5115 = vshrl.u32 %v5114, 7
      %v5116 = vsub.s32 %v5113, %v5115
      %v5117 = vrot.slane %v5103, %v5116
      %v5118 = vcombine.high %v5110, %v5110
      %v5119 = vcombine.high %v5117, %v5117
      %v5120 = vcombine.high %v4850, %v4850
      %v5122 = vunpack.c.l.s4 1983009808
      %v5123 = vunpack.c.0.s8 %v5122
      %v5124 = vlaneseq
      %v5125 = vshrl.u32 %v5124, 7
      %v5126 = vsub.s32 %v5123, %v5125
      %v5127 = vrot.slane %v4850, %v5126
      %v5129 = vunpack.c.l.s4 1983009808
      %v5130 = vunpack.c.0.s8 %v5129
      %v5131 = vlaneseq
      %v5132 = vshrl.u32 %v5131, 7
      %v5133 = vsub.s32 %v5130, %v5132
      %v5134 = vrot.slane %v5120, %v5133
      %v5135 = vcombine.high %v5127, %v5127
      %v5136 = vcombine.high %v5134, %v5134
      %v5137 = vcombine.high %v4851, %v4851
      %v5139 = vunpack.c.l.s4 1983009808
      %v5140 = vunpack.c.0.s8 %v5139
      %v5141 = vlaneseq
      %v5142 = vshrl.u32 %v5141, 7
      %v5143 = vsub.s32 %v5140, %v5142
      %v5144 = vrot.slane %v4851, %v5143
      %v5146 = vunpack.c.l.s4 1983009808
      %v5147 = vunpack.c.0.s8 %v5146
      %v5148 = vlaneseq
      %v5149 = vshrl.u32 %v5148, 7
      %v5150 = vsub.s32 %v5147, %v5149
      %v5151 = vrot.slane %v5137, %v5150
      %v5152 = vcombine.high %v5144, %v5144
      %v5153 = vcombine.high %v5151, %v5151
      %v5154 = vcombine.high %v4852, %v4852
      %v5156 = vunpack.c.l.s4 1983009808
      %v5157 = vunpack.c.0.s8 %v5156
      %v5158 = vlaneseq
      %v5159 = vshrl.u32 %v5158, 7
      %v5160 = vsub.s32 %v5157, %v5159
      %v5161 = vrot.slane %v4852, %v5160
      %v5163 = vunpack.c.l.s4 1983009808
      %v5164 = vunpack.c.0.s8 %v5163
      %v5165 = vlaneseq
      %v5166 = vshrl.u32 %v5165, 7
      %v5167 = vsub.s32 %v5164, %v5166
      %v5168 = vrot.slane %v5154, %v5167
      %v5169 = vcombine.high %v5161, %v5161
      %v5170 = vcombine.high %v5168, %v5168
      %v5171 = vcombine.high %v4853, %v4853
      %v5173 = vunpack.c.l.s4 1983009808
      %v5174 = vunpack.c.0.s8 %v5173
      %v5175 = vlaneseq
      %v5176 = vshrl.u32 %v5175, 7
      %v5177 = vsub.s32 %v5174, %v5176
      %v5178 = vrot.slane %v4853, %v5177
      %v5180 = vunpack.c.l.s4 1983009808
      %v5181 = vunpack.c.0.s8 %v5180
      %v5182 = vlaneseq
      %v5183 = vshrl.u32 %v5182, 7
      %v5184 = vsub.s32 %v5181, %v5183
      %v5185 = vrot.slane %v5171, %v5184
      %v5186 = vcombine.high %v5178, %v5178
      %v5187 = vcombine.high %v5185, %v5185
      %v5188 = vcombine.high %v4854, %v4854
      %v5190 = vunpack.c.l.s4 1983009808
      %v5191 = vunpack.c.0.s8 %v5190
      %v5192 = vlaneseq
      %v5193 = vshrl.u32 %v5192, 7
      %v5194 = vsub.s32 %v5191, %v5193
      %v5195 = vrot.slane %v4854, %v5194
      %v5197 = vunpack.c.l.s4 1983009808
      %v5198 = vunpack.c.0.s8 %v5197
      %v5199 = vlaneseq
      %v5200 = vshrl.u32 %v5199, 7
      %v5201 = vsub.s32 %v5198, %v5200
      %v5202 = vrot.slane %v5188, %v5201
      %v5203 = vcombine.high %v5195, %v5195
      %v5204 = vcombine.high %v5202, %v5202
      %v5205 = vcombine.high %v4855, %v4855
      %v5207 = vunpack.c.l.s4 1983009808
      %v5208 = vunpack.c.0.s8 %v5207
      %v5209 = vlaneseq
      %v5210 = vshrl.u32 %v5209, 7
      %v5211 = vsub.s32 %v5208, %v5210
      %v5212 = vrot.slane %v4855, %v5211
      %v5214 = vunpack.c.l.s4 1983009808
      %v5215 = vunpack.c.0.s8 %v5214
      %v5216 = vlaneseq
      %v5217 = vshrl.u32 %v5216, 7
      %v5218 = vsub.s32 %v5215, %v5217
      %v5219 = vrot.slane %v5205, %v5218
      %v5220 = vcombine.high %v5212, %v5212
      %v5221 = vcombine.high %v5219, %v5219
      %v5222 = vcombine.high %v4856, %v4856
      %v5224 = vunpack.c.l.s4 1983009808
      %v5225 = vunpack.c.0.s8 %v5224
      %v5226 = vlaneseq
      %v5227 = vshrl.u32 %v5226, 7
      %v5228 = vsub.s32 %v5225, %v5227
      %v5229 = vrot.slane %v4856, %v5228
      %v5231 = vunpack.c.l.s4 1983009808
      %v5232 = vunpack.c.0.s8 %v5231
      %v5233 = vlaneseq
      %v5234 = vshrl.u32 %v5233, 7
      %v5235 = vsub.s32 %v5232, %v5234
      %v5236 = vrot.slane %v5222, %v5235
      %v5237 = vcombine.high %v5229, %v5229
      %v5238 = vcombine.high %v5236, %v5236
      %v5239 = vcombine.high %v4857, %v4857
      %v5241 = vunpack.c.l.s4 1983009808
      %v5242 = vunpack.c.0.s8 %v5241
      %v5243 = vlaneseq
      %v5244 = vshrl.u32 %v5243, 7
      %v5245 = vsub.s32 %v5242, %v5244
      %v5246 = vrot.slane %v4857, %v5245
      %v5248 = vunpack.c.l.s4 1983009808
      %v5249 = vunpack.c.0.s8 %v5248
      %v5250 = vlaneseq
      %v5251 = vshrl.u32 %v5250, 7
      %v5252 = vsub.s32 %v5249, %v5251
      %v5253 = vrot.slane %v5239, %v5252
      %v5254 = vcombine.high %v5246, %v5246
      %v5255 = vcombine.high %v5253, %v5253
      %v5257 = vunpack.c.l.s4 1983009808
      %v5258 = vunpack.c.0.s8 %v5257
      %v5259 = vlaneseq
      %v5260 = vshrl.u32 %v5259, 7
      %v5261 = vsub.s32 %v5258, %v5260
      %v5262 = vrot.slane %v4858, %v5261
      %v5263 = vcombine.high %v5262, %v5262
      %v5264 = vlaneseq
      %v5265 = vshrl.u32 %v5264, 7
      %v5266 = vadd.s32 %v5265, 8
      %v5267 = vadd.s32 %v5265, 16
      %v5268 = vstv %s346
      %v5269 = vadd.s32 %v5268, 2
      %v5270 = vadd.s32 %v5268, 3
      %v5271 = vadd.s32 %v5268, 4
      %v5272 = vadd.s32 %v5268, 5
      %v5273 = vadd.s32 %v5268, 6
      %v5274 = vadd.s32 %v5268, 7
      %v5275 = vadd.s32 %v5268, 8
      %v5276 = vadd.s32 %v5268, 9
      %v5277 = vsub.s32 %v5268, 1
      %v5278 = vsub.s32 %v5269, 1
      %v5279 = vsub.s32 %v5270, 1
      %v5280 = vsub.s32 %v5271, 1
      %v5281 = vsub.s32 %v5272, 1
      %v5282 = vsub.s32 %v5273, 1
      %v5283 = vsub.s32 %v5274, 1
      %v5284 = vsub.s32 %v5275, 1
      %v5285 = vsub.s32 %v5276, 1
      %v5286 = vsub.s32 %v5265, 1
      %v5287 = vsub.s32 %v5266, 1
      %v5288 = vsub.s32 %v5267, 1
      %vm5289 = vcmp.ge.s32.totalorder %v5277, 0
      %vm5290 = vcmp.ge.s32.totalorder %v5268, 0
      %vm5291 = vcmp.ge.s32.totalorder %v5278, 0
      %vm5292 = vcmp.ge.s32.totalorder %v5279, 0
      %vm5293 = vcmp.ge.s32.totalorder %v5280, 0
      %vm5294 = vcmp.ge.s32.totalorder %v5281, 0
      %vm5295 = vcmp.ge.s32.totalorder %v5282, 0
      %vm5296 = vcmp.ge.s32.totalorder %v5283, 0
      %vm5297 = vcmp.ge.s32.totalorder %v5284, 0
      %vm5298 = vcmp.ge.s32.totalorder %v5285, 0
      %vm5299 = vcmp.lt.s32.totalorder %v5277, 16
      %vm5300 = vcmp.lt.s32.totalorder %v5268, 16
      %vm5301 = vcmp.lt.s32.totalorder %v5278, 16
      %vm5302 = vcmp.lt.s32.totalorder %v5279, 16
      %vm5303 = vcmp.lt.s32.totalorder %v5280, 16
      %vm5304 = vcmp.lt.s32.totalorder %v5281, 16
      %vm5305 = vcmp.lt.s32.totalorder %v5282, 16
      %vm5306 = vcmp.lt.s32.totalorder %v5283, 16
      %vm5307 = vcmp.lt.s32.totalorder %v5284, 16
      %vm5308 = vcmp.lt.s32.totalorder %v5285, 16
      %vm5309 = vmand %vm5289, %vm5299
      %vm5310 = vmand %vm5290, %vm5300
      %vm5311 = vmand %vm5291, %vm5301
      %vm5312 = vmand %vm5292, %vm5302
      %vm5313 = vmand %vm5293, %vm5303
      %vm5314 = vmand %vm5294, %vm5304
      %vm5315 = vmand %vm5295, %vm5305
      %vm5316 = vmand %vm5296, %vm5306
      %vm5317 = vmand %vm5297, %vm5307
      %vm5318 = vmand %vm5298, %vm5308
      %vm5319 = vcmp.ge.s32.totalorder %v5286, 0
      %vm5320 = vcmp.ge.s32.totalorder %v5287, 0
      %vm5321 = vcmp.ge.s32.totalorder %v5288, 0
      %vm5322 = vmand %vm5309, %vm5319
      %vm5323 = vmand %vm5309, %vm5320
      %vm5324 = vmand %vm5309, %vm5321
      %vm5325 = vmand %vm5310, %vm5319
      %vm5326 = vmand %vm5310, %vm5320
      %vm5327 = vmand %vm5310, %vm5321
      %vm5328 = vmand %vm5311, %vm5319
      %vm5329 = vmand %vm5311, %vm5320
      %vm5330 = vmand %vm5311, %vm5321
      %vm5331 = vmand %vm5312, %vm5319
      %vm5332 = vmand %vm5312, %vm5320
      %vm5333 = vmand %vm5312, %vm5321
      %vm5334 = vmand %vm5313, %vm5319
      %vm5335 = vmand %vm5313, %vm5320
      %vm5336 = vmand %vm5313, %vm5321
      %vm5337 = vmand %vm5314, %vm5319
      %vm5338 = vmand %vm5314, %vm5320
      %vm5339 = vmand %vm5314, %vm5321
      %vm5340 = vmand %vm5315, %vm5319
      %vm5341 = vmand %vm5315, %vm5320
      %vm5342 = vmand %vm5315, %vm5321
      %vm5343 = vmand %vm5316, %vm5319
      %vm5344 = vmand %vm5316, %vm5320
      %vm5345 = vmand %vm5316, %vm5321
      %vm5346 = vmand %vm5317, %vm5319
      %vm5347 = vmand %vm5317, %vm5320
      %vm5348 = vmand %vm5317, %vm5321
      %vm5349 = vmand %vm5318, %vm5319
      %vm5350 = vmand %vm5318, %vm5320
      %vm5351 = vmand %vm5318, %vm5321
      %vm5352 = vcmp.lt.s32.totalorder %v5286, 16
      %vm5353 = vcmp.lt.s32.totalorder %v5287, 16
      %vm5354 = vcmp.lt.s32.totalorder %v5288, 16
      %vm5355 = vmand %vm5322, %vm5352
      %vm5356 = vmand %vm5323, %vm5353
      %vm5357 = vmand %vm5324, %vm5354
      %vm5358 = vmand %vm5325, %vm5352
      %vm5359 = vmand %vm5326, %vm5353
      %vm5360 = vmand %vm5327, %vm5354
      %vm5361 = vmand %vm5328, %vm5352
      %vm5362 = vmand %vm5329, %vm5353
      %vm5363 = vmand %vm5330, %vm5354
      %vm5364 = vmand %vm5331, %vm5352
      %vm5365 = vmand %vm5332, %vm5353
      %vm5366 = vmand %vm5333, %vm5354
      %vm5367 = vmand %vm5334, %vm5352
      %vm5368 = vmand %vm5335, %vm5353
      %vm5369 = vmand %vm5336, %vm5354
      %vm5370 = vmand %vm5337, %vm5352
      %vm5371 = vmand %vm5338, %vm5353
      %vm5372 = vmand %vm5339, %vm5354
      %vm5373 = vmand %vm5340, %vm5352
      %vm5374 = vmand %vm5341, %vm5353
      %vm5375 = vmand %vm5342, %vm5354
      %vm5376 = vmand %vm5343, %vm5352
      %vm5377 = vmand %vm5344, %vm5353
      %vm5378 = vmand %vm5345, %vm5354
      %vm5379 = vmand %vm5346, %vm5352
      %vm5380 = vmand %vm5347, %vm5353
      %vm5381 = vmand %vm5348, %vm5354
      %vm5382 = vmand %vm5349, %vm5352
      %vm5383 = vmand %vm5350, %vm5353
      %vm5384 = vmand %vm5351, %vm5354
      %v5385 = vsel %vm5355, 1, 0
      %v5386 = vsel %vm5356, 1, 0
      %v5387 = vsel %vm5357, 1, 0
      %v5388 = vsel %vm5358, 1, 0
      %v5389 = vsel %vm5359, 1, 0
      %v5390 = vsel %vm5360, 1, 0
      %v5391 = vsel %vm5361, 1, 0
      %v5392 = vsel %vm5362, 1, 0
      %v5393 = vsel %vm5363, 1, 0
      %v5394 = vsel %vm5364, 1, 0
      %v5395 = vsel %vm5365, 1, 0
      %v5396 = vsel %vm5366, 1, 0
      %v5397 = vsel %vm5367, 1, 0
      %v5398 = vsel %vm5368, 1, 0
      %v5399 = vsel %vm5369, 1, 0
      %v5400 = vsel %vm5370, 1, 0
      %v5401 = vsel %vm5371, 1, 0
      %v5402 = vsel %vm5372, 1, 0
      %v5403 = vsel %vm5373, 1, 0
      %v5404 = vsel %vm5374, 1, 0
      %v5405 = vsel %vm5375, 1, 0
      %v5406 = vsel %vm5376, 1, 0
      %v5407 = vsel %vm5377, 1, 0
      %v5408 = vsel %vm5378, 1, 0
      %v5409 = vsel %vm5379, 1, 0
      %v5410 = vsel %vm5380, 1, 0
      %v5411 = vsel %vm5381, 1, 0
      %v5412 = vsel %vm5382, 1, 0
      %v5413 = vsel %vm5383, 1, 0
      %v5414 = vsel %vm5384, 1, 0
      %vm5415 = vcmp.eq.s32.totalorder %v5385, 1
      %vm5416 = vcmp.eq.s32.totalorder %v5386, 1
      %vm5417 = vcmp.eq.s32.totalorder %v5387, 1
      %vm5418 = vcmp.eq.s32.totalorder %v5388, 1
      %vm5419 = vcmp.eq.s32.totalorder %v5389, 1
      %vm5420 = vcmp.eq.s32.totalorder %v5390, 1
      %vm5421 = vcmp.eq.s32.totalorder %v5391, 1
      %vm5422 = vcmp.eq.s32.totalorder %v5392, 1
      %vm5423 = vcmp.eq.s32.totalorder %v5393, 1
      %vm5424 = vcmp.eq.s32.totalorder %v5394, 1
      %vm5425 = vcmp.eq.s32.totalorder %v5395, 1
      %vm5426 = vcmp.eq.s32.totalorder %v5396, 1
      %vm5427 = vcmp.eq.s32.totalorder %v5397, 1
      %vm5428 = vcmp.eq.s32.totalorder %v5398, 1
      %vm5429 = vcmp.eq.s32.totalorder %v5399, 1
      %vm5430 = vcmp.eq.s32.totalorder %v5400, 1
      %vm5431 = vcmp.eq.s32.totalorder %v5401, 1
      %vm5432 = vcmp.eq.s32.totalorder %v5402, 1
      %vm5433 = vcmp.eq.s32.totalorder %v5403, 1
      %vm5434 = vcmp.eq.s32.totalorder %v5404, 1
      %vm5435 = vcmp.eq.s32.totalorder %v5405, 1
      %vm5436 = vcmp.eq.s32.totalorder %v5406, 1
      %vm5437 = vcmp.eq.s32.totalorder %v5407, 1
      %vm5438 = vcmp.eq.s32.totalorder %v5408, 1
      %vm5439 = vcmp.eq.s32.totalorder %v5409, 1
      %vm5440 = vcmp.eq.s32.totalorder %v5410, 1
      %vm5441 = vcmp.eq.s32.totalorder %v5411, 1
      %vm5442 = vcmp.eq.s32.totalorder %v5412, 1
      %vm5443 = vcmp.eq.s32.totalorder %v5413, 1
      %vm5444 = vcmp.eq.s32.totalorder %v5414, 1
      %v5445 = vcombine.low %v4889, %v4897
      %v5446 = vcombine.low %v4896, %v4898
      %v5448 = vunpack.c.l.s4 1983009808
      %v5449 = vunpack.c.0.s8 %v5448
      %v5450 = vlaneseq
      %v5451 = vshrl.u32 %v5450, 7
      %v5452 = vsub.s32 %v5449, %v5451
      %v5453 = vrot.slane %v5445, %v5452
      %v5455 = vunpack.c.l.s4 1983009808
      %v5456 = vunpack.c.0.s8 %v5455
      %v5457 = vlaneseq
      %v5458 = vshrl.u32 %v5457, 7
      %v5459 = vsub.s32 %v5456, %v5458
      %v5460 = vrot.slane %v5446, %v5459
      %v5461 = vcombine.low %v5453, %v5460
      %v5462 = vcombine.low %v4906, %v4914
      %v5463 = vcombine.low %v4913, %v4915
      %v5465 = vunpack.c.l.s4 1983009808
      %v5466 = vunpack.c.0.s8 %v5465
      %v5467 = vlaneseq
      %v5468 = vshrl.u32 %v5467, 7
      %v5469 = vsub.s32 %v5466, %v5468
      %v5470 = vrot.slane %v5462, %v5469
      %v5472 = vunpack.c.l.s4 1983009808
      %v5473 = vunpack.c.0.s8 %v5472
      %v5474 = vlaneseq
      %v5475 = vshrl.u32 %v5474, 7
      %v5476 = vsub.s32 %v5473, %v5475
      %v5477 = vrot.slane %v5463, %v5476
      %v5478 = vcombine.low %v5470, %v5477
      %v5480 = vunpack.c.l.s4 1983009808
      %v5481 = vunpack.c.0.s8 %v5480
      %v5482 = vlaneseq
      %v5483 = vshrl.u32 %v5482, 7
      %v5484 = vsub.s32 %v5481, %v5483
      %v5485 = vrot.slane %v4923, %v5484
      %v5486 = vcombine.low %v4931, %v4930
      %v5487 = vcombine.low %v4932, %v4940
      %v5489 = vunpack.c.l.s4 1983009808
      %v5490 = vunpack.c.0.s8 %v5489
      %v5491 = vlaneseq
      %v5492 = vshrl.u32 %v5491, 7
      %v5493 = vsub.s32 %v5490, %v5492
      %v5494 = vrot.slane %v5486, %v5493
      %v5496 = vunpack.c.l.s4 1983009808
      %v5497 = vunpack.c.0.s8 %v5496
      %v5498 = vlaneseq
      %v5499 = vshrl.u32 %v5498, 7
      %v5500 = vsub.s32 %v5497, %v5499
      %v5501 = vrot.slane %v5487, %v5500
      %v5502 = vcombine.low %v5494, %v5501
      %v5503 = vcombine.low %v4948, %v4947
      %v5504 = vcombine.low %v4949, %v4957
      %v5506 = vunpack.c.l.s4 1983009808
      %v5507 = vunpack.c.0.s8 %v5506
      %v5508 = vlaneseq
      %v5509 = vshrl.u32 %v5508, 7
      %v5510 = vsub.s32 %v5507, %v5509
      %v5511 = vrot.slane %v5503, %v5510
      %v5513 = vunpack.c.l.s4 1983009808
      %v5514 = vunpack.c.0.s8 %v5513
      %v5515 = vlaneseq
      %v5516 = vshrl.u32 %v5515, 7
      %v5517 = vsub.s32 %v5514, %v5516
      %v5518 = vrot.slane %v5504, %v5517
      %v5519 = vcombine.low %v5511, %v5518
      %v5521 = vunpack.c.l.s4 1983009808
      %v5522 = vunpack.c.0.s8 %v5521
      %v5523 = vlaneseq
      %v5524 = vshrl.u32 %v5523, 7
      %v5525 = vsub.s32 %v5522, %v5524
      %v5526 = vrot.slane %v4965, %v5525
      %v5527 = vcombine.low %v4964, %v4966
      %v5528 = vcombine.low %v4974, %v4982
      %v5530 = vunpack.c.l.s4 1983009808
      %v5531 = vunpack.c.0.s8 %v5530
      %v5532 = vlaneseq
      %v5533 = vshrl.u32 %v5532, 7
      %v5534 = vsub.s32 %v5531, %v5533
      %v5535 = vrot.slane %v5527, %v5534
      %v5537 = vunpack.c.l.s4 1983009808
      %v5538 = vunpack.c.0.s8 %v5537
      %v5539 = vlaneseq
      %v5540 = vshrl.u32 %v5539, 7
      %v5541 = vsub.s32 %v5538, %v5540
      %v5542 = vrot.slane %v5528, %v5541
      %v5543 = vcombine.low %v5535, %v5542
      %v5544 = vcombine.low %v4981, %v4983
      %v5545 = vcombine.low %v4991, %v4999
      %v5547 = vunpack.c.l.s4 1983009808
      %v5548 = vunpack.c.0.s8 %v5547
      %v5549 = vlaneseq
      %v5550 = vshrl.u32 %v5549, 7
      %v5551 = vsub.s32 %v5548, %v5550
      %v5552 = vrot.slane %v5544, %v5551
      %v5554 = vunpack.c.l.s4 1983009808
      %v5555 = vunpack.c.0.s8 %v5554
      %v5556 = vlaneseq
      %v5557 = vshrl.u32 %v5556, 7
      %v5558 = vsub.s32 %v5555, %v5557
      %v5559 = vrot.slane %v5545, %v5558
      %v5560 = vcombine.low %v5552, %v5559
      %v5562 = vunpack.c.l.s4 1983009808
      %v5563 = vunpack.c.0.s8 %v5562
      %v5564 = vlaneseq
      %v5565 = vshrl.u32 %v5564, 7
      %v5566 = vsub.s32 %v5563, %v5565
      %v5567 = vrot.slane %v4998, %v5566
      %v5568 = vcombine.low %v5000, %v5008
      %v5569 = vcombine.low %v5016, %v5015
      %v5571 = vunpack.c.l.s4 1983009808
      %v5572 = vunpack.c.0.s8 %v5571
      %v5573 = vlaneseq
      %v5574 = vshrl.u32 %v5573, 7
      %v5575 = vsub.s32 %v5572, %v5574
      %v5576 = vrot.slane %v5568, %v5575
      %v5578 = vunpack.c.l.s4 1983009808
      %v5579 = vunpack.c.0.s8 %v5578
      %v5580 = vlaneseq
      %v5581 = vshrl.u32 %v5580, 7
      %v5582 = vsub.s32 %v5579, %v5581
      %v5583 = vrot.slane %v5569, %v5582
      %v5584 = vcombine.low %v5576, %v5583
      %v5585 = vcombine.low %v5017, %v5025
      %v5586 = vcombine.low %v5033, %v5032
      %v5588 = vunpack.c.l.s4 1983009808
      %v5589 = vunpack.c.0.s8 %v5588
      %v5590 = vlaneseq
      %v5591 = vshrl.u32 %v5590, 7
      %v5592 = vsub.s32 %v5589, %v5591
      %v5593 = vrot.slane %v5585, %v5592
      %v5595 = vunpack.c.l.s4 1983009808
      %v5596 = vunpack.c.0.s8 %v5595
      %v5597 = vlaneseq
      %v5598 = vshrl.u32 %v5597, 7
      %v5599 = vsub.s32 %v5596, %v5598
      %v5600 = vrot.slane %v5586, %v5599
      %v5601 = vcombine.low %v5593, %v5600
      %v5603 = vunpack.c.l.s4 1983009808
      %v5604 = vunpack.c.0.s8 %v5603
      %v5605 = vlaneseq
      %v5606 = vshrl.u32 %v5605, 7
      %v5607 = vsub.s32 %v5604, %v5606
      %v5608 = vrot.slane %v5034, %v5607
      %v5609 = vcombine.low %v5042, %v5050
      %v5610 = vcombine.low %v5049, %v5051
      %v5612 = vunpack.c.l.s4 1983009808
      %v5613 = vunpack.c.0.s8 %v5612
      %v5614 = vlaneseq
      %v5615 = vshrl.u32 %v5614, 7
      %v5616 = vsub.s32 %v5613, %v5615
      %v5617 = vrot.slane %v5609, %v5616
      %v5619 = vunpack.c.l.s4 1983009808
      %v5620 = vunpack.c.0.s8 %v5619
      %v5621 = vlaneseq
      %v5622 = vshrl.u32 %v5621, 7
      %v5623 = vsub.s32 %v5620, %v5622
      %v5624 = vrot.slane %v5610, %v5623
      %v5625 = vcombine.low %v5617, %v5624
      %v5626 = vcombine.low %v5059, %v5067
      %v5627 = vcombine.low %v5066, %v5068
      %v5629 = vunpack.c.l.s4 1983009808
      %v5630 = vunpack.c.0.s8 %v5629
      %v5631 = vlaneseq
      %v5632 = vshrl.u32 %v5631, 7
      %v5633 = vsub.s32 %v5630, %v5632
      %v5634 = vrot.slane %v5626, %v5633
      %v5636 = vunpack.c.l.s4 1983009808
      %v5637 = vunpack.c.0.s8 %v5636
      %v5638 = vlaneseq
      %v5639 = vshrl.u32 %v5638, 7
      %v5640 = vsub.s32 %v5637, %v5639
      %v5641 = vrot.slane %v5627, %v5640
      %v5642 = vcombine.low %v5634, %v5641
      %v5644 = vunpack.c.l.s4 1983009808
      %v5645 = vunpack.c.0.s8 %v5644
      %v5646 = vlaneseq
      %v5647 = vshrl.u32 %v5646, 7
      %v5648 = vsub.s32 %v5645, %v5647
      %v5649 = vrot.slane %v5076, %v5648
      %v5650 = vcombine.low %v5084, %v5083
      %v5651 = vcombine.low %v5085, %v5093
      %v5653 = vunpack.c.l.s4 1983009808
      %v5654 = vunpack.c.0.s8 %v5653
      %v5655 = vlaneseq
      %v5656 = vshrl.u32 %v5655, 7
      %v5657 = vsub.s32 %v5654, %v5656
      %v5658 = vrot.slane %v5650, %v5657
      %v5660 = vunpack.c.l.s4 1983009808
      %v5661 = vunpack.c.0.s8 %v5660
      %v5662 = vlaneseq
      %v5663 = vshrl.u32 %v5662, 7
      %v5664 = vsub.s32 %v5661, %v5663
      %v5665 = vrot.slane %v5651, %v5664
      %v5666 = vcombine.low %v5658, %v5665
      %v5667 = vcombine.low %v5101, %v5100
      %v5668 = vcombine.low %v5102, %v5110
      %v5670 = vunpack.c.l.s4 1983009808
      %v5671 = vunpack.c.0.s8 %v5670
      %v5672 = vlaneseq
      %v5673 = vshrl.u32 %v5672, 7
      %v5674 = vsub.s32 %v5671, %v5673
      %v5675 = vrot.slane %v5667, %v5674
      %v5677 = vunpack.c.l.s4 1983009808
      %v5678 = vunpack.c.0.s8 %v5677
      %v5679 = vlaneseq
      %v5680 = vshrl.u32 %v5679, 7
      %v5681 = vsub.s32 %v5678, %v5680
      %v5682 = vrot.slane %v5668, %v5681
      %v5683 = vcombine.low %v5675, %v5682
      %v5685 = vunpack.c.l.s4 1983009808
      %v5686 = vunpack.c.0.s8 %v5685
      %v5687 = vlaneseq
      %v5688 = vshrl.u32 %v5687, 7
      %v5689 = vsub.s32 %v5686, %v5688
      %v5690 = vrot.slane %v5118, %v5689
      %v5691 = vcombine.low %v5117, %v5119
      %v5692 = vcombine.low %v5127, %v5135
      %v5694 = vunpack.c.l.s4 1983009808
      %v5695 = vunpack.c.0.s8 %v5694
      %v5696 = vlaneseq
      %v5697 = vshrl.u32 %v5696, 7
      %v5698 = vsub.s32 %v5695, %v5697
      %v5699 = vrot.slane %v5691, %v5698
      %v5701 = vunpack.c.l.s4 1983009808
      %v5702 = vunpack.c.0.s8 %v5701
      %v5703 = vlaneseq
      %v5704 = vshrl.u32 %v5703, 7
      %v5705 = vsub.s32 %v5702, %v5704
      %v5706 = vrot.slane %v5692, %v5705
      %v5707 = vcombine.low %v5699, %v5706
      %v5708 = vcombine.low %v5134, %v5136
      %v5709 = vcombine.low %v5144, %v5152
      %v5711 = vunpack.c.l.s4 1983009808
      %v5712 = vunpack.c.0.s8 %v5711
      %v5713 = vlaneseq
      %v5714 = vshrl.u32 %v5713, 7
      %v5715 = vsub.s32 %v5712, %v5714
      %v5716 = vrot.slane %v5708, %v5715
      %v5718 = vunpack.c.l.s4 1983009808
      %v5719 = vunpack.c.0.s8 %v5718
      %v5720 = vlaneseq
      %v5721 = vshrl.u32 %v5720, 7
      %v5722 = vsub.s32 %v5719, %v5721
      %v5723 = vrot.slane %v5709, %v5722
      %v5724 = vcombine.low %v5716, %v5723
      %v5726 = vunpack.c.l.s4 1983009808
      %v5727 = vunpack.c.0.s8 %v5726
      %v5728 = vlaneseq
      %v5729 = vshrl.u32 %v5728, 7
      %v5730 = vsub.s32 %v5727, %v5729
      %v5731 = vrot.slane %v5151, %v5730
      %v5732 = vcombine.low %v5153, %v5161
      %v5733 = vcombine.low %v5169, %v5168
      %v5735 = vunpack.c.l.s4 1983009808
      %v5736 = vunpack.c.0.s8 %v5735
      %v5737 = vlaneseq
      %v5738 = vshrl.u32 %v5737, 7
      %v5739 = vsub.s32 %v5736, %v5738
      %v5740 = vrot.slane %v5732, %v5739
      %v5742 = vunpack.c.l.s4 1983009808
      %v5743 = vunpack.c.0.s8 %v5742
      %v5744 = vlaneseq
      %v5745 = vshrl.u32 %v5744, 7
      %v5746 = vsub.s32 %v5743, %v5745
      %v5747 = vrot.slane %v5733, %v5746
      %v5748 = vcombine.low %v5740, %v5747
      %v5749 = vcombine.low %v5170, %v5178
      %v5750 = vcombine.low %v5186, %v5185
      %v5752 = vunpack.c.l.s4 1983009808
      %v5753 = vunpack.c.0.s8 %v5752
      %v5754 = vlaneseq
      %v5755 = vshrl.u32 %v5754, 7
      %v5756 = vsub.s32 %v5753, %v5755
      %v5757 = vrot.slane %v5749, %v5756
      %v5759 = vunpack.c.l.s4 1983009808
      %v5760 = vunpack.c.0.s8 %v5759
      %v5761 = vlaneseq
      %v5762 = vshrl.u32 %v5761, 7
      %v5763 = vsub.s32 %v5760, %v5762
      %v5764 = vrot.slane %v5750, %v5763
      %v5765 = vcombine.low %v5757, %v5764
      %v5767 = vunpack.c.l.s4 1983009808
      %v5768 = vunpack.c.0.s8 %v5767
      %v5769 = vlaneseq
      %v5770 = vshrl.u32 %v5769, 7
      %v5771 = vsub.s32 %v5768, %v5770
      %v5772 = vrot.slane %v5187, %v5771
      %v5773 = vcombine.low %v5195, %v5203
      %v5774 = vcombine.low %v5202, %v5204
      %v5776 = vunpack.c.l.s4 1983009808
      %v5777 = vunpack.c.0.s8 %v5776
      %v5778 = vlaneseq
      %v5779 = vshrl.u32 %v5778, 7
      %v5780 = vsub.s32 %v5777, %v5779
      %v5781 = vrot.slane %v5773, %v5780
      %v5783 = vunpack.c.l.s4 1983009808
      %v5784 = vunpack.c.0.s8 %v5783
      %v5785 = vlaneseq
      %v5786 = vshrl.u32 %v5785, 7
      %v5787 = vsub.s32 %v5784, %v5786
      %v5788 = vrot.slane %v5774, %v5787
      %v5789 = vcombine.low %v5781, %v5788
      %v5790 = vcombine.low %v5212, %v5220
      %v5791 = vcombine.low %v5219, %v5221
      %v5793 = vunpack.c.l.s4 1983009808
      %v5794 = vunpack.c.0.s8 %v5793
      %v5795 = vlaneseq
      %v5796 = vshrl.u32 %v5795, 7
      %v5797 = vsub.s32 %v5794, %v5796
      %v5798 = vrot.slane %v5790, %v5797
      %v5800 = vunpack.c.l.s4 1983009808
      %v5801 = vunpack.c.0.s8 %v5800
      %v5802 = vlaneseq
      %v5803 = vshrl.u32 %v5802, 7
      %v5804 = vsub.s32 %v5801, %v5803
      %v5805 = vrot.slane %v5791, %v5804
      %v5806 = vcombine.low %v5798, %v5805
      %v5808 = vunpack.c.l.s4 1983009808
      %v5809 = vunpack.c.0.s8 %v5808
      %v5810 = vlaneseq
      %v5811 = vshrl.u32 %v5810, 7
      %v5812 = vsub.s32 %v5809, %v5811
      %v5813 = vrot.slane %v5229, %v5812
      %v5814 = vcombine.low %v5237, %v5236
      %v5815 = vcombine.low %v5238, %v5246
      %v5817 = vunpack.c.l.s4 1983009808
      %v5818 = vunpack.c.0.s8 %v5817
      %v5819 = vlaneseq
      %v5820 = vshrl.u32 %v5819, 7
      %v5821 = vsub.s32 %v5818, %v5820
      %v5822 = vrot.slane %v5814, %v5821
      %v5824 = vunpack.c.l.s4 1983009808
      %v5825 = vunpack.c.0.s8 %v5824
      %v5826 = vlaneseq
      %v5827 = vshrl.u32 %v5826, 7
      %v5828 = vsub.s32 %v5825, %v5827
      %v5829 = vrot.slane %v5815, %v5828
      %v5830 = vcombine.low %v5822, %v5829
      %v5831 = vcombine.low %v5254, %v5253
      %v5832 = vcombine.low %v5255, %v5262
      %v5834 = vunpack.c.l.s4 1983009808
      %v5835 = vunpack.c.0.s8 %v5834
      %v5836 = vlaneseq
      %v5837 = vshrl.u32 %v5836, 7
      %v5838 = vsub.s32 %v5835, %v5837
      %v5839 = vrot.slane %v5831, %v5838
      %v5841 = vunpack.c.l.s4 1983009808
      %v5842 = vunpack.c.0.s8 %v5841
      %v5843 = vlaneseq
      %v5844 = vshrl.u32 %v5843, 7
      %v5845 = vsub.s32 %v5842, %v5844
      %v5846 = vrot.slane %v5832, %v5845
      %v5847 = vcombine.low %v5839, %v5846
      %v5849 = vunpack.c.l.s4 1983009808
      %v5850 = vunpack.c.0.s8 %v5849
      %v5851 = vlaneseq
      %v5852 = vshrl.u32 %v5851, 7
      %v5853 = vsub.s32 %v5850, %v5852
      %v5854 = vrot.slane %v5263, %v5853
      %v5885 = vsel %vm5415, %v5461, 0.0
      %v5886 = vsel %vm5416, %v5478, 0.0
      %v5887 = vsel %vm5417, %v5485, 0.0
      %v5888 = vsel %vm5418, %v5502, 0.0
      %v5889 = vsel %vm5419, %v5519, 0.0
      %v5890 = vsel %vm5420, %v5526, 0.0
      %v5891 = vsel %vm5421, %v5543, 0.0
      %v5892 = vsel %vm5422, %v5560, 0.0
      %v5893 = vsel %vm5423, %v5567, 0.0
      %v5894 = vsel %vm5424, %v5584, 0.0
      %v5895 = vsel %vm5425, %v5601, 0.0
      %v5896 = vsel %vm5426, %v5608, 0.0
      %v5897 = vsel %vm5427, %v5625, 0.0
      %v5898 = vsel %vm5428, %v5642, 0.0
      %v5899 = vsel %vm5429, %v5649, 0.0
      %v5900 = vsel %vm5430, %v5666, 0.0
      %v5901 = vsel %vm5431, %v5683, 0.0
      %v5902 = vsel %vm5432, %v5690, 0.0
      %v5903 = vsel %vm5433, %v5707, 0.0
      %v5904 = vsel %vm5434, %v5724, 0.0
      %v5905 = vsel %vm5435, %v5731, 0.0
      %v5906 = vsel %vm5436, %v5748, 0.0
      %v5907 = vsel %vm5437, %v5765, 0.0
      %v5908 = vsel %vm5438, %v5772, 0.0
      %v5909 = vsel %vm5439, %v5789, 0.0
      %v5910 = vsel %vm5440, %v5806, 0.0
      %v5911 = vsel %vm5441, %v5813, 0.0
      %v5912 = vsel %vm5442, %v5830, 0.0
      %v5913 = vsel %vm5443, %v5847, 0.0
      %v5914 = vsel %vm5444, %v5854, 0.0
      %v5915 = vld [vmem:[%s6] sm:$0xff]
      %v5916 = vld [vmem:[%s6 + $0x8] sm:$0xff]
      %v5917 = vld [vmem:[%s6 + $0x10] sm:$0xff]
      %v5918 = vld [vmem:[%s6 + $0x18] sm:$0xff]
      %v5943 = vrot.slane %v5885, 1
      %v5944 = vrot.slane %v5886, 1
      %v5945 = vsel %vm452, %v5943, %v5944
      %v5946 = vrot.slane %v5887, 1
      %v5947 = vsel %vm452, %v5944, %v5946
      %v5948 = vrot.slane %v5888, 1
      %v5949 = vrot.slane %v5889, 1
      %v5950 = vsel %vm452, %v5948, %v5949
      %v5951 = vrot.slane %v5890, 1
      %v5952 = vsel %vm452, %v5949, %v5951
      %v5953 = vrot.slane %v5891, 1
      %v5954 = vrot.slane %v5892, 1
      %v5955 = vsel %vm452, %v5953, %v5954
      %v5956 = vrot.slane %v5893, 1
      %v5957 = vsel %vm452, %v5954, %v5956
      %v5958 = vrot.slane %v5894, 1
      %v5959 = vrot.slane %v5895, 1
      %v5960 = vsel %vm452, %v5958, %v5959
      %v5961 = vrot.slane %v5896, 1
      %v5962 = vsel %vm452, %v5959, %v5961
      %v5963 = vrot.slane %v5897, 1
      %v5964 = vrot.slane %v5898, 1
      %v5965 = vsel %vm452, %v5963, %v5964
      %v5966 = vrot.slane %v5899, 1
      %v5967 = vsel %vm452, %v5964, %v5966
      %v5968 = vrot.slane %v5900, 1
      %v5969 = vrot.slane %v5901, 1
      %v5970 = vsel %vm452, %v5968, %v5969
      %v5971 = vrot.slane %v5902, 1
      %v5972 = vsel %vm452, %v5969, %v5971
      %v5973 = vrot.slane %v5903, 1
      %v5974 = vrot.slane %v5904, 1
      %v5975 = vsel %vm452, %v5973, %v5974
      %v5976 = vrot.slane %v5905, 1
      %v5977 = vsel %vm452, %v5974, %v5976
      %v5978 = vrot.slane %v5906, 1
      %v5979 = vrot.slane %v5907, 1
      %v5980 = vsel %vm452, %v5978, %v5979
      %v5981 = vrot.slane %v5908, 1
      %v5982 = vsel %vm452, %v5979, %v5981
      %s5983 = scalar_lea.vmem %s6, 32
      %v5984 = vld [vmem:[%s5983] sm:$0xff]
      %v5985 = vld [vmem:[%s5983 + $0x8] sm:$0xff]
      %v5986 = vld [vmem:[%s5983 + $0x10] sm:$0xff]
      %v5987 = vld [vmem:[%s5983 + $0x18] sm:$0xff]
      %vm5988 = vcmask 261120
      %v5989 = vsel %vm5988, %v5945, 0
      %v5991 = vsel %vm5988, %v5947, 0
      %v5993 = vsel %vm5988, %v5950, 0
      %v5995 = vsel %vm5988, %v5952, 0
      %v5997 = vsel %vm5988, %v5955, 0
      %v5999 = vsel %vm5988, %v5957, 0
      %v6001 = vsel %vm5988, %v5960, 0
      %v6003 = vsel %vm5988, %v5962, 0
      %v6005 = vsel %vm5988, %v5965, 0
      %v6007 = vsel %vm5988, %v5967, 0
      %v6009 = vsel %vm5988, %v5970, 0
      %v6011 = vsel %vm5988, %v5972, 0
      %v6013 = vsel %vm5988, %v5975, 0
      %v6015 = vsel %vm5988, %v5977, 0
      %v6017 = vsel %vm5988, %v5980, 0
      %v6019 = vsel %vm5988, %v5982, 0
      %6021 = vmatprep.subr.mxu0 0.0
      %6022 = vmatpush1.msra.mxu0 %v5984
      %6023 = vmatprep.subr.mxu0 0.0
      %6024 = vmatpush1.msra.mxu0 %v5985
      %6025 = vmatprep.subr.mxu0 0.0
      %6026 = vmatpush1.msra.mxu0 %v5986
      %6027 = vmatprep.subr.mxu0 0.0
      %6028 = vmatpush1.msra.mxu0 %v5987
      %6029 = vmatprep.subr.mxu0 0.0
      %6030 = vmatpush1.msra.mxu0 0.0
      %6031 = vmatprep.subr.mxu0 0.0
      %6032 = vmatpush1.msra.mxu0 0.0
      %6033 = vmatprep.subr.mxu0 0.0
      %6034 = vmatpush1.msra.mxu0 0.0
      %6035 = vmatprep.subr.mxu0 0.0
      %6036 = vmatpush1.msra.mxu0 0.0
      %6037 = vmatprep.subr.mxu0 0.0
      %6038 = vmatpush1.msra.mxu0 0.0
      %6039 = vmatprep.subr.mxu0 0.0
      %6040 = vmatpush1.msra.mxu0 0.0
      %6041 = vmatprep.subr.mxu0 0.0
      %6042 = vmatpush1.msra.mxu0 0.0
      %6043 = vmatprep.subr.mxu0 0.0
      %6044 = vmatpush1.msra.mxu0 0.0
      %6045 = vmatprep.subr.mxu0 0.0
      %6046 = vmatpush1.msra.mxu0 0.0
      %6047 = vmatprep.subr.mxu0 0.0
      %6048 = vmatpush1.msra.mxu0 0.0
      %6049 = vmatprep.subr.mxu0 0.0
      %6050 = vmatpush1.msra.mxu0 0.0
      %6051 = vmatprep.subr.mxu0 0.0
      %6052 = vmatpush1.msra.mxu0 0.0
      %6053 = vmatprep.subr.mxu0 0.0
      %6054 = vmatpush1.msra.mxu0 0.0
      %6055 = vmatprep.subr.mxu0 0.0
      %6056 = vmatpush1.msra.mxu0 0.0
      %6057 = vmatprep.subr.mxu0 0.0
      %6058 = vmatpush1.msra.mxu0 0.0
      %6059 = vmatprep.subr.mxu0 0.0
      %6060 = vmatpush1.msra.mxu0 0.0
      %6061 = vmatprep.subr.mxu0 0.0
      %6062 = vmatpush1.msra.mxu0 0.0
      %6063 = vmatprep.subr.mxu0 0.0
      %6064 = vmatpush1.msra.mxu0 0.0
      %6065 = vmatprep.subr.mxu0 0.0
      %6066 = vmatpush1.msra.mxu0 0.0
      %6067 = vmatprep.subr.mxu0 0.0
      %6068 = vmatpush1.msra.mxu0 0.0
      %6069 = vmatprep.subr.mxu0 0.0
      %6070 = vmatpush1.msra.mxu0 0.0
      %6071 = vmatprep.subr.mxu0 0.0
      %6072 = vmatpush1.msra.mxu0 0.0
      %6073 = vmatprep.subr.mxu0 0.0
      %6074 = vmatpush1.msra.mxu0 0.0
      %6075 = vmatprep.subr.mxu0 0.0
      %6076 = vmatpush1.msra.mxu0 0.0
      %6077 = vmatprep.subr.mxu0 0.0
      %6078 = vmatpush1.msra.mxu0 0.0
      %6079 = vmatprep.subr.mxu0 0.0
      %6080 = vmatpush1.msra.mxu0 0.0
      %6081 = vmatprep.subr.mxu0 0.0
      %6082 = vmatpush1.msra.mxu0 0.0
      %6083 = vmatprep.subr.mxu0 0.0
      %6084 = vmatpush1.msra.mxu0 0.0
      %6085 = vmatprep.mubr.f32.mxu0 0.0
      %6086 = vmatmul.mubr.f32.gmra.mrb[0].mxu0 %v5989
      %v6087 = vpop.f32.mrb[0].mxu0
      %v6088 = vadd.f32 0.0, %v6087
      %v6089 = vpop.f32.mrb[0].mxu0
      %6090 = vmatprep.mubr.f32.mxu0 0.0
      %6091 = vmatmul.mubr.f32.gmra.mrb[0].mxu0 %v5991
      %v6092 = vpop.f32.mrb[0].mxu0
      %v6093 = vadd.f32 0.0, %v6092
      %v6094 = vpop.f32.mrb[0].mxu0
      %6095 = vmatprep.mubr.f32.mxu0 0.0
      %6096 = vmatmul.mubr.f32.gmra.mrb[0].mxu0 %v5993
      %v6097 = vpop.f32.mrb[0].mxu0
      %v6098 = vadd.f32 0.0, %v6097
      %v6099 = vpop.f32.mrb[0].mxu0
      %6100 = vmatprep.mubr.f32.mxu0 0.0
      %6101 = vmatmul.mubr.f32.gmra.mrb[0].mxu0 %v5995
      %v6102 = vpop.f32.mrb[0].mxu0
      %v6103 = vadd.f32 0.0, %v6102
      %v6104 = vpop.f32.mrb[0].mxu0
      %6105 = vmatprep.mubr.f32.mxu0 0.0
      %6106 = vmatmul.mubr.f32.gmra.mrb[0].mxu0 %v5997
      %v6107 = vpop.f32.mrb[0].mxu0
      %v6108 = vadd.f32 0.0, %v6107
      %v6109 = vpop.f32.mrb[0].mxu0
      %6110 = vmatprep.mubr.f32.mxu0 0.0
      %6111 = vmatmul.mubr.f32.gmra.mrb[0].mxu0 %v5999
      %v6112 = vpop.f32.mrb[0].mxu0
      %v6113 = vadd.f32 0.0, %v6112
      %v6114 = vpop.f32.mrb[0].mxu0
      %6115 = vmatprep.mubr.f32.mxu0 0.0
      %6116 = vmatmul.mubr.f32.gmra.mrb[0].mxu0 %v6001
      %v6117 = vpop.f32.mrb[0].mxu0
      %v6118 = vadd.f32 0.0, %v6117
      %v6119 = vpop.f32.mrb[0].mxu0
      %6120 = vmatprep.mubr.f32.mxu0 0.0
      %6121 = vmatmul.mubr.f32.gmra.mrb[0].mxu0 %v6003
      %v6122 = vpop.f32.mrb[0].mxu0
      %v6123 = vadd.f32 0.0, %v6122
      %v6124 = vpop.f32.mrb[0].mxu0
      %6125 = vmatprep.mubr.f32.mxu0 0.0
      %6126 = vmatmul.mubr.f32.gmra.mrb[0].mxu0 %v6005
      %v6127 = vpop.f32.mrb[0].mxu0
      %v6128 = vadd.f32 0.0, %v6127
      %v6129 = vpop.f32.mrb[0].mxu0
      %6130 = vmatprep.mubr.f32.mxu0 0.0
      %6131 = vmatmul.mubr.f32.gmra.mrb[0].mxu0 %v6007
      %v6132 = vpop.f32.mrb[0].mxu0
      %v6133 = vadd.f32 0.0, %v6132
      %v6134 = vpop.f32.mrb[0].mxu0
      %6135 = vmatprep.mubr.f32.mxu0 0.0
      %6136 = vmatmul.mubr.f32.gmra.mrb[0].mxu0 %v6009
      %v6137 = vpop.f32.mrb[0].mxu0
      %v6138 = vadd.f32 0.0, %v6137
      %v6139 = vpop.f32.mrb[0].mxu0
      %6140 = vmatprep.mubr.f32.mxu0 0.0
      %6141 = vmatmul.mubr.f32.gmra.mrb[0].mxu0 %v6011
      %v6142 = vpop.f32.mrb[0].mxu0
      %v6143 = vadd.f32 0.0, %v6142
      %v6144 = vpop.f32.mrb[0].mxu0
      %6145 = vmatprep.mubr.f32.mxu0 0.0
      %6146 = vmatmul.mubr.f32.gmra.mrb[0].mxu0 %v6013
      %v6147 = vpop.f32.mrb[0].mxu0
      %v6148 = vadd.f32 0.0, %v6147
      %v6149 = vpop.f32.mrb[0].mxu0
      %6150 = vmatprep.mubr.f32.mxu0 0.0
      %6151 = vmatmul.mubr.f32.gmra.mrb[0].mxu0 %v6015
      %v6152 = vpop.f32.mrb[0].mxu0
      %v6153 = vadd.f32 0.0, %v6152
      %v6154 = vpop.f32.mrb[0].mxu0
      %6155 = vmatprep.mubr.f32.mxu0 0.0
      %6156 = vmatmul.mubr.f32.gmra.mrb[0].mxu0 %v6017
      %v6157 = vpop.f32.mrb[0].mxu0
      %v6158 = vadd.f32 0.0, %v6157
      %v6159 = vpop.f32.mrb[0].mxu0
      %6160 = vmatprep.mubr.f32.mxu0 0.0
      %6161 = vmatmul.mubr.f32.gmra.mrb[0].mxu0 %v6019
      %v6162 = vpop.f32.mrb[0].mxu0
      %v6163 = vadd.f32 0.0, %v6162
      %v6164 = vpop.f32.mrb[0].mxu0
      %6165 = vdwg.mxu0
      %v6166 = vsel %vm5988, %v5885, 0
      %v6168 = vsel %vm5988, %v5886, 0
      %v6170 = vsel %vm5988, %v5888, 0
      %v6172 = vsel %vm5988, %v5889, 0
      %v6174 = vsel %vm5988, %v5891, 0
      %v6176 = vsel %vm5988, %v5892, 0
      %v6178 = vsel %vm5988, %v5894, 0
      %v6180 = vsel %vm5988, %v5895, 0
      %v6182 = vsel %vm5988, %v5897, 0
      %v6184 = vsel %vm5988, %v5898, 0
      %v6186 = vsel %vm5988, %v5900, 0
      %v6188 = vsel %vm5988, %v5901, 0
      %v6190 = vsel %vm5988, %v5903, 0
      %v6192 = vsel %vm5988, %v5904, 0
      %v6194 = vsel %vm5988, %v5906, 0
      %v6196 = vsel %vm5988, %v5907, 0
      %6198 = vmatprep.subr.mxu0 0.0
      %6199 = vmatpush1.msra.mxu0 %v5915
      %6200 = vmatprep.subr.mxu0 0.0
      %6201 = vmatpush1.msra.mxu0 %v5916
      %6202 = vmatprep.subr.mxu0 0.0
      %6203 = vmatpush1.msra.mxu0 %v5917
      %6204 = vmatprep.subr.mxu0 0.0
      %6205 = vmatpush1.msra.mxu0 %v5918
      %6206 = vmatprep.subr.mxu0 0.0
      %6207 = vmatpush1.msra.mxu0 0.0
      %6208 = vmatprep.subr.mxu0 0.0
      %6209 = vmatpush1.msra.mxu0 0.0
      %6210 = vmatprep.subr.mxu0 0.0
      %6211 = vmatpush1.msra.mxu0 0.0
      %6212 = vmatprep.subr.mxu0 0.0
      %6213 = vmatpush1.msra.mxu0 0.0
      %6214 = vmatprep.subr.mxu0 0.0
      %6215 = vmatpush1.msra.mxu0 0.0
      %6216 = vmatprep.subr.mxu0 0.0
      %6217 = vmatpush1.msra.mxu0 0.0
      %6218 = vmatprep.subr.mxu0 0.0
      %6219 = vmatpush1.msra.mxu0 0.0
      %6220 = vmatprep.subr.mxu0 0.0
      %6221 = vmatpush1.msra.mxu0 0.0
      %6222 = vmatprep.subr.mxu0 0.0
      %6223 = vmatpush1.msra.mxu0 0.0
      %6224 = vmatprep.subr.mxu0 0.0
      %6225 = vmatpush1.msra.mxu0 0.0
      %6226 = vmatprep.subr.mxu0 0.0
      %6227 = vmatpush1.msra.mxu0 0.0
      %6228 = vmatprep.subr.mxu0 0.0
      %6229 = vmatpush1.msra.mxu0 0.0
      %6230 = vmatprep.subr.mxu0 0.0
      %6231 = vmatpush1.msra.mxu0 0.0
      %6232 = vmatprep.subr.mxu0 0.0
      %6233 = vmatpush1.msra.mxu0 0.0
      %6234 = vmatprep.subr.mxu0 0.0
      %6235 = vmatpush1.msra.mxu0 0.0
      %6236 = vmatprep.subr.mxu0 0.0
      %6237 = vmatpush1.msra.mxu0 0.0
      %6238 = vmatprep.subr.mxu0 0.0
      %6239 = vmatpush1.msra.mxu0 0.0
      %6240 = vmatprep.subr.mxu0 0.0
      %6241 = vmatpush1.msra.mxu0 0.0
      %6242 = vmatprep.subr.mxu0 0.0
      %6243 = vmatpush1.msra.mxu0 0.0
      %6244 = vmatprep.subr.mxu0 0.0
      %6245 = vmatpush1.msra.mxu0 0.0
      %6246 = vmatprep.subr.mxu0 0.0
      %6247 = vmatpush1.msra.mxu0 0.0
      %6248 = vmatprep.subr.mxu0 0.0
      %6249 = vmatpush1.msra.mxu0 0.0
      %6250 = vmatprep.subr.mxu0 0.0
      %6251 = vmatpush1.msra.mxu0 0.0
      %6252 = vmatprep.subr.mxu0 0.0
      %6253 = vmatpush1.msra.mxu0 0.0
      %6254 = vmatprep.subr.mxu0 0.0
      %6255 = vmatpush1.msra.mxu0 0.0
      %6256 = vmatprep.subr.mxu0 0.0
      %6257 = vmatpush1.msra.mxu0 0.0
      %6258 = vmatprep.subr.mxu0 0.0
      %6259 = vmatpush1.msra.mxu0 0.0
      %6260 = vmatprep.subr.mxu0 0.0
      %6261 = vmatpush1.msra.mxu0 0.0
      %6262 = vmatprep.mubr.f32.mxu0 0.0
      %6263 = vmatmul.mubr.f32.gmra.mrb[0].mxu0 %v6166
      %v6264 = vpop.f32.mrb[0].mxu0
      %v6265 = vadd.f32 %v6088, %v6264
      %v6266 = vpop.f32.mrb[0].mxu0
      %6267 = vmatprep.mubr.f32.mxu0 0.0
      %6268 = vmatmul.mubr.f32.gmra.mrb[0].mxu0 %v6168
      %v6269 = vpop.f32.mrb[0].mxu0
      %v6270 = vadd.f32 %v6093, %v6269
      %v6271 = vpop.f32.mrb[0].mxu0
      %6272 = vmatprep.mubr.f32.mxu0 0.0
      %6273 = vmatmul.mubr.f32.gmra.mrb[0].mxu0 %v6170
      %v6274 = vpop.f32.mrb[0].mxu0
      %v6275 = vadd.f32 %v6098, %v6274
      %v6276 = vpop.f32.mrb[0].mxu0
      %6277 = vmatprep.mubr.f32.mxu0 0.0
      %6278 = vmatmul.mubr.f32.gmra.mrb[0].mxu0 %v6172
      %v6279 = vpop.f32.mrb[0].mxu0
      %v6280 = vadd.f32 %v6103, %v6279
      %v6281 = vpop.f32.mrb[0].mxu0
      %6282 = vmatprep.mubr.f32.mxu0 0.0
      %6283 = vmatmul.mubr.f32.gmra.mrb[0].mxu0 %v6174
      %v6284 = vpop.f32.mrb[0].mxu0
      %v6285 = vadd.f32 %v6108, %v6284
      %v6286 = vpop.f32.mrb[0].mxu0
      %6287 = vmatprep.mubr.f32.mxu0 0.0
      %6288 = vmatmul.mubr.f32.gmra.mrb[0].mxu0 %v6176
      %v6289 = vpop.f32.mrb[0].mxu0
      %v6290 = vadd.f32 %v6113, %v6289
      %v6291 = vpop.f32.mrb[0].mxu0
      %6292 = vmatprep.mubr.f32.mxu0 0.0
      %6293 = vmatmul.mubr.f32.gmra.mrb[0].mxu0 %v6178
      %v6294 = vpop.f32.mrb[0].mxu0
      %v6295 = vadd.f32 %v6118, %v6294
      %v6296 = vpop.f32.mrb[0].mxu0
      %6297 = vmatprep.mubr.f32.mxu0 0.0
      %6298 = vmatmul.mubr.f32.gmra.mrb[0].mxu0 %v6180
      %v6299 = vpop.f32.mrb[0].mxu0
      %v6300 = vadd.f32 %v6123, %v6299
      %v6301 = vpop.f32.mrb[0].mxu0
      %6302 = vmatprep.mubr.f32.mxu0 0.0
      %6303 = vmatmul.mubr.f32.gmra.mrb[0].mxu0 %v6182
      %v6304 = vpop.f32.mrb[0].mxu0
      %v6305 = vadd.f32 %v6128, %v6304
      %v6306 = vpop.f32.mrb[0].mxu0
      %6307 = vmatprep.mubr.f32.mxu0 0.0
      %6308 = vmatmul.mubr.f32.gmra.mrb[0].mxu0 %v6184
      %v6309 = vpop.f32.mrb[0].mxu0
      %v6310 = vadd.f32 %v6133, %v6309
      %v6311 = vpop.f32.mrb[0].mxu0
      %6312 = vmatprep.mubr.f32.mxu0 0.0
      %6313 = vmatmul.mubr.f32.gmra.mrb[0].mxu0 %v6186
      %v6314 = vpop.f32.mrb[0].mxu0
      %v6315 = vadd.f32 %v6138, %v6314
      %v6316 = vpop.f32.mrb[0].mxu0
      %6317 = vmatprep.mubr.f32.mxu0 0.0
      %6318 = vmatmul.mubr.f32.gmra.mrb[0].mxu0 %v6188
      %v6319 = vpop.f32.mrb[0].mxu0
      %v6320 = vadd.f32 %v6143, %v6319
      %v6321 = vpop.f32.mrb[0].mxu0
      %6322 = vmatprep.mubr.f32.mxu0 0.0
      %6323 = vmatmul.mubr.f32.gmra.mrb[0].mxu0 %v6190
      %v6324 = vpop.f32.mrb[0].mxu0
      %v6325 = vadd.f32 %v6148, %v6324
      %v6326 = vpop.f32.mrb[0].mxu0
      %6327 = vmatprep.mubr.f32.mxu0 0.0
      %6328 = vmatmul.mubr.f32.gmra.mrb[0].mxu0 %v6192
      %v6329 = vpop.f32.mrb[0].mxu0
      %v6330 = vadd.f32 %v6153, %v6329
      %v6331 = vpop.f32.mrb[0].mxu0
      %6332 = vmatprep.mubr.f32.mxu0 0.0
      %6333 = vmatmul.mubr.f32.gmra.mrb[0].mxu0 %v6194
      %v6334 = vpop.f32.mrb[0].mxu0
      %v6335 = vadd.f32 %v6158, %v6334
      %v6336 = vpop.f32.mrb[0].mxu0
      %6337 = vmatprep.mubr.f32.mxu0 0.0
      %6338 = vmatmul.mubr.f32.gmra.mrb[0].mxu0 %v6196
      %v6339 = vpop.f32.mrb[0].mxu0
      %v6340 = vadd.f32 %v6163, %v6339
      %v6341 = vpop.f32.mrb[0].mxu0
      %6342 = vdwg.mxu0
      %v6343 = vrot.slane %v5885, 2
      %v6344 = vrot.slane %v5886, 2
      %v6345 = vsel %vm593, %v6343, %v6344
      %v6346 = vrot.slane %v5887, 2
      %v6347 = vsel %vm593, %v6344, %v6346
      %v6348 = vrot.slane %v5888, 2
      %v6349 = vrot.slane %v5889, 2
      %v6350 = vsel %vm593, %v6348, %v6349
      %v6351 = vrot.slane %v5890, 2
      %v6352 = vsel %vm593, %v6349, %v6351
      %v6353 = vrot.slane %v5891, 2
      %v6354 = vrot.slane %v5892, 2
      %v6355 = vsel %vm593, %v6353, %v6354
      %v6356 = vrot.slane %v5893, 2
      %v6357 = vsel %vm593, %v6354, %v6356
      %v6358 = vrot.slane %v5894, 2
      %v6359 = vrot.slane %v5895, 2
      %v6360 = vsel %vm593, %v6358, %v6359
      %v6361 = vrot.slane %v5896, 2
      %v6362 = vsel %vm593, %v6359, %v6361
      %v6363 = vrot.slane %v5897, 2
      %v6364 = vrot.slane %v5898, 2
      %v6365 = vsel %vm593, %v6363, %v6364
      %v6366 = vrot.slane %v5899, 2
      %v6367 = vsel %vm593, %v6364, %v6366
      %v6368 = vrot.slane %v5900, 2
      %v6369 = vrot.slane %v5901, 2
      %v6370 = vsel %vm593, %v6368, %v6369
      %v6371 = vrot.slane %v5902, 2
      %v6372 = vsel %vm593, %v6369, %v6371
      %v6373 = vrot.slane %v5903, 2
      %v6374 = vrot.slane %v5904, 2
      %v6375 = vsel %vm593, %v6373, %v6374
      %v6376 = vrot.slane %v5905, 2
      %v6377 = vsel %vm593, %v6374, %v6376
      %v6378 = vrot.slane %v5906, 2
      %v6379 = vrot.slane %v5907, 2
      %v6380 = vsel %vm593, %v6378, %v6379
      %v6381 = vrot.slane %v5908, 2
      %v6382 = vsel %vm593, %v6379, %v6381
      %s6383 = scalar_lea.vmem %s6, 64
      %v6384 = vld [vmem:[%s6383] sm:$0xff]
      %v6385 = vld [vmem:[%s6383 + $0x8] sm:$0xff]
      %v6386 = vld [vmem:[%s6383 + $0x10] sm:$0xff]
      %v6387 = vld [vmem:[%s6383 + $0x18] sm:$0xff]
      %v6388 = vsel %vm5988, %v6345, 0
      %v6390 = vsel %vm5988, %v6347, 0
      %v6392 = vsel %vm5988, %v6350, 0
      %v6394 = vsel %vm5988, %v6352, 0
      %v6396 = vsel %vm5988, %v6355, 0
      %v6398 = vsel %vm5988, %v6357, 0
      %v6400 = vsel %vm5988, %v6360, 0
      %v6402 = vsel %vm5988, %v6362, 0
      %v6404 = vsel %vm5988, %v6365, 0
      %v6406 = vsel %vm5988, %v6367, 0
      %v6408 = vsel %vm5988, %v6370, 0
      %v6410 = vsel %vm5988, %v6372, 0
      %v6412 = vsel %vm5988, %v6375, 0
      %v6414 = vsel %vm5988, %v6377, 0
      %v6416 = vsel %vm5988, %v6380, 0
      %v6418 = vsel %vm5988, %v6382, 0
      %6420 = vmatprep.subr.mxu0 0.0
      %6421 = vmatpush1.msra.mxu0 %v6384
      %6422 = vmatprep.subr.mxu0 0.0
      %6423 = vmatpush1.msra.mxu0 %v6385
      %6424 = vmatprep.subr.mxu0 0.0
      %6425 = vmatpush1.msra.mxu0 %v6386
      %6426 = vmatprep.subr.mxu0 0.0
      %6427 = vmatpush1.msra.mxu0 %v6387
      %6428 = vmatprep.subr.mxu0 0.0
      %6429 = vmatpush1.msra.mxu0 0.0
      %6430 = vmatprep.subr.mxu0 0.0
      %6431 = vmatpush1.msra.mxu0 0.0
      %6432 = vmatprep.subr.mxu0 0.0
      %6433 = vmatpush1.msra.mxu0 0.0
      %6434 = vmatprep.subr.mxu0 0.0
      %6435 = vmatpush1.msra.mxu0 0.0
      %6436 = vmatprep.subr.mxu0 0.0
      %6437 = vmatpush1.msra.mxu0 0.0
      %6438 = vmatprep.subr.mxu0 0.0
      %6439 = vmatpush1.msra.mxu0 0.0
      %6440 = vmatprep.subr.mxu0 0.0
      %6441 = vmatpush1.msra.mxu0 0.0
      %6442 = vmatprep.subr.mxu0 0.0
      %6443 = vmatpush1.msra.mxu0 0.0
      %6444 = vmatprep.subr.mxu0 0.0
      %6445 = vmatpush1.msra.mxu0 0.0
      %6446 = vmatprep.subr.mxu0 0.0
      %6447 = vmatpush1.msra.mxu0 0.0
      %6448 = vmatprep.subr.mxu0 0.0
      %6449 = vmatpush1.msra.mxu0 0.0
      %6450 = vmatprep.subr.mxu0 0.0
      %6451 = vmatpush1.msra.mxu0 0.0
      %6452 = vmatprep.subr.mxu0 0.0
      %6453 = vmatpush1.msra.mxu0 0.0
      %6454 = vmatprep.subr.mxu0 0.0
      %6455 = vmatpush1.msra.mxu0 0.0
      %6456 = vmatprep.subr.mxu0 0.0
      %6457 = vmatpush1.msra.mxu0 0.0
      %6458 = vmatprep.subr.mxu0 0.0
      %6459 = vmatpush1.msra.mxu0 0.0
      %6460 = vmatprep.subr.mxu0 0.0
      %6461 = vmatpush1.msra.mxu0 0.0
      %6462 = vmatprep.subr.mxu0 0.0
      %6463 = vmatpush1.msra.mxu0 0.0
      %6464 = vmatprep.subr.mxu0 0.0
      %6465 = vmatpush1.msra.mxu0 0.0
      %6466 = vmatprep.subr.mxu0 0.0
      %6467 = vmatpush1.msra.mxu0 0.0
      %6468 = vmatprep.subr.mxu0 0.0
      %6469 = vmatpush1.msra.mxu0 0.0
      %6470 = vmatprep.subr.mxu0 0.0
      %6471 = vmatpush1.msra.mxu0 0.0
      %6472 = vmatprep.subr.mxu0 0.0
      %6473 = vmatpush1.msra.mxu0 0.0
      %6474 = vmatprep.subr.mxu0 0.0
      %6475 = vmatpush1.msra.mxu0 0.0
      %6476 = vmatprep.subr.mxu0 0.0
      %6477 = vmatpush1.msra.mxu0 0.0
      %6478 = vmatprep.subr.mxu0 0.0
      %6479 = vmatpush1.msra.mxu0 0.0
      %6480 = vmatprep.subr.mxu0 0.0
      %6481 = vmatpush1.msra.mxu0 0.0
      %6482 = vmatprep.subr.mxu0 0.0
      %6483 = vmatpush1.msra.mxu0 0.0
      %6484 = vmatprep.mubr.f32.mxu0 0.0
      %6485 = vmatmul.mubr.f32.gmra.mrb[0].mxu0 %v6388
      %v6486 = vpop.f32.mrb[0].mxu0
      %v6487 = vadd.f32 0.0, %v6486
      %v6488 = vpop.f32.mrb[0].mxu0
      %6489 = vmatprep.mubr.f32.mxu0 0.0
      %6490 = vmatmul.mubr.f32.gmra.mrb[0].mxu0 %v6390
      %v6491 = vpop.f32.mrb[0].mxu0
      %v6492 = vadd.f32 0.0, %v6491
      %v6493 = vpop.f32.mrb[0].mxu0
      %6494 = vmatprep.mubr.f32.mxu0 0.0
      %6495 = vmatmul.mubr.f32.gmra.mrb[0].mxu0 %v6392
      %v6496 = vpop.f32.mrb[0].mxu0
      %v6497 = vadd.f32 0.0, %v6496
      %v6498 = vpop.f32.mrb[0].mxu0
      %6499 = vmatprep.mubr.f32.mxu0 0.0
      %6500 = vmatmul.mubr.f32.gmra.mrb[0].mxu0 %v6394
      %v6501 = vpop.f32.mrb[0].mxu0
      %v6502 = vadd.f32 0.0, %v6501
      %v6503 = vpop.f32.mrb[0].mxu0
      %6504 = vmatprep.mubr.f32.mxu0 0.0
      %6505 = vmatmul.mubr.f32.gmra.mrb[0].mxu0 %v6396
      %v6506 = vpop.f32.mrb[0].mxu0
      %v6507 = vadd.f32 0.0, %v6506
      %v6508 = vpop.f32.mrb[0].mxu0
      %6509 = vmatprep.mubr.f32.mxu0 0.0
      %6510 = vmatmul.mubr.f32.gmra.mrb[0].mxu0 %v6398
      %v6511 = vpop.f32.mrb[0].mxu0
      %v6512 = vadd.f32 0.0, %v6511
      %v6513 = vpop.f32.mrb[0].mxu0
      %6514 = vmatprep.mubr.f32.mxu0 0.0
      %6515 = vmatmul.mubr.f32.gmra.mrb[0].mxu0 %v6400
      %v6516 = vpop.f32.mrb[0].mxu0
      %v6517 = vadd.f32 0.0, %v6516
      %v6518 = vpop.f32.mrb[0].mxu0
      %6519 = vmatprep.mubr.f32.mxu0 0.0
      %6520 = vmatmul.mubr.f32.gmra.mrb[0].mxu0 %v6402
      %v6521 = vpop.f32.mrb[0].mxu0
      %v6522 = vadd.f32 0.0, %v6521
      %v6523 = vpop.f32.mrb[0].mxu0
      %6524 = vmatprep.mubr.f32.mxu0 0.0
      %6525 = vmatmul.mubr.f32.gmra.mrb[0].mxu0 %v6404
      %v6526 = vpop.f32.mrb[0].mxu0
      %v6527 = vadd.f32 0.0, %v6526
      %v6528 = vpop.f32.mrb[0].mxu0
      %6529 = vmatprep.mubr.f32.mxu0 0.0
      %6530 = vmatmul.mubr.f32.gmra.mrb[0].mxu0 %v6406
      %v6531 = vpop.f32.mrb[0].mxu0
      %v6532 = vadd.f32 0.0, %v6531
      %v6533 = vpop.f32.mrb[0].mxu0
      %6534 = vmatprep.mubr.f32.mxu0 0.0
      %6535 = vmatmul.mubr.f32.gmra.mrb[0].mxu0 %v6408
      %v6536 = vpop.f32.mrb[0].mxu0
      %v6537 = vadd.f32 0.0, %v6536
      %v6538 = vpop.f32.mrb[0].mxu0
      %6539 = vmatprep.mubr.f32.mxu0 0.0
      %6540 = vmatmul.mubr.f32.gmra.mrb[0].mxu0 %v6410
      %v6541 = vpop.f32.mrb[0].mxu0
      %v6542 = vadd.f32 0.0, %v6541
      %v6543 = vpop.f32.mrb[0].mxu0
      %6544 = vmatprep.mubr.f32.mxu0 0.0
      %6545 = vmatmul.mubr.f32.gmra.mrb[0].mxu0 %v6412
      %v6546 = vpop.f32.mrb[0].mxu0
      %v6547 = vadd.f32 0.0, %v6546
      %v6548 = vpop.f32.mrb[0].mxu0
      %6549 = vmatprep.mubr.f32.mxu0 0.0
      %6550 = vmatmul.mubr.f32.gmra.mrb[0].mxu0 %v6414
      %v6551 = vpop.f32.mrb[0].mxu0
      %v6552 = vadd.f32 0.0, %v6551
      %v6553 = vpop.f32.mrb[0].mxu0
      %6554 = vmatprep.mubr.f32.mxu0 0.0
      %6555 = vmatmul.mubr.f32.gmra.mrb[0].mxu0 %v6416
      %v6556 = vpop.f32.mrb[0].mxu0
      %v6557 = vadd.f32 0.0, %v6556
      %v6558 = vpop.f32.mrb[0].mxu0
      %6559 = vmatprep.mubr.f32.mxu0 0.0
      %6560 = vmatmul.mubr.f32.gmra.mrb[0].mxu0 %v6418
      %v6561 = vpop.f32.mrb[0].mxu0
      %v6562 = vadd.f32 0.0, %v6561
      %v6563 = vpop.f32.mrb[0].mxu0
      %6564 = vdwg.mxu0
      %v6565 = vadd.f32 %v6265, %v6487
      %v6566 = vadd.f32 %v6270, %v6492
      %v6567 = vadd.f32 %v6275, %v6497
      %v6568 = vadd.f32 %v6280, %v6502
      %v6569 = vadd.f32 %v6285, %v6507
      %v6570 = vadd.f32 %v6290, %v6512
      %v6571 = vadd.f32 %v6295, %v6517
      %v6572 = vadd.f32 %v6300, %v6522
      %v6573 = vadd.f32 %v6305, %v6527
      %v6574 = vadd.f32 %v6310, %v6532
      %v6575 = vadd.f32 %v6315, %v6537
      %v6576 = vadd.f32 %v6320, %v6542
      %v6577 = vadd.f32 %v6325, %v6547
      %v6578 = vadd.f32 %v6330, %v6552
      %v6579 = vadd.f32 %v6335, %v6557
      %v6580 = vadd.f32 %v6340, %v6562
      %s6581 = scalar_lea.vmem %s6, 96
      %v6582 = vld [vmem:[%s6581] sm:$0xff]
      %v6583 = vld [vmem:[%s6581 + $0x8] sm:$0xff]
      %v6584 = vld [vmem:[%s6581 + $0x10] sm:$0xff]
      %v6585 = vld [vmem:[%s6581 + $0x18] sm:$0xff]
      %v6587 = vsel %vm5988, %v5909, 0
      %v6590 = vsel %vm5988, %v5910, 0
      %6592 = vmatprep.subr.mxu0 0.0
      %6593 = vmatpush1.msra.mxu0 %v6582
      %6594 = vmatprep.subr.mxu0 0.0
      %6595 = vmatpush1.msra.mxu0 %v6583
      %6596 = vmatprep.subr.mxu0 0.0
      %6597 = vmatpush1.msra.mxu0 %v6584
      %6598 = vmatprep.subr.mxu0 0.0
      %6599 = vmatpush1.msra.mxu0 %v6585
      %6600 = vmatprep.subr.mxu0 0.0
      %6601 = vmatpush1.msra.mxu0 0.0
      %6602 = vmatprep.subr.mxu0 0.0
      %6603 = vmatpush1.msra.mxu0 0.0
      %6604 = vmatprep.subr.mxu0 0.0
      %6605 = vmatpush1.msra.mxu0 0.0
      %6606 = vmatprep.subr.mxu0 0.0
      %6607 = vmatpush1.msra.mxu0 0.0
      %6608 = vmatprep.subr.mxu0 0.0
      %6609 = vmatpush1.msra.mxu0 0.0
      %6610 = vmatprep.subr.mxu0 0.0
      %6611 = vmatpush1.msra.mxu0 0.0
      %6612 = vmatprep.subr.mxu0 0.0
      %6613 = vmatpush1.msra.mxu0 0.0
      %6614 = vmatprep.subr.mxu0 0.0
      %6615 = vmatpush1.msra.mxu0 0.0
      %6616 = vmatprep.subr.mxu0 0.0
      %6617 = vmatpush1.msra.mxu0 0.0
      %6618 = vmatprep.subr.mxu0 0.0
      %6619 = vmatpush1.msra.mxu0 0.0
      %6620 = vmatprep.subr.mxu0 0.0
      %6621 = vmatpush1.msra.mxu0 0.0
      %6622 = vmatprep.subr.mxu0 0.0
      %6623 = vmatpush1.msra.mxu0 0.0
      %6624 = vmatprep.subr.mxu0 0.0
      %6625 = vmatpush1.msra.mxu0 0.0
      %6626 = vmatprep.subr.mxu0 0.0
      %6627 = vmatpush1.msra.mxu0 0.0
      %6628 = vmatprep.subr.mxu0 0.0
      %6629 = vmatpush1.msra.mxu0 0.0
      %6630 = vmatprep.subr.mxu0 0.0
      %6631 = vmatpush1.msra.mxu0 0.0
      %6632 = vmatprep.subr.mxu0 0.0
      %6633 = vmatpush1.msra.mxu0 0.0
      %6634 = vmatprep.subr.mxu0 0.0
      %6635 = vmatpush1.msra.mxu0 0.0
      %6636 = vmatprep.subr.mxu0 0.0
      %6637 = vmatpush1.msra.mxu0 0.0
      %6638 = vmatprep.subr.mxu0 0.0
      %6639 = vmatpush1.msra.mxu0 0.0
      %6640 = vmatprep.subr.mxu0 0.0
      %6641 = vmatpush1.msra.mxu0 0.0
      %6642 = vmatprep.subr.mxu0 0.0
      %6643 = vmatpush1.msra.mxu0 0.0
      %6644 = vmatprep.subr.mxu0 0.0
      %6645 = vmatpush1.msra.mxu0 0.0
      %6646 = vmatprep.subr.mxu0 0.0
      %6647 = vmatpush1.msra.mxu0 0.0
      %6648 = vmatprep.subr.mxu0 0.0
      %6649 = vmatpush1.msra.mxu0 0.0
      %6650 = vmatprep.subr.mxu0 0.0
      %6651 = vmatpush1.msra.mxu0 0.0
      %6652 = vmatprep.subr.mxu0 0.0
      %6653 = vmatpush1.msra.mxu0 0.0
      %6654 = vmatprep.subr.mxu0 0.0
      %6655 = vmatpush1.msra.mxu0 0.0
      %6656 = vmatprep.mubr.f32.mxu0 0.0
      %6657 = vmatmul.mubr.f32.gmra.mrb[0].mxu0 %v6170
      %v6658 = vpop.f32.mrb[0].mxu0
      %v6659 = vadd.f32 0.0, %v6658
      %v6660 = vpop.f32.mrb[0].mxu0
      %6661 = vmatprep.mubr.f32.mxu0 0.0
      %6662 = vmatmul.mubr.f32.gmra.mrb[0].mxu0 %v6172
      %v6663 = vpop.f32.mrb[0].mxu0
      %v6664 = vadd.f32 0.0, %v6663
      %v6665 = vpop.f32.mrb[0].mxu0
      %6666 = vmatprep.mubr.f32.mxu0 0.0
      %6667 = vmatmul.mubr.f32.gmra.mrb[0].mxu0 %v6174
      %v6668 = vpop.f32.mrb[0].mxu0
      %v6669 = vadd.f32 0.0, %v6668
      %v6670 = vpop.f32.mrb[0].mxu0
      %6671 = vmatprep.mubr.f32.mxu0 0.0
      %6672 = vmatmul.mubr.f32.gmra.mrb[0].mxu0 %v6176
      %v6673 = vpop.f32.mrb[0].mxu0
      %v6674 = vadd.f32 0.0, %v6673
      %v6675 = vpop.f32.mrb[0].mxu0
      %6676 = vmatprep.mubr.f32.mxu0 0.0
      %6677 = vmatmul.mubr.f32.gmra.mrb[0].mxu0 %v6178
      %v6678 = vpop.f32.mrb[0].mxu0
      %v6679 = vadd.f32 0.0, %v6678
      %v6680 = vpop.f32.mrb[0].mxu0
      %6681 = vmatprep.mubr.f32.mxu0 0.0
      %6682 = vmatmul.mubr.f32.gmra.mrb[0].mxu0 %v6180
      %v6683 = vpop.f32.mrb[0].mxu0
      %v6684 = vadd.f32 0.0, %v6683
      %v6685 = vpop.f32.mrb[0].mxu0
      %6686 = vmatprep.mubr.f32.mxu0 0.0
      %6687 = vmatmul.mubr.f32.gmra.mrb[0].mxu0 %v6182
      %v6688 = vpop.f32.mrb[0].mxu0
      %v6689 = vadd.f32 0.0, %v6688
      %v6690 = vpop.f32.mrb[0].mxu0
      %6691 = vmatprep.mubr.f32.mxu0 0.0
      %6692 = vmatmul.mubr.f32.gmra.mrb[0].mxu0 %v6184
      %v6693 = vpop.f32.mrb[0].mxu0
      %v6694 = vadd.f32 0.0, %v6693
      %v6695 = vpop.f32.mrb[0].mxu0
      %6696 = vmatprep.mubr.f32.mxu0 0.0
      %6697 = vmatmul.mubr.f32.gmra.mrb[0].mxu0 %v6186
      %v6698 = vpop.f32.mrb[0].mxu0
      %v6699 = vadd.f32 0.0, %v6698
      %v6700 = vpop.f32.mrb[0].mxu0
      %6701 = vmatprep.mubr.f32.mxu0 0.0
      %6702 = vmatmul.mubr.f32.gmra.mrb[0].mxu0 %v6188
      %v6703 = vpop.f32.mrb[0].mxu0
      %v6704 = vadd.f32 0.0, %v6703
      %v6705 = vpop.f32.mrb[0].mxu0
      %6706 = vmatprep.mubr.f32.mxu0 0.0
      %6707 = vmatmul.mubr.f32.gmra.mrb[0].mxu0 %v6190
      %v6708 = vpop.f32.mrb[0].mxu0
      %v6709 = vadd.f32 0.0, %v6708
      %v6710 = vpop.f32.mrb[0].mxu0
      %6711 = vmatprep.mubr.f32.mxu0 0.0
      %6712 = vmatmul.mubr.f32.gmra.mrb[0].mxu0 %v6192
      %v6713 = vpop.f32.mrb[0].mxu0
      %v6714 = vadd.f32 0.0, %v6713
      %v6715 = vpop.f32.mrb[0].mxu0
      %6716 = vmatprep.mubr.f32.mxu0 0.0
      %6717 = vmatmul.mubr.f32.gmra.mrb[0].mxu0 %v6194
      %v6718 = vpop.f32.mrb[0].mxu0
      %v6719 = vadd.f32 0.0, %v6718
      %v6720 = vpop.f32.mrb[0].mxu0
      %6721 = vmatprep.mubr.f32.mxu0 0.0
      %6722 = vmatmul.mubr.f32.gmra.mrb[0].mxu0 %v6196
      %v6723 = vpop.f32.mrb[0].mxu0
      %v6724 = vadd.f32 0.0, %v6723
      %v6725 = vpop.f32.mrb[0].mxu0
      %6726 = vmatprep.mubr.f32.mxu0 0.0
      %6727 = vmatmul.mubr.f32.gmra.mrb[0].mxu0 %v6587
      %v6728 = vpop.f32.mrb[0].mxu0
      %v6729 = vadd.f32 0.0, %v6728
      %v6730 = vpop.f32.mrb[0].mxu0
      %6731 = vmatprep.mubr.f32.mxu0 0.0
      %6732 = vmatmul.mubr.f32.gmra.mrb[0].mxu0 %v6590
      %v6733 = vpop.f32.mrb[0].mxu0
      %v6734 = vadd.f32 0.0, %v6733
      %v6735 = vpop.f32.mrb[0].mxu0
      %6736 = vdwg.mxu0
      %v6737 = vadd.f32 %v6565, %v6659
      %v6738 = vadd.f32 %v6566, %v6664
      %v6739 = vadd.f32 %v6567, %v6669
      %v6740 = vadd.f32 %v6568, %v6674
      %v6741 = vadd.f32 %v6569, %v6679
      %v6742 = vadd.f32 %v6570, %v6684
      %v6743 = vadd.f32 %v6571, %v6689
      %v6744 = vadd.f32 %v6572, %v6694
      %v6745 = vadd.f32 %v6573, %v6699
      %v6746 = vadd.f32 %v6574, %v6704
      %v6747 = vadd.f32 %v6575, %v6709
      %v6748 = vadd.f32 %v6576, %v6714
      %v6749 = vadd.f32 %v6577, %v6719
      %v6750 = vadd.f32 %v6578, %v6724
      %v6751 = vadd.f32 %v6579, %v6729
      %v6752 = vadd.f32 %v6580, %v6734
      %v6754 = vrot.slane %v5909, 1
      %v6755 = vrot.slane %v5910, 1
      %v6756 = vsel %vm452, %v6754, %v6755
      %v6757 = vrot.slane %v5911, 1
      %v6758 = vsel %vm452, %v6755, %v6757
      %s6759 = scalar_lea.vmem %s6, 128
      %v6760 = vld [vmem:[%s6759] sm:$0xff]
      %v6761 = vld [vmem:[%s6759 + $0x8] sm:$0xff]
      %v6762 = vld [vmem:[%s6759 + $0x10] sm:$0xff]
      %v6763 = vld [vmem:[%s6759 + $0x18] sm:$0xff]
      %v6764 = vsel %vm5988, %v6756, 0
      %v6766 = vsel %vm5988, %v6758, 0
      %6768 = vmatprep.subr.mxu0 0.0
      %6769 = vmatpush1.msra.mxu0 %v6760
      %6770 = vmatprep.subr.mxu0 0.0
      %6771 = vmatpush1.msra.mxu0 %v6761
      %6772 = vmatprep.subr.mxu0 0.0
      %6773 = vmatpush1.msra.mxu0 %v6762
      %6774 = vmatprep.subr.mxu0 0.0
      %6775 = vmatpush1.msra.mxu0 %v6763
      %6776 = vmatprep.subr.mxu0 0.0
      %6777 = vmatpush1.msra.mxu0 0.0
      %6778 = vmatprep.subr.mxu0 0.0
      %6779 = vmatpush1.msra.mxu0 0.0
      %6780 = vmatprep.subr.mxu0 0.0
      %6781 = vmatpush1.msra.mxu0 0.0
      %6782 = vmatprep.subr.mxu0 0.0
      %6783 = vmatpush1.msra.mxu0 0.0
      %6784 = vmatprep.subr.mxu0 0.0
      %6785 = vmatpush1.msra.mxu0 0.0
      %6786 = vmatprep.subr.mxu0 0.0
      %6787 = vmatpush1.msra.mxu0 0.0
      %6788 = vmatprep.subr.mxu0 0.0
      %6789 = vmatpush1.msra.mxu0 0.0
      %6790 = vmatprep.subr.mxu0 0.0
      %6791 = vmatpush1.msra.mxu0 0.0
      %6792 = vmatprep.subr.mxu0 0.0
      %6793 = vmatpush1.msra.mxu0 0.0
      %6794 = vmatprep.subr.mxu0 0.0
      %6795 = vmatpush1.msra.mxu0 0.0
      %6796 = vmatprep.subr.mxu0 0.0
      %6797 = vmatpush1.msra.mxu0 0.0
      %6798 = vmatprep.subr.mxu0 0.0
      %6799 = vmatpush1.msra.mxu0 0.0
      %6800 = vmatprep.subr.mxu0 0.0
      %6801 = vmatpush1.msra.mxu0 0.0
      %6802 = vmatprep.subr.mxu0 0.0
      %6803 = vmatpush1.msra.mxu0 0.0
      %6804 = vmatprep.subr.mxu0 0.0
      %6805 = vmatpush1.msra.mxu0 0.0
      %6806 = vmatprep.subr.mxu0 0.0
      %6807 = vmatpush1.msra.mxu0 0.0
      %6808 = vmatprep.subr.mxu0 0.0
      %6809 = vmatpush1.msra.mxu0 0.0
      %6810 = vmatprep.subr.mxu0 0.0
      %6811 = vmatpush1.msra.mxu0 0.0
      %6812 = vmatprep.subr.mxu0 0.0
      %6813 = vmatpush1.msra.mxu0 0.0
      %6814 = vmatprep.subr.mxu0 0.0
      %6815 = vmatpush1.msra.mxu0 0.0
      %6816 = vmatprep.subr.mxu0 0.0
      %6817 = vmatpush1.msra.mxu0 0.0
      %6818 = vmatprep.subr.mxu0 0.0
      %6819 = vmatpush1.msra.mxu0 0.0
      %6820 = vmatprep.subr.mxu0 0.0
      %6821 = vmatpush1.msra.mxu0 0.0
      %6822 = vmatprep.subr.mxu0 0.0
      %6823 = vmatpush1.msra.mxu0 0.0
      %6824 = vmatprep.subr.mxu0 0.0
      %6825 = vmatpush1.msra.mxu0 0.0
      %6826 = vmatprep.subr.mxu0 0.0
      %6827 = vmatpush1.msra.mxu0 0.0
      %6828 = vmatprep.subr.mxu0 0.0
      %6829 = vmatpush1.msra.mxu0 0.0
      %6830 = vmatprep.subr.mxu0 0.0
      %6831 = vmatpush1.msra.mxu0 0.0
      %6832 = vmatprep.mubr.f32.mxu0 0.0
      %6833 = vmatmul.mubr.f32.gmra.mrb[0].mxu0 %v5993
      %v6834 = vpop.f32.mrb[0].mxu0
      %v6835 = vadd.f32 0.0, %v6834
      %v6836 = vpop.f32.mrb[0].mxu0
      %6837 = vmatprep.mubr.f32.mxu0 0.0
      %6838 = vmatmul.mubr.f32.gmra.mrb[0].mxu0 %v5995
      %v6839 = vpop.f32.mrb[0].mxu0
      %v6840 = vadd.f32 0.0, %v6839
      %v6841 = vpop.f32.mrb[0].mxu0
      %6842 = vmatprep.mubr.f32.mxu0 0.0
      %6843 = vmatmul.mubr.f32.gmra.mrb[0].mxu0 %v5997
      %v6844 = vpop.f32.mrb[0].mxu0
      %v6845 = vadd.f32 0.0, %v6844
      %v6846 = vpop.f32.mrb[0].mxu0
      %6847 = vmatprep.mubr.f32.mxu0 0.0
      %6848 = vmatmul.mubr.f32.gmra.mrb[0].mxu0 %v5999
      %v6849 = vpop.f32.mrb[0].mxu0
      %v6850 = vadd.f32 0.0, %v6849
      %v6851 = vpop.f32.mrb[0].mxu0
      %6852 = vmatprep.mubr.f32.mxu0 0.0
      %6853 = vmatmul.mubr.f32.gmra.mrb[0].mxu0 %v6001
      %v6854 = vpop.f32.mrb[0].mxu0
      %v6855 = vadd.f32 0.0, %v6854
      %v6856 = vpop.f32.mrb[0].mxu0
      %6857 = vmatprep.mubr.f32.mxu0 0.0
      %6858 = vmatmul.mubr.f32.gmra.mrb[0].mxu0 %v6003
      %v6859 = vpop.f32.mrb[0].mxu0
      %v6860 = vadd.f32 0.0, %v6859
      %v6861 = vpop.f32.mrb[0].mxu0
      %6862 = vmatprep.mubr.f32.mxu0 0.0
      %6863 = vmatmul.mubr.f32.gmra.mrb[0].mxu0 %v6005
      %v6864 = vpop.f32.mrb[0].mxu0
      %v6865 = vadd.f32 0.0, %v6864
      %v6866 = vpop.f32.mrb[0].mxu0
      %6867 = vmatprep.mubr.f32.mxu0 0.0
      %6868 = vmatmul.mubr.f32.gmra.mrb[0].mxu0 %v6007
      %v6869 = vpop.f32.mrb[0].mxu0
      %v6870 = vadd.f32 0.0, %v6869
      %v6871 = vpop.f32.mrb[0].mxu0
      %6872 = vmatprep.mubr.f32.mxu0 0.0
      %6873 = vmatmul.mubr.f32.gmra.mrb[0].mxu0 %v6009
      %v6874 = vpop.f32.mrb[0].mxu0
      %v6875 = vadd.f32 0.0, %v6874
      %v6876 = vpop.f32.mrb[0].mxu0
      %6877 = vmatprep.mubr.f32.mxu0 0.0
      %6878 = vmatmul.mubr.f32.gmra.mrb[0].mxu0 %v6011
      %v6879 = vpop.f32.mrb[0].mxu0
      %v6880 = vadd.f32 0.0, %v6879
      %v6881 = vpop.f32.mrb[0].mxu0
      %6882 = vmatprep.mubr.f32.mxu0 0.0
      %6883 = vmatmul.mubr.f32.gmra.mrb[0].mxu0 %v6013
      %v6884 = vpop.f32.mrb[0].mxu0
      %v6885 = vadd.f32 0.0, %v6884
      %v6886 = vpop.f32.mrb[0].mxu0
      %6887 = vmatprep.mubr.f32.mxu0 0.0
      %6888 = vmatmul.mubr.f32.gmra.mrb[0].mxu0 %v6015
      %v6889 = vpop.f32.mrb[0].mxu0
      %v6890 = vadd.f32 0.0, %v6889
      %v6891 = vpop.f32.mrb[0].mxu0
      %6892 = vmatprep.mubr.f32.mxu0 0.0
      %6893 = vmatmul.mubr.f32.gmra.mrb[0].mxu0 %v6017
      %v6894 = vpop.f32.mrb[0].mxu0
      %v6895 = vadd.f32 0.0, %v6894
      %v6896 = vpop.f32.mrb[0].mxu0
      %6897 = vmatprep.mubr.f32.mxu0 0.0
      %6898 = vmatmul.mubr.f32.gmra.mrb[0].mxu0 %v6019
      %v6899 = vpop.f32.mrb[0].mxu0
      %v6900 = vadd.f32 0.0, %v6899
      %v6901 = vpop.f32.mrb[0].mxu0
      %6902 = vmatprep.mubr.f32.mxu0 0.0
      %6903 = vmatmul.mubr.f32.gmra.mrb[0].mxu0 %v6764
      %v6904 = vpop.f32.mrb[0].mxu0
      %v6905 = vadd.f32 0.0, %v6904
      %v6906 = vpop.f32.mrb[0].mxu0
      %6907 = vmatprep.mubr.f32.mxu0 0.0
      %6908 = vmatmul.mubr.f32.gmra.mrb[0].mxu0 %v6766
      %v6909 = vpop.f32.mrb[0].mxu0
      %v6910 = vadd.f32 0.0, %v6909
      %v6911 = vpop.f32.mrb[0].mxu0
      %6912 = vdwg.mxu0
      %v6913 = vadd.f32 %v6737, %v6835
      %v6914 = vadd.f32 %v6738, %v6840
      %v6915 = vadd.f32 %v6739, %v6845
      %v6916 = vadd.f32 %v6740, %v6850
      %v6917 = vadd.f32 %v6741, %v6855
      %v6918 = vadd.f32 %v6742, %v6860
      %v6919 = vadd.f32 %v6743, %v6865
      %v6920 = vadd.f32 %v6744, %v6870
      %v6921 = vadd.f32 %v6745, %v6875
      %v6922 = vadd.f32 %v6746, %v6880
      %v6923 = vadd.f32 %v6747, %v6885
      %v6924 = vadd.f32 %v6748, %v6890
      %v6925 = vadd.f32 %v6749, %v6895
      %v6926 = vadd.f32 %v6750, %v6900
      %v6927 = vadd.f32 %v6751, %v6905
      %v6928 = vadd.f32 %v6752, %v6910
      %v6929 = vrot.slane %v5909, 2
      %v6930 = vrot.slane %v5910, 2
      %v6931 = vsel %vm593, %v6929, %v6930
      %v6932 = vrot.slane %v5911, 2
      %v6933 = vsel %vm593, %v6930, %v6932
      %s6934 = scalar_lea.vmem %s6, 160
      %v6935 = vld [vmem:[%s6934] sm:$0xff]
      %v6936 = vld [vmem:[%s6934 + $0x8] sm:$0xff]
      %v6937 = vld [vmem:[%s6934 + $0x10] sm:$0xff]
      %v6938 = vld [vmem:[%s6934 + $0x18] sm:$0xff]
      %v6939 = vsel %vm5988, %v6931, 0
      %v6941 = vsel %vm5988, %v6933, 0
      %6943 = vmatprep.subr.mxu0 0.0
      %6944 = vmatpush1.msra.mxu0 %v6935
      %6945 = vmatprep.subr.mxu0 0.0
      %6946 = vmatpush1.msra.mxu0 %v6936
      %6947 = vmatprep.subr.mxu0 0.0
      %6948 = vmatpush1.msra.mxu0 %v6937
      %6949 = vmatprep.subr.mxu0 0.0
      %6950 = vmatpush1.msra.mxu0 %v6938
      %6951 = vmatprep.subr.mxu0 0.0
      %6952 = vmatpush1.msra.mxu0 0.0
      %6953 = vmatprep.subr.mxu0 0.0
      %6954 = vmatpush1.msra.mxu0 0.0
      %6955 = vmatprep.subr.mxu0 0.0
      %6956 = vmatpush1.msra.mxu0 0.0
      %6957 = vmatprep.subr.mxu0 0.0
      %6958 = vmatpush1.msra.mxu0 0.0
      %6959 = vmatprep.subr.mxu0 0.0
      %6960 = vmatpush1.msra.mxu0 0.0
      %6961 = vmatprep.subr.mxu0 0.0
      %6962 = vmatpush1.msra.mxu0 0.0
      %6963 = vmatprep.subr.mxu0 0.0
      %6964 = vmatpush1.msra.mxu0 0.0
      %6965 = vmatprep.subr.mxu0 0.0
      %6966 = vmatpush1.msra.mxu0 0.0
      %6967 = vmatprep.subr.mxu0 0.0
      %6968 = vmatpush1.msra.mxu0 0.0
      %6969 = vmatprep.subr.mxu0 0.0
      %6970 = vmatpush1.msra.mxu0 0.0
      %6971 = vmatprep.subr.mxu0 0.0
      %6972 = vmatpush1.msra.mxu0 0.0
      %6973 = vmatprep.subr.mxu0 0.0
      %6974 = vmatpush1.msra.mxu0 0.0
      %6975 = vmatprep.subr.mxu0 0.0
      %6976 = vmatpush1.msra.mxu0 0.0
      %6977 = vmatprep.subr.mxu0 0.0
      %6978 = vmatpush1.msra.mxu0 0.0
      %6979 = vmatprep.subr.mxu0 0.0
      %6980 = vmatpush1.msra.mxu0 0.0
      %6981 = vmatprep.subr.mxu0 0.0
      %6982 = vmatpush1.msra.mxu0 0.0
      %6983 = vmatprep.subr.mxu0 0.0
      %6984 = vmatpush1.msra.mxu0 0.0
      %6985 = vmatprep.subr.mxu0 0.0
      %6986 = vmatpush1.msra.mxu0 0.0
      %6987 = vmatprep.subr.mxu0 0.0
      %6988 = vmatpush1.msra.mxu0 0.0
      %6989 = vmatprep.subr.mxu0 0.0
      %6990 = vmatpush1.msra.mxu0 0.0
      %6991 = vmatprep.subr.mxu0 0.0
      %6992 = vmatpush1.msra.mxu0 0.0
      %6993 = vmatprep.subr.mxu0 0.0
      %6994 = vmatpush1.msra.mxu0 0.0
      %6995 = vmatprep.subr.mxu0 0.0
      %6996 = vmatpush1.msra.mxu0 0.0
      %6997 = vmatprep.subr.mxu0 0.0
      %6998 = vmatpush1.msra.mxu0 0.0
      %6999 = vmatprep.subr.mxu0 0.0
      %7000 = vmatpush1.msra.mxu0 0.0
      %7001 = vmatprep.subr.mxu0 0.0
      %7002 = vmatpush1.msra.mxu0 0.0
      %7003 = vmatprep.subr.mxu0 0.0
      %7004 = vmatpush1.msra.mxu0 0.0
      %7005 = vmatprep.subr.mxu0 0.0
      %7006 = vmatpush1.msra.mxu0 0.0
      %7007 = vmatprep.mubr.f32.mxu0 0.0
      %7008 = vmatmul.mubr.f32.gmra.mrb[0].mxu0 %v6392
      %v7009 = vpop.f32.mrb[0].mxu0
      %v7010 = vadd.f32 0.0, %v7009
      %v7011 = vpop.f32.mrb[0].mxu0
      %7012 = vmatprep.mubr.f32.mxu0 0.0
      %7013 = vmatmul.mubr.f32.gmra.mrb[0].mxu0 %v6394
      %v7014 = vpop.f32.mrb[0].mxu0
      %v7015 = vadd.f32 0.0, %v7014
      %v7016 = vpop.f32.mrb[0].mxu0
      %7017 = vmatprep.mubr.f32.mxu0 0.0
      %7018 = vmatmul.mubr.f32.gmra.mrb[0].mxu0 %v6396
      %v7019 = vpop.f32.mrb[0].mxu0
      %v7020 = vadd.f32 0.0, %v7019
      %v7021 = vpop.f32.mrb[0].mxu0
      %7022 = vmatprep.mubr.f32.mxu0 0.0
      %7023 = vmatmul.mubr.f32.gmra.mrb[0].mxu0 %v6398
      %v7024 = vpop.f32.mrb[0].mxu0
      %v7025 = vadd.f32 0.0, %v7024
      %v7026 = vpop.f32.mrb[0].mxu0
      %7027 = vmatprep.mubr.f32.mxu0 0.0
      %7028 = vmatmul.mubr.f32.gmra.mrb[0].mxu0 %v6400
      %v7029 = vpop.f32.mrb[0].mxu0
      %v7030 = vadd.f32 0.0, %v7029
      %v7031 = vpop.f32.mrb[0].mxu0
      %7032 = vmatprep.mubr.f32.mxu0 0.0
      %7033 = vmatmul.mubr.f32.gmra.mrb[0].mxu0 %v6402
      %v7034 = vpop.f32.mrb[0].mxu0
      %v7035 = vadd.f32 0.0, %v7034
      %v7036 = vpop.f32.mrb[0].mxu0
      %7037 = vmatprep.mubr.f32.mxu0 0.0
      %7038 = vmatmul.mubr.f32.gmra.mrb[0].mxu0 %v6404
      %v7039 = vpop.f32.mrb[0].mxu0
      %v7040 = vadd.f32 0.0, %v7039
      %v7041 = vpop.f32.mrb[0].mxu0
      %7042 = vmatprep.mubr.f32.mxu0 0.0
      %7043 = vmatmul.mubr.f32.gmra.mrb[0].mxu0 %v6406
      %v7044 = vpop.f32.mrb[0].mxu0
      %v7045 = vadd.f32 0.0, %v7044
      %v7046 = vpop.f32.mrb[0].mxu0
      %7047 = vmatprep.mubr.f32.mxu0 0.0
      %7048 = vmatmul.mubr.f32.gmra.mrb[0].mxu0 %v6408
      %v7049 = vpop.f32.mrb[0].mxu0
      %v7050 = vadd.f32 0.0, %v7049
      %v7051 = vpop.f32.mrb[0].mxu0
      %7052 = vmatprep.mubr.f32.mxu0 0.0
      %7053 = vmatmul.mubr.f32.gmra.mrb[0].mxu0 %v6410
      %v7054 = vpop.f32.mrb[0].mxu0
      %v7055 = vadd.f32 0.0, %v7054
      %v7056 = vpop.f32.mrb[0].mxu0
      %7057 = vmatprep.mubr.f32.mxu0 0.0
      %7058 = vmatmul.mubr.f32.gmra.mrb[0].mxu0 %v6412
      %v7059 = vpop.f32.mrb[0].mxu0
      %v7060 = vadd.f32 0.0, %v7059
      %v7061 = vpop.f32.mrb[0].mxu0
      %7062 = vmatprep.mubr.f32.mxu0 0.0
      %7063 = vmatmul.mubr.f32.gmra.mrb[0].mxu0 %v6414
      %v7064 = vpop.f32.mrb[0].mxu0
      %v7065 = vadd.f32 0.0, %v7064
      %v7066 = vpop.f32.mrb[0].mxu0
      %7067 = vmatprep.mubr.f32.mxu0 0.0
      %7068 = vmatmul.mubr.f32.gmra.mrb[0].mxu0 %v6416
      %v7069 = vpop.f32.mrb[0].mxu0
      %v7070 = vadd.f32 0.0, %v7069
      %v7071 = vpop.f32.mrb[0].mxu0
      %7072 = vmatprep.mubr.f32.mxu0 0.0
      %7073 = vmatmul.mubr.f32.gmra.mrb[0].mxu0 %v6418
      %v7074 = vpop.f32.mrb[0].mxu0
      %v7075 = vadd.f32 0.0, %v7074
      %v7076 = vpop.f32.mrb[0].mxu0
      %7077 = vmatprep.mubr.f32.mxu0 0.0
      %7078 = vmatmul.mubr.f32.gmra.mrb[0].mxu0 %v6939
      %v7079 = vpop.f32.mrb[0].mxu0
      %v7080 = vadd.f32 0.0, %v7079
      %v7081 = vpop.f32.mrb[0].mxu0
      %7082 = vmatprep.mubr.f32.mxu0 0.0
      %7083 = vmatmul.mubr.f32.gmra.mrb[0].mxu0 %v6941
      %v7084 = vpop.f32.mrb[0].mxu0
      %v7085 = vadd.f32 0.0, %v7084
      %v7086 = vpop.f32.mrb[0].mxu0
      %7087 = vdwg.mxu0
      %v7088 = vadd.f32 %v6913, %v7010
      %v7089 = vadd.f32 %v6914, %v7015
      %v7090 = vadd.f32 %v6915, %v7020
      %v7091 = vadd.f32 %v6916, %v7025
      %v7092 = vadd.f32 %v6917, %v7030
      %v7093 = vadd.f32 %v6918, %v7035
      %v7094 = vadd.f32 %v6919, %v7040
      %v7095 = vadd.f32 %v6920, %v7045
      %v7096 = vadd.f32 %v6921, %v7050
      %v7097 = vadd.f32 %v6922, %v7055
      %v7098 = vadd.f32 %v6923, %v7060
      %v7099 = vadd.f32 %v6924, %v7065
      %v7100 = vadd.f32 %v6925, %v7070
      %v7101 = vadd.f32 %v6926, %v7075
      %v7102 = vadd.f32 %v6927, %v7080
      %v7103 = vadd.f32 %v6928, %v7085
      %s7104 = scalar_lea.vmem %s6, 192
      %v7105 = vld [vmem:[%s7104] sm:$0xff]
      %v7106 = vld [vmem:[%s7104 + $0x8] sm:$0xff]
      %v7107 = vld [vmem:[%s7104 + $0x10] sm:$0xff]
      %v7108 = vld [vmem:[%s7104 + $0x18] sm:$0xff]
      %v7110 = vsel %vm5988, %v5912, 0
      %v7113 = vsel %vm5988, %v5913, 0
      %7115 = vmatprep.subr.mxu0 0.0
      %7116 = vmatpush1.msra.mxu0 %v7105
      %7117 = vmatprep.subr.mxu0 0.0
      %7118 = vmatpush1.msra.mxu0 %v7106
      %7119 = vmatprep.subr.mxu0 0.0
      %7120 = vmatpush1.msra.mxu0 %v7107
      %7121 = vmatprep.subr.mxu0 0.0
      %7122 = vmatpush1.msra.mxu0 %v7108
      %7123 = vmatprep.subr.mxu0 0.0
      %7124 = vmatpush1.msra.mxu0 0.0
      %7125 = vmatprep.subr.mxu0 0.0
      %7126 = vmatpush1.msra.mxu0 0.0
      %7127 = vmatprep.subr.mxu0 0.0
      %7128 = vmatpush1.msra.mxu0 0.0
      %7129 = vmatprep.subr.mxu0 0.0
      %7130 = vmatpush1.msra.mxu0 0.0
      %7131 = vmatprep.subr.mxu0 0.0
      %7132 = vmatpush1.msra.mxu0 0.0
      %7133 = vmatprep.subr.mxu0 0.0
      %7134 = vmatpush1.msra.mxu0 0.0
      %7135 = vmatprep.subr.mxu0 0.0
      %7136 = vmatpush1.msra.mxu0 0.0
      %7137 = vmatprep.subr.mxu0 0.0
      %7138 = vmatpush1.msra.mxu0 0.0
      %7139 = vmatprep.subr.mxu0 0.0
      %7140 = vmatpush1.msra.mxu0 0.0
      %7141 = vmatprep.subr.mxu0 0.0
      %7142 = vmatpush1.msra.mxu0 0.0
      %7143 = vmatprep.subr.mxu0 0.0
      %7144 = vmatpush1.msra.mxu0 0.0
      %7145 = vmatprep.subr.mxu0 0.0
      %7146 = vmatpush1.msra.mxu0 0.0
      %7147 = vmatprep.subr.mxu0 0.0
      %7148 = vmatpush1.msra.mxu0 0.0
      %7149 = vmatprep.subr.mxu0 0.0
      %7150 = vmatpush1.msra.mxu0 0.0
      %7151 = vmatprep.subr.mxu0 0.0
      %7152 = vmatpush1.msra.mxu0 0.0
      %7153 = vmatprep.subr.mxu0 0.0
      %7154 = vmatpush1.msra.mxu0 0.0
      %7155 = vmatprep.subr.mxu0 0.0
      %7156 = vmatpush1.msra.mxu0 0.0
      %7157 = vmatprep.subr.mxu0 0.0
      %7158 = vmatpush1.msra.mxu0 0.0
      %7159 = vmatprep.subr.mxu0 0.0
      %7160 = vmatpush1.msra.mxu0 0.0
      %7161 = vmatprep.subr.mxu0 0.0
      %7162 = vmatpush1.msra.mxu0 0.0
      %7163 = vmatprep.subr.mxu0 0.0
      %7164 = vmatpush1.msra.mxu0 0.0
      %7165 = vmatprep.subr.mxu0 0.0
      %7166 = vmatpush1.msra.mxu0 0.0
      %7167 = vmatprep.subr.mxu0 0.0
      %7168 = vmatpush1.msra.mxu0 0.0
      %7169 = vmatprep.subr.mxu0 0.0
      %7170 = vmatpush1.msra.mxu0 0.0
      %7171 = vmatprep.subr.mxu0 0.0
      %7172 = vmatpush1.msra.mxu0 0.0
      %7173 = vmatprep.subr.mxu0 0.0
      %7174 = vmatpush1.msra.mxu0 0.0
      %7175 = vmatprep.subr.mxu0 0.0
      %7176 = vmatpush1.msra.mxu0 0.0
      %7177 = vmatprep.subr.mxu0 0.0
      %7178 = vmatpush1.msra.mxu0 0.0
      %7179 = vmatprep.mubr.f32.mxu0 0.0
      %7180 = vmatmul.mubr.f32.gmra.mrb[0].mxu0 %v6174
      %v7181 = vpop.f32.mrb[0].mxu0
      %v7182 = vadd.f32 0.0, %v7181
      %v7183 = vpop.f32.mrb[0].mxu0
      %7184 = vmatprep.mubr.f32.mxu0 0.0
      %7185 = vmatmul.mubr.f32.gmra.mrb[0].mxu0 %v6176
      %v7186 = vpop.f32.mrb[0].mxu0
      %v7187 = vadd.f32 0.0, %v7186
      %v7188 = vpop.f32.mrb[0].mxu0
      %7189 = vmatprep.mubr.f32.mxu0 0.0
      %7190 = vmatmul.mubr.f32.gmra.mrb[0].mxu0 %v6178
      %v7191 = vpop.f32.mrb[0].mxu0
      %v7192 = vadd.f32 0.0, %v7191
      %v7193 = vpop.f32.mrb[0].mxu0
      %7194 = vmatprep.mubr.f32.mxu0 0.0
      %7195 = vmatmul.mubr.f32.gmra.mrb[0].mxu0 %v6180
      %v7196 = vpop.f32.mrb[0].mxu0
      %v7197 = vadd.f32 0.0, %v7196
      %v7198 = vpop.f32.mrb[0].mxu0
      %7199 = vmatprep.mubr.f32.mxu0 0.0
      %7200 = vmatmul.mubr.f32.gmra.mrb[0].mxu0 %v6182
      %v7201 = vpop.f32.mrb[0].mxu0
      %v7202 = vadd.f32 0.0, %v7201
      %v7203 = vpop.f32.mrb[0].mxu0
      %7204 = vmatprep.mubr.f32.mxu0 0.0
      %7205 = vmatmul.mubr.f32.gmra.mrb[0].mxu0 %v6184
      %v7206 = vpop.f32.mrb[0].mxu0
      %v7207 = vadd.f32 0.0, %v7206
      %v7208 = vpop.f32.mrb[0].mxu0
      %7209 = vmatprep.mubr.f32.mxu0 0.0
      %7210 = vmatmul.mubr.f32.gmra.mrb[0].mxu0 %v6186
      %v7211 = vpop.f32.mrb[0].mxu0
      %v7212 = vadd.f32 0.0, %v7211
      %v7213 = vpop.f32.mrb[0].mxu0
      %7214 = vmatprep.mubr.f32.mxu0 0.0
      %7215 = vmatmul.mubr.f32.gmra.mrb[0].mxu0 %v6188
      %v7216 = vpop.f32.mrb[0].mxu0
      %v7217 = vadd.f32 0.0, %v7216
      %v7218 = vpop.f32.mrb[0].mxu0
      %7219 = vmatprep.mubr.f32.mxu0 0.0
      %7220 = vmatmul.mubr.f32.gmra.mrb[0].mxu0 %v6190
      %v7221 = vpop.f32.mrb[0].mxu0
      %v7222 = vadd.f32 0.0, %v7221
      %v7223 = vpop.f32.mrb[0].mxu0
      %7224 = vmatprep.mubr.f32.mxu0 0.0
      %7225 = vmatmul.mubr.f32.gmra.mrb[0].mxu0 %v6192
      %v7226 = vpop.f32.mrb[0].mxu0
      %v7227 = vadd.f32 0.0, %v7226
      %v7228 = vpop.f32.mrb[0].mxu0
      %7229 = vmatprep.mubr.f32.mxu0 0.0
      %7230 = vmatmul.mubr.f32.gmra.mrb[0].mxu0 %v6194
      %v7231 = vpop.f32.mrb[0].mxu0
      %v7232 = vadd.f32 0.0, %v7231
      %v7233 = vpop.f32.mrb[0].mxu0
      %7234 = vmatprep.mubr.f32.mxu0 0.0
      %7235 = vmatmul.mubr.f32.gmra.mrb[0].mxu0 %v6196
      %v7236 = vpop.f32.mrb[0].mxu0
      %v7237 = vadd.f32 0.0, %v7236
      %v7238 = vpop.f32.mrb[0].mxu0
      %7239 = vmatprep.mubr.f32.mxu0 0.0
      %7240 = vmatmul.mubr.f32.gmra.mrb[0].mxu0 %v6587
      %v7241 = vpop.f32.mrb[0].mxu0
      %v7242 = vadd.f32 0.0, %v7241
      %v7243 = vpop.f32.mrb[0].mxu0
      %7244 = vmatprep.mubr.f32.mxu0 0.0
      %7245 = vmatmul.mubr.f32.gmra.mrb[0].mxu0 %v6590
      %v7246 = vpop.f32.mrb[0].mxu0
      %v7247 = vadd.f32 0.0, %v7246
      %v7248 = vpop.f32.mrb[0].mxu0
      %7249 = vmatprep.mubr.f32.mxu0 0.0
      %7250 = vmatmul.mubr.f32.gmra.mrb[0].mxu0 %v7110
      %v7251 = vpop.f32.mrb[0].mxu0
      %v7252 = vadd.f32 0.0, %v7251
      %v7253 = vpop.f32.mrb[0].mxu0
      %7254 = vmatprep.mubr.f32.mxu0 0.0
      %7255 = vmatmul.mubr.f32.gmra.mrb[0].mxu0 %v7113
      %v7256 = vpop.f32.mrb[0].mxu0
      %v7257 = vadd.f32 0.0, %v7256
      %v7258 = vpop.f32.mrb[0].mxu0
      %7259 = vdwg.mxu0
      %v7260 = vadd.f32 %v7088, %v7182
      %v7261 = vadd.f32 %v7089, %v7187
      %v7262 = vadd.f32 %v7090, %v7192
      %v7263 = vadd.f32 %v7091, %v7197
      %v7264 = vadd.f32 %v7092, %v7202
      %v7265 = vadd.f32 %v7093, %v7207
      %v7266 = vadd.f32 %v7094, %v7212
      %v7267 = vadd.f32 %v7095, %v7217
      %v7268 = vadd.f32 %v7096, %v7222
      %v7269 = vadd.f32 %v7097, %v7227
      %v7270 = vadd.f32 %v7098, %v7232
      %v7271 = vadd.f32 %v7099, %v7237
      %v7272 = vadd.f32 %v7100, %v7242
      %v7273 = vadd.f32 %v7101, %v7247
      %v7274 = vadd.f32 %v7102, %v7252
      %v7275 = vadd.f32 %v7103, %v7257
      %v7277 = vrot.slane %v5912, 1
      %v7278 = vrot.slane %v5913, 1
      %v7279 = vsel %vm452, %v7277, %v7278
      %v7280 = vrot.slane %v5914, 1
      %v7281 = vsel %vm452, %v7278, %v7280
      %s7282 = scalar_lea.vmem %s6, 224
      %v7283 = vld [vmem:[%s7282] sm:$0xff]
      %v7284 = vld [vmem:[%s7282 + $0x8] sm:$0xff]
      %v7285 = vld [vmem:[%s7282 + $0x10] sm:$0xff]
      %v7286 = vld [vmem:[%s7282 + $0x18] sm:$0xff]
      %v7287 = vsel %vm5988, %v7279, 0
      %v7289 = vsel %vm5988, %v7281, 0
      %7291 = vmatprep.subr.mxu0 0.0
      %7292 = vmatpush1.msra.mxu0 %v7283
      %7293 = vmatprep.subr.mxu0 0.0
      %7294 = vmatpush1.msra.mxu0 %v7284
      %7295 = vmatprep.subr.mxu0 0.0
      %7296 = vmatpush1.msra.mxu0 %v7285
      %7297 = vmatprep.subr.mxu0 0.0
      %7298 = vmatpush1.msra.mxu0 %v7286
      %7299 = vmatprep.subr.mxu0 0.0
      %7300 = vmatpush1.msra.mxu0 0.0
      %7301 = vmatprep.subr.mxu0 0.0
      %7302 = vmatpush1.msra.mxu0 0.0
      %7303 = vmatprep.subr.mxu0 0.0
      %7304 = vmatpush1.msra.mxu0 0.0
      %7305 = vmatprep.subr.mxu0 0.0
      %7306 = vmatpush1.msra.mxu0 0.0
      %7307 = vmatprep.subr.mxu0 0.0
      %7308 = vmatpush1.msra.mxu0 0.0
      %7309 = vmatprep.subr.mxu0 0.0
      %7310 = vmatpush1.msra.mxu0 0.0
      %7311 = vmatprep.subr.mxu0 0.0
      %7312 = vmatpush1.msra.mxu0 0.0
      %7313 = vmatprep.subr.mxu0 0.0
      %7314 = vmatpush1.msra.mxu0 0.0
      %7315 = vmatprep.subr.mxu0 0.0
      %7316 = vmatpush1.msra.mxu0 0.0
      %7317 = vmatprep.subr.mxu0 0.0
      %7318 = vmatpush1.msra.mxu0 0.0
      %7319 = vmatprep.subr.mxu0 0.0
      %7320 = vmatpush1.msra.mxu0 0.0
      %7321 = vmatprep.subr.mxu0 0.0
      %7322 = vmatpush1.msra.mxu0 0.0
      %7323 = vmatprep.subr.mxu0 0.0
      %7324 = vmatpush1.msra.mxu0 0.0
      %7325 = vmatprep.subr.mxu0 0.0
      %7326 = vmatpush1.msra.mxu0 0.0
      %7327 = vmatprep.subr.mxu0 0.0
      %7328 = vmatpush1.msra.mxu0 0.0
      %7329 = vmatprep.subr.mxu0 0.0
      %7330 = vmatpush1.msra.mxu0 0.0
      %7331 = vmatprep.subr.mxu0 0.0
      %7332 = vmatpush1.msra.mxu0 0.0
      %7333 = vmatprep.subr.mxu0 0.0
      %7334 = vmatpush1.msra.mxu0 0.0
      %7335 = vmatprep.subr.mxu0 0.0
      %7336 = vmatpush1.msra.mxu0 0.0
      %7337 = vmatprep.subr.mxu0 0.0
      %7338 = vmatpush1.msra.mxu0 0.0
      %7339 = vmatprep.subr.mxu0 0.0
      %7340 = vmatpush1.msra.mxu0 0.0
      %7341 = vmatprep.subr.mxu0 0.0
      %7342 = vmatpush1.msra.mxu0 0.0
      %7343 = vmatprep.subr.mxu0 0.0
      %7344 = vmatpush1.msra.mxu0 0.0
      %7345 = vmatprep.subr.mxu0 0.0
      %7346 = vmatpush1.msra.mxu0 0.0
      %7347 = vmatprep.subr.mxu0 0.0
      %7348 = vmatpush1.msra.mxu0 0.0
      %7349 = vmatprep.subr.mxu0 0.0
      %7350 = vmatpush1.msra.mxu0 0.0
      %7351 = vmatprep.subr.mxu0 0.0
      %7352 = vmatpush1.msra.mxu0 0.0
      %7353 = vmatprep.subr.mxu0 0.0
      %7354 = vmatpush1.msra.mxu0 0.0
      %7355 = vmatprep.mubr.f32.mxu0 0.0
      %7356 = vmatmul.mubr.f32.gmra.mrb[0].mxu0 %v5997
      %v7357 = vpop.f32.mrb[0].mxu0
      %v7358 = vadd.f32 0.0, %v7357
      %v7359 = vpop.f32.mrb[0].mxu0
      %7360 = vmatprep.mubr.f32.mxu0 0.0
      %7361 = vmatmul.mubr.f32.gmra.mrb[0].mxu0 %v5999
      %v7362 = vpop.f32.mrb[0].mxu0
      %v7363 = vadd.f32 0.0, %v7362
      %v7364 = vpop.f32.mrb[0].mxu0
      %7365 = vmatprep.mubr.f32.mxu0 0.0
      %7366 = vmatmul.mubr.f32.gmra.mrb[0].mxu0 %v6001
      %v7367 = vpop.f32.mrb[0].mxu0
      %v7368 = vadd.f32 0.0, %v7367
      %v7369 = vpop.f32.mrb[0].mxu0
      %7370 = vmatprep.mubr.f32.mxu0 0.0
      %7371 = vmatmul.mubr.f32.gmra.mrb[0].mxu0 %v6003
      %v7372 = vpop.f32.mrb[0].mxu0
      %v7373 = vadd.f32 0.0, %v7372
      %v7374 = vpop.f32.mrb[0].mxu0
      %7375 = vmatprep.mubr.f32.mxu0 0.0
      %7376 = vmatmul.mubr.f32.gmra.mrb[0].mxu0 %v6005
      %v7377 = vpop.f32.mrb[0].mxu0
      %v7378 = vadd.f32 0.0, %v7377
      %v7379 = vpop.f32.mrb[0].mxu0
      %7380 = vmatprep.mubr.f32.mxu0 0.0
      %7381 = vmatmul.mubr.f32.gmra.mrb[0].mxu0 %v6007
      %v7382 = vpop.f32.mrb[0].mxu0
      %v7383 = vadd.f32 0.0, %v7382
      %v7384 = vpop.f32.mrb[0].mxu0
      %7385 = vmatprep.mubr.f32.mxu0 0.0
      %7386 = vmatmul.mubr.f32.gmra.mrb[0].mxu0 %v6009
      %v7387 = vpop.f32.mrb[0].mxu0
      %v7388 = vadd.f32 0.0, %v7387
      %v7389 = vpop.f32.mrb[0].mxu0
      %7390 = vmatprep.mubr.f32.mxu0 0.0
      %7391 = vmatmul.mubr.f32.gmra.mrb[0].mxu0 %v6011
      %v7392 = vpop.f32.mrb[0].mxu0
      %v7393 = vadd.f32 0.0, %v7392
      %v7394 = vpop.f32.mrb[0].mxu0
      %7395 = vmatprep.mubr.f32.mxu0 0.0
      %7396 = vmatmul.mubr.f32.gmra.mrb[0].mxu0 %v6013
      %v7397 = vpop.f32.mrb[0].mxu0
      %v7398 = vadd.f32 0.0, %v7397
      %v7399 = vpop.f32.mrb[0].mxu0
      %7400 = vmatprep.mubr.f32.mxu0 0.0
      %7401 = vmatmul.mubr.f32.gmra.mrb[0].mxu0 %v6015
      %v7402 = vpop.f32.mrb[0].mxu0
      %v7403 = vadd.f32 0.0, %v7402
      %v7404 = vpop.f32.mrb[0].mxu0
      %7405 = vmatprep.mubr.f32.mxu0 0.0
      %7406 = vmatmul.mubr.f32.gmra.mrb[0].mxu0 %v6017
      %v7407 = vpop.f32.mrb[0].mxu0
      %v7408 = vadd.f32 0.0, %v7407
      %v7409 = vpop.f32.mrb[0].mxu0
      %7410 = vmatprep.mubr.f32.mxu0 0.0
      %7411 = vmatmul.mubr.f32.gmra.mrb[0].mxu0 %v6019
      %v7412 = vpop.f32.mrb[0].mxu0
      %v7413 = vadd.f32 0.0, %v7412
      %v7414 = vpop.f32.mrb[0].mxu0
      %7415 = vmatprep.mubr.f32.mxu0 0.0
      %7416 = vmatmul.mubr.f32.gmra.mrb[0].mxu0 %v6764
      %v7417 = vpop.f32.mrb[0].mxu0
      %v7418 = vadd.f32 0.0, %v7417
      %v7419 = vpop.f32.mrb[0].mxu0
      %7420 = vmatprep.mubr.f32.mxu0 0.0
      %7421 = vmatmul.mubr.f32.gmra.mrb[0].mxu0 %v6766
      %v7422 = vpop.f32.mrb[0].mxu0
      %v7423 = vadd.f32 0.0, %v7422
      %v7424 = vpop.f32.mrb[0].mxu0
      %7425 = vmatprep.mubr.f32.mxu0 0.0
      %7426 = vmatmul.mubr.f32.gmra.mrb[0].mxu0 %v7287
      %v7427 = vpop.f32.mrb[0].mxu0
      %v7428 = vadd.f32 0.0, %v7427
      %v7429 = vpop.f32.mrb[0].mxu0
      %7430 = vmatprep.mubr.f32.mxu0 0.0
      %7431 = vmatmul.mubr.f32.gmra.mrb[0].mxu0 %v7289
      %v7432 = vpop.f32.mrb[0].mxu0
      %v7433 = vadd.f32 0.0, %v7432
      %v7434 = vpop.f32.mrb[0].mxu0
      %7435 = vdwg.mxu0
      %v7436 = vadd.f32 %v7260, %v7358
      %v7437 = vadd.f32 %v7261, %v7363
      %v7438 = vadd.f32 %v7262, %v7368
      %v7439 = vadd.f32 %v7263, %v7373
      %v7440 = vadd.f32 %v7264, %v7378
      %v7441 = vadd.f32 %v7265, %v7383
      %v7442 = vadd.f32 %v7266, %v7388
      %v7443 = vadd.f32 %v7267, %v7393
      %v7444 = vadd.f32 %v7268, %v7398
      %v7445 = vadd.f32 %v7269, %v7403
      %v7446 = vadd.f32 %v7270, %v7408
      %v7447 = vadd.f32 %v7271, %v7413
      %v7448 = vadd.f32 %v7272, %v7418
      %v7449 = vadd.f32 %v7273, %v7423
      %v7450 = vadd.f32 %v7274, %v7428
      %v7451 = vadd.f32 %v7275, %v7433
      %v7452 = vrot.slane %v5912, 2
      %v7453 = vrot.slane %v5913, 2
      %v7454 = vsel %vm593, %v7452, %v7453
      %v7455 = vrot.slane %v5914, 2
      %v7456 = vsel %vm593, %v7453, %v7455
      %s7457 = scalar_lea.vmem %s6, 256
      %v7458 = vld [vmem:[%s7457] sm:$0xff]
      %v7459 = vld [vmem:[%s7457 + $0x8] sm:$0xff]
      %v7460 = vld [vmem:[%s7457 + $0x10] sm:$0xff]
      %v7461 = vld [vmem:[%s7457 + $0x18] sm:$0xff]
      %v7462 = vsel %vm5988, %v7454, 0
      %v7464 = vsel %vm5988, %v7456, 0
      %7466 = vmatprep.subr.mxu0 0.0
      %7467 = vmatpush1.msra.mxu0 %v7458
      %7468 = vmatprep.subr.mxu0 0.0
      %7469 = vmatpush1.msra.mxu0 %v7459
      %7470 = vmatprep.subr.mxu0 0.0
      %7471 = vmatpush1.msra.mxu0 %v7460
      %7472 = vmatprep.subr.mxu0 0.0
      %7473 = vmatpush1.msra.mxu0 %v7461
      %7474 = vmatprep.subr.mxu0 0.0
      %7475 = vmatpush1.msra.mxu0 0.0
      %7476 = vmatprep.subr.mxu0 0.0
      %7477 = vmatpush1.msra.mxu0 0.0
      %7478 = vmatprep.subr.mxu0 0.0
      %7479 = vmatpush1.msra.mxu0 0.0
      %7480 = vmatprep.subr.mxu0 0.0
      %7481 = vmatpush1.msra.mxu0 0.0
      %7482 = vmatprep.subr.mxu0 0.0
      %7483 = vmatpush1.msra.mxu0 0.0
      %7484 = vmatprep.subr.mxu0 0.0
      %7485 = vmatpush1.msra.mxu0 0.0
      %7486 = vmatprep.subr.mxu0 0.0
      %7487 = vmatpush1.msra.mxu0 0.0
      %7488 = vmatprep.subr.mxu0 0.0
      %7489 = vmatpush1.msra.mxu0 0.0
      %7490 = vmatprep.subr.mxu0 0.0
      %7491 = vmatpush1.msra.mxu0 0.0
      %7492 = vmatprep.subr.mxu0 0.0
      %7493 = vmatpush1.msra.mxu0 0.0
      %7494 = vmatprep.subr.mxu0 0.0
      %7495 = vmatpush1.msra.mxu0 0.0
      %7496 = vmatprep.subr.mxu0 0.0
      %7497 = vmatpush1.msra.mxu0 0.0
      %7498 = vmatprep.subr.mxu0 0.0
      %7499 = vmatpush1.msra.mxu0 0.0
      %7500 = vmatprep.subr.mxu0 0.0
      %7501 = vmatpush1.msra.mxu0 0.0
      %7502 = vmatprep.subr.mxu0 0.0
      %7503 = vmatpush1.msra.mxu0 0.0
      %7504 = vmatprep.subr.mxu0 0.0
      %7505 = vmatpush1.msra.mxu0 0.0
      %7506 = vmatprep.subr.mxu0 0.0
      %7507 = vmatpush1.msra.mxu0 0.0
      %7508 = vmatprep.subr.mxu0 0.0
      %7509 = vmatpush1.msra.mxu0 0.0
      %7510 = vmatprep.subr.mxu0 0.0
      %7511 = vmatpush1.msra.mxu0 0.0
      %7512 = vmatprep.subr.mxu0 0.0
      %7513 = vmatpush1.msra.mxu0 0.0
      %7514 = vmatprep.subr.mxu0 0.0
      %7515 = vmatpush1.msra.mxu0 0.0
      %7516 = vmatprep.subr.mxu0 0.0
      %7517 = vmatpush1.msra.mxu0 0.0
      %7518 = vmatprep.subr.mxu0 0.0
      %7519 = vmatpush1.msra.mxu0 0.0
      %7520 = vmatprep.subr.mxu0 0.0
      %7521 = vmatpush1.msra.mxu0 0.0
      %7522 = vmatprep.subr.mxu0 0.0
      %7523 = vmatpush1.msra.mxu0 0.0
      %7524 = vmatprep.subr.mxu0 0.0
      %7525 = vmatpush1.msra.mxu0 0.0
      %7526 = vmatprep.subr.mxu0 0.0
      %7527 = vmatpush1.msra.mxu0 0.0
      %7528 = vmatprep.subr.mxu0 0.0
      %7529 = vmatpush1.msra.mxu0 0.0
      %7530 = vmatprep.mubr.f32.mxu0 0.0
      %7531 = vmatmul.mubr.f32.gmra.mrb[0].mxu0 %v6396
      %v7532 = vpop.f32.mrb[0].mxu0
      %v7533 = vadd.f32 0.0, %v7532
      %v7534 = vpop.f32.mrb[0].mxu0
      %7535 = vmatprep.mubr.f32.mxu0 0.0
      %7536 = vmatmul.mubr.f32.gmra.mrb[0].mxu0 %v6398
      %v7537 = vpop.f32.mrb[0].mxu0
      %v7538 = vadd.f32 0.0, %v7537
      %v7539 = vpop.f32.mrb[0].mxu0
      %7540 = vmatprep.mubr.f32.mxu0 0.0
      %7541 = vmatmul.mubr.f32.gmra.mrb[0].mxu0 %v6400
      %v7542 = vpop.f32.mrb[0].mxu0
      %v7543 = vadd.f32 0.0, %v7542
      %v7544 = vpop.f32.mrb[0].mxu0
      %7545 = vmatprep.mubr.f32.mxu0 0.0
      %7546 = vmatmul.mubr.f32.gmra.mrb[0].mxu0 %v6402
      %v7547 = vpop.f32.mrb[0].mxu0
      %v7548 = vadd.f32 0.0, %v7547
      %v7549 = vpop.f32.mrb[0].mxu0
      %7550 = vmatprep.mubr.f32.mxu0 0.0
      %7551 = vmatmul.mubr.f32.gmra.mrb[0].mxu0 %v6404
      %v7552 = vpop.f32.mrb[0].mxu0
      %v7553 = vadd.f32 0.0, %v7552
      %v7554 = vpop.f32.mrb[0].mxu0
      %7555 = vmatprep.mubr.f32.mxu0 0.0
      %7556 = vmatmul.mubr.f32.gmra.mrb[0].mxu0 %v6406
      %v7557 = vpop.f32.mrb[0].mxu0
      %v7558 = vadd.f32 0.0, %v7557
      %v7559 = vpop.f32.mrb[0].mxu0
      %7560 = vmatprep.mubr.f32.mxu0 0.0
      %7561 = vmatmul.mubr.f32.gmra.mrb[0].mxu0 %v6408
      %v7562 = vpop.f32.mrb[0].mxu0
      %v7563 = vadd.f32 0.0, %v7562
      %v7564 = vpop.f32.mrb[0].mxu0
      %7565 = vmatprep.mubr.f32.mxu0 0.0
      %7566 = vmatmul.mubr.f32.gmra.mrb[0].mxu0 %v6410
      %v7567 = vpop.f32.mrb[0].mxu0
      %v7568 = vadd.f32 0.0, %v7567
      %v7569 = vpop.f32.mrb[0].mxu0
      %7570 = vmatprep.mubr.f32.mxu0 0.0
      %7571 = vmatmul.mubr.f32.gmra.mrb[0].mxu0 %v6412
      %v7572 = vpop.f32.mrb[0].mxu0
      %v7573 = vadd.f32 0.0, %v7572
      %v7574 = vpop.f32.mrb[0].mxu0
      %7575 = vmatprep.mubr.f32.mxu0 0.0
      %7576 = vmatmul.mubr.f32.gmra.mrb[0].mxu0 %v6414
      %v7577 = vpop.f32.mrb[0].mxu0
      %v7578 = vadd.f32 0.0, %v7577
      %v7579 = vpop.f32.mrb[0].mxu0
      %7580 = vmatprep.mubr.f32.mxu0 0.0
      %7581 = vmatmul.mubr.f32.gmra.mrb[0].mxu0 %v6416
      %v7582 = vpop.f32.mrb[0].mxu0
      %v7583 = vadd.f32 0.0, %v7582
      %v7584 = vpop.f32.mrb[0].mxu0
      %7585 = vmatprep.mubr.f32.mxu0 0.0
      %7586 = vmatmul.mubr.f32.gmra.mrb[0].mxu0 %v6418
      %v7587 = vpop.f32.mrb[0].mxu0
      %v7588 = vadd.f32 0.0, %v7587
      %v7589 = vpop.f32.mrb[0].mxu0
      %7590 = vmatprep.mubr.f32.mxu0 0.0
      %7591 = vmatmul.mubr.f32.gmra.mrb[0].mxu0 %v6939
      %v7592 = vpop.f32.mrb[0].mxu0
      %v7593 = vadd.f32 0.0, %v7592
      %v7594 = vpop.f32.mrb[0].mxu0
      %7595 = vmatprep.mubr.f32.mxu0 0.0
      %7596 = vmatmul.mubr.f32.gmra.mrb[0].mxu0 %v6941
      %v7597 = vpop.f32.mrb[0].mxu0
      %v7598 = vadd.f32 0.0, %v7597
      %v7599 = vpop.f32.mrb[0].mxu0
      %7600 = vmatprep.mubr.f32.mxu0 0.0
      %7601 = vmatmul.mubr.f32.gmra.mrb[0].mxu0 %v7462
      %v7602 = vpop.f32.mrb[0].mxu0
      %v7603 = vadd.f32 0.0, %v7602
      %v7604 = vpop.f32.mrb[0].mxu0
      %7605 = vmatprep.mubr.f32.mxu0 0.0
      %7606 = vmatmul.mubr.f32.gmra.mrb[0].mxu0 %v7464
      %v7607 = vpop.f32.mrb[0].mxu0
      %v7608 = vadd.f32 0.0, %v7607
      %v7609 = vpop.f32.mrb[0].mxu0
      %7610 = vdwg.mxu0
      %v7611 = vadd.f32 %v7436, %v7533
      %v7612 = vadd.f32 %v7437, %v7538
      %v7613 = vadd.f32 %v7438, %v7543
      %v7614 = vadd.f32 %v7439, %v7548
      %v7615 = vadd.f32 %v7440, %v7553
      %v7616 = vadd.f32 %v7441, %v7558
      %v7617 = vadd.f32 %v7442, %v7563
      %v7618 = vadd.f32 %v7443, %v7568
      %v7619 = vadd.f32 %v7444, %v7573
      %v7620 = vadd.f32 %v7445, %v7578
      %v7621 = vadd.f32 %v7446, %v7583
      %v7622 = vadd.f32 %v7447, %v7588
      %v7623 = vadd.f32 %v7448, %v7593
      %v7624 = vadd.f32 %v7449, %v7598
      %v7625 = vadd.f32 %v7450, %v7603
      %v7626 = vadd.f32 %v7451, %v7608
      %v7627 = vld [vmem:[%s7] sm:$0x1]
      %v7629 = vlaneseq
      %v7630 = vshrl.u32 %v7629, 7
      %v7631 = vsub.s32 0, %v7630
      %v7632 = vrot.slane %v7627, %v7631
      %v7634 = vadd.f32 %v7611, %v7632
      %v7635 = vadd.f32 %v7612, %v7632
      %v7636 = vadd.f32 %v7613, %v7632
      %v7637 = vadd.f32 %v7614, %v7632
      %v7638 = vadd.f32 %v7615, %v7632
      %v7639 = vadd.f32 %v7616, %v7632
      %v7640 = vadd.f32 %v7617, %v7632
      %v7641 = vadd.f32 %v7618, %v7632
      %v7642 = vadd.f32 %v7619, %v7632
      %v7643 = vadd.f32 %v7620, %v7632
      %v7644 = vadd.f32 %v7621, %v7632
      %v7645 = vadd.f32 %v7622, %v7632
      %v7646 = vadd.f32 %v7623, %v7632
      %v7647 = vadd.f32 %v7624, %v7632
      %v7648 = vadd.f32 %v7625, %v7632
      %v7649 = vadd.f32 %v7626, %v7632
      %7650 = vxpose.xlu0.b32.start [1/16] %v7634, 128
      %7651 = vxpose.xlu0.b32.cont [2/16] %v7635, 128
      %7652 = vxpose.xlu0.b32.cont [3/16] %v7636, 128
      %7653 = vxpose.xlu0.b32.cont [4/16] %v7637, 128
      %7654 = vxpose.xlu0.b32.cont [5/16] %v7638, 128
      %7655 = vxpose.xlu0.b32.cont [6/16] %v7639, 128
      %7656 = vxpose.xlu0.b32.cont [7/16] %v7640, 128
      %7657 = vxpose.xlu0.b32.cont [8/16] %v7641, 128
      %7658 = vxpose.xlu0.b32.cont [9/16] %v7642, 128
      %7659 = vxpose.xlu0.b32.cont [10/16] %v7643, 128
      %7660 = vxpose.xlu0.b32.cont [11/16] %v7644, 128
      %7661 = vxpose.xlu0.b32.cont [12/16] %v7645, 128
      %7662 = vxpose.xlu0.b32.cont [13/16] %v7646, 128
      %7663 = vxpose.xlu0.b32.cont [14/16] %v7647, 128
      %7664 = vxpose.xlu0.b32.cont [15/16] %v7648, 128
      %7665 = vxpose.xlu0.b32.end [16/16] %v7649, 128
      %v7666 = vpop.trf.xlu0
      %v7667 = vpop.trf.xlu0
      %v7668 = vpop.trf.xlu0
      %v7669 = vpop.trf.xlu0
      %v7670 = vpop.trf.xlu0
      %v7671 = vpop.trf.xlu0
      %v7672 = vpop.trf.xlu0
      %v7673 = vpop.trf.xlu0
      %v7674 = vpop.trf.xlu0
      %v7675 = vpop.trf.xlu0
      %v7676 = vpop.trf.xlu0
      %v7677 = vpop.trf.xlu0
      %v7678 = vpop.trf.xlu0
      %v7679 = vpop.trf.xlu0
      %v7680 = vpop.trf.xlu0
      %v7681 = vpop.trf.xlu0
      %v7682 = vtanh.pop %v7666
      %7683 = vst [vmem:[%s345] sm:$0x7] %v7682
      %p7684 = scmp.lt.s32.totalorder %s23, 1
      %s7685 = scalar_select %p7684, %s23, 1
      %p7686 = scmp.lt.s32.totalorder %s24, 1
      %s7687 = scalar_select %p7686, %s24, 1
      %s7688 = smul.addr %s7685, 2
      %s7689 = sadd.s32 %s7687, %s7688
      %s7690 = smul.addr %s7689, 4
      %s7691 = scalar_lea.vmem %s8, %s7690
      // Predicated region
      $region53: #{transfer_generator_forward.1} parent=51 // pred_check
        %p7692 = pneg %p229
      $region54: #{transfer_generator_forward.1} parent=51 // pred_check_branch
        %7694 = sbr.rel (%p7692) target = $region56
      $region55: #{transfer_generator_forward.1} parent=51 // pred_region
        _
      $region56: #{transfer_generator_forward.1} parent=51 // pred_fallthru
        _
    $region52: #{transfer_generator_forward.1} parent=5 // pred_fallthru
      _
    %p7695 = scmp.le.s32.totalorder 2, %s14
    // Predicated region
    $region57: #{transfer_generator_forward.1} parent=5 // pred_check
      %p7696 = pneg %p7695
    $region58: #{transfer_generator_forward.1} parent=5 // pred_check_branch
      %7698 = sbr.rel (%p7696) target = $region60
    $region59: #{transfer_generator_forward.1} parent=5 // pred_region
      %s7699 = ssub.s32 %s14, 2
      // Predicated region
      $region61: #{transfer_generator_forward.1} parent=59 // pred_check
        %p7700 = pneg %p235
      $region62: #{transfer_generator_forward.1} parent=59 // pred_check_branch
        %7702 = sbr.rel (%p7700) target = $region64
      $region63: #{transfer_generator_forward.1} parent=59 // pred_region
        %p7703 = scmp.lt.s32.totalorder %s25, 1
        %s7704 = scalar_select %p7703, %s25, 1
        %p7705 = scmp.lt.s32.totalorder %s26, 1
        %s7706 = scalar_select %p7705, %s26, 1
        %s7707 = smul.addr %s7704, 2
        %s7708 = sadd.s32 %s7706, %s7707
        %s7709 = smul.addr %s7708, 4
        %s7710 = scalar_lea.vmem %s8, %s7709
      $region64: #{transfer_generator_forward.1} parent=59 // pred_fallthru
        _
    $region60: #{transfer_generator_forward.1} parent=5 // pred_fallthru
      _
  $region6: #{transfer_generator_forward.1} parent=0 // loop_footer
    %s18 = sadd.s32 1, %s14
  $region7: #{transfer_generator_forward.1} parent=0 // loop_footer_branch
    %13 = sbr.rel target = $region3
  $region8: #{transfer_generator_forward.1} parent=0 // loop_exit
    _

</llo_original>
